<compile_context>
chip_gen: v7x
topology: tpu7x:2x2x1
jax: 0.10.0
libtpu: 0.0.40
codegen_flags: <defaults>
</compile_context>

<pallas_src>
import math
from functools import partial

import jax
import jax.numpy as jnp
from jax.experimental import pallas as pl
from jax.experimental.pallas import tpu as pltpu

GROUP_NORM_LOOKUP = {16: 2, 32: 4, 64: 8, 128: 8, 256: 16, 512: 32, 1024: 32, 2048: 32}
_EPS = 1e-5
_PADL = 8                                   # sublane-aligned column offset for scratch pads
_TAPS3 = tuple((di, dj) for di in range(3) for dj in range(3))


# ----------------------------------------------------------------------------- kernel helpers
def _gn_relu(y, gamma, beta, p, *, count, eps):
    """GroupNorm (+ReLU) on f32 (rows, C); p is the (C, C) within-group indicator."""
    csum = jnp.sum(y, axis=0, keepdims=True)                 # (1, C)
    csq = jnp.sum(y * y, axis=0, keepdims=True)              # (1, C)
    mean = jnp.dot(csum, p, preferred_element_type=jnp.float32) / count
    msq = jnp.dot(csq, p, preferred_element_type=jnp.float32) / count
    var = jnp.maximum(msq - mean * mean, 0.0)                # guard against cancellation
    inv = jax.lax.rsqrt(var + eps)
    out = (y - mean) * inv * gamma + beta
    return jnp.maximum(out, 0.0)


def _tap_window(x_ref, di, dj, *, stride, hs, ho, wo):
    """One (Ho*Wo, Cin) bf16 conv window from a phase-split padded input block."""
    ph = (di % stride) * stride + (dj % stride)
    r0 = ph * hs + di // stride
    c0 = dj // stride
    win = x_ref[0, r0:r0 + ho, c0:c0 + wo, :].astype(jnp.float32)   # (Ho, Wo, Cin)
    # Wo is a multiple of 8 for these shapes, so the sublane merge is tile-aligned.
    return win.reshape(ho * wo, win.shape[-1]).astype(jnp.bfloat16)


# ----------------------------------------------------------------------------- kernels
def gn_relu_kernel(x_ref, gamma_ref, beta_ref, p_ref, o_ref, *, count, eps):
    x = x_ref[0].astype(jnp.float32)                         # (HW, C)
    o_ref[0] = _gn_relu(x, gamma_ref[...], beta_ref[...], p_ref[...],
                        count=count, eps=eps).astype(o_ref.dtype)


def conv1_gn_relu_shortcut_kernel(x_ref, w_ref, ws_ref, gamma_ref, beta_ref, p_ref,
                                  h_ref, skip_ref, *, stride, hs, ho, wo, count, eps):
    """3x3 conv (pad 1, stride) + GroupNorm + ReLU, with the 1x1 shortcut conv fused.

    The shortcut conv's input window (act at strided positions) is exactly the centre
    tap (1,1) of the padded 3x3 conv, so it reuses that window.
    """
    cout = w_ref.shape[-1]
    acc = jnp.zeros((ho * wo, cout), jnp.float32)
    for t, (di, dj) in enumerate(_TAPS3):
        win = _tap_window(x_ref, di, dj, stride=stride, hs=hs, ho=ho, wo=wo)
        if (di, dj) == (1, 1):
            skip_ref[0] = jnp.dot(win, ws_ref[0],
                                  preferred_element_type=jnp.float32).astype(skip_ref.dtype)
        acc = acc + jnp.dot(win, w_ref[t], preferred_element_type=jnp.float32)
    h_ref[0] = _gn_relu(acc, gamma_ref[...], beta_ref[...], p_ref[...],
                        count=count, eps=eps).astype(h_ref.dtype)


def conv2_add_kernel(x_ref, w_ref, skip_ref, o_ref, *, hs, ho, wo):
    """3x3 conv (stride 1, pad 1) with fused residual add."""
    cout = w_ref.shape[-1]
    acc = jnp.zeros((ho * wo, cout), jnp.float32)
    for t, (di, dj) in enumerate(_TAPS3):
        win = _tap_window(x_ref, di, dj, stride=1, hs=hs, ho=ho, wo=wo)
        acc = acc + jnp.dot(win, w_ref[t], preferred_element_type=jnp.float32)
    o_ref[0] = (acc + skip_ref[0].astype(jnp.float32)).astype(o_ref.dtype)


def fused_basic_block_kernel(x_ref, w1_ref, w2_ref, g1_ref, b1_ref, p1_ref,
                             g2_ref, b2_ref, p2_ref, o_ref, pad1_ref, pad2_ref,
                             *, h, w, count1, count2, eps):
    """Whole equal-in/out stride-1 BasicBlock for one image, entirely in VMEM.

    x_ref: (1, H*W, C).  pad1/pad2 scratch: (H+2, W+2*_PADL, C) f32 with the activation
    interior placed at rows [1:H+1], cols [_PADL:_PADL+W] (sublane-aligned stores); the
    zero border supplies the conv padding.
    """
    cin = x_ref.shape[-1]
    cout = w1_ref.shape[-1]
    x = x_ref[0].astype(jnp.float32)                                     # (HW, Cin)

    # GroupNorm1 + ReLU
    act = _gn_relu(x, g1_ref[...], b1_ref[...], p1_ref[...], count=count1, eps=eps)

    # conv1 (3x3, stride 1, pad 1) from zero-padded scratch
    pad1_ref[...] = jnp.zeros_like(pad1_ref)
    pad1_ref[1:h + 1, _PADL:_PADL + w, :] = act.reshape(h, w, cin)
    acc1 = jnp.zeros((h * w, cout), jnp.float32)
    for t, (di, dj) in enumerate(_TAPS3):
        win = pad1_ref[di:di + h, _PADL - 1 + dj:_PADL - 1 + dj + w, :]
        win = win.reshape(h * w, cin).astype(jnp.bfloat16)
        acc1 = acc1 + jnp.dot(win, w1_ref[t], preferred_element_type=jnp.float32)

    # GroupNorm2 + ReLU
    hid = _gn_relu(acc1, g2_ref[...], b2_ref[...], p2_ref[...], count=count2, eps=eps)
    # TODO(synk): F.dropout(hid) would go here; dropRate=0.0 makes it a no-op.

    # conv2 (3x3, stride 1, pad 1) from zero-padded scratch, fused residual add
    pad2_ref[...] = jnp.zeros_like(pad2_ref)
    pad2_ref[1:h + 1, _PADL:_PADL + w, :] = hid.reshape(h, w, cout)
    acc2 = jnp.zeros((h * w, cout), jnp.float32)
    for t, (di, dj) in enumerate(_TAPS3):
        win = pad2_ref[di:di + h, _PADL - 1 + dj:_PADL - 1 + dj + w, :]
        win = win.reshape(h * w, cout).astype(jnp.bfloat16)
        acc2 = acc2 + jnp.dot(win, w2_ref[t], preferred_element_type=jnp.float32)

    o_ref[0] = (acc2 + x).astype(o_ref.dtype)                 # skip = x (equal in/out)


# ----------------------------------------------------------------------------- wrappers
def _phase_rows(xp, stride):
    """(N, Hp, Wp, C) padded input -> (N, stride^2 * Hp/stride, Wp/stride, C)."""
    n, hp, wp, c = xp.shape
    if stride == 1:
        return xp, hp, wp
    s = stride
    assert hp % s == 0 and wp % s == 0, (hp, wp, s)
    hs, ws = hp // s, wp // s
    xph = xp.reshape(n, hs, s, ws, s, c).transpose(0, 2, 4, 1, 3, 5)
    return xph.reshape(n, s * s * hs, ws, c), hs, ws


def group_norm_relu(x, gamma, beta, p, groups):
    n, h, w, c = x.shape
    hw = h * w
    x2 = x.reshape(n, hw, c)
    kern = partial(gn_relu_kernel, count=float(hw * (c // groups)), eps=_EPS)
    out = pl.pallas_call(
        kern,
        out_shape=jax.ShapeDtypeStruct((n, hw, c), jnp.bfloat16),
        grid=(n,),
        in_specs=[
            pl.BlockSpec((1, hw, c), lambda i: (i, 0, 0)),
            pl.BlockSpec((1, c), lambda i: (0, 0)),
            pl.BlockSpec((1, c), lambda i: (0, 0)),
            pl.BlockSpec((c, c), lambda i: (0, 0)),
        ],
        out_specs=pl.BlockSpec((1, hw, c), lambda i: (i, 0, 0)),
        compiler_params=pltpu.CompilerParams(dimension_semantics=("parallel",)),
    )(x2, gamma, beta, p)
    return out.reshape(n, h, w, c)


def conv1_gn_relu_shortcut(act, bp):
    """conv1 (3x3, stride, pad 1) + GN2 + ReLU, shortcut conv fused.  Returns flat maps."""
    n, h, w, cin = act.shape
    cout, stride = bp["out"], bp["stride"]
    ho = (h + 2 - 3) // stride + 1
    wo = (w + 2 - 3) // stride + 1
    assert wo % 8 == 0, wo
    xp = jnp.pad(act, ((0, 0), (1, 1), (1, 1), (0, 0)))
    xrows, hs, ws = _phase_rows(xp, stride)
    rows = xrows.shape[1]
    w1 = bp["conv1"].reshape(9, cin, cout)
    wsc = bp["shortcut"].reshape(1, cin, cout)
    kern = partial(conv1_gn_relu_shortcut_kernel, stride=stride, hs=hs, ho=ho, wo=wo,
                   count=float(ho * wo * (cout // bp["g2"])), eps=_EPS)
    h_out, skip = pl.pallas_call(
        kern,
        out_shape=(jax.ShapeDtypeStruct((n, ho * wo, cout), jnp.bfloat16),
                   jax.ShapeDtypeStruct((n, ho * wo, cout), jnp.bfloat16)),
        grid=(n,),
        in_specs=[
            pl.BlockSpec((1, rows, ws, cin), lambda i: (i, 0, 0, 0)),
            pl.BlockSpec((9, cin, cout), lambda i: (0, 0, 0)),
            pl.BlockSpec((1, cin, cout), lambda i: (0, 0, 0)),
            pl.BlockSpec((1, cout), lambda i: (0, 0)),
            pl.BlockSpec((1, cout), lambda i: (0, 0)),
            pl.BlockSpec((cout, cout), lambda i: (0, 0)),
        ],
        out_specs=(pl.BlockSpec((1, ho * wo, cout), lambda i: (i, 0, 0)),
                   pl.BlockSpec((1, ho * wo, cout), lambda i: (i, 0, 0))),
        compiler_params=pltpu.CompilerParams(dimension_semantics=("parallel",)),
    )(xrows, w1, wsc, bp["gn2_g"], bp["gn2_b"], bp["p2"])
    return h_out, skip, ho, wo


def conv2_add(h, skip_flat, w2):
    """conv2 (3x3, stride 1, pad 1) with fused residual add; skip_flat is (N, H*W, Cout)."""
    n, hh, ww, cout = h.shape
    assert ww % 8 == 0, ww
    xp = jnp.pad(h, ((0, 0), (1, 1), (1, 1), (0, 0)))
    hs, ws = hh + 2, ww + 2
    kern = partial(conv2_add_kernel, hs=hs, ho=hh, wo=ww)
    out = pl.pallas_call(
        kern,
        out_shape=jax.ShapeDtypeStruct((n, hh * ww, cout), jnp.bfloat16),
        grid=(n,),
        in_specs=[
            pl.BlockSpec((1, hs, ws, cout), lambda i: (i, 0, 0, 0)),
            pl.BlockSpec((9, cout, cout), lambda i: (0, 0, 0)),
            pl.BlockSpec((1, hh * ww, cout), lambda i: (i, 0, 0)),
        ],
        out_specs=pl.BlockSpec((1, hh * ww, cout), lambda i: (i, 0, 0)),
        compiler_params=pltpu.CompilerParams(dimension_semantics=("parallel",)),
    )(xp, w2.reshape(9, cout, cout), skip_flat)
    return out.reshape(n, hh, ww, cout)


def basic_block_fused(bp, x):
    """One pallas_call for an equal-in/out, stride-1 BasicBlock."""
    n, h, w, c = x.shape
    cout = bp["out"]
    assert c == bp["in"] == cout and bp["stride"] == 1 and w % 8 == 0
    x2 = x.reshape(n, h * w, c)
    kern = partial(fused_basic_block_kernel, h=h, w=w,
                   count1=float(h * w * (c // bp["g1"])),
                   count2=float(h * w * (cout // bp["g2"])), eps=_EPS)
    out = pl.pallas_call(
        kern,
        out_shape=jax.ShapeDtypeStruct((n, h * w, cout), jnp.bfloat16),
        grid=(n,),
        in_specs=[
            pl.BlockSpec((1, h * w, c), lambda i: (i, 0, 0)),
            pl.BlockSpec((9, c, cout), lambda i: (0, 0, 0)),
            pl.BlockSpec((9, cout, cout), lambda i: (0, 0, 0)),
            pl.BlockSpec((1, c), lambda i: (0, 0)),
            pl.BlockSpec((1, c), lambda i: (0, 0)),
            pl.BlockSpec((c, c), lambda i: (0, 0)),
            pl.BlockSpec((1, cout), lambda i: (0, 0)),
            pl.BlockSpec((1, cout), lambda i: (0, 0)),
            pl.BlockSpec((cout, cout), lambda i: (0, 0)),
        ],
        out_specs=pl.BlockSpec((1, h * w, cout), lambda i: (i, 0, 0)),
        scratch_shapes=[
            pltpu.VMEM((h + 2, w + 2 * _PADL, c), jnp.float32),
            pltpu.VMEM((h + 2, w + 2 * _PADL, cout), jnp.float32),
        ],
        compiler_params=pltpu.CompilerParams(dimension_semantics=("parallel",)),
    )(x2, bp["conv1"].reshape(9, c, cout), bp["conv2"].reshape(9, cout, cout),
      bp["gn1_g"], bp["gn1_b"], bp["p1"], bp["gn2_g"], bp["gn2_b"], bp["p2"])
    return out.reshape(n, h, w, cout)


# ----------------------------------------------------------------------------- params
def _kaiming_conv(key, kh, kw, cin, cout):
    fan_out = kh * kw * cout
    std = math.sqrt(2.0 / fan_out)
    w = std * jax.random.normal(key, (kh, kw, cin, cout), dtype=jnp.float32)
    return w.astype(jnp.bfloat16)


def _group_indicator(c, groups):
    grp = jnp.arange(c) // (c // groups)
    return (grp[:, None] == grp[None, :]).astype(jnp.float32)


def build_network_block_params(key, nb_layers, in_planes, out_planes, stride):
    keys = iter(jax.random.split(key, 4 * nb_layers + 1))
    blocks = []
    for i in range(nb_layers):
        bin_p = in_planes if i == 0 else out_planes
        bstride = stride if i == 0 else 1
        bp = {
            "in": bin_p, "out": out_planes, "stride": bstride,
            "g1": GROUP_NORM_LOOKUP[bin_p], "g2": GROUP_NORM_LOOKUP[out_planes],
            "gn1_g": jnp.ones((1, bin_p), jnp.float32),
            "gn1_b": jnp.zeros((1, bin_p), jnp.float32),
            "gn2_g": jnp.ones((1, out_planes), jnp.float32),
            "gn2_b": jnp.zeros((1, out_planes), jnp.float32),
            "conv1": _kaiming_conv(next(keys), 3, 3, bin_p, out_planes),
            "conv2": _kaiming_conv(next(keys), 3, 3, out_planes, out_planes),
            "p1": _group_indicator(bin_p, GROUP_NORM_LOOKUP[bin_p]),
            "p2": _group_indicator(out_planes, GROUP_NORM_LOOKUP[out_planes]),
        }
        if bin_p != out_planes:
            bp["shortcut"] = _kaiming_conv(next(keys), 1, 1, bin_p, out_planes)
        blocks.append(bp)
    return blocks


# ----------------------------------------------------------------------------- forward
def basic_block_forward(bp, x):
    equal = bp["in"] == bp["out"]
    if equal and bp["stride"] == 1:
        return basic_block_fused(bp, x)                        # one pallas_call
    assert not equal, "stride != 1 requires in_planes != out_planes in this architecture"
    act = group_norm_relu(x, bp["gn1_g"], bp["gn1_b"], bp["p1"], bp["g1"])
    h, skip, ho, wo = conv1_gn_relu_shortcut(act, bp)          # shortcut fused into conv1
    h4 = h.reshape(x.shape[0], ho, wo, bp["out"])
    return conv2_add(h4, skip, bp["conv2"])                    # residual add fused


def network_block_forward(blocks, x_nchw):
    # layout: accepts NCHW like the PyTorch module; internal compute is NHWC / bf16.
    x = jnp.transpose(x_nchw, (0, 2, 3, 1)).astype(jnp.bfloat16)
    for bp in blocks:
        x = basic_block_forward(bp, x)
    return jnp.transpose(x, (0, 3, 1, 2)).astype(jnp.float32)   # back to NCHW, f32


if __name__ == "__main__":
    key = jax.random.PRNGKey(0)
    pkey, xkey = jax.random.split(key)
    # NetworkBlock(nb_layers=2, in_planes=16, out_planes=32, block=BasicBlock, stride=2,
    #              dropRate=0.0, batch_norm=False)
    blocks = build_network_block_params(pkey, nb_layers=2, in_planes=16,
                                        out_planes=32, stride=2)
    x = jax.random.normal(xkey, (2, 16, 16, 16), jnp.float32)   # NCHW, like PyTorch
    fwd = jax.jit(lambda inp: network_block_forward(blocks, inp))
    out = jax.block_until_ready(fwd(x))
    assert out.shape == (2, 32, 8, 8), out.shape
    assert bool(jnp.all(jnp.isfinite(out)))
    print("KERNEL_OK")
</pallas_src>

<mosaic_0001>
module attributes {stable_mosaic.version = 11 : i64} {
  func.func @gn_relu_kernel(%arg0: i32, %arg1: memref<1x256x16xbf16, #tpu.memory_space<vmem>>, %arg2: memref<1x16xf32, #tpu.memory_space<vmem>>, %arg3: memref<1x16xf32, #tpu.memory_space<vmem>>, %arg4: memref<16x16xf32, #tpu.memory_space<vmem>>, %arg5: memref<1x256x16xbf16, #tpu.memory_space<vmem>>) attributes {dimension_semantics = [#tpu.dimension_semantics<parallel>], iteration_bounds = array<i64: 2>, scalar_prefetch = 0 : i64, scratch_operands = 0 : i64, tpu.core_type = #tpu.core_type<tc>, window_params = [{transform_indices = @transform_0, window_bounds = array<i64: 1, 256, 16>}, {pipeline_mode = #tpu.pipeline_mode<synchronous>, transform_indices = @transform_1, window_bounds = array<i64: 1, 16>}, {pipeline_mode = #tpu.pipeline_mode<synchronous>, transform_indices = @transform_2, window_bounds = array<i64: 1, 16>}, {pipeline_mode = #tpu.pipeline_mode<synchronous>, transform_indices = @transform_3, window_bounds = array<i64: 16, 16>}, {transform_indices = @transform_4, window_bounds = array<i64: 1, 256, 16>}]} {
    %c0 = arith.constant 0 : index
    %c0_0 = arith.constant 0 : index
    %c0_1 = arith.constant 0 : index
    %0 = vector.load %arg1[%c0, %c0_0, %c0_1] : memref<1x256x16xbf16, #tpu.memory_space<vmem>>, vector<1x256x16xbf16>
    %1 = vector.shape_cast %0 : vector<1x256x16xbf16> to vector<256x16xbf16>
    %2 = arith.extf %1 : vector<256x16xbf16> to vector<256x16xf32>
    %c0_2 = arith.constant 0 : index
    %c0_3 = arith.constant 0 : index
    %3 = vector.load %arg2[%c0_2, %c0_3] : memref<1x16xf32, #tpu.memory_space<vmem>>, vector<1x16xf32>
    %c0_4 = arith.constant 0 : index
    %c0_5 = arith.constant 0 : index
    %4 = vector.load %arg3[%c0_4, %c0_5] : memref<1x16xf32, #tpu.memory_space<vmem>>, vector<1x16xf32>
    %c0_6 = arith.constant 0 : index
    %c0_7 = arith.constant 0 : index
    %5 = vector.load %arg4[%c0_6, %c0_7] : memref<16x16xf32, #tpu.memory_space<vmem>>, vector<16x16xf32>
    %cst = arith.constant dense<0.000000e+00> : vector<16xf32>
    %6 = vector.multi_reduction <add>, %2, %cst [0] : vector<256x16xf32> to vector<16xf32>
    %7 = vector.shape_cast %6 : vector<16xf32> to vector<1x16xf32>
    %8 = arith.mulf %2, %2 : vector<256x16xf32>
    %cst_8 = arith.constant dense<0.000000e+00> : vector<16xf32>
    %9 = vector.multi_reduction <add>, %8, %cst_8 [0] : vector<256x16xf32> to vector<16xf32>
    %10 = vector.shape_cast %9 : vector<16xf32> to vector<1x16xf32>
    %cst_9 = arith.constant dense<0.000000e+00> : vector<1x16xf32>
    %11 = tpu.matmul %7, %5, %cst_9 {dimension_numbers = #tpu.dot_dimension_numbers<[1], [0], [0], [1], [0, 0, 1, 1], [], []>} : vector<1x16xf32>, vector<16x16xf32>, vector<1x16xf32> -> vector<1x16xf32>
    %cst_10 = arith.constant 2.048000e+03 : f32
    %12 = vector.broadcast %cst_10 : f32 to vector<1x16xf32>
    %13 = arith.divf %11, %12 : vector<1x16xf32>
    %cst_11 = arith.constant dense<0.000000e+00> : vector<1x16xf32>
    %14 = tpu.matmul %10, %5, %cst_11 {dimension_numbers = #tpu.dot_dimension_numbers<[1], [0], [0], [1], [0, 0, 1, 1], [], []>} : vector<1x16xf32>, vector<16x16xf32>, vector<1x16xf32> -> vector<1x16xf32>
    %cst_12 = arith.constant 2.048000e+03 : f32
    %15 = vector.broadcast %cst_12 : f32 to vector<1x16xf32>
    %16 = arith.divf %14, %15 : vector<1x16xf32>
    %17 = arith.mulf %13, %13 : vector<1x16xf32>
    %18 = arith.subf %16, %17 : vector<1x16xf32>
    %cst_13 = arith.constant 0.000000e+00 : f32
    %19 = vector.broadcast %cst_13 : f32 to vector<1x16xf32>
    %20 = arith.maximumf %18, %19 : vector<1x16xf32>
    %cst_14 = arith.constant 9.99999974E-6 : f32
    %21 = vector.broadcast %cst_14 : f32 to vector<1x16xf32>
    %22 = arith.addf %20, %21 : vector<1x16xf32>
    %23 = math.rsqrt %22 : vector<1x16xf32>
    %24 = vector.broadcast %13 : vector<1x16xf32> to vector<256x16xf32>
    %25 = arith.subf %2, %24 : vector<256x16xf32>
    %26 = vector.broadcast %23 : vector<1x16xf32> to vector<256x16xf32>
    %27 = arith.mulf %25, %26 : vector<256x16xf32>
    %28 = vector.broadcast %3 : vector<1x16xf32> to vector<256x16xf32>
    %29 = arith.mulf %27, %28 : vector<256x16xf32>
    %30 = vector.broadcast %4 : vector<1x16xf32> to vector<256x16xf32>
    %31 = arith.addf %29, %30 : vector<256x16xf32>
    %cst_15 = arith.constant 0.000000e+00 : f32
    %32 = vector.broadcast %cst_15 : f32 to vector<256x16xf32>
    %33 = arith.maximumf %31, %32 : vector<256x16xf32>
    %34 = arith.truncf %33 : vector<256x16xf32> to vector<256x16xbf16>
    %c0_16 = arith.constant 0 : index
    %c0_17 = arith.constant 0 : index
    %c0_18 = arith.constant 0 : index
    %35 = vector.load %arg5[%c0_16, %c0_17, %c0_18] : memref<1x256x16xbf16, #tpu.memory_space<vmem>>, vector<1x256x16xbf16>
    %36 = vector.shape_cast %35 : vector<1x256x16xbf16> to vector<256x16xbf16>
    %37 = vector.shape_cast %34 : vector<256x16xbf16> to vector<1x256x16xbf16>
    tpu.vector_store %arg5[%c0_16, %c0_17, %c0_18], %37 {strides = array<i32>} : memref<1x256x16xbf16, #tpu.memory_space<vmem>>, vector<1x256x16xbf16>,
    return
  }
  func.func @transform_0(%arg0: i32) -> (i32, i32, i32) {
    %c0_i32 = arith.constant 0 : i32
    %c0_i32_0 = arith.constant 0 : i32
    %c0_i32_1 = arith.constant 0 : i32
    return %arg0, %c0_i32, %c0_i32_0 : i32, i32, i32
  }
  func.func @transform_1(%arg0: i32) -> (i32, i32) {
    %c0_i32 = arith.constant 0 : i32
    %c0_i32_0 = arith.constant 0 : i32
    %c0_i32_1 = arith.constant 0 : i32
    return %c0_i32, %c0_i32_0 : i32, i32
  }
  func.func @transform_2(%arg0: i32) -> (i32, i32) {
    %c0_i32 = arith.constant 0 : i32
    %c0_i32_0 = arith.constant 0 : i32
    %c0_i32_1 = arith.constant 0 : i32
    return %c0_i32, %c0_i32_0 : i32, i32
  }
  func.func @transform_3(%arg0: i32) -> (i32, i32) {
    %c0_i32 = arith.constant 0 : i32
    %c0_i32_0 = arith.constant 0 : i32
    %c0_i32_1 = arith.constant 0 : i32
    return %c0_i32, %c0_i32_0 : i32, i32
  }
  func.func @transform_4(%arg0: i32) -> (i32, i32, i32) {
    %c0_i32 = arith.constant 0 : i32
    %c0_i32_0 = arith.constant 0 : i32
    %c0_i32_1 = arith.constant 0 : i32
    return %arg0, %c0_i32, %c0_i32_0 : i32, i32, i32
  }
}

module attributes {stable_mosaic.version = 11 : i64} {
  func.func @conv2_add_kernel(%arg0: i32, %arg1: memref<1x10x10x32xbf16, #tpu.memory_space<vmem>>, %arg2: memref<9x32x32xbf16, #tpu.memory_space<vmem>>, %arg3: memref<1x64x32xbf16, #tpu.memory_space<vmem>>, %arg4: memref<1x64x32xbf16, #tpu.memory_space<vmem>>) attributes {dimension_semantics = [#tpu.dimension_semantics<parallel>], iteration_bounds = array<i64: 2>, scalar_prefetch = 0 : i64, scratch_operands = 0 : i64, tpu.core_type = #tpu.core_type<tc>, window_params = [{transform_indices = @transform_0, window_bounds = array<i64: 1, 10, 10, 32>}, {pipeline_mode = #tpu.pipeline_mode<synchronous>, transform_indices = @transform_1, window_bounds = array<i64: 9, 32, 32>}, {transform_indices = @transform_2, window_bounds = array<i64: 1, 64, 32>}, {transform_indices = @transform_3, window_bounds = array<i64: 1, 64, 32>}]} {
    %cst = arith.constant 0.000000e+00 : f32
    %0 = vector.broadcast %cst : f32 to vector<64x32xf32>
    %c0 = arith.constant 0 : index
    %c0_0 = arith.constant 0 : index
    %c0_1 = arith.constant 0 : index
    %c0_2 = arith.constant 0 : index
    %1 = vector.load %arg1[%c0, %c0_0, %c0_1, %c0_2] : memref<1x10x10x32xbf16, #tpu.memory_space<vmem>>, vector<1x8x8x32xbf16>
    %2 = vector.shape_cast %1 : vector<1x8x8x32xbf16> to vector<8x8x32xbf16>
    %3 = arith.extf %2 : vector<8x8x32xbf16> to vector<8x8x32xf32>
    %4 = vector.shape_cast %3 : vector<8x8x32xf32> to vector<64x32xf32>
    %5 = arith.truncf %4 : vector<64x32xf32> to vector<64x32xbf16>
    %c0_3 = arith.constant 0 : index
    %c0_4 = arith.constant 0 : index
    %c0_5 = arith.constant 0 : index
    %6 = vector.load %arg2[%c0_3, %c0_4, %c0_5] : memref<9x32x32xbf16, #tpu.memory_space<vmem>>, vector<1x32x32xbf16>
    %7 = vector.shape_cast %6 : vector<1x32x32xbf16> to vector<32x32xbf16>
    %cst_6 = arith.constant dense<0.000000e+00> : vector<64x32xf32>
    %8 = tpu.matmul %5, %7, %cst_6 {dimension_numbers = #tpu.dot_dimension_numbers<[1], [0], [0], [1], [0, 0, 1, 1], [], []>} : vector<64x32xbf16>, vector<32x32xbf16>, vector<64x32xf32> -> vector<64x32xf32>
    %9 = arith.addf %0, %8 : vector<64x32xf32>
    %c0_7 = arith.constant 0 : index
    %c0_8 = arith.constant 0 : index
    %c1 = arith.constant 1 : index
    %c0_9 = arith.constant 0 : index
    %10 = vector.load %arg1[%c0_7, %c0_8, %c1, %c0_9] : memref<1x10x10x32xbf16, #tpu.memory_space<vmem>>, vector<1x8x8x32xbf16>
    %11 = vector.shape_cast %10 : vector<1x8x8x32xbf16> to vector<8x8x32xbf16>
    %12 = arith.extf %11 : vector<8x8x32xbf16> to vector<8x8x32xf32>
    %13 = vector.shape_cast %12 : vector<8x8x32xf32> to vector<64x32xf32>
    %14 = arith.truncf %13 : vector<64x32xf32> to vector<64x32xbf16>
    %c1_10 = arith.constant 1 : index
    %c0_11 = arith.constant 0 : index
    %c0_12 = arith.constant 0 : index
    %15 = vector.load %arg2[%c1_10, %c0_11, %c0_12] : memref<9x32x32xbf16, #tpu.memory_space<vmem>>, vector<1x32x32xbf16>
    %16 = vector.shape_cast %15 : vector<1x32x32xbf16> to vector<32x32xbf16>
    %cst_13 = arith.constant dense<0.000000e+00> : vector<64x32xf32>
    %17 = tpu.matmul %14, %16, %cst_13 {dimension_numbers = #tpu.dot_dimension_numbers<[1], [0], [0], [1], [0, 0, 1, 1], [], []>} : vector<64x32xbf16>, vector<32x32xbf16>, vector<64x32xf32> -> vector<64x32xf32>
    %18 = arith.addf %9, %17 : vector<64x32xf32>
    %c0_14 = arith.constant 0 : index
    %c0_15 = arith.constant 0 : index
    %c2 = arith.constant 2 : index
    %c0_16 = arith.constant 0 : index
    %19 = vector.load %arg1[%c0_14, %c0_15, %c2, %c0_16] : memref<1x10x10x32xbf16, #tpu.memory_space<vmem>>, vector<1x8x8x32xbf16>
    %20 = vector.shape_cast %19 : vector<1x8x8x32xbf16> to vector<8x8x32xbf16>
    %21 = arith.extf %20 : vector<8x8x32xbf16> to vector<8x8x32xf32>
    %22 = vector.shape_cast %21 : vector<8x8x32xf32> to vector<64x32xf32>
    %23 = arith.truncf %22 : vector<64x32xf32> to vector<64x32xbf16>
    %c2_17 = arith.constant 2 : index
    %c0_18 = arith.constant 0 : index
    %c0_19 = arith.constant 0 : index
    %24 = vector.load %arg2[%c2_17, %c0_18, %c0_19] : memref<9x32x32xbf16, #tpu.memory_space<vmem>>, vector<1x32x32xbf16>
    %25 = vector.shape_cast %24 : vector<1x32x32xbf16> to vector<32x32xbf16>
    %cst_20 = arith.constant dense<0.000000e+00> : vector<64x32xf32>
    %26 = tpu.matmul %23, %25, %cst_20 {dimension_numbers = #tpu.dot_dimension_numbers<[1], [0], [0], [1], [0, 0, 1, 1], [], []>} : vector<64x32xbf16>, vector<32x32xbf16>, vector<64x32xf32> -> vector<64x32xf32>
    %27 = arith.addf %18, %26 : vector<64x32xf32>
    %c0_21 = arith.constant 0 : index
    %c1_22 = arith.constant 1 : index
    %c0_23 = arith.constant 0 : index
    %c0_24 = arith.constant 0 : index
    %28 = vector.load %arg1[%c0_21, %c1_22, %c0_23, %c0_24] : memref<1x10x10x32xbf16, #tpu.memory_space<vmem>>, vector<1x8x8x32xbf16>
    %29 = vector.shape_cast %28 : vector<1x8x8x32xbf16> to vector<8x8x32xbf16>
    %30 = arith.extf %29 : vector<8x8x32xbf16> to vector<8x8x32xf32>
    %31 = vector.shape_cast %30 : vector<8x8x32xf32> to vector<64x32xf32>
    %32 = arith.truncf %31 : vector<64x32xf32> to vector<64x32xbf16>
    %c3 = arith.constant 3 : index
    %c0_25 = arith.constant 0 : index
    %c0_26 = arith.constant 0 : index
    %33 = vector.load %arg2[%c3, %c0_25, %c0_26] : memref<9x32x32xbf16, #tpu.memory_space<vmem>>, vector<1x32x32xbf16>
    %34 = vector.shape_cast %33 : vector<1x32x32xbf16> to vector<32x32xbf16>
    %cst_27 = arith.constant dense<0.000000e+00> : vector<64x32xf32>
    %35 = tpu.matmul %32, %34, %cst_27 {dimension_numbers = #tpu.dot_dimension_numbers<[1], [0], [0], [1], [0, 0, 1, 1], [], []>} : vector<64x32xbf16>, vector<32x32xbf16>, vector<64x32xf32> -> vector<64x32xf32>
    %36 = arith.addf %27, %35 : vector<64x32xf32>
    %c0_28 = arith.constant 0 : index
    %c1_29 = arith.constant 1 : index
    %c1_30 = arith.constant 1 : index
    %c0_31 = arith.constant 0 : index
    %37 = vector.load %arg1[%c0_28, %c1_29, %c1_30, %c0_31] : memref<1x10x10x32xbf16, #tpu.memory_space<vmem>>, vector<1x8x8x32xbf16>
    %38 = vector.shape_cast %37 : vector<1x8x8x32xbf16> to vector<8x8x32xbf16>
    %39 = arith.extf %38 : vector<8x8x32xbf16> to vector<8x8x32xf32>
    %40 = vector.shape_cast %39 : vector<8x8x32xf32> to vector<64x32xf32>
    %41 = arith.truncf %40 : vector<64x32xf32> to vector<64x32xbf16>
    %c4 = arith.constant 4 : index
    %c0_32 = arith.constant 0 : index
    %c0_33 = arith.constant 0 : index
    %42 = vector.load %arg2[%c4, %c0_32, %c0_33] : memref<9x32x32xbf16, #tpu.memory_space<vmem>>, vector<1x32x32xbf16>
    %43 = vector.shape_cast %42 : vector<1x32x32xbf16> to vector<32x32xbf16>
    %cst_34 = arith.constant dense<0.000000e+00> : vector<64x32xf32>
    %44 = tpu.matmul %41, %43, %cst_34 {dimension_numbers = #tpu.dot_dimension_numbers<[1], [0], [0], [1], [0, 0, 1, 1], [], []>} : vector<64x32xbf16>, vector<32x32xbf16>, vector<64x32xf32> -> vector<64x32xf32>
    %45 = arith.addf %36, %44 : vector<64x32xf32>
    %c0_35 = arith.constant 0 : index
    %c1_36 = arith.constant 1 : index
    %c2_37 = arith.constant 2 : index
    %c0_38 = arith.constant 0 : index
    %46 = vector.load %arg1[%c0_35, %c1_36, %c2_37, %c0_38] : memref<1x10x10x32xbf16, #tpu.memory_space<vmem>>, vector<1x8x8x32xbf16>
    %47 = vector.shape_cast %46 : vector<1x8x8x32xbf16> to vector<8x8x32xbf16>
    %48 = arith.extf %47 : vector<8x8x32xbf16> to vector<8x8x32xf32>
    %49 = vector.shape_cast %48 : vector<8x8x32xf32> to vector<64x32xf32>
    %50 = arith.truncf %49 : vector<64x32xf32> to vector<64x32xbf16>
    %c5 = arith.constant 5 : index
    %c0_39 = arith.constant 0 : index
    %c0_40 = arith.constant 0 : index
    %51 = vector.load %arg2[%c5, %c0_39, %c0_40] : memref<9x32x32xbf16, #tpu.memory_space<vmem>>, vector<1x32x32xbf16>
    %52 = vector.shape_cast %51 : vector<1x32x32xbf16> to vector<32x32xbf16>
    %cst_41 = arith.constant dense<0.000000e+00> : vector<64x32xf32>
    %53 = tpu.matmul %50, %52, %cst_41 {dimension_numbers = #tpu.dot_dimension_numbers<[1], [0], [0], [1], [0, 0, 1, 1], [], []>} : vector<64x32xbf16>, vector<32x32xbf16>, vector<64x32xf32> -> vector<64x32xf32>
    %54 = arith.addf %45, %53 : vector<64x32xf32>
    %c0_42 = arith.constant 0 : index
    %c2_43 = arith.constant 2 : index
    %c0_44 = arith.constant 0 : index
    %c0_45 = arith.constant 0 : index
    %55 = vector.load %arg1[%c0_42, %c2_43, %c0_44, %c0_45] : memref<1x10x10x32xbf16, #tpu.memory_space<vmem>>, vector<1x8x8x32xbf16>
    %56 = vector.shape_cast %55 : vector<1x8x8x32xbf16> to vector<8x8x32xbf16>
    %57 = arith.extf %56 : vector<8x8x32xbf16> to vector<8x8x32xf32>
    %58 = vector.shape_cast %57 : vector<8x8x32xf32> to vector<64x32xf32>
    %59 = arith.truncf %58 : vector<64x32xf32> to vector<64x32xbf16>
    %c6 = arith.constant 6 : index
    %c0_46 = arith.constant 0 : index
    %c0_47 = arith.constant 0 : index
    %60 = vector.load %arg2[%c6, %c0_46, %c0_47] : memref<9x32x32xbf16, #tpu.memory_space<vmem>>, vector<1x32x32xbf16>
    %61 = vector.shape_cast %60 : vector<1x32x32xbf16> to vector<32x32xbf16>
    %cst_48 = arith.constant dense<0.000000e+00> : vector<64x32xf32>
    %62 = tpu.matmul %59, %61, %cst_48 {dimension_numbers = #tpu.dot_dimension_numbers<[1], [0], [0], [1], [0, 0, 1, 1], [], []>} : vector<64x32xbf16>, vector<32x32xbf16>, vector<64x32xf32> -> vector<64x32xf32>
    %63 = arith.addf %54, %62 : vector<64x32xf32>
    %c0_49 = arith.constant 0 : index
    %c2_50 = arith.constant 2 : index
    %c1_51 = arith.constant 1 : index
    %c0_52 = arith.constant 0 : index
    %64 = vector.load %arg1[%c0_49, %c2_50, %c1_51, %c0_52] : memref<1x10x10x32xbf16, #tpu.memory_space<vmem>>, vector<1x8x8x32xbf16>
    %65 = vector.shape_cast %64 : vector<1x8x8x32xbf16> to vector<8x8x32xbf16>
    %66 = arith.extf %65 : vector<8x8x32xbf16> to vector<8x8x32xf32>
    %67 = vector.shape_cast %66 : vector<8x8x32xf32> to vector<64x32xf32>
    %68 = arith.truncf %67 : vector<64x32xf32> to vector<64x32xbf16>
    %c7 = arith.constant 7 : index
    %c0_53 = arith.constant 0 : index
    %c0_54 = arith.constant 0 : index
    %69 = vector.load %arg2[%c7, %c0_53, %c0_54] : memref<9x32x32xbf16, #tpu.memory_space<vmem>>, vector<1x32x32xbf16>
    %70 = vector.shape_cast %69 : vector<1x32x32xbf16> to vector<32x32xbf16>
    %cst_55 = arith.constant dense<0.000000e+00> : vector<64x32xf32>
    %71 = tpu.matmul %68, %70, %cst_55 {dimension_numbers = #tpu.dot_dimension_numbers<[1], [0], [0], [1], [0, 0, 1, 1], [], []>} : vector<64x32xbf16>, vector<32x32xbf16>, vector<64x32xf32> -> vector<64x32xf32>
    %72 = arith.addf %63, %71 : vector<64x32xf32>
    %c0_56 = arith.constant 0 : index
    %c2_57 = arith.constant 2 : index
    %c2_58 = arith.constant 2 : index
    %c0_59 = arith.constant 0 : index
    %73 = vector.load %arg1[%c0_56, %c2_57, %c2_58, %c0_59] : memref<1x10x10x32xbf16, #tpu.memory_space<vmem>>, vector<1x8x8x32xbf16>
    %74 = vector.shape_cast %73 : vector<1x8x8x32xbf16> to vector<8x8x32xbf16>
    %75 = arith.extf %74 : vector<8x8x32xbf16> to vector<8x8x32xf32>
    %76 = vector.shape_cast %75 : vector<8x8x32xf32> to vector<64x32xf32>
    %77 = arith.truncf %76 : vector<64x32xf32> to vector<64x32xbf16>
    %c8 = arith.constant 8 : index
    %c0_60 = arith.constant 0 : index
    %c0_61 = arith.constant 0 : index
    %78 = vector.load %arg2[%c8, %c0_60, %c0_61] : memref<9x32x32xbf16, #tpu.memory_space<vmem>>, vector<1x32x32xbf16>
    %79 = vector.shape_cast %78 : vector<1x32x32xbf16> to vector<32x32xbf16>
    %cst_62 = arith.constant dense<0.000000e+00> : vector<64x32xf32>
    %80 = tpu.matmul %77, %79, %cst_62 {dimension_numbers = #tpu.dot_dimension_numbers<[1], [0], [0], [1], [0, 0, 1, 1], [], []>} : vector<64x32xbf16>, vector<32x32xbf16>, vector<64x32xf32> -> vector<64x32xf32>
    %81 = arith.addf %72, %80 : vector<64x32xf32>
    %c0_63 = arith.constant 0 : index
    %c0_64 = arith.constant 0 : index
    %c0_65 = arith.constant 0 : index
    %82 = vector.load %arg3[%c0_63, %c0_64, %c0_65] : memref<1x64x32xbf16, #tpu.memory_space<vmem>>, vector<1x64x32xbf16>
    %83 = vector.shape_cast %82 : vector<1x64x32xbf16> to vector<64x32xbf16>
    %84 = arith.extf %83 : vector<64x32xbf16> to vector<64x32xf32>
    %85 = arith.addf %81, %84 : vector<64x32xf32>
    %86 = arith.truncf %85 : vector<64x32xf32> to vector<64x32xbf16>
    %c0_66 = arith.constant 0 : index
    %c0_67 = arith.constant 0 : index
    %c0_68 = arith.constant 0 : index
    %87 = vector.load %arg4[%c0_66, %c0_67, %c0_68] : memref<1x64x32xbf16, #tpu.memory_space<vmem>>, vector<1x64x32xbf16>
    %88 = vector.shape_cast %87 : vector<1x64x32xbf16> to vector<64x32xbf16>
    %89 = vector.shape_cast %86 : vector<64x32xbf16> to vector<1x64x32xbf16>
    tpu.vector_store %arg4[%c0_66, %c0_67, %c0_68], %89 {strides = array<i32>} : memref<1x64x32xbf16, #tpu.memory_space<vmem>>, vector<1x64x32xbf16>,
    return
  }
  func.func @transform_0(%arg0: i32) -> (i32, i32, i32, i32) {
    %c0_i32 = arith.constant 0 : i32
    %c0_i32_0 = arith.constant 0 : i32
    %c0_i32_1 = arith.constant 0 : i32
    %c0_i32_2 = arith.constant 0 : i32
    return %arg0, %c0_i32, %c0_i32_0, %c0_i32_1 : i32, i32, i32, i32
  }
  func.func @transform_1(%arg0: i32) -> (i32, i32, i32) {
    %c0_i32 = arith.constant 0 : i32
    %c0_i32_0 = arith.constant 0 : i32
    %c0_i32_1 = arith.constant 0 : i32
    %c0_i32_2 = arith.constant 0 : i32
    return %c0_i32, %c0_i32_0, %c0_i32_1 : i32, i32, i32
  }
  func.func @transform_2(%arg0: i32) -> (i32, i32, i32) {
    %c0_i32 = arith.constant 0 : i32
    %c0_i32_0 = arith.constant 0 : i32
    %c0_i32_1 = arith.constant 0 : i32
    return %arg0, %c0_i32, %c0_i32_0 : i32, i32, i32
  }
  func.func @transform_3(%arg0: i32) -> (i32, i32, i32) {
    %c0_i32 = arith.constant 0 : i32
    %c0_i32_0 = arith.constant 0 : i32
    %c0_i32_1 = arith.constant 0 : i32
    return %arg0, %c0_i32, %c0_i32_0 : i32, i32, i32
  }
}

module attributes {stable_mosaic.version = 11 : i64} {
  func.func @conv1_gn_relu_shortcut_kernel(%arg0: i32, %arg1: memref<1x36x9x16xbf16, #tpu.memory_space<vmem>>, %arg2: memref<9x16x32xbf16, #tpu.memory_space<vmem>>, %arg3: memref<1x16x32xbf16, #tpu.memory_space<vmem>>, %arg4: memref<1x32xf32, #tpu.memory_space<vmem>>, %arg5: memref<1x32xf32, #tpu.memory_space<vmem>>, %arg6: memref<32x32xf32, #tpu.memory_space<vmem>>, %arg7: memref<1x64x32xbf16, #tpu.memory_space<vmem>>, %arg8: memref<1x64x32xbf16, #tpu.memory_space<vmem>>) attributes {dimension_semantics = [#tpu.dimension_semantics<parallel>], iteration_bounds = array<i64: 2>, scalar_prefetch = 0 : i64, scratch_operands = 0 : i64, tpu.core_type = #tpu.core_type<tc>, window_params = [{transform_indices = @transform_0, window_bounds = array<i64: 1, 36, 9, 16>}, {pipeline_mode = #tpu.pipeline_mode<synchronous>, transform_indices = @transform_1, window_bounds = array<i64: 9, 16, 32>}, {pipeline_mode = #tpu.pipeline_mode<synchronous>, transform_indices = @transform_2, window_bounds = array<i64: 1, 16, 32>}, {pipeline_mode = #tpu.pipeline_mode<synchronous>, transform_indices = @transform_3, window_bounds = array<i64: 1, 32>}, {pipeline_mode = #tpu.pipeline_mode<synchronous>, transform_indices = @transform_4, window_bounds = array<i64: 1, 32>}, {pipeline_mode = #tpu.pipeline_mode<synchronous>, transform_indices = @transform_5, window_bounds = array<i64: 32, 32>}, {transform_indices = @transform_6, window_bounds = array<i64: 1, 64, 32>}, {transform_indices = @transform_7, window_bounds = array<i64: 1, 64, 32>}]} {
    %cst = arith.constant 0.000000e+00 : f32
    %0 = vector.broadcast %cst : f32 to vector<64x32xf32>
    %c0 = arith.constant 0 : index
    %c0_0 = arith.constant 0 : index
    %c0_1 = arith.constant 0 : index
    %c0_2 = arith.constant 0 : index
    %1 = vector.load %arg1[%c0, %c0_0, %c0_1, %c0_2] : memref<1x36x9x16xbf16, #tpu.memory_space<vmem>>, vector<1x8x8x16xbf16>
    %2 = vector.shape_cast %1 : vector<1x8x8x16xbf16> to vector<8x8x16xbf16>
    %3 = arith.extf %2 : vector<8x8x16xbf16> to vector<8x8x16xf32>
    %4 = vector.shape_cast %3 : vector<8x8x16xf32> to vector<64x16xf32>
    %5 = arith.truncf %4 : vector<64x16xf32> to vector<64x16xbf16>
    %c0_3 = arith.constant 0 : index
    %c0_4 = arith.constant 0 : index
    %c0_5 = arith.constant 0 : index
    %6 = vector.load %arg2[%c0_3, %c0_4, %c0_5] : memref<9x16x32xbf16, #tpu.memory_space<vmem>>, vector<1x16x32xbf16>
    %7 = vector.shape_cast %6 : vector<1x16x32xbf16> to vector<16x32xbf16>
    %cst_6 = arith.constant dense<0.000000e+00> : vector<64x32xf32>
    %8 = tpu.matmul %5, %7, %cst_6 {dimension_numbers = #tpu.dot_dimension_numbers<[1], [0], [0], [1], [0, 0, 1, 1], [], []>} : vector<64x16xbf16>, vector<16x32xbf16>, vector<64x32xf32> -> vector<64x32xf32>
    %9 = arith.addf %0, %8 : vector<64x32xf32>
    %c0_7 = arith.constant 0 : index
    %c9 = arith.constant 9 : index
    %c0_8 = arith.constant 0 : index
    %c0_9 = arith.constant 0 : index
    %10 = vector.load %arg1[%c0_7, %c9, %c0_8, %c0_9] : memref<1x36x9x16xbf16, #tpu.memory_space<vmem>>, vector<1x8x8x16xbf16>
    %11 = vector.shape_cast %10 : vector<1x8x8x16xbf16> to vector<8x8x16xbf16>
    %12 = arith.extf %11 : vector<8x8x16xbf16> to vector<8x8x16xf32>
    %13 = vector.shape_cast %12 : vector<8x8x16xf32> to vector<64x16xf32>
    %14 = arith.truncf %13 : vector<64x16xf32> to vector<64x16xbf16>
    %c1 = arith.constant 1 : index
    %c0_10 = arith.constant 0 : index
    %c0_11 = arith.constant 0 : index
    %15 = vector.load %arg2[%c1, %c0_10, %c0_11] : memref<9x16x32xbf16, #tpu.memory_space<vmem>>, vector<1x16x32xbf16>
    %16 = vector.shape_cast %15 : vector<1x16x32xbf16> to vector<16x32xbf16>
    %cst_12 = arith.constant dense<0.000000e+00> : vector<64x32xf32>
    %17 = tpu.matmul %14, %16, %cst_12 {dimension_numbers = #tpu.dot_dimension_numbers<[1], [0], [0], [1], [0, 0, 1, 1], [], []>} : vector<64x16xbf16>, vector<16x32xbf16>, vector<64x32xf32> -> vector<64x32xf32>
    %18 = arith.addf %9, %17 : vector<64x32xf32>
    %c0_13 = arith.constant 0 : index
    %c0_14 = arith.constant 0 : index
    %c1_15 = arith.constant 1 : index
    %c0_16 = arith.constant 0 : index
    %19 = vector.load %arg1[%c0_13, %c0_14, %c1_15, %c0_16] : memref<1x36x9x16xbf16, #tpu.memory_space<vmem>>, vector<1x8x8x16xbf16>
    %20 = vector.shape_cast %19 : vector<1x8x8x16xbf16> to vector<8x8x16xbf16>
    %21 = arith.extf %20 : vector<8x8x16xbf16> to vector<8x8x16xf32>
    %22 = vector.shape_cast %21 : vector<8x8x16xf32> to vector<64x16xf32>
    %23 = arith.truncf %22 : vector<64x16xf32> to vector<64x16xbf16>
    %c2 = arith.constant 2 : index
    %c0_17 = arith.constant 0 : index
    %c0_18 = arith.constant 0 : index
    %24 = vector.load %arg2[%c2, %c0_17, %c0_18] : memref<9x16x32xbf16, #tpu.memory_space<vmem>>, vector<1x16x32xbf16>
    %25 = vector.shape_cast %24 : vector<1x16x32xbf16> to vector<16x32xbf16>
    %cst_19 = arith.constant dense<0.000000e+00> : vector<64x32xf32>
    %26 = tpu.matmul %23, %25, %cst_19 {dimension_numbers = #tpu.dot_dimension_numbers<[1], [0], [0], [1], [0, 0, 1, 1], [], []>} : vector<64x16xbf16>, vector<16x32xbf16>, vector<64x32xf32> -> vector<64x32xf32>
    %27 = arith.addf %18, %26 : vector<64x32xf32>
    %c0_20 = arith.constant 0 : index
    %c18 = arith.constant 18 : index
    %c0_21 = arith.constant 0 : index
    %c0_22 = arith.constant 0 : index
    %28 = vector.load %arg1[%c0_20, %c18, %c0_21, %c0_22] : memref<1x36x9x16xbf16, #tpu.memory_space<vmem>>, vector<1x8x8x16xbf16>
    %29 = vector.shape_cast %28 : vector<1x8x8x16xbf16> to vector<8x8x16xbf16>
    %30 = arith.extf %29 : vector<8x8x16xbf16> to vector<8x8x16xf32>
    %31 = vector.shape_cast %30 : vector<8x8x16xf32> to vector<64x16xf32>
    %32 = arith.truncf %31 : vector<64x16xf32> to vector<64x16xbf16>
    %c3 = arith.constant 3 : index
    %c0_23 = arith.constant 0 : index
    %c0_24 = arith.constant 0 : index
    %33 = vector.load %arg2[%c3, %c0_23, %c0_24] : memref<9x16x32xbf16, #tpu.memory_space<vmem>>, vector<1x16x32xbf16>
    %34 = vector.shape_cast %33 : vector<1x16x32xbf16> to vector<16x32xbf16>
    %cst_25 = arith.constant dense<0.000000e+00> : vector<64x32xf32>
    %35 = tpu.matmul %32, %34, %cst_25 {dimension_numbers = #tpu.dot_dimension_numbers<[1], [0], [0], [1], [0, 0, 1, 1], [], []>} : vector<64x16xbf16>, vector<16x32xbf16>, vector<64x32xf32> -> vector<64x32xf32>
    %36 = arith.addf %27, %35 : vector<64x32xf32>
    %c0_26 = arith.constant 0 : index
    %c27 = arith.constant 27 : index
    %c0_27 = arith.constant 0 : index
    %c0_28 = arith.constant 0 : index
    %37 = vector.load %arg1[%c0_26, %c27, %c0_27, %c0_28] : memref<1x36x9x16xbf16, #tpu.memory_space<vmem>>, vector<1x8x8x16xbf16>
    %38 = vector.shape_cast %37 : vector<1x8x8x16xbf16> to vector<8x8x16xbf16>
    %39 = arith.extf %38 : vector<8x8x16xbf16> to vector<8x8x16xf32>
    %40 = vector.shape_cast %39 : vector<8x8x16xf32> to vector<64x16xf32>
    %41 = arith.truncf %40 : vector<64x16xf32> to vector<64x16xbf16>
    %c0_29 = arith.constant 0 : index
    %c0_30 = arith.constant 0 : index
    %c0_31 = arith.constant 0 : index
    %42 = vector.load %arg3[%c0_29, %c0_30, %c0_31] : memref<1x16x32xbf16, #tpu.memory_space<vmem>>, vector<1x16x32xbf16>
    %43 = vector.shape_cast %42 : vector<1x16x32xbf16> to vector<16x32xbf16>
    %cst_32 = arith.constant dense<0.000000e+00> : vector<64x32xf32>
    %44 = tpu.matmul %41, %43, %cst_32 {dimension_numbers = #tpu.dot_dimension_numbers<[1], [0], [0], [1], [0, 0, 1, 1], [], []>} : vector<64x16xbf16>, vector<16x32xbf16>, vector<64x32xf32> -> vector<64x32xf32>
    %45 = arith.truncf %44 : vector<64x32xf32> to vector<64x32xbf16>
    %c0_33 = arith.constant 0 : index
    %c0_34 = arith.constant 0 : index
    %c0_35 = arith.constant 0 : index
    %46 = vector.load %arg8[%c0_33, %c0_34, %c0_35] : memref<1x64x32xbf16, #tpu.memory_space<vmem>>, vector<1x64x32xbf16>
    %47 = vector.shape_cast %46 : vector<1x64x32xbf16> to vector<64x32xbf16>
    %48 = vector.shape_cast %45 : vector<64x32xbf16> to vector<1x64x32xbf16>
    tpu.vector_store %arg8[%c0_33, %c0_34, %c0_35], %48 {strides = array<i32>} : memref<1x64x32xbf16, #tpu.memory_space<vmem>>, vector<1x64x32xbf16>,
    %c4 = arith.constant 4 : index
    %c0_36 = arith.constant 0 : index
    %c0_37 = arith.constant 0 : index
    %49 = vector.load %arg2[%c4, %c0_36, %c0_37] : memref<9x16x32xbf16, #tpu.memory_space<vmem>>, vector<1x16x32xbf16>
    %50 = vector.shape_cast %49 : vector<1x16x32xbf16> to vector<16x32xbf16>
    %cst_38 = arith.constant dense<0.000000e+00> : vector<64x32xf32>
    %51 = tpu.matmul %41, %50, %cst_38 {dimension_numbers = #tpu.dot_dimension_numbers<[1], [0], [0], [1], [0, 0, 1, 1], [], []>} : vector<64x16xbf16>, vector<16x32xbf16>, vector<64x32xf32> -> vector<64x32xf32>
    %52 = arith.addf %36, %51 : vector<64x32xf32>
    %c0_39 = arith.constant 0 : index
    %c18_40 = arith.constant 18 : index
    %c1_41 = arith.constant 1 : index
    %c0_42 = arith.constant 0 : index
    %53 = vector.load %arg1[%c0_39, %c18_40, %c1_41, %c0_42] : memref<1x36x9x16xbf16, #tpu.memory_space<vmem>>, vector<1x8x8x16xbf16>
    %54 = vector.shape_cast %53 : vector<1x8x8x16xbf16> to vector<8x8x16xbf16>
    %55 = arith.extf %54 : vector<8x8x16xbf16> to vector<8x8x16xf32>
    %56 = vector.shape_cast %55 : vector<8x8x16xf32> to vector<64x16xf32>
    %57 = arith.truncf %56 : vector<64x16xf32> to vector<64x16xbf16>
    %c5 = arith.constant 5 : index
    %c0_43 = arith.constant 0 : index
    %c0_44 = arith.constant 0 : index
    %58 = vector.load %arg2[%c5, %c0_43, %c0_44] : memref<9x16x32xbf16, #tpu.memory_space<vmem>>, vector<1x16x32xbf16>
    %59 = vector.shape_cast %58 : vector<1x16x32xbf16> to vector<16x32xbf16>
    %cst_45 = arith.constant dense<0.000000e+00> : vector<64x32xf32>
    %60 = tpu.matmul %57, %59, %cst_45 {dimension_numbers = #tpu.dot_dimension_numbers<[1], [0], [0], [1], [0, 0, 1, 1], [], []>} : vector<64x16xbf16>, vector<16x32xbf16>, vector<64x32xf32> -> vector<64x32xf32>
    %61 = arith.addf %52, %60 : vector<64x32xf32>
    %c0_46 = arith.constant 0 : index
    %c1_47 = arith.constant 1 : index
    %c0_48 = arith.constant 0 : index
    %c0_49 = arith.constant 0 : index
    %62 = vector.load %arg1[%c0_46, %c1_47, %c0_48, %c0_49] : memref<1x36x9x16xbf16, #tpu.memory_space<vmem>>, vector<1x8x8x16xbf16>
    %63 = vector.shape_cast %62 : vector<1x8x8x16xbf16> to vector<8x8x16xbf16>
    %64 = arith.extf %63 : vector<8x8x16xbf16> to vector<8x8x16xf32>
    %65 = vector.shape_cast %64 : vector<8x8x16xf32> to vector<64x16xf32>
    %66 = arith.truncf %65 : vector<64x16xf32> to vector<64x16xbf16>
    %c6 = arith.constant 6 : index
    %c0_50 = arith.constant 0 : index
    %c0_51 = arith.constant 0 : index
    %67 = vector.load %arg2[%c6, %c0_50, %c0_51] : memref<9x16x32xbf16, #tpu.memory_space<vmem>>, vector<1x16x32xbf16>
    %68 = vector.shape_cast %67 : vector<1x16x32xbf16> to vector<16x32xbf16>
    %cst_52 = arith.constant dense<0.000000e+00> : vector<64x32xf32>
    %69 = tpu.matmul %66, %68, %cst_52 {dimension_numbers = #tpu.dot_dimension_numbers<[1], [0], [0], [1], [0, 0, 1, 1], [], []>} : vector<64x16xbf16>, vector<16x32xbf16>, vector<64x32xf32> -> vector<64x32xf32>
    %70 = arith.addf %61, %69 : vector<64x32xf32>
    %c0_53 = arith.constant 0 : index
    %c10 = arith.constant 10 : index
    %c0_54 = arith.constant 0 : index
    %c0_55 = arith.constant 0 : index
    %71 = vector.load %arg1[%c0_53, %c10, %c0_54, %c0_55] : memref<1x36x9x16xbf16, #tpu.memory_space<vmem>>, vector<1x8x8x16xbf16>
    %72 = vector.shape_cast %71 : vector<1x8x8x16xbf16> to vector<8x8x16xbf16>
    %73 = arith.extf %72 : vector<8x8x16xbf16> to vector<8x8x16xf32>
    %74 = vector.shape_cast %73 : vector<8x8x16xf32> to vector<64x16xf32>
    %75 = arith.truncf %74 : vector<64x16xf32> to vector<64x16xbf16>
    %c7 = arith.constant 7 : index
    %c0_56 = arith.constant 0 : index
    %c0_57 = arith.constant 0 : index
    %76 = vector.load %arg2[%c7, %c0_56, %c0_57] : memref<9x16x32xbf16, #tpu.memory_space<vmem>>, vector<1x16x32xbf16>
    %77 = vector.shape_cast %76 : vector<1x16x32xbf16> to vector<16x32xbf16>
    %cst_58 = arith.constant dense<0.000000e+00> : vector<64x32xf32>
    %78 = tpu.matmul %75, %77, %cst_58 {dimension_numbers = #tpu.dot_dimension_numbers<[1], [0], [0], [1], [0, 0, 1, 1], [], []>} : vector<64x16xbf16>, vector<16x32xbf16>, vector<64x32xf32> -> vector<64x32xf32>
    %79 = arith.addf %70, %78 : vector<64x32xf32>
    %c0_59 = arith.constant 0 : index
    %c1_60 = arith.constant 1 : index
    %c1_61 = arith.constant 1 : index
    %c0_62 = arith.constant 0 : index
    %80 = vector.load %arg1[%c0_59, %c1_60, %c1_61, %c0_62] : memref<1x36x9x16xbf16, #tpu.memory_space<vmem>>, vector<1x8x8x16xbf16>
    %81 = vector.shape_cast %80 : vector<1x8x8x16xbf16> to vector<8x8x16xbf16>
    %82 = arith.extf %81 : vector<8x8x16xbf16> to vector<8x8x16xf32>
    %83 = vector.shape_cast %82 : vector<8x8x16xf32> to vector<64x16xf32>
    %84 = arith.truncf %83 : vector<64x16xf32> to vector<64x16xbf16>
    %c8 = arith.constant 8 : index
    %c0_63 = arith.constant 0 : index
    %c0_64 = arith.constant 0 : index
    %85 = vector.load %arg2[%c8, %c0_63, %c0_64] : memref<9x16x32xbf16, #tpu.memory_space<vmem>>, vector<1x16x32xbf16>
    %86 = vector.shape_cast %85 : vector<1x16x32xbf16> to vector<16x32xbf16>
    %cst_65 = arith.constant dense<0.000000e+00> : vector<64x32xf32>
    %87 = tpu.matmul %84, %86, %cst_65 {dimension_numbers = #tpu.dot_dimension_numbers<[1], [0], [0], [1], [0, 0, 1, 1], [], []>} : vector<64x16xbf16>, vector<16x32xbf16>, vector<64x32xf32> -> vector<64x32xf32>
    %88 = arith.addf %79, %87 : vector<64x32xf32>
    %c0_66 = arith.constant 0 : index
    %c0_67 = arith.constant 0 : index
    %89 = vector.load %arg4[%c0_66, %c0_67] : memref<1x32xf32, #tpu.memory_space<vmem>>, vector<1x32xf32>
    %c0_68 = arith.constant 0 : index
    %c0_69 = arith.constant 0 : index
    %90 = vector.load %arg5[%c0_68, %c0_69] : memref<1x32xf32, #tpu.memory_space<vmem>>, vector<1x32xf32>
    %c0_70 = arith.constant 0 : index
    %c0_71 = arith.constant 0 : index
    %91 = vector.load %arg6[%c0_70, %c0_71] : memref<32x32xf32, #tpu.memory_space<vmem>>, vector<32x32xf32>
    %cst_72 = arith.constant dense<0.000000e+00> : vector<32xf32>
    %92 = vector.multi_reduction <add>, %88, %cst_72 [0] : vector<64x32xf32> to vector<32xf32>
    %93 = vector.shape_cast %92 : vector<32xf32> to vector<1x32xf32>
    %94 = arith.mulf %88, %88 : vector<64x32xf32>
    %cst_73 = arith.constant dense<0.000000e+00> : vector<32xf32>
    %95 = vector.multi_reduction <add>, %94, %cst_73 [0] : vector<64x32xf32> to vector<32xf32>
    %96 = vector.shape_cast %95 : vector<32xf32> to vector<1x32xf32>
    %cst_74 = arith.constant dense<0.000000e+00> : vector<1x32xf32>
    %97 = tpu.matmul %93, %91, %cst_74 {dimension_numbers = #tpu.dot_dimension_numbers<[1], [0], [0], [1], [0, 0, 1, 1], [], []>} : vector<1x32xf32>, vector<32x32xf32>, vector<1x32xf32> -> vector<1x32xf32>
    %cst_75 = arith.constant 5.120000e+02 : f32
    %98 = vector.broadcast %cst_75 : f32 to vector<1x32xf32>
    %99 = arith.divf %97, %98 : vector<1x32xf32>
    %cst_76 = arith.constant dense<0.000000e+00> : vector<1x32xf32>
    %100 = tpu.matmul %96, %91, %cst_76 {dimension_numbers = #tpu.dot_dimension_numbers<[1], [0], [0], [1], [0, 0, 1, 1], [], []>} : vector<1x32xf32>, vector<32x32xf32>, vector<1x32xf32> -> vector<1x32xf32>
    %cst_77 = arith.constant 5.120000e+02 : f32
    %101 = vector.broadcast %cst_77 : f32 to vector<1x32xf32>
    %102 = arith.divf %100, %101 : vector<1x32xf32>
    %103 = arith.mulf %99, %99 : vector<1x32xf32>
    %104 = arith.subf %102, %103 : vector<1x32xf32>
    %cst_78 = arith.constant 0.000000e+00 : f32
    %105 = vector.broadcast %cst_78 : f32 to vector<1x32xf32>
    %106 = arith.maximumf %104, %105 : vector<1x32xf32>
    %cst_79 = arith.constant 9.99999974E-6 : f32
    %107 = vector.broadcast %cst_79 : f32 to vector<1x32xf32>
    %108 = arith.addf %106, %107 : vector<1x32xf32>
    %109 = math.rsqrt %108 : vector<1x32xf32>
    %110 = vector.broadcast %99 : vector<1x32xf32> to vector<64x32xf32>
    %111 = arith.subf %88, %110 : vector<64x32xf32>
    %112 = vector.broadcast %109 : vector<1x32xf32> to vector<64x32xf32>
    %113 = arith.mulf %111, %112 : vector<64x32xf32>
    %114 = vector.broadcast %89 : vector<1x32xf32> to vector<64x32xf32>
    %115 = arith.mulf %113, %114 : vector<64x32xf32>
    %116 = vector.broadcast %90 : vector<1x32xf32> to vector<64x32xf32>
    %117 = arith.addf %115, %116 : vector<64x32xf32>
    %cst_80 = arith.constant 0.000000e+00 : f32
    %118 = vector.broadcast %cst_80 : f32 to vector<64x32xf32>
    %119 = arith.maximumf %117, %118 : vector<64x32xf32>
    %120 = arith.truncf %119 : vector<64x32xf32> to vector<64x32xbf16>
    %c0_81 = arith.constant 0 : index
    %c0_82 = arith.constant 0 : index
    %c0_83 = arith.constant 0 : index
    %121 = vector.load %arg7[%c0_81, %c0_82, %c0_83] : memref<1x64x32xbf16, #tpu.memory_space<vmem>>, vector<1x64x32xbf16>
    %122 = vector.shape_cast %121 : vector<1x64x32xbf16> to vector<64x32xbf16>
    %123 = vector.shape_cast %120 : vector<64x32xbf16> to vector<1x64x32xbf16>
    tpu.vector_store %arg7[%c0_81, %c0_82, %c0_83], %123 {strides = array<i32>} : memref<1x64x32xbf16, #tpu.memory_space<vmem>>, vector<1x64x32xbf16>,
    return
  }
  func.func @transform_0(%arg0: i32) -> (i32, i32, i32, i32) {
    %c0_i32 = arith.constant 0 : i32
    %c0_i32_0 = arith.constant 0 : i32
    %c0_i32_1 = arith.constant 0 : i32
    %c0_i32_2 = arith.constant 0 : i32
    return %arg0, %c0_i32, %c0_i32_0, %c0_i32_1 : i32, i32, i32, i32
  }
  func.func @transform_1(%arg0: i32) -> (i32, i32, i32) {
    %c0_i32 = arith.constant 0 : i32
    %c0_i32_0 = arith.constant 0 : i32
    %c0_i32_1 = arith.constant 0 : i32
    %c0_i32_2 = arith.constant 0 : i32
    return %c0_i32, %c0_i32_0, %c0_i32_1 : i32, i32, i32
  }
  func.func @transform_2(%arg0: i32) -> (i32, i32, i32) {
    %c0_i32 = arith.constant 0 : i32
    %c0_i32_0 = arith.constant 0 : i32
    %c0_i32_1 = arith.constant 0 : i32
    %c0_i32_2 = arith.constant 0 : i32
    return %c0_i32, %c0_i32_0, %c0_i32_1 : i32, i32, i32
  }
  func.func @transform_3(%arg0: i32) -> (i32, i32) {
    %c0_i32 = arith.constant 0 : i32
    %c0_i32_0 = arith.constant 0 : i32
    %c0_i32_1 = arith.constant 0 : i32
    return %c0_i32, %c0_i32_0 : i32, i32
  }
  func.func @transform_4(%arg0: i32) -> (i32, i32) {
    %c0_i32 = arith.constant 0 : i32
    %c0_i32_0 = arith.constant 0 : i32
    %c0_i32_1 = arith.constant 0 : i32
    return %c0_i32, %c0_i32_0 : i32, i32
  }
  func.func @transform_5(%arg0: i32) -> (i32, i32) {
    %c0_i32 = arith.constant 0 : i32
    %c0_i32_0 = arith.constant 0 : i32
    %c0_i32_1 = arith.constant 0 : i32
    return %c0_i32, %c0_i32_0 : i32, i32
  }
  func.func @transform_6(%arg0: i32) -> (i32, i32, i32) {
    %c0_i32 = arith.constant 0 : i32
    %c0_i32_0 = arith.constant 0 : i32
    %c0_i32_1 = arith.constant 0 : i32
    return %arg0, %c0_i32, %c0_i32_0 : i32, i32, i32
  }
  func.func @transform_7(%arg0: i32) -> (i32, i32, i32) {
    %c0_i32 = arith.constant 0 : i32
    %c0_i32_0 = arith.constant 0 : i32
    %c0_i32_1 = arith.constant 0 : i32
    return %arg0, %c0_i32, %c0_i32_0 : i32, i32, i32
  }
}

module attributes {stable_mosaic.version = 11 : i64} {
  func.func @fused_basic_block_kernel(%arg0: i32, %arg1: memref<1x64x32xbf16, #tpu.memory_space<vmem>>, %arg2: memref<9x32x32xbf16, #tpu.memory_space<vmem>>, %arg3: memref<9x32x32xbf16, #tpu.memory_space<vmem>>, %arg4: memref<1x32xf32, #tpu.memory_space<vmem>>, %arg5: memref<1x32xf32, #tpu.memory_space<vmem>>, %arg6: memref<32x32xf32, #tpu.memory_space<vmem>>, %arg7: memref<1x32xf32, #tpu.memory_space<vmem>>, %arg8: memref<1x32xf32, #tpu.memory_space<vmem>>, %arg9: memref<32x32xf32, #tpu.memory_space<vmem>>, %arg10: memref<1x64x32xbf16, #tpu.memory_space<vmem>>, %arg11: memref<10x24x32xf32, #tpu.memory_space<vmem>>, %arg12: memref<10x24x32xf32, #tpu.memory_space<vmem>>) attributes {dimension_semantics = [#tpu.dimension_semantics<parallel>], iteration_bounds = array<i64: 2>, scalar_prefetch = 0 : i64, scratch_operands = 2 : i64, tpu.core_type = #tpu.core_type<tc>, window_params = [{transform_indices = @transform_0, window_bounds = array<i64: 1, 64, 32>}, {pipeline_mode = #tpu.pipeline_mode<synchronous>, transform_indices = @transform_1, window_bounds = array<i64: 9, 32, 32>}, {pipeline_mode = #tpu.pipeline_mode<synchronous>, transform_indices = @transform_2, window_bounds = array<i64: 9, 32, 32>}, {pipeline_mode = #tpu.pipeline_mode<synchronous>, transform_indices = @transform_3, window_bounds = array<i64: 1, 32>}, {pipeline_mode = #tpu.pipeline_mode<synchronous>, transform_indices = @transform_4, window_bounds = array<i64: 1, 32>}, {pipeline_mode = #tpu.pipeline_mode<synchronous>, transform_indices = @transform_5, window_bounds = array<i64: 32, 32>}, {pipeline_mode = #tpu.pipeline_mode<synchronous>, transform_indices = @transform_6, window_bounds = array<i64: 1, 32>}, {pipeline_mode = #tpu.pipeline_mode<synchronous>, transform_indices = @transform_7, window_bounds = array<i64: 1, 32>}, {pipeline_mode = #tpu.pipeline_mode<synchronous>, transform_indices = @transform_8, window_bounds = array<i64: 32, 32>}, {transform_indices = @transform_9, window_bounds = array<i64: 1, 64, 32>}]} {
    %c0 = arith.constant 0 : index
    %c0_0 = arith.constant 0 : index
    %c0_1 = arith.constant 0 : index
    %0 = vector.load %arg1[%c0, %c0_0, %c0_1] : memref<1x64x32xbf16, #tpu.memory_space<vmem>>, vector<1x64x32xbf16>
    %1 = vector.shape_cast %0 : vector<1x64x32xbf16> to vector<64x32xbf16>
    %2 = arith.extf %1 : vector<64x32xbf16> to vector<64x32xf32>
    %c0_2 = arith.constant 0 : index
    %c0_3 = arith.constant 0 : index
    %3 = vector.load %arg4[%c0_2, %c0_3] : memref<1x32xf32, #tpu.memory_space<vmem>>, vector<1x32xf32>
    %c0_4 = arith.constant 0 : index
    %c0_5 = arith.constant 0 : index
    %4 = vector.load %arg5[%c0_4, %c0_5] : memref<1x32xf32, #tpu.memory_space<vmem>>, vector<1x32xf32>
    %c0_6 = arith.constant 0 : index
    %c0_7 = arith.constant 0 : index
    %5 = vector.load %arg6[%c0_6, %c0_7] : memref<32x32xf32, #tpu.memory_space<vmem>>, vector<32x32xf32>
    %cst = arith.constant dense<0.000000e+00> : vector<32xf32>
    %6 = vector.multi_reduction <add>, %2, %cst [0] : vector<64x32xf32> to vector<32xf32>
    %7 = vector.shape_cast %6 : vector<32xf32> to vector<1x32xf32>
    %8 = arith.mulf %2, %2 : vector<64x32xf32>
    %cst_8 = arith.constant dense<0.000000e+00> : vector<32xf32>
    %9 = vector.multi_reduction <add>, %8, %cst_8 [0] : vector<64x32xf32> to vector<32xf32>
    %10 = vector.shape_cast %9 : vector<32xf32> to vector<1x32xf32>
    %cst_9 = arith.constant dense<0.000000e+00> : vector<1x32xf32>
    %11 = tpu.matmul %7, %5, %cst_9 {dimension_numbers = #tpu.dot_dimension_numbers<[1], [0], [0], [1], [0, 0, 1, 1], [], []>} : vector<1x32xf32>, vector<32x32xf32>, vector<1x32xf32> -> vector<1x32xf32>
    %cst_10 = arith.constant 5.120000e+02 : f32
    %12 = vector.broadcast %cst_10 : f32 to vector<1x32xf32>
    %13 = arith.divf %11, %12 : vector<1x32xf32>
    %cst_11 = arith.constant dense<0.000000e+00> : vector<1x32xf32>
    %14 = tpu.matmul %10, %5, %cst_11 {dimension_numbers = #tpu.dot_dimension_numbers<[1], [0], [0], [1], [0, 0, 1, 1], [], []>} : vector<1x32xf32>, vector<32x32xf32>, vector<1x32xf32> -> vector<1x32xf32>
    %cst_12 = arith.constant 5.120000e+02 : f32
    %15 = vector.broadcast %cst_12 : f32 to vector<1x32xf32>
    %16 = arith.divf %14, %15 : vector<1x32xf32>
    %17 = arith.mulf %13, %13 : vector<1x32xf32>
    %18 = arith.subf %16, %17 : vector<1x32xf32>
    %cst_13 = arith.constant 0.000000e+00 : f32
    %19 = vector.broadcast %cst_13 : f32 to vector<1x32xf32>
    %20 = arith.maximumf %18, %19 : vector<1x32xf32>
    %cst_14 = arith.constant 9.99999974E-6 : f32
    %21 = vector.broadcast %cst_14 : f32 to vector<1x32xf32>
    %22 = arith.addf %20, %21 : vector<1x32xf32>
    %23 = math.rsqrt %22 : vector<1x32xf32>
    %24 = vector.broadcast %13 : vector<1x32xf32> to vector<64x32xf32>
    %25 = arith.subf %2, %24 : vector<64x32xf32>
    %26 = vector.broadcast %23 : vector<1x32xf32> to vector<64x32xf32>
    %27 = arith.mulf %25, %26 : vector<64x32xf32>
    %28 = vector.broadcast %3 : vector<1x32xf32> to vector<64x32xf32>
    %29 = arith.mulf %27, %28 : vector<64x32xf32>
    %30 = vector.broadcast %4 : vector<1x32xf32> to vector<64x32xf32>
    %31 = arith.addf %29, %30 : vector<64x32xf32>
    %cst_15 = arith.constant 0.000000e+00 : f32
    %32 = vector.broadcast %cst_15 : f32 to vector<64x32xf32>
    %33 = arith.maximumf %31, %32 : vector<64x32xf32>
    %cst_16 = arith.constant 0.000000e+00 : f32
    %34 = vector.broadcast %cst_16 : f32 to vector<10x24x32xf32>
    %c0_17 = arith.constant 0 : index
    %c0_18 = arith.constant 0 : index
    %c0_19 = arith.constant 0 : index
    %35 = vector.load %arg11[%c0_17, %c0_18, %c0_19] : memref<10x24x32xf32, #tpu.memory_space<vmem>>, vector<10x24x32xf32>
    tpu.vector_store %arg11[%c0_17, %c0_18, %c0_19], %34 {strides = array<i32>} : memref<10x24x32xf32, #tpu.memory_space<vmem>>, vector<10x24x32xf32>,
    %36 = vector.shape_cast %33 : vector<64x32xf32> to vector<8x8x32xf32>
    %c1 = arith.constant 1 : index
    %c8 = arith.constant 8 : index
    %c0_20 = arith.constant 0 : index
    %37 = vector.load %arg11[%c1, %c8, %c0_20] : memref<10x24x32xf32, #tpu.memory_space<vmem>>, vector<8x8x32xf32>
    tpu.vector_store %arg11[%c1, %c8, %c0_20], %36 {strides = array<i32>} : memref<10x24x32xf32, #tpu.memory_space<vmem>>, vector<8x8x32xf32>,
    %cst_21 = arith.constant 0.000000e+00 : f32
    %38 = vector.broadcast %cst_21 : f32 to vector<64x32xf32>
    %c0_22 = arith.constant 0 : index
    %c7 = arith.constant 7 : index
    %c0_23 = arith.constant 0 : index
    %39 = vector.load %arg11[%c0_22, %c7, %c0_23] : memref<10x24x32xf32, #tpu.memory_space<vmem>>, vector<8x8x32xf32>
    %40 = vector.shape_cast %39 : vector<8x8x32xf32> to vector<64x32xf32>
    %41 = arith.truncf %40 : vector<64x32xf32> to vector<64x32xbf16>
    %c0_24 = arith.constant 0 : index
    %c0_25 = arith.constant 0 : index
    %c0_26 = arith.constant 0 : index
    %42 = vector.load %arg2[%c0_24, %c0_25, %c0_26] : memref<9x32x32xbf16, #tpu.memory_space<vmem>>, vector<1x32x32xbf16>
    %43 = vector.shape_cast %42 : vector<1x32x32xbf16> to vector<32x32xbf16>
    %cst_27 = arith.constant dense<0.000000e+00> : vector<64x32xf32>
    %44 = tpu.matmul %41, %43, %cst_27 {dimension_numbers = #tpu.dot_dimension_numbers<[1], [0], [0], [1], [0, 0, 1, 1], [], []>} : vector<64x32xbf16>, vector<32x32xbf16>, vector<64x32xf32> -> vector<64x32xf32>
    %45 = arith.addf %38, %44 : vector<64x32xf32>
    %c0_28 = arith.constant 0 : index
    %c8_29 = arith.constant 8 : index
    %c0_30 = arith.constant 0 : index
    %46 = vector.load %arg11[%c0_28, %c8_29, %c0_30] : memref<10x24x32xf32, #tpu.memory_space<vmem>>, vector<8x8x32xf32>
    %47 = vector.shape_cast %46 : vector<8x8x32xf32> to vector<64x32xf32>
    %48 = arith.truncf %47 : vector<64x32xf32> to vector<64x32xbf16>
    %c1_31 = arith.constant 1 : index
    %c0_32 = arith.constant 0 : index
    %c0_33 = arith.constant 0 : index
    %49 = vector.load %arg2[%c1_31, %c0_32, %c0_33] : memref<9x32x32xbf16, #tpu.memory_space<vmem>>, vector<1x32x32xbf16>
    %50 = vector.shape_cast %49 : vector<1x32x32xbf16> to vector<32x32xbf16>
    %cst_34 = arith.constant dense<0.000000e+00> : vector<64x32xf32>
    %51 = tpu.matmul %48, %50, %cst_34 {dimension_numbers = #tpu.dot_dimension_numbers<[1], [0], [0], [1], [0, 0, 1, 1], [], []>} : vector<64x32xbf16>, vector<32x32xbf16>, vector<64x32xf32> -> vector<64x32xf32>
    %52 = arith.addf %45, %51 : vector<64x32xf32>
    %c0_35 = arith.constant 0 : index
    %c9 = arith.constant 9 : index
    %c0_36 = arith.constant 0 : index
    %53 = vector.load %arg11[%c0_35, %c9, %c0_36] : memref<10x24x32xf32, #tpu.memory_space<vmem>>, vector<8x8x32xf32>
    %54 = vector.shape_cast %53 : vector<8x8x32xf32> to vector<64x32xf32>
    %55 = arith.truncf %54 : vector<64x32xf32> to vector<64x32xbf16>
    %c2 = arith.constant 2 : index
    %c0_37 = arith.constant 0 : index
    %c0_38 = arith.constant 0 : index
    %56 = vector.load %arg2[%c2, %c0_37, %c0_38] : memref<9x32x32xbf16, #tpu.memory_space<vmem>>, vector<1x32x32xbf16>
    %57 = vector.shape_cast %56 : vector<1x32x32xbf16> to vector<32x32xbf16>
    %cst_39 = arith.constant dense<0.000000e+00> : vector<64x32xf32>
    %58 = tpu.matmul %55, %57, %cst_39 {dimension_numbers = #tpu.dot_dimension_numbers<[1], [0], [0], [1], [0, 0, 1, 1], [], []>} : vector<64x32xbf16>, vector<32x32xbf16>, vector<64x32xf32> -> vector<64x32xf32>
    %59 = arith.addf %52, %58 : vector<64x32xf32>
    %c1_40 = arith.constant 1 : index
    %c7_41 = arith.constant 7 : index
    %c0_42 = arith.constant 0 : index
    %60 = vector.load %arg11[%c1_40, %c7_41, %c0_42] : memref<10x24x32xf32, #tpu.memory_space<vmem>>, vector<8x8x32xf32>
    %61 = vector.shape_cast %60 : vector<8x8x32xf32> to vector<64x32xf32>
    %62 = arith.truncf %61 : vector<64x32xf32> to vector<64x32xbf16>
    %c3 = arith.constant 3 : index
    %c0_43 = arith.constant 0 : index
    %c0_44 = arith.constant 0 : index
    %63 = vector.load %arg2[%c3, %c0_43, %c0_44] : memref<9x32x32xbf16, #tpu.memory_space<vmem>>, vector<1x32x32xbf16>
    %64 = vector.shape_cast %63 : vector<1x32x32xbf16> to vector<32x32xbf16>
    %cst_45 = arith.constant dense<0.000000e+00> : vector<64x32xf32>
    %65 = tpu.matmul %62, %64, %cst_45 {dimension_numbers = #tpu.dot_dimension_numbers<[1], [0], [0], [1], [0, 0, 1, 1], [], []>} : vector<64x32xbf16>, vector<32x32xbf16>, vector<64x32xf32> -> vector<64x32xf32>
    %66 = arith.addf %59, %65 : vector<64x32xf32>
    %c1_46 = arith.constant 1 : index
    %c8_47 = arith.constant 8 : index
    %c0_48 = arith.constant 0 : index
    %67 = vector.load %arg11[%c1_46, %c8_47, %c0_48] : memref<10x24x32xf32, #tpu.memory_space<vmem>>, vector<8x8x32xf32>
    %68 = vector.shape_cast %67 : vector<8x8x32xf32> to vector<64x32xf32>
    %69 = arith.truncf %68 : vector<64x32xf32> to vector<64x32xbf16>
    %c4 = arith.constant 4 : index
    %c0_49 = arith.constant 0 : index
    %c0_50 = arith.constant 0 : index
    %70 = vector.load %arg2[%c4, %c0_49, %c0_50] : memref<9x32x32xbf16, #tpu.memory_space<vmem>>, vector<1x32x32xbf16>
    %71 = vector.shape_cast %70 : vector<1x32x32xbf16> to vector<32x32xbf16>
    %cst_51 = arith.constant dense<0.000000e+00> : vector<64x32xf32>
    %72 = tpu.matmul %69, %71, %cst_51 {dimension_numbers = #tpu.dot_dimension_numbers<[1], [0], [0], [1], [0, 0, 1, 1], [], []>} : vector<64x32xbf16>, vector<32x32xbf16>, vector<64x32xf32> -> vector<64x32xf32>
    %73 = arith.addf %66, %72 : vector<64x32xf32>
    %c1_52 = arith.constant 1 : index
    %c9_53 = arith.constant 9 : index
    %c0_54 = arith.constant 0 : index
    %74 = vector.load %arg11[%c1_52, %c9_53, %c0_54] : memref<10x24x32xf32, #tpu.memory_space<vmem>>, vector<8x8x32xf32>
    %75 = vector.shape_cast %74 : vector<8x8x32xf32> to vector<64x32xf32>
    %76 = arith.truncf %75 : vector<64x32xf32> to vector<64x32xbf16>
    %c5 = arith.constant 5 : index
    %c0_55 = arith.constant 0 : index
    %c0_56 = arith.constant 0 : index
    %77 = vector.load %arg2[%c5, %c0_55, %c0_56] : memref<9x32x32xbf16, #tpu.memory_space<vmem>>, vector<1x32x32xbf16>
    %78 = vector.shape_cast %77 : vector<1x32x32xbf16> to vector<32x32xbf16>
    %cst_57 = arith.constant dense<0.000000e+00> : vector<64x32xf32>
    %79 = tpu.matmul %76, %78, %cst_57 {dimension_numbers = #tpu.dot_dimension_numbers<[1], [0], [0], [1], [0, 0, 1, 1], [], []>} : vector<64x32xbf16>, vector<32x32xbf16>, vector<64x32xf32> -> vector<64x32xf32>
    %80 = arith.addf %73, %79 : vector<64x32xf32>
    %c2_58 = arith.constant 2 : index
    %c7_59 = arith.constant 7 : index
    %c0_60 = arith.constant 0 : index
    %81 = vector.load %arg11[%c2_58, %c7_59, %c0_60] : memref<10x24x32xf32, #tpu.memory_space<vmem>>, vector<8x8x32xf32>
    %82 = vector.shape_cast %81 : vector<8x8x32xf32> to vector<64x32xf32>
    %83 = arith.truncf %82 : vector<64x32xf32> to vector<64x32xbf16>
    %c6 = arith.constant 6 : index
    %c0_61 = arith.constant 0 : index
    %c0_62 = arith.constant 0 : index
    %84 = vector.load %arg2[%c6, %c0_61, %c0_62] : memref<9x32x32xbf16, #tpu.memory_space<vmem>>, vector<1x32x32xbf16>
    %85 = vector.shape_cast %84 : vector<1x32x32xbf16> to vector<32x32xbf16>
    %cst_63 = arith.constant dense<0.000000e+00> : vector<64x32xf32>
    %86 = tpu.matmul %83, %85, %cst_63 {dimension_numbers = #tpu.dot_dimension_numbers<[1], [0], [0], [1], [0, 0, 1, 1], [], []>} : vector<64x32xbf16>, vector<32x32xbf16>, vector<64x32xf32> -> vector<64x32xf32>
    %87 = arith.addf %80, %86 : vector<64x32xf32>
    %c2_64 = arith.constant 2 : index
    %c8_65 = arith.constant 8 : index
    %c0_66 = arith.constant 0 : index
    %88 = vector.load %arg11[%c2_64, %c8_65, %c0_66] : memref<10x24x32xf32, #tpu.memory_space<vmem>>, vector<8x8x32xf32>
    %89 = vector.shape_cast %88 : vector<8x8x32xf32> to vector<64x32xf32>
    %90 = arith.truncf %89 : vector<64x32xf32> to vector<64x32xbf16>
    %c7_67 = arith.constant 7 : index
    %c0_68 = arith.constant 0 : index
    %c0_69 = arith.constant 0 : index
    %91 = vector.load %arg2[%c7_67, %c0_68, %c0_69] : memref<9x32x32xbf16, #tpu.memory_space<vmem>>, vector<1x32x32xbf16>
    %92 = vector.shape_cast %91 : vector<1x32x32xbf16> to vector<32x32xbf16>
    %cst_70 = arith.constant dense<0.000000e+00> : vector<64x32xf32>
    %93 = tpu.matmul %90, %92, %cst_70 {dimension_numbers = #tpu.dot_dimension_numbers<[1], [0], [0], [1], [0, 0, 1, 1], [], []>} : vector<64x32xbf16>, vector<32x32xbf16>, vector<64x32xf32> -> vector<64x32xf32>
    %94 = arith.addf %87, %93 : vector<64x32xf32>
    %c2_71 = arith.constant 2 : index
    %c9_72 = arith.constant 9 : index
    %c0_73 = arith.constant 0 : index
    %95 = vector.load %arg11[%c2_71, %c9_72, %c0_73] : memref<10x24x32xf32, #tpu.memory_space<vmem>>, vector<8x8x32xf32>
    %96 = vector.shape_cast %95 : vector<8x8x32xf32> to vector<64x32xf32>
    %97 = arith.truncf %96 : vector<64x32xf32> to vector<64x32xbf16>
    %c8_74 = arith.constant 8 : index
    %c0_75 = arith.constant 0 : index
    %c0_76 = arith.constant 0 : index
    %98 = vector.load %arg2[%c8_74, %c0_75, %c0_76] : memref<9x32x32xbf16, #tpu.memory_space<vmem>>, vector<1x32x32xbf16>
    %99 = vector.shape_cast %98 : vector<1x32x32xbf16> to vector<32x32xbf16>
    %cst_77 = arith.constant dense<0.000000e+00> : vector<64x32xf32>
    %100 = tpu.matmul %97, %99, %cst_77 {dimension_numbers = #tpu.dot_dimension_numbers<[1], [0], [0], [1], [0, 0, 1, 1], [], []>} : vector<64x32xbf16>, vector<32x32xbf16>, vector<64x32xf32> -> vector<64x32xf32>
    %101 = arith.addf %94, %100 : vector<64x32xf32>
    %c0_78 = arith.constant 0 : index
    %c0_79 = arith.constant 0 : index
    %102 = vector.load %arg7[%c0_78, %c0_79] : memref<1x32xf32, #tpu.memory_space<vmem>>, vector<1x32xf32>
    %c0_80 = arith.constant 0 : index
    %c0_81 = arith.constant 0 : index
    %103 = vector.load %arg8[%c0_80, %c0_81] : memref<1x32xf32, #tpu.memory_space<vmem>>, vector<1x32xf32>
    %c0_82 = arith.constant 0 : index
    %c0_83 = arith.constant 0 : index
    %104 = vector.load %arg9[%c0_82, %c0_83] : memref<32x32xf32, #tpu.memory_space<vmem>>, vector<32x32xf32>
    %cst_84 = arith.constant dense<0.000000e+00> : vector<32xf32>
    %105 = vector.multi_reduction <add>, %101, %cst_84 [0] : vector<64x32xf32> to vector<32xf32>
    %106 = vector.shape_cast %105 : vector<32xf32> to vector<1x32xf32>
    %107 = arith.mulf %101, %101 : vector<64x32xf32>
    %cst_85 = arith.constant dense<0.000000e+00> : vector<32xf32>
    %108 = vector.multi_reduction <add>, %107, %cst_85 [0] : vector<64x32xf32> to vector<32xf32>
    %109 = vector.shape_cast %108 : vector<32xf32> to vector<1x32xf32>
    %cst_86 = arith.constant dense<0.000000e+00> : vector<1x32xf32>
    %110 = tpu.matmul %106, %104, %cst_86 {dimension_numbers = #tpu.dot_dimension_numbers<[1], [0], [0], [1], [0, 0, 1, 1], [], []>} : vector<1x32xf32>, vector<32x32xf32>, vector<1x32xf32> -> vector<1x32xf32>
    %cst_87 = arith.constant 5.120000e+02 : f32
    %111 = vector.broadcast %cst_87 : f32 to vector<1x32xf32>
    %112 = arith.divf %110, %111 : vector<1x32xf32>
    %cst_88 = arith.constant dense<0.000000e+00> : vector<1x32xf32>
    %113 = tpu.matmul %109, %104, %cst_88 {dimension_numbers = #tpu.dot_dimension_numbers<[1], [0], [0], [1], [0, 0, 1, 1], [], []>} : vector<1x32xf32>, vector<32x32xf32>, vector<1x32xf32> -> vector<1x32xf32>
    %cst_89 = arith.constant 5.120000e+02 : f32
    %114 = vector.broadcast %cst_89 : f32 to vector<1x32xf32>
    %115 = arith.divf %113, %114 : vector<1x32xf32>
    %116 = arith.mulf %112, %112 : vector<1x32xf32>
    %117 = arith.subf %115, %116 : vector<1x32xf32>
    %cst_90 = arith.constant 0.000000e+00 : f32
    %118 = vector.broadcast %cst_90 : f32 to vector<1x32xf32>
    %119 = arith.maximumf %117, %118 : vector<1x32xf32>
    %cst_91 = arith.constant 9.99999974E-6 : f32
    %120 = vector.broadcast %cst_91 : f32 to vector<1x32xf32>
    %121 = arith.addf %119, %120 : vector<1x32xf32>
    %122 = math.rsqrt %121 : vector<1x32xf32>
    %123 = vector.broadcast %112 : vector<1x32xf32> to vector<64x32xf32>
    %124 = arith.subf %101, %123 : vector<64x32xf32>
    %125 = vector.broadcast %122 : vector<1x32xf32> to vector<64x32xf32>
    %126 = arith.mulf %124, %125 : vector<64x32xf32>
    %127 = vector.broadcast %102 : vector<1x32xf32> to vector<64x32xf32>
    %128 = arith.mulf %126, %127 : vector<64x32xf32>
    %129 = vector.broadcast %103 : vector<1x32xf32> to vector<64x32xf32>
    %130 = arith.addf %128, %129 : vector<64x32xf32>
    %cst_92 = arith.constant 0.000000e+00 : f32
    %131 = vector.broadcast %cst_92 : f32 to vector<64x32xf32>
    %132 = arith.maximumf %130, %131 : vector<64x32xf32>
    %cst_93 = arith.constant 0.000000e+00 : f32
    %133 = vector.broadcast %cst_93 : f32 to vector<10x24x32xf32>
    %c0_94 = arith.constant 0 : index
    %c0_95 = arith.constant 0 : index
    %c0_96 = arith.constant 0 : index
    %134 = vector.load %arg12[%c0_94, %c0_95, %c0_96] : memref<10x24x32xf32, #tpu.memory_space<vmem>>, vector<10x24x32xf32>
    tpu.vector_store %arg12[%c0_94, %c0_95, %c0_96], %133 {strides = array<i32>} : memref<10x24x32xf32, #tpu.memory_space<vmem>>, vector<10x24x32xf32>,
    %135 = vector.shape_cast %132 : vector<64x32xf32> to vector<8x8x32xf32>
    %c1_97 = arith.constant 1 : index
    %c8_98 = arith.constant 8 : index
    %c0_99 = arith.constant 0 : index
    %136 = vector.load %arg12[%c1_97, %c8_98, %c0_99] : memref<10x24x32xf32, #tpu.memory_space<vmem>>, vector<8x8x32xf32>
    tpu.vector_store %arg12[%c1_97, %c8_98, %c0_99], %135 {strides = array<i32>} : memref<10x24x32xf32, #tpu.memory_space<vmem>>, vector<8x8x32xf32>,
    %cst_100 = arith.constant 0.000000e+00 : f32
    %137 = vector.broadcast %cst_100 : f32 to vector<64x32xf32>
    %c0_101 = arith.constant 0 : index
    %c7_102 = arith.constant 7 : index
    %c0_103 = arith.constant 0 : index
    %138 = vector.load %arg12[%c0_101, %c7_102, %c0_103] : memref<10x24x32xf32, #tpu.memory_space<vmem>>, vector<8x8x32xf32>
    %139 = vector.shape_cast %138 : vector<8x8x32xf32> to vector<64x32xf32>
    %140 = arith.truncf %139 : vector<64x32xf32> to vector<64x32xbf16>
    %c0_104 = arith.constant 0 : index
    %c0_105 = arith.constant 0 : index
    %c0_106 = arith.constant 0 : index
    %141 = vector.load %arg3[%c0_104, %c0_105, %c0_106] : memref<9x32x32xbf16, #tpu.memory_space<vmem>>, vector<1x32x32xbf16>
    %142 = vector.shape_cast %141 : vector<1x32x32xbf16> to vector<32x32xbf16>
    %cst_107 = arith.constant dense<0.000000e+00> : vector<64x32xf32>
    %143 = tpu.matmul %140, %142, %cst_107 {dimension_numbers = #tpu.dot_dimension_numbers<[1], [0], [0], [1], [0, 0, 1, 1], [], []>} : vector<64x32xbf16>, vector<32x32xbf16>, vector<64x32xf32> -> vector<64x32xf32>
    %144 = arith.addf %137, %143 : vector<64x32xf32>
    %c0_108 = arith.constant 0 : index
    %c8_109 = arith.constant 8 : index
    %c0_110 = arith.constant 0 : index
    %145 = vector.load %arg12[%c0_108, %c8_109, %c0_110] : memref<10x24x32xf32, #tpu.memory_space<vmem>>, vector<8x8x32xf32>
    %146 = vector.shape_cast %145 : vector<8x8x32xf32> to vector<64x32xf32>
    %147 = arith.truncf %146 : vector<64x32xf32> to vector<64x32xbf16>
    %c1_111 = arith.constant 1 : index
    %c0_112 = arith.constant 0 : index
    %c0_113 = arith.constant 0 : index
    %148 = vector.load %arg3[%c1_111, %c0_112, %c0_113] : memref<9x32x32xbf16, #tpu.memory_space<vmem>>, vector<1x32x32xbf16>
    %149 = vector.shape_cast %148 : vector<1x32x32xbf16> to vector<32x32xbf16>
    %cst_114 = arith.constant dense<0.000000e+00> : vector<64x32xf32>
    %150 = tpu.matmul %147, %149, %cst_114 {dimension_numbers = #tpu.dot_dimension_numbers<[1], [0], [0], [1], [0, 0, 1, 1], [], []>} : vector<64x32xbf16>, vector<32x32xbf16>, vector<64x32xf32> -> vector<64x32xf32>
    %151 = arith.addf %144, %150 : vector<64x32xf32>
    %c0_115 = arith.constant 0 : index
    %c9_116 = arith.constant 9 : index
    %c0_117 = arith.constant 0 : index
    %152 = vector.load %arg12[%c0_115, %c9_116, %c0_117] : memref<10x24x32xf32, #tpu.memory_space<vmem>>, vector<8x8x32xf32>
    %153 = vector.shape_cast %152 : vector<8x8x32xf32> to vector<64x32xf32>
    %154 = arith.truncf %153 : vector<64x32xf32> to vector<64x32xbf16>
    %c2_118 = arith.constant 2 : index
    %c0_119 = arith.constant 0 : index
    %c0_120 = arith.constant 0 : index
    %155 = vector.load %arg3[%c2_118, %c0_119, %c0_120] : memref<9x32x32xbf16, #tpu.memory_space<vmem>>, vector<1x32x32xbf16>
    %156 = vector.shape_cast %155 : vector<1x32x32xbf16> to vector<32x32xbf16>
    %cst_121 = arith.constant dense<0.000000e+00> : vector<64x32xf32>
    %157 = tpu.matmul %154, %156, %cst_121 {dimension_numbers = #tpu.dot_dimension_numbers<[1], [0], [0], [1], [0, 0, 1, 1], [], []>} : vector<64x32xbf16>, vector<32x32xbf16>, vector<64x32xf32> -> vector<64x32xf32>
    %158 = arith.addf %151, %157 : vector<64x32xf32>
    %c1_122 = arith.constant 1 : index
    %c7_123 = arith.constant 7 : index
    %c0_124 = arith.constant 0 : index
    %159 = vector.load %arg12[%c1_122, %c7_123, %c0_124] : memref<10x24x32xf32, #tpu.memory_space<vmem>>, vector<8x8x32xf32>
    %160 = vector.shape_cast %159 : vector<8x8x32xf32> to vector<64x32xf32>
    %161 = arith.truncf %160 : vector<64x32xf32> to vector<64x32xbf16>
    %c3_125 = arith.constant 3 : index
    %c0_126 = arith.constant 0 : index
    %c0_127 = arith.constant 0 : index
    %162 = vector.load %arg3[%c3_125, %c0_126, %c0_127] : memref<9x32x32xbf16, #tpu.memory_space<vmem>>, vector<1x32x32xbf16>
    %163 = vector.shape_cast %162 : vector<1x32x32xbf16> to vector<32x32xbf16>
    %cst_128 = arith.constant dense<0.000000e+00> : vector<64x32xf32>
    %164 = tpu.matmul %161, %163, %cst_128 {dimension_numbers = #tpu.dot_dimension_numbers<[1], [0], [0], [1], [0, 0, 1, 1], [], []>} : vector<64x32xbf16>, vector<32x32xbf16>, vector<64x32xf32> -> vector<64x32xf32>
    %165 = arith.addf %158, %164 : vector<64x32xf32>
    %c1_129 = arith.constant 1 : index
    %c8_130 = arith.constant 8 : index
    %c0_131 = arith.constant 0 : index
    %166 = vector.load %arg12[%c1_129, %c8_130, %c0_131] : memref<10x24x32xf32, #tpu.memory_space<vmem>>, vector<8x8x32xf32>
    %167 = vector.shape_cast %166 : vector<8x8x32xf32> to vector<64x32xf32>
    %168 = arith.truncf %167 : vector<64x32xf32> to vector<64x32xbf16>
    %c4_132 = arith.constant 4 : index
    %c0_133 = arith.constant 0 : index
    %c0_134 = arith.constant 0 : index
    %169 = vector.load %arg3[%c4_132, %c0_133, %c0_134] : memref<9x32x32xbf16, #tpu.memory_space<vmem>>, vector<1x32x32xbf16>
    %170 = vector.shape_cast %169 : vector<1x32x32xbf16> to vector<32x32xbf16>
    %cst_135 = arith.constant dense<0.000000e+00> : vector<64x32xf32>
    %171 = tpu.matmul %168, %170, %cst_135 {dimension_numbers = #tpu.dot_dimension_numbers<[1], [0], [0], [1], [0, 0, 1, 1], [], []>} : vector<64x32xbf16>, vector<32x32xbf16>, vector<64x32xf32> -> vector<64x32xf32>
    %172 = arith.addf %165, %171 : vector<64x32xf32>
    %c1_136 = arith.constant 1 : index
    %c9_137 = arith.constant 9 : index
    %c0_138 = arith.constant 0 : index
    %173 = vector.load %arg12[%c1_136, %c9_137, %c0_138] : memref<10x24x32xf32, #tpu.memory_space<vmem>>, vector<8x8x32xf32>
    %174 = vector.shape_cast %173 : vector<8x8x32xf32> to vector<64x32xf32>
    %175 = arith.truncf %174 : vector<64x32xf32> to vector<64x32xbf16>
    %c5_139 = arith.constant 5 : index
    %c0_140 = arith.constant 0 : index
    %c0_141 = arith.constant 0 : index
    %176 = vector.load %arg3[%c5_139, %c0_140, %c0_141] : memref<9x32x32xbf16, #tpu.memory_space<vmem>>, vector<1x32x32xbf16>
    %177 = vector.shape_cast %176 : vector<1x32x32xbf16> to vector<32x32xbf16>
    %cst_142 = arith.constant dense<0.000000e+00> : vector<64x32xf32>
    %178 = tpu.matmul %175, %177, %cst_142 {dimension_numbers = #tpu.dot_dimension_numbers<[1], [0], [0], [1], [0, 0, 1, 1], [], []>} : vector<64x32xbf16>, vector<32x32xbf16>, vector<64x32xf32> -> vector<64x32xf32>
    %179 = arith.addf %172, %178 : vector<64x32xf32>
    %c2_143 = arith.constant 2 : index
    %c7_144 = arith.constant 7 : index
    %c0_145 = arith.constant 0 : index
    %180 = vector.load %arg12[%c2_143, %c7_144, %c0_145] : memref<10x24x32xf32, #tpu.memory_space<vmem>>, vector<8x8x32xf32>
    %181 = vector.shape_cast %180 : vector<8x8x32xf32> to vector<64x32xf32>
    %182 = arith.truncf %181 : vector<64x32xf32> to vector<64x32xbf16>
    %c6_146 = arith.constant 6 : index
    %c0_147 = arith.constant 0 : index
    %c0_148 = arith.constant 0 : index
    %183 = vector.load %arg3[%c6_146, %c0_147, %c0_148] : memref<9x32x32xbf16, #tpu.memory_space<vmem>>, vector<1x32x32xbf16>
    %184 = vector.shape_cast %183 : vector<1x32x32xbf16> to vector<32x32xbf16>
    %cst_149 = arith.constant dense<0.000000e+00> : vector<64x32xf32>
    %185 = tpu.matmul %182, %184, %cst_149 {dimension_numbers = #tpu.dot_dimension_numbers<[1], [0], [0], [1], [0, 0, 1, 1], [], []>} : vector<64x32xbf16>, vector<32x32xbf16>, vector<64x32xf32> -> vector<64x32xf32>
    %186 = arith.addf %179, %185 : vector<64x32xf32>
    %c2_150 = arith.constant 2 : index
    %c8_151 = arith.constant 8 : index
    %c0_152 = arith.constant 0 : index
    %187 = vector.load %arg12[%c2_150, %c8_151, %c0_152] : memref<10x24x32xf32, #tpu.memory_space<vmem>>, vector<8x8x32xf32>
    %188 = vector.shape_cast %187 : vector<8x8x32xf32> to vector<64x32xf32>
    %189 = arith.truncf %188 : vector<64x32xf32> to vector<64x32xbf16>
    %c7_153 = arith.constant 7 : index
    %c0_154 = arith.constant 0 : index
    %c0_155 = arith.constant 0 : index
    %190 = vector.load %arg3[%c7_153, %c0_154, %c0_155] : memref<9x32x32xbf16, #tpu.memory_space<vmem>>, vector<1x32x32xbf16>
    %191 = vector.shape_cast %190 : vector<1x32x32xbf16> to vector<32x32xbf16>
    %cst_156 = arith.constant dense<0.000000e+00> : vector<64x32xf32>
    %192 = tpu.matmul %189, %191, %cst_156 {dimension_numbers = #tpu.dot_dimension_numbers<[1], [0], [0], [1], [0, 0, 1, 1], [], []>} : vector<64x32xbf16>, vector<32x32xbf16>, vector<64x32xf32> -> vector<64x32xf32>
    %193 = arith.addf %186, %192 : vector<64x32xf32>
    %c2_157 = arith.constant 2 : index
    %c9_158 = arith.constant 9 : index
    %c0_159 = arith.constant 0 : index
    %194 = vector.load %arg12[%c2_157, %c9_158, %c0_159] : memref<10x24x32xf32, #tpu.memory_space<vmem>>, vector<8x8x32xf32>
    %195 = vector.shape_cast %194 : vector<8x8x32xf32> to vector<64x32xf32>
    %196 = arith.truncf %195 : vector<64x32xf32> to vector<64x32xbf16>
    %c8_160 = arith.constant 8 : index
    %c0_161 = arith.constant 0 : index
    %c0_162 = arith.constant 0 : index
    %197 = vector.load %arg3[%c8_160, %c0_161, %c0_162] : memref<9x32x32xbf16, #tpu.memory_space<vmem>>, vector<1x32x32xbf16>
    %198 = vector.shape_cast %197 : vector<1x32x32xbf16> to vector<32x32xbf16>
    %cst_163 = arith.constant dense<0.000000e+00> : vector<64x32xf32>
    %199 = tpu.matmul %196, %198, %cst_163 {dimension_numbers = #tpu.dot_dimension_numbers<[1], [0], [0], [1], [0, 0, 1, 1], [], []>} : vector<64x32xbf16>, vector<32x32xbf16>, vector<64x32xf32> -> vector<64x32xf32>
    %200 = arith.addf %193, %199 : vector<64x32xf32>
    %201 = arith.addf %200, %2 : vector<64x32xf32>
    %202 = arith.truncf %201 : vector<64x32xf32> to vector<64x32xbf16>
    %c0_164 = arith.constant 0 : index
    %c0_165 = arith.constant 0 : index
    %c0_166 = arith.constant 0 : index
    %203 = vector.load %arg10[%c0_164, %c0_165, %c0_166] : memref<1x64x32xbf16, #tpu.memory_space<vmem>>, vector<1x64x32xbf16>
    %204 = vector.shape_cast %203 : vector<1x64x32xbf16> to vector<64x32xbf16>
    %205 = vector.shape_cast %202 : vector<64x32xbf16> to vector<1x64x32xbf16>
    tpu.vector_store %arg10[%c0_164, %c0_165, %c0_166], %205 {strides = array<i32>} : memref<1x64x32xbf16, #tpu.memory_space<vmem>>, vector<1x64x32xbf16>,
    return
  }
  func.func @transform_0(%arg0: i32) -> (i32, i32, i32) {
    %c0_i32 = arith.constant 0 : i32
    %c0_i32_0 = arith.constant 0 : i32
    %c0_i32_1 = arith.constant 0 : i32
    return %arg0, %c0_i32, %c0_i32_0 : i32, i32, i32
  }
  func.func @transform_1(%arg0: i32) -> (i32, i32, i32) {
    %c0_i32 = arith.constant 0 : i32
    %c0_i32_0 = arith.constant 0 : i32
    %c0_i32_1 = arith.constant 0 : i32
    %c0_i32_2 = arith.constant 0 : i32
    return %c0_i32, %c0_i32_0, %c0_i32_1 : i32, i32, i32
  }
  func.func @transform_2(%arg0: i32) -> (i32, i32, i32) {
    %c0_i32 = arith.constant 0 : i32
    %c0_i32_0 = arith.constant 0 : i32
    %c0_i32_1 = arith.constant 0 : i32
    %c0_i32_2 = arith.constant 0 : i32
    return %c0_i32, %c0_i32_0, %c0_i32_1 : i32, i32, i32
  }
  func.func @transform_3(%arg0: i32) -> (i32, i32) {
    %c0_i32 = arith.constant 0 : i32
    %c0_i32_0 = arith.constant 0 : i32
    %c0_i32_1 = arith.constant 0 : i32
    return %c0_i32, %c0_i32_0 : i32, i32
  }
  func.func @transform_4(%arg0: i32) -> (i32, i32) {
    %c0_i32 = arith.constant 0 : i32
    %c0_i32_0 = arith.constant 0 : i32
    %c0_i32_1 = arith.constant 0 : i32
    return %c0_i32, %c0_i32_0 : i32, i32
  }
  func.func @transform_5(%arg0: i32) -> (i32, i32) {
    %c0_i32 = arith.constant 0 : i32
    %c0_i32_0 = arith.constant 0 : i32
    %c0_i32_1 = arith.constant 0 : i32
    return %c0_i32, %c0_i32_0 : i32, i32
  }
  func.func @transform_6(%arg0: i32) -> (i32, i32) {
    %c0_i32 = arith.constant 0 : i32
    %c0_i32_0 = arith.constant 0 : i32
    %c0_i32_1 = arith.constant 0 : i32
    return %c0_i32, %c0_i32_0 : i32, i32
  }
  func.func @transform_7(%arg0: i32) -> (i32, i32) {
    %c0_i32 = arith.constant 0 : i32
    %c0_i32_0 = arith.constant 0 : i32
    %c0_i32_1 = arith.constant 0 : i32
    return %c0_i32, %c0_i32_0 : i32, i32
  }
  func.func @transform_8(%arg0: i32) -> (i32, i32) {
    %c0_i32 = arith.constant 0 : i32
    %c0_i32_0 = arith.constant 0 : i32
    %c0_i32_1 = arith.constant 0 : i32
    return %c0_i32, %c0_i32_0 : i32, i32
  }
  func.func @transform_9(%arg0: i32) -> (i32, i32, i32) {
    %c0_i32 = arith.constant 0 : i32
    %c0_i32_0 = arith.constant 0 : i32
    %c0_i32_1 = arith.constant 0 : i32
    return %arg0, %c0_i32, %c0_i32_0 : i32, i32, i32
  }
}

</mosaic_0001>

<llo_original>
// kernel: _lambda_.4
$region0: #{_lambda_.4}
  #allocation0 [shape = 'u32[]', space=smem, size = 0x4, offset = 0x4, fixed_abs, tag = 'smem constant byte address 0x4 - core index']
  #allocation1 [shape = 'u32[144,128]{1,0:T(1,128)}', space=vmem, size = 0x12000, scoped, tag = 'internal scratch']
  %s0 = inlined_call_operand.vmem [shape: bf16[2,256,16], index: 0, kind: input, shape index: {}]
  %s1 = inlined_call_operand.vmem [shape: f32[1,16], index: 1, kind: input, shape index: {}]
  %s2 = inlined_call_operand.vmem [shape: f32[1,16], index: 2, kind: input, shape index: {}]
  %s3 = inlined_call_operand.vmem [shape: f32[16,16], index: 3, kind: input, shape index: {}]
  %s4 = inlined_call_operand.vmem [shape: bf16[2,256,16], index: 4, kind: output, shape index: {}]
  %s5 = sld [smem:[#allocation0]]
  $region49: #{_lambda_.4} parent=0
    _
  %s7 = ssub.s32 1, %s5
  %s8 = scalar_select 0, %s7, %s5
  loop: start=0, step=1, limit=4
  $region2: #{_lambda_.4} parent=0 // loop_pre_header
    _
  $region3: #{_lambda_.4} parent=0 // loop_header
    %s10 = sphi 0, %s14
    %p11 = scmp.ge.s32.totalorder %s10, 4
    %s20 = sphi 0, %s22
    %s23 = sphi 0, %s20
    %s24 = sphi 0, %s23
    %s40 = sphi 0, %s24
    %s44 = sphi 0, %s44
    %s46 = sphi 0, %s44
    %s47 = sphi 0, %s46
    %s61 = sphi 0, %s47
    %s65 = sphi 0, %s65
    %s67 = sphi 0, %s65
    %s68 = sphi 0, %s67
    %s82 = sphi 0, %s68
    %s86 = sphi 0, %s86
    %s88 = sphi 0, %s86
    %s89 = sphi 0, %s88
    %s103 = sphi 0, %s89
    %s109 = sphi 0, %s111
    %s112 = sphi 0, %s109
    %s113 = sphi 0, %s112
    %s129 = sphi 0, %s113
  $region4: #{_lambda_.4} parent=0 // loop_header_branch
    %13 = sbr.rel (%p11) target = $region8
  $region5: #{_lambda_.4} parent=0 // loop_body
    %s15 = ssub.s32 %s10, 1
    %s16 = ssub.s32 %s10, 2
    %s17 = sadd.s32 %s10, 1
    %s18 = ssub.s32 %s10, %s17
    %p19 = scmp.eq.s32.totalorder %s18, 0
    %s21 = sadd.s32 %s20, 1
    %s22 = scalar_select %p19, %s20, %s21
    %p25 = pneg %p19
    %p26 = scmp.eq.s32.totalorder %s10, 1
    %p27 = por %p25, %p26
    %p28 = scmp.ne.s32.totalorder %s20, %s23
    %p29 = scmp.eq.s32.totalorder %s10, 0
    %p30 = por %p28, %p29
    %p31 = scmp.ne.s32.totalorder %s20, %s23
    %p32 = scmp.eq.s32.totalorder %s15, 1
    %p33 = por %p31, %p32
    %p34 = scmp.ne.s32.totalorder %s23, %s24
    %p35 = scmp.eq.s32.totalorder %s15, 0
    %p36 = por %p34, %p35
    %p37 = scmp.ne.s32.totalorder %s23, %s24
    %p38 = scmp.eq.s32.totalorder %s16, 1
    %p39 = por %p37, %p38
    %p41 = scmp.ne.s32.totalorder %s24, %s40
    %p42 = scmp.eq.s32.totalorder %s16, 0
    %p43 = por %p41, %p42
    %s45 = sadd.s32 %s44, 1
    %p48 = scmp.eq.s32.totalorder %s10, 1
    %p49 = scmp.ne.s32.totalorder %s44, %s46
    %p50 = scmp.eq.s32.totalorder %s10, 0
    %p51 = por %p49, %p50
    %p52 = scmp.ne.s32.totalorder %s44, %s46
    %p53 = scmp.eq.s32.totalorder %s15, 1
    %p54 = por %p52, %p53
    %p55 = scmp.ne.s32.totalorder %s46, %s47
    %p56 = scmp.eq.s32.totalorder %s15, 0
    %p57 = por %p55, %p56
    %p58 = scmp.ne.s32.totalorder %s46, %s47
    %p59 = scmp.eq.s32.totalorder %s16, 1
    %p60 = por %p58, %p59
    %p62 = scmp.ne.s32.totalorder %s47, %s61
    %p63 = scmp.eq.s32.totalorder %s16, 0
    %p64 = por %p62, %p63
    %s66 = sadd.s32 %s65, 1
    %p69 = scmp.eq.s32.totalorder %s10, 1
    %p70 = scmp.ne.s32.totalorder %s65, %s67
    %p71 = scmp.eq.s32.totalorder %s10, 0
    %p72 = por %p70, %p71
    %p73 = scmp.ne.s32.totalorder %s65, %s67
    %p74 = scmp.eq.s32.totalorder %s15, 1
    %p75 = por %p73, %p74
    %p76 = scmp.ne.s32.totalorder %s67, %s68
    %p77 = scmp.eq.s32.totalorder %s15, 0
    %p78 = por %p76, %p77
    %p79 = scmp.ne.s32.totalorder %s67, %s68
    %p80 = scmp.eq.s32.totalorder %s16, 1
    %p81 = por %p79, %p80
    %p83 = scmp.ne.s32.totalorder %s68, %s82
    %p84 = scmp.eq.s32.totalorder %s16, 0
    %p85 = por %p83, %p84
    %s87 = sadd.s32 %s86, 1
    %p90 = scmp.eq.s32.totalorder %s10, 1
    %p91 = scmp.ne.s32.totalorder %s86, %s88
    %p92 = scmp.eq.s32.totalorder %s10, 0
    %p93 = por %p91, %p92
    %p94 = scmp.ne.s32.totalorder %s86, %s88
    %p95 = scmp.eq.s32.totalorder %s15, 1
    %p96 = por %p94, %p95
    %p97 = scmp.ne.s32.totalorder %s88, %s89
    %p98 = scmp.eq.s32.totalorder %s15, 0
    %p99 = por %p97, %p98
    %p100 = scmp.ne.s32.totalorder %s88, %s89
    %p101 = scmp.eq.s32.totalorder %s16, 1
    %p102 = por %p100, %p101
    %p104 = scmp.ne.s32.totalorder %s89, %s103
    %p105 = scmp.eq.s32.totalorder %s16, 0
    %p106 = por %p104, %p105
    %s107 = ssub.s32 %s10, %s17
    %p108 = scmp.eq.s32.totalorder %s107, 0
    %s110 = sadd.s32 %s109, 1
    %s111 = scalar_select %p108, %s109, %s110
    %p114 = pneg %p108
    %p115 = scmp.eq.s32.totalorder %s10, 1
    %p116 = por %p114, %p115
    %p117 = scmp.ne.s32.totalorder %s109, %s112
    %p118 = scmp.eq.s32.totalorder %s10, 0
    %p119 = por %p117, %p118
    %p120 = scmp.ne.s32.totalorder %s109, %s112
    %p121 = scmp.eq.s32.totalorder %s15, 1
    %p122 = por %p120, %p121
    %p123 = scmp.ne.s32.totalorder %s112, %s113
    %p124 = scmp.eq.s32.totalorder %s15, 0
    %p125 = por %p123, %p124
    %p126 = scmp.ne.s32.totalorder %s112, %s113
    %p127 = scmp.eq.s32.totalorder %s16, 1
    %p128 = por %p126, %p127
    %p130 = scmp.ne.s32.totalorder %s113, %s129
    %p131 = scmp.eq.s32.totalorder %s16, 0
    %p132 = por %p130, %p131
    %p133 = scmp.le.s32.totalorder 1, %s10
    %p134 = scmp.lt.s32.totalorder %s10, 3
    %p135 = pnand %p133, %p134
    %p136 = pneg %p135
    // Predicated region
    $region9: #{_lambda_.4} parent=5 // pred_check
      _
    $region10: #{_lambda_.4} parent=5 // pred_check_branch
      %138 = sbr.rel (%p135) target = $region12
    $region11: #{_lambda_.4} parent=5 // pred_region
      %s139 = ssub.s32 %s10, 1
      // Predicated region
      $region13: #{_lambda_.4} parent=11 // pred_check
        %p140 = pneg %p57
      $region14: #{_lambda_.4} parent=11 // pred_check_branch
        %142 = sbr.rel (%p140) target = $region16
      $region15: #{_lambda_.4} parent=11 // pred_region
        _
      $region16: #{_lambda_.4} parent=11 // pred_fallthru
        _
      // Predicated region
      $region17: #{_lambda_.4} parent=11 // pred_check
        %p143 = pneg %p78
      $region18: #{_lambda_.4} parent=11 // pred_check_branch
        %145 = sbr.rel (%p143) target = $region20
      $region19: #{_lambda_.4} parent=11 // pred_region
        _
      $region20: #{_lambda_.4} parent=11 // pred_fallthru
        _
      // Predicated region
      $region21: #{_lambda_.4} parent=11 // pred_check
        %p146 = pneg %p99
      $region22: #{_lambda_.4} parent=11 // pred_check_branch
        %148 = sbr.rel (%p146) target = $region24
      $region23: #{_lambda_.4} parent=11 // pred_region
        _
      $region24: #{_lambda_.4} parent=11 // pred_fallthru
        _
    $region12: #{_lambda_.4} parent=5 // pred_fallthru
      _
    %p149 = scmp.lt.s32.totalorder %s10, 2
    // Predicated region
    $region25: #{_lambda_.4} parent=5 // pred_check
      %p150 = pneg %p149
    $region26: #{_lambda_.4} parent=5 // pred_check_branch
      %152 = sbr.rel (%p150) target = $region28
    $region27: #{_lambda_.4} parent=5 // pred_region
      // Predicated region
      $region29: #{_lambda_.4} parent=27 // pred_check
        %p153 = pneg %p30
      $region30: #{_lambda_.4} parent=27 // pred_check_branch
        %155 = sbr.rel (%p153) target = $region32
      $region31: #{_lambda_.4} parent=27 // pred_region
        %p156 = scmp.lt.s32.totalorder %s10, 1
        %s157 = scalar_select %p156, %s10, 1
        %s158 = smul.addr %s157, 32
        %s159 = smul.addr %s158, 4
        %s160 = scalar_lea.vmem %s0, %s159
      $region32: #{_lambda_.4} parent=27 // pred_fallthru
        _
    $region28: #{_lambda_.4} parent=5 // pred_fallthru
      _
    %p161 = scmp.le.s32.totalorder 1, %s10
    %p162 = scmp.lt.s32.totalorder %s10, 3
    %p163 = pnand %p161, %p162
    %p164 = pneg %p163
    // Predicated region
    $region33: #{_lambda_.4} parent=5 // pred_check
      _
    $region34: #{_lambda_.4} parent=5 // pred_check_branch
      %166 = sbr.rel (%p163) target = $region36
    $region35: #{_lambda_.4} parent=5 // pred_region
      %s167 = ssub.s32 %s10, 1
      %p168 = scmp.lt.s32.totalorder %s15, 1
      %s169 = scalar_select %p168, %s15, 1
      %s170 = smul.addr %s169, 32
      %s171 = smul.addr %s170, 4
      %s172 = scalar_lea.vmem %s0, %s171
      %p173 = pneg %p36
      %p174 = pneg %p33
      %p175 = pneg %p57
      %p176 = pneg %p54
      %p177 = pneg %p78
      %p178 = pneg %p75
      %p179 = pneg %p99
      %p180 = pneg %p96
      %p181 = pneg %p125
      %p182 = pneg %p122
      %p183 = scmp.lt.s32.totalorder %s15, 1
      %s184 = scalar_select %p183, %s15, 1
      %s185 = smul.addr %s184, 32
      %s186 = smul.addr %s185, 4
      %s187 = scalar_lea.vmem %s4, %s186
      %p188 = scmp.lt.s32.totalorder %s15, 1
      %s189 = scalar_select %p188, %s15, 1
      %s190 = smul.addr %s189, 32
      %s191 = smul.addr %s190, 4
      %s192 = scalar_lea.vmem %s0, %s191
      %p193 = scmp.lt.s32.totalorder %s15, 1
      %s194 = scalar_select %p193, %s15, 1
      %s195 = smul.addr %s194, 32
      %s196 = smul.addr %s195, 4
      %s197 = scalar_lea.vmem %s4, %s196
      %v198 = vld [vmem:[%s192] sm:$0xf]
      %v199 = vld [vmem:[%s192 + $0x4] sm:$0xf]
      %v200 = vld [vmem:[%s192 + $0x8] sm:$0xf]
      %v201 = vld [vmem:[%s192 + $0xc] sm:$0xf]
      %v202 = vld [vmem:[%s192 + $0x10] sm:$0xf]
      %v203 = vld [vmem:[%s192 + $0x14] sm:$0xf]
      %v204 = vld [vmem:[%s192 + $0x18] sm:$0xf]
      %v205 = vld [vmem:[%s192 + $0x1c] sm:$0xf]
      %v206 = vld [vmem:[%s192 + $0x20] sm:$0xf]
      %v207 = vld [vmem:[%s192 + $0x24] sm:$0xf]
      %v208 = vld [vmem:[%s192 + $0x28] sm:$0xf]
      %v209 = vld [vmem:[%s192 + $0x2c] sm:$0xf]
      %v210 = vld [vmem:[%s192 + $0x30] sm:$0xf]
      %v211 = vld [vmem:[%s192 + $0x34] sm:$0xf]
      %v212 = vld [vmem:[%s192 + $0x38] sm:$0xf]
      %v213 = vld [vmem:[%s192 + $0x3c] sm:$0xf]
      %v214 = vld [vmem:[%s192 + $0x40] sm:$0xf]
      %v215 = vld [vmem:[%s192 + $0x44] sm:$0xf]
      %v216 = vld [vmem:[%s192 + $0x48] sm:$0xf]
      %v217 = vld [vmem:[%s192 + $0x4c] sm:$0xf]
      %v218 = vld [vmem:[%s192 + $0x50] sm:$0xf]
      %v219 = vld [vmem:[%s192 + $0x54] sm:$0xf]
      %v220 = vld [vmem:[%s192 + $0x58] sm:$0xf]
      %v221 = vld [vmem:[%s192 + $0x5c] sm:$0xf]
      %v222 = vld [vmem:[%s192 + $0x60] sm:$0xf]
      %v223 = vld [vmem:[%s192 + $0x64] sm:$0xf]
      %v224 = vld [vmem:[%s192 + $0x68] sm:$0xf]
      %v225 = vld [vmem:[%s192 + $0x6c] sm:$0xf]
      %v226 = vld [vmem:[%s192 + $0x70] sm:$0xf]
      %v227 = vld [vmem:[%s192 + $0x74] sm:$0xf]
      %v228 = vld [vmem:[%s192 + $0x78] sm:$0xf]
      %v229 = vld [vmem:[%s192 + $0x7c] sm:$0xf]
      %v230 = vunpack.c.l.bf16 %v198
      %v231 = vunpack.c.l.bf16 %v199
      %v232 = vunpack.c.l.bf16 %v200
      %v233 = vunpack.c.l.bf16 %v201
      %v234 = vunpack.c.l.bf16 %v202
      %v235 = vunpack.c.l.bf16 %v203
      %v236 = vunpack.c.l.bf16 %v204
      %v237 = vunpack.c.l.bf16 %v205
      %v238 = vunpack.c.l.bf16 %v206
      %v239 = vunpack.c.l.bf16 %v207
      %v240 = vunpack.c.l.bf16 %v208
      %v241 = vunpack.c.l.bf16 %v209
      %v242 = vunpack.c.l.bf16 %v210
      %v243 = vunpack.c.l.bf16 %v211
      %v244 = vunpack.c.l.bf16 %v212
      %v245 = vunpack.c.l.bf16 %v213
      %v246 = vunpack.c.l.bf16 %v214
      %v247 = vunpack.c.l.bf16 %v215
      %v248 = vunpack.c.l.bf16 %v216
      %v249 = vunpack.c.l.bf16 %v217
      %v250 = vunpack.c.l.bf16 %v218
      %v251 = vunpack.c.l.bf16 %v219
      %v252 = vunpack.c.l.bf16 %v220
      %v253 = vunpack.c.l.bf16 %v221
      %v254 = vunpack.c.l.bf16 %v222
      %v255 = vunpack.c.l.bf16 %v223
      %v256 = vunpack.c.l.bf16 %v224
      %v257 = vunpack.c.l.bf16 %v225
      %v258 = vunpack.c.l.bf16 %v226
      %v259 = vunpack.c.l.bf16 %v227
      %v260 = vunpack.c.l.bf16 %v228
      %v261 = vunpack.c.l.bf16 %v229
      %v262 = vld [vmem:[%s1] sm:$0x1]
      %v263 = vld [vmem:[%s2] sm:$0x1]
      %v264 = vld [vmem:[%s3] sm:$0xff]
      %v265 = vld [vmem:[%s3 + $0x8] sm:$0xff]
      %vm266 = vcmask 130048
      %v267 = vsel %vm266, %v230, 0.0
      %v268 = vsel %vm266, %v231, 0.0
      %v269 = vadd.f32 %v267, %v268
      %v270 = vsel %vm266, %v232, 0.0
      %v271 = vadd.f32 %v269, %v270
      %v272 = vsel %vm266, %v233, 0.0
      %v273 = vadd.f32 %v271, %v272
      %v274 = vsel %vm266, %v234, 0.0
      %v275 = vadd.f32 %v273, %v274
      %v276 = vsel %vm266, %v235, 0.0
      %v277 = vadd.f32 %v275, %v276
      %v278 = vsel %vm266, %v236, 0.0
      %v279 = vadd.f32 %v277, %v278
      %v280 = vsel %vm266, %v237, 0.0
      %v281 = vadd.f32 %v279, %v280
      %v282 = vsel %vm266, %v238, 0.0
      %v283 = vadd.f32 %v281, %v282
      %v284 = vsel %vm266, %v239, 0.0
      %v285 = vadd.f32 %v283, %v284
      %v286 = vsel %vm266, %v240, 0.0
      %v287 = vadd.f32 %v285, %v286
      %v288 = vsel %vm266, %v241, 0.0
      %v289 = vadd.f32 %v287, %v288
      %v290 = vsel %vm266, %v242, 0.0
      %v291 = vadd.f32 %v289, %v290
      %v292 = vsel %vm266, %v243, 0.0
      %v293 = vadd.f32 %v291, %v292
      %v294 = vsel %vm266, %v244, 0.0
      %v295 = vadd.f32 %v293, %v294
      %v296 = vsel %vm266, %v245, 0.0
      %v297 = vadd.f32 %v295, %v296
      %v298 = vsel %vm266, %v246, 0.0
      %v299 = vadd.f32 %v297, %v298
      %v300 = vsel %vm266, %v247, 0.0
      %v301 = vadd.f32 %v299, %v300
      %v302 = vsel %vm266, %v248, 0.0
      %v303 = vadd.f32 %v301, %v302
      %v304 = vsel %vm266, %v249, 0.0
      %v305 = vadd.f32 %v303, %v304
      %v306 = vsel %vm266, %v250, 0.0
      %v307 = vadd.f32 %v305, %v306
      %v308 = vsel %vm266, %v251, 0.0
      %v309 = vadd.f32 %v307, %v308
      %v310 = vsel %vm266, %v252, 0.0
      %v311 = vadd.f32 %v309, %v310
      %v312 = vsel %vm266, %v253, 0.0
      %v313 = vadd.f32 %v311, %v312
      %v314 = vsel %vm266, %v254, 0.0
      %v315 = vadd.f32 %v313, %v314
      %v316 = vsel %vm266, %v255, 0.0
      %v317 = vadd.f32 %v315, %v316
      %v318 = vsel %vm266, %v256, 0.0
      %v319 = vadd.f32 %v317, %v318
      %v320 = vsel %vm266, %v257, 0.0
      %v321 = vadd.f32 %v319, %v320
      %v322 = vsel %vm266, %v258, 0.0
      %v323 = vadd.f32 %v321, %v322
      %v324 = vsel %vm266, %v259, 0.0
      %v325 = vadd.f32 %v323, %v324
      %v326 = vsel %vm266, %v260, 0.0
      %v327 = vadd.f32 %v325, %v326
      %v328 = vsel %vm266, %v261, 0.0
      %v329 = vadd.f32 %v327, %v328
      %v330 = vrot.slane %v329, 4
      %v331 = vadd.f32 %v329, %v330
      %v332 = vrot.slane %v331, 2
      %v333 = vadd.f32 %v331, %v332
      %v334 = vrot.slane %v333, 1
      %v335 = vadd.f32 %v333, %v334
      %v336 = vmul.f32 %v230, %v230
      %v337 = vmul.f32 %v231, %v231
      %v338 = vmul.f32 %v232, %v232
      %v339 = vmul.f32 %v233, %v233
      %v340 = vmul.f32 %v234, %v234
      %v341 = vmul.f32 %v235, %v235
      %v342 = vmul.f32 %v236, %v236
      %v343 = vmul.f32 %v237, %v237
      %v344 = vmul.f32 %v238, %v238
      %v345 = vmul.f32 %v239, %v239
      %v346 = vmul.f32 %v240, %v240
      %v347 = vmul.f32 %v241, %v241
      %v348 = vmul.f32 %v242, %v242
      %v349 = vmul.f32 %v243, %v243
      %v350 = vmul.f32 %v244, %v244
      %v351 = vmul.f32 %v245, %v245
      %v352 = vmul.f32 %v246, %v246
      %v353 = vmul.f32 %v247, %v247
      %v354 = vmul.f32 %v248, %v248
      %v355 = vmul.f32 %v249, %v249
      %v356 = vmul.f32 %v250, %v250
      %v357 = vmul.f32 %v251, %v251
      %v358 = vmul.f32 %v252, %v252
      %v359 = vmul.f32 %v253, %v253
      %v360 = vmul.f32 %v254, %v254
      %v361 = vmul.f32 %v255, %v255
      %v362 = vmul.f32 %v256, %v256
      %v363 = vmul.f32 %v257, %v257
      %v364 = vmul.f32 %v258, %v258
      %v365 = vmul.f32 %v259, %v259
      %v366 = vmul.f32 %v260, %v260
      %v367 = vmul.f32 %v261, %v261
      %v368 = vsel %vm266, %v336, 0.0
      %v369 = vsel %vm266, %v337, 0.0
      %v370 = vadd.f32 %v368, %v369
      %v371 = vsel %vm266, %v338, 0.0
      %v372 = vadd.f32 %v370, %v371
      %v373 = vsel %vm266, %v339, 0.0
      %v374 = vadd.f32 %v372, %v373
      %v375 = vsel %vm266, %v340, 0.0
      %v376 = vadd.f32 %v374, %v375
      %v377 = vsel %vm266, %v341, 0.0
      %v378 = vadd.f32 %v376, %v377
      %v379 = vsel %vm266, %v342, 0.0
      %v380 = vadd.f32 %v378, %v379
      %v381 = vsel %vm266, %v343, 0.0
      %v382 = vadd.f32 %v380, %v381
      %v383 = vsel %vm266, %v344, 0.0
      %v384 = vadd.f32 %v382, %v383
      %v385 = vsel %vm266, %v345, 0.0
      %v386 = vadd.f32 %v384, %v385
      %v387 = vsel %vm266, %v346, 0.0
      %v388 = vadd.f32 %v386, %v387
      %v389 = vsel %vm266, %v347, 0.0
      %v390 = vadd.f32 %v388, %v389
      %v391 = vsel %vm266, %v348, 0.0
      %v392 = vadd.f32 %v390, %v391
      %v393 = vsel %vm266, %v349, 0.0
      %v394 = vadd.f32 %v392, %v393
      %v395 = vsel %vm266, %v350, 0.0
      %v396 = vadd.f32 %v394, %v395
      %v397 = vsel %vm266, %v351, 0.0
      %v398 = vadd.f32 %v396, %v397
      %v399 = vsel %vm266, %v352, 0.0
      %v400 = vadd.f32 %v398, %v399
      %v401 = vsel %vm266, %v353, 0.0
      %v402 = vadd.f32 %v400, %v401
      %v403 = vsel %vm266, %v354, 0.0
      %v404 = vadd.f32 %v402, %v403
      %v405 = vsel %vm266, %v355, 0.0
      %v406 = vadd.f32 %v404, %v405
      %v407 = vsel %vm266, %v356, 0.0
      %v408 = vadd.f32 %v406, %v407
      %v409 = vsel %vm266, %v357, 0.0
      %v410 = vadd.f32 %v408, %v409
      %v411 = vsel %vm266, %v358, 0.0
      %v412 = vadd.f32 %v410, %v411
      %v413 = vsel %vm266, %v359, 0.0
      %v414 = vadd.f32 %v412, %v413
      %v415 = vsel %vm266, %v360, 0.0
      %v416 = vadd.f32 %v414, %v415
      %v417 = vsel %vm266, %v361, 0.0
      %v418 = vadd.f32 %v416, %v417
      %v419 = vsel %vm266, %v362, 0.0
      %v420 = vadd.f32 %v418, %v419
      %v421 = vsel %vm266, %v363, 0.0
      %v422 = vadd.f32 %v420, %v421
      %v423 = vsel %vm266, %v364, 0.0
      %v424 = vadd.f32 %v422, %v423
      %v425 = vsel %vm266, %v365, 0.0
      %v426 = vadd.f32 %v424, %v425
      %v427 = vsel %vm266, %v366, 0.0
      %v428 = vadd.f32 %v426, %v427
      %v429 = vsel %vm266, %v367, 0.0
      %v430 = vadd.f32 %v428, %v429
      %v431 = vrot.slane %v430, 4
      %v432 = vadd.f32 %v430, %v431
      %v433 = vrot.slane %v432, 2
      %v434 = vadd.f32 %v432, %v433
      %v435 = vrot.slane %v434, 1
      %v436 = vadd.f32 %v434, %v435
      %v438 = vsel %vm266, %v335, 0
      %440 = vmatprep.subr.mxu0 0.0
      %441 = vmatpush1.msra.mxu0 %v264
      %442 = vmatprep.subr.mxu0 0.0
      %443 = vmatpush1.msra.mxu0 %v265
      %444 = vmatprep.subr.mxu0 0.0
      %445 = vmatpush1.msra.mxu0 0.0
      %446 = vmatprep.subr.mxu0 0.0
      %447 = vmatpush1.msra.mxu0 0.0
      %448 = vmatprep.subr.mxu0 0.0
      %449 = vmatpush1.msra.mxu0 0.0
      %450 = vmatprep.subr.mxu0 0.0
      %451 = vmatpush1.msra.mxu0 0.0
      %452 = vmatprep.subr.mxu0 0.0
      %453 = vmatpush1.msra.mxu0 0.0
      %454 = vmatprep.subr.mxu0 0.0
      %455 = vmatpush1.msra.mxu0 0.0
      %456 = vmatprep.subr.mxu0 0.0
      %457 = vmatpush1.msra.mxu0 0.0
      %458 = vmatprep.subr.mxu0 0.0
      %459 = vmatpush1.msra.mxu0 0.0
      %460 = vmatprep.subr.mxu0 0.0
      %461 = vmatpush1.msra.mxu0 0.0
      %462 = vmatprep.subr.mxu0 0.0
      %463 = vmatpush1.msra.mxu0 0.0
      %464 = vmatprep.subr.mxu0 0.0
      %465 = vmatpush1.msra.mxu0 0.0
      %466 = vmatprep.subr.mxu0 0.0
      %467 = vmatpush1.msra.mxu0 0.0
      %468 = vmatprep.subr.mxu0 0.0
      %469 = vmatpush1.msra.mxu0 0.0
      %470 = vmatprep.subr.mxu0 0.0
      %471 = vmatpush1.msra.mxu0 0.0
      %472 = vmatprep.subr.mxu0 0.0
      %473 = vmatpush1.msra.mxu0 0.0
      %474 = vmatprep.subr.mxu0 0.0
      %475 = vmatpush1.msra.mxu0 0.0
      %476 = vmatprep.subr.mxu0 0.0
      %477 = vmatpush1.msra.mxu0 0.0
      %478 = vmatprep.subr.mxu0 0.0
      %479 = vmatpush1.msra.mxu0 0.0
      %480 = vmatprep.subr.mxu0 0.0
      %481 = vmatpush1.msra.mxu0 0.0
      %482 = vmatprep.subr.mxu0 0.0
      %483 = vmatpush1.msra.mxu0 0.0
      %484 = vmatprep.subr.mxu0 0.0
      %485 = vmatpush1.msra.mxu0 0.0
      %486 = vmatprep.subr.mxu0 0.0
      %487 = vmatpush1.msra.mxu0 0.0
      %488 = vmatprep.subr.mxu0 0.0
      %489 = vmatpush1.msra.mxu0 0.0
      %490 = vmatprep.subr.mxu0 0.0
      %491 = vmatpush1.msra.mxu0 0.0
      %492 = vmatprep.subr.mxu0 0.0
      %493 = vmatpush1.msra.mxu0 0.0
      %494 = vmatprep.subr.mxu0 0.0
      %495 = vmatpush1.msra.mxu0 0.0
      %496 = vmatprep.subr.mxu0 0.0
      %497 = vmatpush1.msra.mxu0 0.0
      %498 = vmatprep.subr.mxu0 0.0
      %499 = vmatpush1.msra.mxu0 0.0
      %500 = vmatprep.subr.mxu0 0.0
      %501 = vmatpush1.msra.mxu0 0.0
      %502 = vmatprep.subr.mxu0 0.0
      %503 = vmatpush1.msra.mxu0 0.0
      %504 = vmatprep.mubr.f32.mxu0 0.0
      %505 = vmatmul.mubr.f32.gmra.mrb[0].mxu0 %v438
      %v506 = vpop.f32.mrb[0].mxu0
      %v507 = vadd.f32 0.0, %v506
      %v508 = vpop.f32.mrb[0].mxu0
      %509 = vdwg.mxu0
      %v510 = vrcp.pop 2048.0
      %v511 = vmul.f32 %v507, %v510
      %v513 = vsel %vm266, %v436, 0
      %515 = vmatprep.subr.mxu0 0.0
      %516 = vmatpush1.msra.mxu0 %v264
      %517 = vmatprep.subr.mxu0 0.0
      %518 = vmatpush1.msra.mxu0 %v265
      %519 = vmatprep.subr.mxu0 0.0
      %520 = vmatpush1.msra.mxu0 0.0
      %521 = vmatprep.subr.mxu0 0.0
      %522 = vmatpush1.msra.mxu0 0.0
      %523 = vmatprep.subr.mxu0 0.0
      %524 = vmatpush1.msra.mxu0 0.0
      %525 = vmatprep.subr.mxu0 0.0
      %526 = vmatpush1.msra.mxu0 0.0
      %527 = vmatprep.subr.mxu0 0.0
      %528 = vmatpush1.msra.mxu0 0.0
      %529 = vmatprep.subr.mxu0 0.0
      %530 = vmatpush1.msra.mxu0 0.0
      %531 = vmatprep.subr.mxu0 0.0
      %532 = vmatpush1.msra.mxu0 0.0
      %533 = vmatprep.subr.mxu0 0.0
      %534 = vmatpush1.msra.mxu0 0.0
      %535 = vmatprep.subr.mxu0 0.0
      %536 = vmatpush1.msra.mxu0 0.0
      %537 = vmatprep.subr.mxu0 0.0
      %538 = vmatpush1.msra.mxu0 0.0
      %539 = vmatprep.subr.mxu0 0.0
      %540 = vmatpush1.msra.mxu0 0.0
      %541 = vmatprep.subr.mxu0 0.0
      %542 = vmatpush1.msra.mxu0 0.0
      %543 = vmatprep.subr.mxu0 0.0
      %544 = vmatpush1.msra.mxu0 0.0
      %545 = vmatprep.subr.mxu0 0.0
      %546 = vmatpush1.msra.mxu0 0.0
      %547 = vmatprep.subr.mxu0 0.0
      %548 = vmatpush1.msra.mxu0 0.0
      %549 = vmatprep.subr.mxu0 0.0
      %550 = vmatpush1.msra.mxu0 0.0
      %551 = vmatprep.subr.mxu0 0.0
      %552 = vmatpush1.msra.mxu0 0.0
      %553 = vmatprep.subr.mxu0 0.0
      %554 = vmatpush1.msra.mxu0 0.0
      %555 = vmatprep.subr.mxu0 0.0
      %556 = vmatpush1.msra.mxu0 0.0
      %557 = vmatprep.subr.mxu0 0.0
      %558 = vmatpush1.msra.mxu0 0.0
      %559 = vmatprep.subr.mxu0 0.0
      %560 = vmatpush1.msra.mxu0 0.0
      %561 = vmatprep.subr.mxu0 0.0
      %562 = vmatpush1.msra.mxu0 0.0
      %563 = vmatprep.subr.mxu0 0.0
      %564 = vmatpush1.msra.mxu0 0.0
      %565 = vmatprep.subr.mxu0 0.0
      %566 = vmatpush1.msra.mxu0 0.0
      %567 = vmatprep.subr.mxu0 0.0
      %568 = vmatpush1.msra.mxu0 0.0
      %569 = vmatprep.subr.mxu0 0.0
      %570 = vmatpush1.msra.mxu0 0.0
      %571 = vmatprep.subr.mxu0 0.0
      %572 = vmatpush1.msra.mxu0 0.0
      %573 = vmatprep.subr.mxu0 0.0
      %574 = vmatpush1.msra.mxu0 0.0
      %575 = vmatprep.subr.mxu0 0.0
      %576 = vmatpush1.msra.mxu0 0.0
      %577 = vmatprep.subr.mxu0 0.0
      %578 = vmatpush1.msra.mxu0 0.0
      %579 = vmatprep.mubr.f32.mxu0 0.0
      %580 = vmatmul.mubr.f32.gmra.mrb[0].mxu0 %v513
      %v581 = vpop.f32.mrb[0].mxu0
      %v582 = vadd.f32 0.0, %v581
      %v583 = vpop.f32.mrb[0].mxu0
      %584 = vdwg.mxu0
      %v585 = vmul.f32 %v582, %v510
      %v586 = vmul.f32 %v511, %v511
      %v587 = vsub.f32 %v585, %v586
      %v588 = vmax.f32 %v587, 0.0
      %v589 = vadd.f32 %v588, 1e-05
      %v590 = vrsqrt.pop %v589
      %v591 = vlaneseq
      %v592 = vshrl.u32 %v591, 7
      %v593 = vsub.s32 0, %v592
      %v594 = vrot.slane %v511, %v593
      %v595 = vsub.f32 %v230, %v594
      %v596 = vsub.f32 %v231, %v594
      %v597 = vsub.f32 %v232, %v594
      %v598 = vsub.f32 %v233, %v594
      %v599 = vsub.f32 %v234, %v594
      %v600 = vsub.f32 %v235, %v594
      %v601 = vsub.f32 %v236, %v594
      %v602 = vsub.f32 %v237, %v594
      %v603 = vsub.f32 %v238, %v594
      %v604 = vsub.f32 %v239, %v594
      %v605 = vsub.f32 %v240, %v594
      %v606 = vsub.f32 %v241, %v594
      %v607 = vsub.f32 %v242, %v594
      %v608 = vsub.f32 %v243, %v594
      %v609 = vsub.f32 %v244, %v594
      %v610 = vsub.f32 %v245, %v594
      %v611 = vsub.f32 %v246, %v594
      %v612 = vsub.f32 %v247, %v594
      %v613 = vsub.f32 %v248, %v594
      %v614 = vsub.f32 %v249, %v594
      %v615 = vsub.f32 %v250, %v594
      %v616 = vsub.f32 %v251, %v594
      %v617 = vsub.f32 %v252, %v594
      %v618 = vsub.f32 %v253, %v594
      %v619 = vsub.f32 %v254, %v594
      %v620 = vsub.f32 %v255, %v594
      %v621 = vsub.f32 %v256, %v594
      %v622 = vsub.f32 %v257, %v594
      %v623 = vsub.f32 %v258, %v594
      %v624 = vsub.f32 %v259, %v594
      %v625 = vsub.f32 %v260, %v594
      %v626 = vsub.f32 %v261, %v594
      %v627 = vlaneseq
      %v628 = vshrl.u32 %v627, 7
      %v629 = vsub.s32 0, %v628
      %v630 = vrot.slane %v590, %v629
      %v631 = vmul.f32 %v595, %v630
      %v632 = vmul.f32 %v596, %v630
      %v633 = vmul.f32 %v597, %v630
      %v634 = vmul.f32 %v598, %v630
      %v635 = vmul.f32 %v599, %v630
      %v636 = vmul.f32 %v600, %v630
      %v637 = vmul.f32 %v601, %v630
      %v638 = vmul.f32 %v602, %v630
      %v639 = vmul.f32 %v603, %v630
      %v640 = vmul.f32 %v604, %v630
      %v641 = vmul.f32 %v605, %v630
      %v642 = vmul.f32 %v606, %v630
      %v643 = vmul.f32 %v607, %v630
      %v644 = vmul.f32 %v608, %v630
      %v645 = vmul.f32 %v609, %v630
      %v646 = vmul.f32 %v610, %v630
      %v647 = vmul.f32 %v611, %v630
      %v648 = vmul.f32 %v612, %v630
      %v649 = vmul.f32 %v613, %v630
      %v650 = vmul.f32 %v614, %v630
      %v651 = vmul.f32 %v615, %v630
      %v652 = vmul.f32 %v616, %v630
      %v653 = vmul.f32 %v617, %v630
      %v654 = vmul.f32 %v618, %v630
      %v655 = vmul.f32 %v619, %v630
      %v656 = vmul.f32 %v620, %v630
      %v657 = vmul.f32 %v621, %v630
      %v658 = vmul.f32 %v622, %v630
      %v659 = vmul.f32 %v623, %v630
      %v660 = vmul.f32 %v624, %v630
      %v661 = vmul.f32 %v625, %v630
      %v662 = vmul.f32 %v626, %v630
      %v664 = vlaneseq
      %v665 = vshrl.u32 %v664, 7
      %v666 = vsub.s32 0, %v665
      %v667 = vrot.slane %v262, %v666
      %v669 = vmul.f32 %v631, %v667
      %v670 = vmul.f32 %v632, %v667
      %v671 = vmul.f32 %v633, %v667
      %v672 = vmul.f32 %v634, %v667
      %v673 = vmul.f32 %v635, %v667
      %v674 = vmul.f32 %v636, %v667
      %v675 = vmul.f32 %v637, %v667
      %v676 = vmul.f32 %v638, %v667
      %v677 = vmul.f32 %v639, %v667
      %v678 = vmul.f32 %v640, %v667
      %v679 = vmul.f32 %v641, %v667
      %v680 = vmul.f32 %v642, %v667
      %v681 = vmul.f32 %v643, %v667
      %v682 = vmul.f32 %v644, %v667
      %v683 = vmul.f32 %v645, %v667
      %v684 = vmul.f32 %v646, %v667
      %v685 = vmul.f32 %v647, %v667
      %v686 = vmul.f32 %v648, %v667
      %v687 = vmul.f32 %v649, %v667
      %v688 = vmul.f32 %v650, %v667
      %v689 = vmul.f32 %v651, %v667
      %v690 = vmul.f32 %v652, %v667
      %v691 = vmul.f32 %v653, %v667
      %v692 = vmul.f32 %v654, %v667
      %v693 = vmul.f32 %v655, %v667
      %v694 = vmul.f32 %v656, %v667
      %v695 = vmul.f32 %v657, %v667
      %v696 = vmul.f32 %v658, %v667
      %v697 = vmul.f32 %v659, %v667
      %v698 = vmul.f32 %v660, %v667
      %v699 = vmul.f32 %v661, %v667
      %v700 = vmul.f32 %v662, %v667
      %v702 = vlaneseq
      %v703 = vshrl.u32 %v702, 7
      %v704 = vsub.s32 0, %v703
      %v705 = vrot.slane %v263, %v704
      %v707 = vadd.f32 %v669, %v705
      %v708 = vadd.f32 %v670, %v705
      %v709 = vadd.f32 %v671, %v705
      %v710 = vadd.f32 %v672, %v705
      %v711 = vadd.f32 %v673, %v705
      %v712 = vadd.f32 %v674, %v705
      %v713 = vadd.f32 %v675, %v705
      %v714 = vadd.f32 %v676, %v705
      %v715 = vadd.f32 %v677, %v705
      %v716 = vadd.f32 %v678, %v705
      %v717 = vadd.f32 %v679, %v705
      %v718 = vadd.f32 %v680, %v705
      %v719 = vadd.f32 %v681, %v705
      %v720 = vadd.f32 %v682, %v705
      %v721 = vadd.f32 %v683, %v705
      %v722 = vadd.f32 %v684, %v705
      %v723 = vadd.f32 %v685, %v705
      %v724 = vadd.f32 %v686, %v705
      %v725 = vadd.f32 %v687, %v705
      %v726 = vadd.f32 %v688, %v705
      %v727 = vadd.f32 %v689, %v705
      %v728 = vadd.f32 %v690, %v705
      %v729 = vadd.f32 %v691, %v705
      %v730 = vadd.f32 %v692, %v705
      %v731 = vadd.f32 %v693, %v705
      %v732 = vadd.f32 %v694, %v705
      %v733 = vadd.f32 %v695, %v705
      %v734 = vadd.f32 %v696, %v705
      %v735 = vadd.f32 %v697, %v705
      %v736 = vadd.f32 %v698, %v705
      %v737 = vadd.f32 %v699, %v705
      %v738 = vadd.f32 %v700, %v705
      %v739 = vmax.f32 %v707, 0.0
      %v740 = vmax.f32 %v708, 0.0
      %v741 = vmax.f32 %v709, 0.0
      %v742 = vmax.f32 %v710, 0.0
      %v743 = vmax.f32 %v711, 0.0
      %v744 = vmax.f32 %v712, 0.0
      %v745 = vmax.f32 %v713, 0.0
      %v746 = vmax.f32 %v714, 0.0
      %v747 = vmax.f32 %v715, 0.0
      %v748 = vmax.f32 %v716, 0.0
      %v749 = vmax.f32 %v717, 0.0
      %v750 = vmax.f32 %v718, 0.0
      %v751 = vmax.f32 %v719, 0.0
      %v752 = vmax.f32 %v720, 0.0
      %v753 = vmax.f32 %v721, 0.0
      %v754 = vmax.f32 %v722, 0.0
      %v755 = vmax.f32 %v723, 0.0
      %v756 = vmax.f32 %v724, 0.0
      %v757 = vmax.f32 %v725, 0.0
      %v758 = vmax.f32 %v726, 0.0
      %v759 = vmax.f32 %v727, 0.0
      %v760 = vmax.f32 %v728, 0.0
      %v761 = vmax.f32 %v729, 0.0
      %v762 = vmax.f32 %v730, 0.0
      %v763 = vmax.f32 %v731, 0.0
      %v764 = vmax.f32 %v732, 0.0
      %v765 = vmax.f32 %v733, 0.0
      %v766 = vmax.f32 %v734, 0.0
      %v767 = vmax.f32 %v735, 0.0
      %v768 = vmax.f32 %v736, 0.0
      %v769 = vmax.f32 %v737, 0.0
      %v770 = vmax.f32 %v738, 0.0
      %v771 = vpack.c.bf16 %v740, %v739
      %v772 = vpack.c.bf16 %v742, %v741
      %v773 = vpack.c.bf16 %v744, %v743
      %v774 = vpack.c.bf16 %v746, %v745
      %v775 = vpack.c.bf16 %v748, %v747
      %v776 = vpack.c.bf16 %v750, %v749
      %v777 = vpack.c.bf16 %v752, %v751
      %v778 = vpack.c.bf16 %v754, %v753
      %v779 = vpack.c.bf16 %v756, %v755
      %v780 = vpack.c.bf16 %v758, %v757
      %v781 = vpack.c.bf16 %v760, %v759
      %v782 = vpack.c.bf16 %v762, %v761
      %v783 = vpack.c.bf16 %v764, %v763
      %v784 = vpack.c.bf16 %v766, %v765
      %v785 = vpack.c.bf16 %v768, %v767
      %v786 = vpack.c.bf16 %v770, %v769
      %v803 = vunpack.c.l.b16 %v771
      %v804 = vunpack.c.h.b16 %v771
      %v805 = vunpack.c.l.b16 %v772
      %v806 = vunpack.c.h.b16 %v772
      %v807 = vunpack.c.l.b16 %v773
      %v808 = vunpack.c.h.b16 %v773
      %v809 = vunpack.c.l.b16 %v774
      %v810 = vunpack.c.h.b16 %v774
      %v811 = vunpack.c.l.b16 %v775
      %v812 = vunpack.c.h.b16 %v775
      %v813 = vunpack.c.l.b16 %v776
      %v814 = vunpack.c.h.b16 %v776
      %v815 = vunpack.c.l.b16 %v777
      %v816 = vunpack.c.h.b16 %v777
      %v817 = vunpack.c.l.b16 %v778
      %v818 = vunpack.c.h.b16 %v778
      %v819 = vunpack.c.l.b16 %v779
      %v820 = vunpack.c.h.b16 %v779
      %v821 = vunpack.c.l.b16 %v780
      %v822 = vunpack.c.h.b16 %v780
      %v823 = vunpack.c.l.b16 %v781
      %v824 = vunpack.c.h.b16 %v781
      %v825 = vunpack.c.l.b16 %v782
      %v826 = vunpack.c.h.b16 %v782
      %v827 = vunpack.c.l.b16 %v783
      %v828 = vunpack.c.h.b16 %v783
      %v829 = vunpack.c.l.b16 %v784
      %v830 = vunpack.c.h.b16 %v784
      %v831 = vunpack.c.l.b16 %v785
      %v832 = vunpack.c.h.b16 %v785
      %v833 = vunpack.c.l.b16 %v786
      %v834 = vunpack.c.h.b16 %v786
      %v835 = vpack.c.b16 %v803, %v803
      %v836 = vpack.c.b16 %v804, %v804
      %v837 = vpack.c.b16 %v805, %v805
      %v838 = vpack.c.b16 %v806, %v806
      %v839 = vpack.c.b16 %v807, %v807
      %v840 = vpack.c.b16 %v808, %v808
      %v841 = vpack.c.b16 %v809, %v809
      %v842 = vpack.c.b16 %v810, %v810
      %v843 = vpack.c.b16 %v811, %v811
      %v844 = vpack.c.b16 %v812, %v812
      %v845 = vpack.c.b16 %v813, %v813
      %v846 = vpack.c.b16 %v814, %v814
      %v847 = vpack.c.b16 %v815, %v815
      %v848 = vpack.c.b16 %v816, %v816
      %v849 = vpack.c.b16 %v817, %v817
      %v850 = vpack.c.b16 %v818, %v818
      %v851 = vpack.c.b16 %v819, %v819
      %v852 = vpack.c.b16 %v820, %v820
      %v853 = vpack.c.b16 %v821, %v821
      %v854 = vpack.c.b16 %v822, %v822
      %v855 = vpack.c.b16 %v823, %v823
      %v856 = vpack.c.b16 %v824, %v824
      %v857 = vpack.c.b16 %v825, %v825
      %v858 = vpack.c.b16 %v826, %v826
      %v859 = vpack.c.b16 %v827, %v827
      %v860 = vpack.c.b16 %v828, %v828
      %v861 = vpack.c.b16 %v829, %v829
      %v862 = vpack.c.b16 %v830, %v830
      %v863 = vpack.c.b16 %v831, %v831
      %v864 = vpack.c.b16 %v832, %v832
      %v865 = vpack.c.b16 %v833, %v833
      %v866 = vpack.c.b16 %v834, %v834
      %vm899 = vcmask 125952
      %900 = vst.msk [vmem:[%s197] sm:$0xf] %vm899, %v835
      %901 = vst.msk [vmem:[%s197 + $0x4] sm:$0xf] %vm899, %v836
      %902 = vst.msk [vmem:[%s197 + $0x8] sm:$0xf] %vm899, %v837
      %903 = vst.msk [vmem:[%s197 + $0xc] sm:$0xf] %vm899, %v838
      %904 = vst.msk [vmem:[%s197 + $0x10] sm:$0xf] %vm899, %v839
      %905 = vst.msk [vmem:[%s197 + $0x14] sm:$0xf] %vm899, %v840
      %906 = vst.msk [vmem:[%s197 + $0x18] sm:$0xf] %vm899, %v841
      %907 = vst.msk [vmem:[%s197 + $0x1c] sm:$0xf] %vm899, %v842
      %908 = vst.msk [vmem:[%s197 + $0x20] sm:$0xf] %vm899, %v843
      %909 = vst.msk [vmem:[%s197 + $0x24] sm:$0xf] %vm899, %v844
      %910 = vst.msk [vmem:[%s197 + $0x28] sm:$0xf] %vm899, %v845
      %911 = vst.msk [vmem:[%s197 + $0x2c] sm:$0xf] %vm899, %v846
      %912 = vst.msk [vmem:[%s197 + $0x30] sm:$0xf] %vm899, %v847
      %913 = vst.msk [vmem:[%s197 + $0x34] sm:$0xf] %vm899, %v848
      %914 = vst.msk [vmem:[%s197 + $0x38] sm:$0xf] %vm899, %v849
      %915 = vst.msk [vmem:[%s197 + $0x3c] sm:$0xf] %vm899, %v850
      %916 = vst.msk [vmem:[%s197 + $0x40] sm:$0xf] %vm899, %v851
      %917 = vst.msk [vmem:[%s197 + $0x44] sm:$0xf] %vm899, %v852
      %918 = vst.msk [vmem:[%s197 + $0x48] sm:$0xf] %vm899, %v853
      %919 = vst.msk [vmem:[%s197 + $0x4c] sm:$0xf] %vm899, %v854
      %920 = vst.msk [vmem:[%s197 + $0x50] sm:$0xf] %vm899, %v855
      %921 = vst.msk [vmem:[%s197 + $0x54] sm:$0xf] %vm899, %v856
      %922 = vst.msk [vmem:[%s197 + $0x58] sm:$0xf] %vm899, %v857
      %923 = vst.msk [vmem:[%s197 + $0x5c] sm:$0xf] %vm899, %v858
      %924 = vst.msk [vmem:[%s197 + $0x60] sm:$0xf] %vm899, %v859
      %925 = vst.msk [vmem:[%s197 + $0x64] sm:$0xf] %vm899, %v860
      %926 = vst.msk [vmem:[%s197 + $0x68] sm:$0xf] %vm899, %v861
      %927 = vst.msk [vmem:[%s197 + $0x6c] sm:$0xf] %vm899, %v862
      %928 = vst.msk [vmem:[%s197 + $0x70] sm:$0xf] %vm899, %v863
      %929 = vst.msk [vmem:[%s197 + $0x74] sm:$0xf] %vm899, %v864
      %930 = vst.msk [vmem:[%s197 + $0x78] sm:$0xf] %vm899, %v865
      %931 = vst.msk [vmem:[%s197 + $0x7c] sm:$0xf] %vm899, %v866
      %p932 = scmp.lt.s32.totalorder %s15, 1
      %s933 = scalar_select %p932, %s15, 1
      %s934 = smul.addr %s933, 32
      %s935 = smul.addr %s934, 4
      %s936 = scalar_lea.vmem %s4, %s935
      // Predicated region
      $region37: #{_lambda_.4} parent=35 // pred_check
        %p937 = pneg %p122
      $region38: #{_lambda_.4} parent=35 // pred_check_branch
        %939 = sbr.rel (%p937) target = $region40
      $region39: #{_lambda_.4} parent=35 // pred_region
        _
      $region40: #{_lambda_.4} parent=35 // pred_fallthru
        _
    $region36: #{_lambda_.4} parent=5 // pred_fallthru
      _
    %p940 = scmp.le.s32.totalorder 2, %s10
    // Predicated region
    $region41: #{_lambda_.4} parent=5 // pred_check
      %p941 = pneg %p940
    $region42: #{_lambda_.4} parent=5 // pred_check_branch
      %943 = sbr.rel (%p941) target = $region44
    $region43: #{_lambda_.4} parent=5 // pred_region
      %s944 = ssub.s32 %s10, 2
      // Predicated region
      $region45: #{_lambda_.4} parent=43 // pred_check
        %p945 = pneg %p128
      $region46: #{_lambda_.4} parent=43 // pred_check_branch
        %947 = sbr.rel (%p945) target = $region48
      $region47: #{_lambda_.4} parent=43 // pred_region
        %p948 = scmp.lt.s32.totalorder %s16, 1
        %s949 = scalar_select %p948, %s16, 1
        %s950 = smul.addr %s949, 32
        %s951 = smul.addr %s950, 4
        %s952 = scalar_lea.vmem %s4, %s951
      $region48: #{_lambda_.4} parent=43 // pred_fallthru
        _
    $region44: #{_lambda_.4} parent=5 // pred_fallthru
      _
  $region6: #{_lambda_.4} parent=0 // loop_footer
    %s14 = sadd.s32 1, %s10
  $region7: #{_lambda_.4} parent=0 // loop_footer_branch
    %9 = sbr.rel target = $region3
  $region8: #{_lambda_.4} parent=0 // loop_exit
    _

// kernel: _lambda_.6
$region0: #{_lambda_.6}
  #allocation0 [shape = 'u32[]', space=smem, size = 0x4, offset = 0x4, fixed_abs, tag = 'smem constant byte address 0x4 - core index']
  #allocation1 [shape = 'u32[144,128]{1,0:T(1,128)}', space=vmem, size = 0x12000, scoped, tag = 'internal scratch']
  %s0 = inlined_call_operand.vmem [shape: bf16[2,10,10,32], index: 0, kind: input, shape index: {}]
  %s1 = inlined_call_operand.vmem [shape: bf16[9,32,32], index: 1, kind: input, shape index: {}]
  %s2 = inlined_call_operand.vmem [shape: bf16[2,64,32], index: 2, kind: input, shape index: {}]
  %s3 = inlined_call_operand.vmem [shape: bf16[2,64,32], index: 3, kind: output, shape index: {}]
  %s4 = sld [smem:[#allocation0]]
  $region45: #{_lambda_.6} parent=0
    _
  %s6 = ssub.s32 1, %s4
  %s7 = scalar_select 0, %s6, %s4
  loop: start=0, step=1, limit=4
  $region2: #{_lambda_.6} parent=0 // loop_pre_header
    _
  $region3: #{_lambda_.6} parent=0 // loop_header
    %s9 = sphi 0, %s13
    %p10 = scmp.ge.s32.totalorder %s9, 4
    %s19 = sphi 0, %s21
    %s22 = sphi 0, %s19
    %s23 = sphi 0, %s22
    %s39 = sphi 0, %s23
    %s43 = sphi 0, %s43
    %s45 = sphi 0, %s43
    %s46 = sphi 0, %s45
    %s60 = sphi 0, %s46
    %s66 = sphi 0, %s68
    %s69 = sphi 0, %s66
    %s70 = sphi 0, %s69
    %s86 = sphi 0, %s70
    %s92 = sphi 0, %s94
    %s95 = sphi 0, %s92
    %s96 = sphi 0, %s95
    %s112 = sphi 0, %s96
  $region4: #{_lambda_.6} parent=0 // loop_header_branch
    %12 = sbr.rel (%p10) target = $region8
  $region5: #{_lambda_.6} parent=0 // loop_body
    %s14 = ssub.s32 %s9, 1
    %s15 = ssub.s32 %s9, 2
    %s16 = sadd.s32 %s9, 1
    %s17 = ssub.s32 %s9, %s16
    %p18 = scmp.eq.s32.totalorder %s17, 0
    %s20 = sadd.s32 %s19, 1
    %s21 = scalar_select %p18, %s19, %s20
    %p24 = pneg %p18
    %p25 = scmp.eq.s32.totalorder %s9, 1
    %p26 = por %p24, %p25
    %p27 = scmp.ne.s32.totalorder %s19, %s22
    %p28 = scmp.eq.s32.totalorder %s9, 0
    %p29 = por %p27, %p28
    %p30 = scmp.ne.s32.totalorder %s19, %s22
    %p31 = scmp.eq.s32.totalorder %s14, 1
    %p32 = por %p30, %p31
    %p33 = scmp.ne.s32.totalorder %s22, %s23
    %p34 = scmp.eq.s32.totalorder %s14, 0
    %p35 = por %p33, %p34
    %p36 = scmp.ne.s32.totalorder %s22, %s23
    %p37 = scmp.eq.s32.totalorder %s15, 1
    %p38 = por %p36, %p37
    %p40 = scmp.ne.s32.totalorder %s23, %s39
    %p41 = scmp.eq.s32.totalorder %s15, 0
    %p42 = por %p40, %p41
    %s44 = sadd.s32 %s43, 1
    %p47 = scmp.eq.s32.totalorder %s9, 1
    %p48 = scmp.ne.s32.totalorder %s43, %s45
    %p49 = scmp.eq.s32.totalorder %s9, 0
    %p50 = por %p48, %p49
    %p51 = scmp.ne.s32.totalorder %s43, %s45
    %p52 = scmp.eq.s32.totalorder %s14, 1
    %p53 = por %p51, %p52
    %p54 = scmp.ne.s32.totalorder %s45, %s46
    %p55 = scmp.eq.s32.totalorder %s14, 0
    %p56 = por %p54, %p55
    %p57 = scmp.ne.s32.totalorder %s45, %s46
    %p58 = scmp.eq.s32.totalorder %s15, 1
    %p59 = por %p57, %p58
    %p61 = scmp.ne.s32.totalorder %s46, %s60
    %p62 = scmp.eq.s32.totalorder %s15, 0
    %p63 = por %p61, %p62
    %s64 = ssub.s32 %s9, %s16
    %p65 = scmp.eq.s32.totalorder %s64, 0
    %s67 = sadd.s32 %s66, 1
    %s68 = scalar_select %p65, %s66, %s67
    %p71 = pneg %p65
    %p72 = scmp.eq.s32.totalorder %s9, 1
    %p73 = por %p71, %p72
    %p74 = scmp.ne.s32.totalorder %s66, %s69
    %p75 = scmp.eq.s32.totalorder %s9, 0
    %p76 = por %p74, %p75
    %p77 = scmp.ne.s32.totalorder %s66, %s69
    %p78 = scmp.eq.s32.totalorder %s14, 1
    %p79 = por %p77, %p78
    %p80 = scmp.ne.s32.totalorder %s69, %s70
    %p81 = scmp.eq.s32.totalorder %s14, 0
    %p82 = por %p80, %p81
    %p83 = scmp.ne.s32.totalorder %s69, %s70
    %p84 = scmp.eq.s32.totalorder %s15, 1
    %p85 = por %p83, %p84
    %p87 = scmp.ne.s32.totalorder %s70, %s86
    %p88 = scmp.eq.s32.totalorder %s15, 0
    %p89 = por %p87, %p88
    %s90 = ssub.s32 %s9, %s16
    %p91 = scmp.eq.s32.totalorder %s90, 0
    %s93 = sadd.s32 %s92, 1
    %s94 = scalar_select %p91, %s92, %s93
    %p97 = pneg %p91
    %p98 = scmp.eq.s32.totalorder %s9, 1
    %p99 = por %p97, %p98
    %p100 = scmp.ne.s32.totalorder %s92, %s95
    %p101 = scmp.eq.s32.totalorder %s9, 0
    %p102 = por %p100, %p101
    %p103 = scmp.ne.s32.totalorder %s92, %s95
    %p104 = scmp.eq.s32.totalorder %s14, 1
    %p105 = por %p103, %p104
    %p106 = scmp.ne.s32.totalorder %s95, %s96
    %p107 = scmp.eq.s32.totalorder %s14, 0
    %p108 = por %p106, %p107
    %p109 = scmp.ne.s32.totalorder %s95, %s96
    %p110 = scmp.eq.s32.totalorder %s15, 1
    %p111 = por %p109, %p110
    %p113 = scmp.ne.s32.totalorder %s96, %s112
    %p114 = scmp.eq.s32.totalorder %s15, 0
    %p115 = por %p113, %p114
    %p116 = scmp.le.s32.totalorder 1, %s9
    %p117 = scmp.lt.s32.totalorder %s9, 3
    %p118 = pnand %p116, %p117
    %p119 = pneg %p118
    // Predicated region
    $region9: #{_lambda_.6} parent=5 // pred_check
      _
    $region10: #{_lambda_.6} parent=5 // pred_check_branch
      %121 = sbr.rel (%p118) target = $region12
    $region11: #{_lambda_.6} parent=5 // pred_region
      %s122 = ssub.s32 %s9, 1
      // Predicated region
      $region13: #{_lambda_.6} parent=11 // pred_check
        %p123 = pneg %p56
      $region14: #{_lambda_.6} parent=11 // pred_check_branch
        %125 = sbr.rel (%p123) target = $region16
      $region15: #{_lambda_.6} parent=11 // pred_region
        _
      $region16: #{_lambda_.6} parent=11 // pred_fallthru
        _
    $region12: #{_lambda_.6} parent=5 // pred_fallthru
      _
    %p126 = scmp.lt.s32.totalorder %s9, 2
    // Predicated region
    $region17: #{_lambda_.6} parent=5 // pred_check
      %p127 = pneg %p126
    $region18: #{_lambda_.6} parent=5 // pred_check_branch
      %129 = sbr.rel (%p127) target = $region20
    $region19: #{_lambda_.6} parent=5 // pred_region
      // Predicated region
      $region21: #{_lambda_.6} parent=19 // pred_check
        %p130 = pneg %p29
      $region22: #{_lambda_.6} parent=19 // pred_check_branch
        %132 = sbr.rel (%p130) target = $region24
      $region23: #{_lambda_.6} parent=19 // pred_region
        %p133 = scmp.lt.s32.totalorder %s9, 1
        %s134 = scalar_select %p133, %s9, 1
        %s135 = smul.addr %s134, 20
        %s136 = smul.addr %s135, 4
        %s137 = scalar_lea.vmem %s0, %s136
      $region24: #{_lambda_.6} parent=19 // pred_fallthru
        _
      // Predicated region
      $region25: #{_lambda_.6} parent=19 // pred_check
        %p138 = pneg %p76
      $region26: #{_lambda_.6} parent=19 // pred_check_branch
        %140 = sbr.rel (%p138) target = $region28
      $region27: #{_lambda_.6} parent=19 // pred_region
        %p141 = scmp.lt.s32.totalorder %s9, 1
        %s142 = scalar_select %p141, %s9, 1
        %s143 = smul.addr %s142, 8
        %s144 = smul.addr %s143, 4
        %s145 = scalar_lea.vmem %s2, %s144
      $region28: #{_lambda_.6} parent=19 // pred_fallthru
        _
    $region20: #{_lambda_.6} parent=5 // pred_fallthru
      _
    %p146 = scmp.le.s32.totalorder 1, %s9
    %p147 = scmp.lt.s32.totalorder %s9, 3
    %p148 = pnand %p146, %p147
    %p149 = pneg %p148
    // Predicated region
    $region29: #{_lambda_.6} parent=5 // pred_check
      _
    $region30: #{_lambda_.6} parent=5 // pred_check_branch
      %151 = sbr.rel (%p148) target = $region32
    $region31: #{_lambda_.6} parent=5 // pred_region
      %s152 = ssub.s32 %s9, 1
      %p153 = scmp.lt.s32.totalorder %s14, 1
      %s154 = scalar_select %p153, %s14, 1
      %s155 = smul.addr %s154, 20
      %s156 = smul.addr %s155, 4
      %s157 = scalar_lea.vmem %s0, %s156
      %p158 = pneg %p35
      %p159 = pneg %p32
      %p160 = pneg %p56
      %p161 = pneg %p53
      %p162 = scmp.lt.s32.totalorder %s14, 1
      %s163 = scalar_select %p162, %s14, 1
      %s164 = smul.addr %s163, 8
      %s165 = smul.addr %s164, 4
      %s166 = scalar_lea.vmem %s2, %s165
      %p167 = pneg %p82
      %p168 = pneg %p79
      %p169 = pneg %p108
      %p170 = pneg %p105
      %p171 = scmp.lt.s32.totalorder %s14, 1
      %s172 = scalar_select %p171, %s14, 1
      %s173 = smul.addr %s172, 8
      %s174 = smul.addr %s173, 4
      %s175 = scalar_lea.vmem %s3, %s174
      %p176 = scmp.lt.s32.totalorder %s14, 1
      %s177 = scalar_select %p176, %s14, 1
      %s178 = smul.addr %s177, 20
      %s179 = smul.addr %s178, 4
      %s180 = scalar_lea.vmem %s0, %s179
      %p181 = scmp.lt.s32.totalorder %s14, 1
      %s182 = scalar_select %p181, %s14, 1
      %s183 = smul.addr %s182, 8
      %s184 = smul.addr %s183, 4
      %s185 = scalar_lea.vmem %s2, %s184
      %p186 = scmp.lt.s32.totalorder %s14, 1
      %s187 = scalar_select %p186, %s14, 1
      %s188 = smul.addr %s187, 8
      %s189 = smul.addr %s188, 4
      %s190 = scalar_lea.vmem %s3, %s189
      %v192 = vld [vmem:[%s180] sm:$0xf]
      %v193 = vld [vmem:[%s180 + $0x8] sm:$0xf]
      %v194 = vld [vmem:[%s180 + $0x10] sm:$0xf]
      %v195 = vld [vmem:[%s180 + $0x18] sm:$0xf]
      %v196 = vld [vmem:[%s180 + $0x20] sm:$0xf]
      %v197 = vld [vmem:[%s180 + $0x28] sm:$0xf]
      %v198 = vld [vmem:[%s180 + $0x30] sm:$0xf]
      %v199 = vld [vmem:[%s180 + $0x38] sm:$0xf]
      %v200 = vunpack.c.l.bf16 %v192
      %v201 = vunpack.c.l.bf16 %v193
      %v202 = vunpack.c.l.bf16 %v194
      %v203 = vunpack.c.l.bf16 %v195
      %v204 = vunpack.c.l.bf16 %v196
      %v205 = vunpack.c.l.bf16 %v197
      %v206 = vunpack.c.l.bf16 %v198
      %v207 = vunpack.c.l.bf16 %v199
      %v208 = vpack.c.bf16 %v201, %v200
      %v209 = vpack.c.bf16 %v203, %v202
      %v210 = vpack.c.bf16 %v205, %v204
      %v211 = vpack.c.bf16 %v207, %v206
      %v212 = vld [vmem:[%s1] sm:$0xf]
      %v213 = vld [vmem:[%s1 + $0x4] sm:$0xf]
      %v214 = vld [vmem:[%s1 + $0x8] sm:$0xf]
      %v215 = vld [vmem:[%s1 + $0xc] sm:$0xf]
      %v216 = vld [vmem:[%s180 + $0x4] sm:$0x1]
      %v217 = vld [vmem:[%s180 + $0xc] sm:$0x1]
      %v218 = vld [vmem:[%s180 + $0x14] sm:$0x1]
      %v219 = vld [vmem:[%s180 + $0x1c] sm:$0x1]
      %v220 = vld [vmem:[%s180 + $0x24] sm:$0x1]
      %v221 = vld [vmem:[%s180 + $0x2c] sm:$0x1]
      %v222 = vld [vmem:[%s180 + $0x34] sm:$0x1]
      %v223 = vld [vmem:[%s180 + $0x3c] sm:$0x1]
      %v224 = vunpack.c.l.bf16 %v216
      %v225 = vunpack.c.l.bf16 %v217
      %v226 = vunpack.c.l.bf16 %v218
      %v227 = vunpack.c.l.bf16 %v219
      %v228 = vunpack.c.l.bf16 %v220
      %v229 = vunpack.c.l.bf16 %v221
      %v230 = vunpack.c.l.bf16 %v222
      %v231 = vunpack.c.l.bf16 %v223
      %vm248 = vcmask 1046528
      %v249 = vrot.slane %v200, 1
      %v250 = vrot.slane %v224, 1
      %v251 = vsel %vm248, %v249, %v250
      %v252 = vrot.slane %v201, 1
      %v253 = vrot.slane %v225, 1
      %v254 = vsel %vm248, %v252, %v253
      %v255 = vrot.slane %v202, 1
      %v256 = vrot.slane %v226, 1
      %v257 = vsel %vm248, %v255, %v256
      %v258 = vrot.slane %v203, 1
      %v259 = vrot.slane %v227, 1
      %v260 = vsel %vm248, %v258, %v259
      %v261 = vrot.slane %v204, 1
      %v262 = vrot.slane %v228, 1
      %v263 = vsel %vm248, %v261, %v262
      %v264 = vrot.slane %v205, 1
      %v265 = vrot.slane %v229, 1
      %v266 = vsel %vm248, %v264, %v265
      %v267 = vrot.slane %v206, 1
      %v268 = vrot.slane %v230, 1
      %v269 = vsel %vm248, %v267, %v268
      %v270 = vrot.slane %v207, 1
      %v271 = vrot.slane %v231, 1
      %v272 = vsel %vm248, %v270, %v271
      %v281 = vpack.c.bf16 %v254, %v251
      %v282 = vpack.c.bf16 %v260, %v257
      %v283 = vpack.c.bf16 %v266, %v263
      %v284 = vpack.c.bf16 %v272, %v269
      %s285 = scalar_lea.vmem %s1, 16
      %v286 = vld [vmem:[%s285] sm:$0xf]
      %v287 = vld [vmem:[%s285 + $0x4] sm:$0xf]
      %v288 = vld [vmem:[%s285 + $0x8] sm:$0xf]
      %v289 = vld [vmem:[%s285 + $0xc] sm:$0xf]
      %v294 = vunpack.c.l.b16 %v286
      %v295 = vunpack.c.l.b16 %v287
      %v296 = vunpack.c.l.b16 %v288
      %v297 = vunpack.c.l.b16 %v289
      %v298 = vpack.c.b16 %v295, %v294
      %v299 = vpack.c.b16 %v297, %v296
      %vm302 = vcmask 261120
      %v304 = vsel %vm302, %v281, 0
      %v307 = vsel %vm302, %v282, 0
      %v310 = vsel %vm302, %v283, 0
      %v313 = vsel %vm302, %v284, 0
      %315 = vmatprep.subr.bf16.mxu0 0
      %316 = vmatpush1.bf16.msra.mxu0 %v298
      %317 = vmatprep.subr.bf16.mxu0 0
      %318 = vmatpush1.bf16.msra.mxu0 %v299
      %319 = vmatprep.subr.bf16.mxu0 0
      %320 = vmatpush1.bf16.msra.mxu0 0
      %321 = vmatprep.subr.bf16.mxu0 0
      %322 = vmatpush1.bf16.msra.mxu0 0
      %323 = vmatprep.subr.bf16.mxu0 0
      %324 = vmatpush1.bf16.msra.mxu0 0
      %325 = vmatprep.subr.bf16.mxu0 0
      %326 = vmatpush1.bf16.msra.mxu0 0
      %327 = vmatprep.subr.bf16.mxu0 0
      %328 = vmatpush1.bf16.msra.mxu0 0
      %329 = vmatprep.subr.bf16.mxu0 0
      %330 = vmatpush1.bf16.msra.mxu0 0
      %331 = vmatprep.subr.bf16.mxu0 0
      %332 = vmatpush1.bf16.msra.mxu0 0
      %333 = vmatprep.subr.bf16.mxu0 0
      %334 = vmatpush1.bf16.msra.mxu0 0
      %335 = vmatprep.subr.bf16.mxu0 0
      %336 = vmatpush1.bf16.msra.mxu0 0
      %337 = vmatprep.subr.bf16.mxu0 0
      %338 = vmatpush1.bf16.msra.mxu0 0
      %339 = vmatprep.subr.bf16.mxu0 0
      %340 = vmatpush1.bf16.msra.mxu0 0
      %341 = vmatprep.subr.bf16.mxu0 0
      %342 = vmatpush1.bf16.msra.mxu0 0
      %343 = vmatprep.subr.bf16.mxu0 0
      %344 = vmatpush1.bf16.msra.mxu0 0
      %345 = vmatprep.subr.bf16.mxu0 0
      %346 = vmatpush1.bf16.msra.mxu0 0
      %347 = vmatprep.mubr.bf16.mxu0 0
      %348 = vmatmul.mubr.bf16.gmra.mrb[0].mxu0 %v304
      %v349 = vpop.f32.mrb[0].mxu0
      %v350 = vadd.f32 0.0, %v349
      %v351 = vpop.f32.mrb[0].mxu0
      %v352 = vpop.f32.mrb[0].mxu0
      %v353 = vadd.f32 0.0, %v352
      %v354 = vpop.f32.mrb[0].mxu0
      %355 = vmatprep.mubr.bf16.mxu0 0
      %356 = vmatmul.mubr.bf16.gmra.mrb[0].mxu0 %v307
      %v357 = vpop.f32.mrb[0].mxu0
      %v358 = vadd.f32 0.0, %v357
      %v359 = vpop.f32.mrb[0].mxu0
      %v360 = vpop.f32.mrb[0].mxu0
      %v361 = vadd.f32 0.0, %v360
      %v362 = vpop.f32.mrb[0].mxu0
      %363 = vmatprep.mubr.bf16.mxu0 0
      %364 = vmatmul.mubr.bf16.gmra.mrb[0].mxu0 %v310
      %v365 = vpop.f32.mrb[0].mxu0
      %v366 = vadd.f32 0.0, %v365
      %v367 = vpop.f32.mrb[0].mxu0
      %v368 = vpop.f32.mrb[0].mxu0
      %v369 = vadd.f32 0.0, %v368
      %v370 = vpop.f32.mrb[0].mxu0
      %371 = vmatprep.mubr.bf16.mxu0 0
      %372 = vmatmul.mubr.bf16.gmra.mrb[0].mxu0 %v313
      %v373 = vpop.f32.mrb[0].mxu0
      %v374 = vadd.f32 0.0, %v373
      %v375 = vpop.f32.mrb[0].mxu0
      %v376 = vpop.f32.mrb[0].mxu0
      %v377 = vadd.f32 0.0, %v376
      %v378 = vpop.f32.mrb[0].mxu0
      %379 = vdwg.mxu0
      %v384 = vunpack.c.l.b16 %v212
      %v385 = vunpack.c.l.b16 %v213
      %v386 = vunpack.c.l.b16 %v214
      %v387 = vunpack.c.l.b16 %v215
      %v388 = vpack.c.b16 %v385, %v384
      %v389 = vpack.c.b16 %v387, %v386
      %v393 = vsel %vm302, %v208, 0
      %v396 = vsel %vm302, %v209, 0
      %v399 = vsel %vm302, %v210, 0
      %v402 = vsel %vm302, %v211, 0
      %404 = vmatprep.subr.bf16.mxu0 0
      %405 = vmatpush1.bf16.msra.mxu0 %v388
      %406 = vmatprep.subr.bf16.mxu0 0
      %407 = vmatpush1.bf16.msra.mxu0 %v389
      %408 = vmatprep.subr.bf16.mxu0 0
      %409 = vmatpush1.bf16.msra.mxu0 0
      %410 = vmatprep.subr.bf16.mxu0 0
      %411 = vmatpush1.bf16.msra.mxu0 0
      %412 = vmatprep.subr.bf16.mxu0 0
      %413 = vmatpush1.bf16.msra.mxu0 0
      %414 = vmatprep.subr.bf16.mxu0 0
      %415 = vmatpush1.bf16.msra.mxu0 0
      %416 = vmatprep.subr.bf16.mxu0 0
      %417 = vmatpush1.bf16.msra.mxu0 0
      %418 = vmatprep.subr.bf16.mxu0 0
      %419 = vmatpush1.bf16.msra.mxu0 0
      %420 = vmatprep.subr.bf16.mxu0 0
      %421 = vmatpush1.bf16.msra.mxu0 0
      %422 = vmatprep.subr.bf16.mxu0 0
      %423 = vmatpush1.bf16.msra.mxu0 0
      %424 = vmatprep.subr.bf16.mxu0 0
      %425 = vmatpush1.bf16.msra.mxu0 0
      %426 = vmatprep.subr.bf16.mxu0 0
      %427 = vmatpush1.bf16.msra.mxu0 0
      %428 = vmatprep.subr.bf16.mxu0 0
      %429 = vmatpush1.bf16.msra.mxu0 0
      %430 = vmatprep.subr.bf16.mxu0 0
      %431 = vmatpush1.bf16.msra.mxu0 0
      %432 = vmatprep.subr.bf16.mxu0 0
      %433 = vmatpush1.bf16.msra.mxu0 0
      %434 = vmatprep.subr.bf16.mxu0 0
      %435 = vmatpush1.bf16.msra.mxu0 0
      %436 = vmatprep.mubr.bf16.mxu0 0
      %437 = vmatmul.mubr.bf16.gmra.mrb[0].mxu0 %v393
      %v438 = vpop.f32.mrb[0].mxu0
      %v439 = vadd.f32 %v350, %v438
      %v440 = vpop.f32.mrb[0].mxu0
      %v441 = vpop.f32.mrb[0].mxu0
      %v442 = vadd.f32 %v353, %v441
      %v443 = vpop.f32.mrb[0].mxu0
      %444 = vmatprep.mubr.bf16.mxu0 0
      %445 = vmatmul.mubr.bf16.gmra.mrb[0].mxu0 %v396
      %v446 = vpop.f32.mrb[0].mxu0
      %v447 = vadd.f32 %v358, %v446
      %v448 = vpop.f32.mrb[0].mxu0
      %v449 = vpop.f32.mrb[0].mxu0
      %v450 = vadd.f32 %v361, %v449
      %v451 = vpop.f32.mrb[0].mxu0
      %452 = vmatprep.mubr.bf16.mxu0 0
      %453 = vmatmul.mubr.bf16.gmra.mrb[0].mxu0 %v399
      %v454 = vpop.f32.mrb[0].mxu0
      %v455 = vadd.f32 %v366, %v454
      %v456 = vpop.f32.mrb[0].mxu0
      %v457 = vpop.f32.mrb[0].mxu0
      %v458 = vadd.f32 %v369, %v457
      %v459 = vpop.f32.mrb[0].mxu0
      %460 = vmatprep.mubr.bf16.mxu0 0
      %461 = vmatmul.mubr.bf16.gmra.mrb[0].mxu0 %v402
      %v462 = vpop.f32.mrb[0].mxu0
      %v463 = vadd.f32 %v374, %v462
      %v464 = vpop.f32.mrb[0].mxu0
      %v465 = vpop.f32.mrb[0].mxu0
      %v466 = vadd.f32 %v377, %v465
      %v467 = vpop.f32.mrb[0].mxu0
      %468 = vdwg.mxu0
      %v469 = vld [vmem:[%s180] sm:$0xe]
      %v470 = vld [vmem:[%s180 + $0x8] sm:$0xe]
      %v471 = vld [vmem:[%s180 + $0x10] sm:$0xe]
      %v472 = vld [vmem:[%s180 + $0x18] sm:$0xe]
      %v473 = vld [vmem:[%s180 + $0x20] sm:$0xe]
      %v474 = vld [vmem:[%s180 + $0x28] sm:$0xe]
      %v475 = vld [vmem:[%s180 + $0x30] sm:$0xe]
      %v476 = vld [vmem:[%s180 + $0x38] sm:$0xe]
      %v477 = vunpack.c.l.bf16 %v469
      %v478 = vunpack.c.l.bf16 %v470
      %v479 = vunpack.c.l.bf16 %v471
      %v480 = vunpack.c.l.bf16 %v472
      %v481 = vunpack.c.l.bf16 %v473
      %v482 = vunpack.c.l.bf16 %v474
      %v483 = vunpack.c.l.bf16 %v475
      %v484 = vunpack.c.l.bf16 %v476
      %vm493 = vcmask 1045504
      %v494 = vrot.slane %v477, 2
      %v495 = vrot.slane %v224, 2
      %v496 = vsel %vm493, %v494, %v495
      %v497 = vrot.slane %v478, 2
      %v498 = vrot.slane %v225, 2
      %v499 = vsel %vm493, %v497, %v498
      %v500 = vrot.slane %v479, 2
      %v501 = vrot.slane %v226, 2
      %v502 = vsel %vm493, %v500, %v501
      %v503 = vrot.slane %v480, 2
      %v504 = vrot.slane %v227, 2
      %v505 = vsel %vm493, %v503, %v504
      %v506 = vrot.slane %v481, 2
      %v507 = vrot.slane %v228, 2
      %v508 = vsel %vm493, %v506, %v507
      %v509 = vrot.slane %v482, 2
      %v510 = vrot.slane %v229, 2
      %v511 = vsel %vm493, %v509, %v510
      %v512 = vrot.slane %v483, 2
      %v513 = vrot.slane %v230, 2
      %v514 = vsel %vm493, %v512, %v513
      %v515 = vrot.slane %v484, 2
      %v516 = vrot.slane %v231, 2
      %v517 = vsel %vm493, %v515, %v516
      %v526 = vpack.c.bf16 %v499, %v496
      %v527 = vpack.c.bf16 %v505, %v502
      %v528 = vpack.c.bf16 %v511, %v508
      %v529 = vpack.c.bf16 %v517, %v514
      %s530 = scalar_lea.vmem %s1, 32
      %v531 = vld [vmem:[%s530] sm:$0xf]
      %v532 = vld [vmem:[%s530 + $0x4] sm:$0xf]
      %v533 = vld [vmem:[%s530 + $0x8] sm:$0xf]
      %v534 = vld [vmem:[%s530 + $0xc] sm:$0xf]
      %v539 = vunpack.c.l.b16 %v531
      %v540 = vunpack.c.l.b16 %v532
      %v541 = vunpack.c.l.b16 %v533
      %v542 = vunpack.c.l.b16 %v534
      %v543 = vpack.c.b16 %v540, %v539
      %v544 = vpack.c.b16 %v542, %v541
      %v548 = vsel %vm302, %v526, 0
      %v551 = vsel %vm302, %v527, 0
      %v554 = vsel %vm302, %v528, 0
      %v557 = vsel %vm302, %v529, 0
      %559 = vmatprep.subr.bf16.mxu0 0
      %560 = vmatpush1.bf16.msra.mxu0 %v543
      %561 = vmatprep.subr.bf16.mxu0 0
      %562 = vmatpush1.bf16.msra.mxu0 %v544
      %563 = vmatprep.subr.bf16.mxu0 0
      %564 = vmatpush1.bf16.msra.mxu0 0
      %565 = vmatprep.subr.bf16.mxu0 0
      %566 = vmatpush1.bf16.msra.mxu0 0
      %567 = vmatprep.subr.bf16.mxu0 0
      %568 = vmatpush1.bf16.msra.mxu0 0
      %569 = vmatprep.subr.bf16.mxu0 0
      %570 = vmatpush1.bf16.msra.mxu0 0
      %571 = vmatprep.subr.bf16.mxu0 0
      %572 = vmatpush1.bf16.msra.mxu0 0
      %573 = vmatprep.subr.bf16.mxu0 0
      %574 = vmatpush1.bf16.msra.mxu0 0
      %575 = vmatprep.subr.bf16.mxu0 0
      %576 = vmatpush1.bf16.msra.mxu0 0
      %577 = vmatprep.subr.bf16.mxu0 0
      %578 = vmatpush1.bf16.msra.mxu0 0
      %579 = vmatprep.subr.bf16.mxu0 0
      %580 = vmatpush1.bf16.msra.mxu0 0
      %581 = vmatprep.subr.bf16.mxu0 0
      %582 = vmatpush1.bf16.msra.mxu0 0
      %583 = vmatprep.subr.bf16.mxu0 0
      %584 = vmatpush1.bf16.msra.mxu0 0
      %585 = vmatprep.subr.bf16.mxu0 0
      %586 = vmatpush1.bf16.msra.mxu0 0
      %587 = vmatprep.subr.bf16.mxu0 0
      %588 = vmatpush1.bf16.msra.mxu0 0
      %589 = vmatprep.subr.bf16.mxu0 0
      %590 = vmatpush1.bf16.msra.mxu0 0
      %591 = vmatprep.mubr.bf16.mxu0 0
      %592 = vmatmul.mubr.bf16.gmra.mrb[0].mxu0 %v548
      %v593 = vpop.f32.mrb[0].mxu0
      %v594 = vadd.f32 0.0, %v593
      %v595 = vpop.f32.mrb[0].mxu0
      %v596 = vpop.f32.mrb[0].mxu0
      %v597 = vadd.f32 0.0, %v596
      %v598 = vpop.f32.mrb[0].mxu0
      %599 = vmatprep.mubr.bf16.mxu0 0
      %600 = vmatmul.mubr.bf16.gmra.mrb[0].mxu0 %v551
      %v601 = vpop.f32.mrb[0].mxu0
      %v602 = vadd.f32 0.0, %v601
      %v603 = vpop.f32.mrb[0].mxu0
      %v604 = vpop.f32.mrb[0].mxu0
      %v605 = vadd.f32 0.0, %v604
      %v606 = vpop.f32.mrb[0].mxu0
      %607 = vmatprep.mubr.bf16.mxu0 0
      %608 = vmatmul.mubr.bf16.gmra.mrb[0].mxu0 %v554
      %v609 = vpop.f32.mrb[0].mxu0
      %v610 = vadd.f32 0.0, %v609
      %v611 = vpop.f32.mrb[0].mxu0
      %v612 = vpop.f32.mrb[0].mxu0
      %v613 = vadd.f32 0.0, %v612
      %v614 = vpop.f32.mrb[0].mxu0
      %615 = vmatprep.mubr.bf16.mxu0 0
      %616 = vmatmul.mubr.bf16.gmra.mrb[0].mxu0 %v557
      %v617 = vpop.f32.mrb[0].mxu0
      %v618 = vadd.f32 0.0, %v617
      %v619 = vpop.f32.mrb[0].mxu0
      %v620 = vpop.f32.mrb[0].mxu0
      %v621 = vadd.f32 0.0, %v620
      %v622 = vpop.f32.mrb[0].mxu0
      %623 = vdwg.mxu0
      %v624 = vadd.f32 %v439, %v594
      %v625 = vadd.f32 %v442, %v597
      %v626 = vadd.f32 %v447, %v602
      %v627 = vadd.f32 %v450, %v605
      %v628 = vadd.f32 %v455, %v610
      %v629 = vadd.f32 %v458, %v613
      %v630 = vadd.f32 %v463, %v618
      %v631 = vadd.f32 %v466, %v621
      %s632 = scalar_lea.vmem %s180, 8
      %v633 = vld [vmem:[%s632] sm:$0xf]
      %v634 = vld [vmem:[%s632 + $0x8] sm:$0xf]
      %v635 = vld [vmem:[%s632 + $0x10] sm:$0xf]
      %v636 = vld [vmem:[%s632 + $0x18] sm:$0xf]
      %v637 = vld [vmem:[%s632 + $0x20] sm:$0xf]
      %v638 = vld [vmem:[%s632 + $0x28] sm:$0xf]
      %v639 = vld [vmem:[%s632 + $0x30] sm:$0xf]
      %v640 = vld [vmem:[%s632 + $0x38] sm:$0xf]
      %v641 = vunpack.c.l.bf16 %v633
      %v642 = vunpack.c.l.bf16 %v634
      %v643 = vunpack.c.l.bf16 %v635
      %v644 = vunpack.c.l.bf16 %v636
      %v645 = vunpack.c.l.bf16 %v637
      %v646 = vunpack.c.l.bf16 %v638
      %v647 = vunpack.c.l.bf16 %v639
      %v648 = vunpack.c.l.bf16 %v640
      %v649 = vpack.c.bf16 %v642, %v641
      %v650 = vpack.c.bf16 %v644, %v643
      %v651 = vpack.c.bf16 %v646, %v645
      %v652 = vpack.c.bf16 %v648, %v647
      %s653 = scalar_lea.vmem %s1, 48
      %v654 = vld [vmem:[%s653] sm:$0xf]
      %v655 = vld [vmem:[%s653 + $0x4] sm:$0xf]
      %v656 = vld [vmem:[%s653 + $0x8] sm:$0xf]
      %v657 = vld [vmem:[%s653 + $0xc] sm:$0xf]
      %v662 = vunpack.c.l.b16 %v654
      %v663 = vunpack.c.l.b16 %v655
      %v664 = vunpack.c.l.b16 %v656
      %v665 = vunpack.c.l.b16 %v657
      %v666 = vpack.c.b16 %v663, %v662
      %v667 = vpack.c.b16 %v665, %v664
      %v671 = vsel %vm302, %v649, 0
      %v674 = vsel %vm302, %v650, 0
      %v677 = vsel %vm302, %v651, 0
      %v680 = vsel %vm302, %v652, 0
      %682 = vmatprep.subr.bf16.mxu0 0
      %683 = vmatpush1.bf16.msra.mxu0 %v666
      %684 = vmatprep.subr.bf16.mxu0 0
      %685 = vmatpush1.bf16.msra.mxu0 %v667
      %686 = vmatprep.subr.bf16.mxu0 0
      %687 = vmatpush1.bf16.msra.mxu0 0
      %688 = vmatprep.subr.bf16.mxu0 0
      %689 = vmatpush1.bf16.msra.mxu0 0
      %690 = vmatprep.subr.bf16.mxu0 0
      %691 = vmatpush1.bf16.msra.mxu0 0
      %692 = vmatprep.subr.bf16.mxu0 0
      %693 = vmatpush1.bf16.msra.mxu0 0
      %694 = vmatprep.subr.bf16.mxu0 0
      %695 = vmatpush1.bf16.msra.mxu0 0
      %696 = vmatprep.subr.bf16.mxu0 0
      %697 = vmatpush1.bf16.msra.mxu0 0
      %698 = vmatprep.subr.bf16.mxu0 0
      %699 = vmatpush1.bf16.msra.mxu0 0
      %700 = vmatprep.subr.bf16.mxu0 0
      %701 = vmatpush1.bf16.msra.mxu0 0
      %702 = vmatprep.subr.bf16.mxu0 0
      %703 = vmatpush1.bf16.msra.mxu0 0
      %704 = vmatprep.subr.bf16.mxu0 0
      %705 = vmatpush1.bf16.msra.mxu0 0
      %706 = vmatprep.subr.bf16.mxu0 0
      %707 = vmatpush1.bf16.msra.mxu0 0
      %708 = vmatprep.subr.bf16.mxu0 0
      %709 = vmatpush1.bf16.msra.mxu0 0
      %710 = vmatprep.subr.bf16.mxu0 0
      %711 = vmatpush1.bf16.msra.mxu0 0
      %712 = vmatprep.subr.bf16.mxu0 0
      %713 = vmatpush1.bf16.msra.mxu0 0
      %714 = vmatprep.mubr.bf16.mxu0 0
      %715 = vmatmul.mubr.bf16.gmra.mrb[0].mxu0 %v671
      %v716 = vpop.f32.mrb[0].mxu0
      %v717 = vadd.f32 0.0, %v716
      %v718 = vpop.f32.mrb[0].mxu0
      %v719 = vpop.f32.mrb[0].mxu0
      %v720 = vadd.f32 0.0, %v719
      %v721 = vpop.f32.mrb[0].mxu0
      %722 = vmatprep.mubr.bf16.mxu0 0
      %723 = vmatmul.mubr.bf16.gmra.mrb[0].mxu0 %v674
      %v724 = vpop.f32.mrb[0].mxu0
      %v725 = vadd.f32 0.0, %v724
      %v726 = vpop.f32.mrb[0].mxu0
      %v727 = vpop.f32.mrb[0].mxu0
      %v728 = vadd.f32 0.0, %v727
      %v729 = vpop.f32.mrb[0].mxu0
      %730 = vmatprep.mubr.bf16.mxu0 0
      %731 = vmatmul.mubr.bf16.gmra.mrb[0].mxu0 %v677
      %v732 = vpop.f32.mrb[0].mxu0
      %v733 = vadd.f32 0.0, %v732
      %v734 = vpop.f32.mrb[0].mxu0
      %v735 = vpop.f32.mrb[0].mxu0
      %v736 = vadd.f32 0.0, %v735
      %v737 = vpop.f32.mrb[0].mxu0
      %738 = vmatprep.mubr.bf16.mxu0 0
      %739 = vmatmul.mubr.bf16.gmra.mrb[0].mxu0 %v680
      %v740 = vpop.f32.mrb[0].mxu0
      %v741 = vadd.f32 0.0, %v740
      %v742 = vpop.f32.mrb[0].mxu0
      %v743 = vpop.f32.mrb[0].mxu0
      %v744 = vadd.f32 0.0, %v743
      %v745 = vpop.f32.mrb[0].mxu0
      %746 = vdwg.mxu0
      %v747 = vadd.f32 %v624, %v717
      %v748 = vadd.f32 %v625, %v720
      %v749 = vadd.f32 %v626, %v725
      %v750 = vadd.f32 %v627, %v728
      %v751 = vadd.f32 %v628, %v733
      %v752 = vadd.f32 %v629, %v736
      %v753 = vadd.f32 %v630, %v741
      %v754 = vadd.f32 %v631, %v744
      %v755 = vld [vmem:[%s632] sm:$0xf]
      %v756 = vld [vmem:[%s632 + $0x4] sm:$0x1]
      %v757 = vld [vmem:[%s632 + $0x8] sm:$0xf]
      %v758 = vld [vmem:[%s632 + $0xc] sm:$0x1]
      %v759 = vld [vmem:[%s632 + $0x10] sm:$0xf]
      %v760 = vld [vmem:[%s632 + $0x14] sm:$0x1]
      %v761 = vld [vmem:[%s632 + $0x18] sm:$0xf]
      %v762 = vld [vmem:[%s632 + $0x1c] sm:$0x1]
      %v763 = vld [vmem:[%s632 + $0x20] sm:$0xf]
      %v764 = vld [vmem:[%s632 + $0x24] sm:$0x1]
      %v765 = vld [vmem:[%s632 + $0x28] sm:$0xf]
      %v766 = vld [vmem:[%s632 + $0x2c] sm:$0x1]
      %v767 = vld [vmem:[%s632 + $0x30] sm:$0xf]
      %v768 = vld [vmem:[%s632 + $0x34] sm:$0x1]
      %v769 = vld [vmem:[%s632 + $0x38] sm:$0xf]
      %v770 = vld [vmem:[%s632 + $0x3c] sm:$0x1]
      %v771 = vunpack.c.l.bf16 %v755
      %v772 = vunpack.c.l.bf16 %v756
      %v773 = vunpack.c.l.bf16 %v757
      %v774 = vunpack.c.l.bf16 %v758
      %v775 = vunpack.c.l.bf16 %v759
      %v776 = vunpack.c.l.bf16 %v760
      %v777 = vunpack.c.l.bf16 %v761
      %v778 = vunpack.c.l.bf16 %v762
      %v779 = vunpack.c.l.bf16 %v763
      %v780 = vunpack.c.l.bf16 %v764
      %v781 = vunpack.c.l.bf16 %v765
      %v782 = vunpack.c.l.bf16 %v766
      %v783 = vunpack.c.l.bf16 %v767
      %v784 = vunpack.c.l.bf16 %v768
      %v785 = vunpack.c.l.bf16 %v769
      %v786 = vunpack.c.l.bf16 %v770
      %v803 = vrot.slane %v771, 1
      %v804 = vrot.slane %v772, 1
      %v805 = vsel %vm248, %v803, %v804
      %v806 = vrot.slane %v773, 1
      %v807 = vrot.slane %v774, 1
      %v808 = vsel %vm248, %v806, %v807
      %v809 = vrot.slane %v775, 1
      %v810 = vrot.slane %v776, 1
      %v811 = vsel %vm248, %v809, %v810
      %v812 = vrot.slane %v777, 1
      %v813 = vrot.slane %v778, 1
      %v814 = vsel %vm248, %v812, %v813
      %v815 = vrot.slane %v779, 1
      %v816 = vrot.slane %v780, 1
      %v817 = vsel %vm248, %v815, %v816
      %v818 = vrot.slane %v781, 1
      %v819 = vrot.slane %v782, 1
      %v820 = vsel %vm248, %v818, %v819
      %v821 = vrot.slane %v783, 1
      %v822 = vrot.slane %v784, 1
      %v823 = vsel %vm248, %v821, %v822
      %v824 = vrot.slane %v785, 1
      %v825 = vrot.slane %v786, 1
      %v826 = vsel %vm248, %v824, %v825
      %v835 = vpack.c.bf16 %v808, %v805
      %v836 = vpack.c.bf16 %v814, %v811
      %v837 = vpack.c.bf16 %v820, %v817
      %v838 = vpack.c.bf16 %v826, %v823
      %s839 = scalar_lea.vmem %s1, 64
      %v840 = vld [vmem:[%s839] sm:$0xf]
      %v841 = vld [vmem:[%s839 + $0x4] sm:$0xf]
      %v842 = vld [vmem:[%s839 + $0x8] sm:$0xf]
      %v843 = vld [vmem:[%s839 + $0xc] sm:$0xf]
      %v848 = vunpack.c.l.b16 %v840
      %v849 = vunpack.c.l.b16 %v841
      %v850 = vunpack.c.l.b16 %v842
      %v851 = vunpack.c.l.b16 %v843
      %v852 = vpack.c.b16 %v849, %v848
      %v853 = vpack.c.b16 %v851, %v850
      %v857 = vsel %vm302, %v835, 0
      %v860 = vsel %vm302, %v836, 0
      %v863 = vsel %vm302, %v837, 0
      %v866 = vsel %vm302, %v838, 0
      %868 = vmatprep.subr.bf16.mxu0 0
      %869 = vmatpush1.bf16.msra.mxu0 %v852
      %870 = vmatprep.subr.bf16.mxu0 0
      %871 = vmatpush1.bf16.msra.mxu0 %v853
      %872 = vmatprep.subr.bf16.mxu0 0
      %873 = vmatpush1.bf16.msra.mxu0 0
      %874 = vmatprep.subr.bf16.mxu0 0
      %875 = vmatpush1.bf16.msra.mxu0 0
      %876 = vmatprep.subr.bf16.mxu0 0
      %877 = vmatpush1.bf16.msra.mxu0 0
      %878 = vmatprep.subr.bf16.mxu0 0
      %879 = vmatpush1.bf16.msra.mxu0 0
      %880 = vmatprep.subr.bf16.mxu0 0
      %881 = vmatpush1.bf16.msra.mxu0 0
      %882 = vmatprep.subr.bf16.mxu0 0
      %883 = vmatpush1.bf16.msra.mxu0 0
      %884 = vmatprep.subr.bf16.mxu0 0
      %885 = vmatpush1.bf16.msra.mxu0 0
      %886 = vmatprep.subr.bf16.mxu0 0
      %887 = vmatpush1.bf16.msra.mxu0 0
      %888 = vmatprep.subr.bf16.mxu0 0
      %889 = vmatpush1.bf16.msra.mxu0 0
      %890 = vmatprep.subr.bf16.mxu0 0
      %891 = vmatpush1.bf16.msra.mxu0 0
      %892 = vmatprep.subr.bf16.mxu0 0
      %893 = vmatpush1.bf16.msra.mxu0 0
      %894 = vmatprep.subr.bf16.mxu0 0
      %895 = vmatpush1.bf16.msra.mxu0 0
      %896 = vmatprep.subr.bf16.mxu0 0
      %897 = vmatpush1.bf16.msra.mxu0 0
      %898 = vmatprep.subr.bf16.mxu0 0
      %899 = vmatpush1.bf16.msra.mxu0 0
      %900 = vmatprep.mubr.bf16.mxu0 0
      %901 = vmatmul.mubr.bf16.gmra.mrb[0].mxu0 %v857
      %v902 = vpop.f32.mrb[0].mxu0
      %v903 = vadd.f32 0.0, %v902
      %v904 = vpop.f32.mrb[0].mxu0
      %v905 = vpop.f32.mrb[0].mxu0
      %v906 = vadd.f32 0.0, %v905
      %v907 = vpop.f32.mrb[0].mxu0
      %908 = vmatprep.mubr.bf16.mxu0 0
      %909 = vmatmul.mubr.bf16.gmra.mrb[0].mxu0 %v860
      %v910 = vpop.f32.mrb[0].mxu0
      %v911 = vadd.f32 0.0, %v910
      %v912 = vpop.f32.mrb[0].mxu0
      %v913 = vpop.f32.mrb[0].mxu0
      %v914 = vadd.f32 0.0, %v913
      %v915 = vpop.f32.mrb[0].mxu0
      %916 = vmatprep.mubr.bf16.mxu0 0
      %917 = vmatmul.mubr.bf16.gmra.mrb[0].mxu0 %v863
      %v918 = vpop.f32.mrb[0].mxu0
      %v919 = vadd.f32 0.0, %v918
      %v920 = vpop.f32.mrb[0].mxu0
      %v921 = vpop.f32.mrb[0].mxu0
      %v922 = vadd.f32 0.0, %v921
      %v923 = vpop.f32.mrb[0].mxu0
      %924 = vmatprep.mubr.bf16.mxu0 0
      %925 = vmatmul.mubr.bf16.gmra.mrb[0].mxu0 %v866
      %v926 = vpop.f32.mrb[0].mxu0
      %v927 = vadd.f32 0.0, %v926
      %v928 = vpop.f32.mrb[0].mxu0
      %v929 = vpop.f32.mrb[0].mxu0
      %v930 = vadd.f32 0.0, %v929
      %v931 = vpop.f32.mrb[0].mxu0
      %932 = vdwg.mxu0
      %v933 = vadd.f32 %v747, %v903
      %v934 = vadd.f32 %v748, %v906
      %v935 = vadd.f32 %v749, %v911
      %v936 = vadd.f32 %v750, %v914
      %v937 = vadd.f32 %v751, %v919
      %v938 = vadd.f32 %v752, %v922
      %v939 = vadd.f32 %v753, %v927
      %v940 = vadd.f32 %v754, %v930
      %v941 = vld [vmem:[%s632] sm:$0xe]
      %v942 = vld [vmem:[%s632 + $0x8] sm:$0xe]
      %v943 = vld [vmem:[%s632 + $0x10] sm:$0xe]
      %v944 = vld [vmem:[%s632 + $0x18] sm:$0xe]
      %v945 = vld [vmem:[%s632 + $0x20] sm:$0xe]
      %v946 = vld [vmem:[%s632 + $0x28] sm:$0xe]
      %v947 = vld [vmem:[%s632 + $0x30] sm:$0xe]
      %v948 = vld [vmem:[%s632 + $0x38] sm:$0xe]
      %v949 = vunpack.c.l.bf16 %v941
      %v950 = vunpack.c.l.bf16 %v942
      %v951 = vunpack.c.l.bf16 %v943
      %v952 = vunpack.c.l.bf16 %v944
      %v953 = vunpack.c.l.bf16 %v945
      %v954 = vunpack.c.l.bf16 %v946
      %v955 = vunpack.c.l.bf16 %v947
      %v956 = vunpack.c.l.bf16 %v948
      %v965 = vrot.slane %v949, 2
      %v966 = vrot.slane %v772, 2
      %v967 = vsel %vm493, %v965, %v966
      %v968 = vrot.slane %v950, 2
      %v969 = vrot.slane %v774, 2
      %v970 = vsel %vm493, %v968, %v969
      %v971 = vrot.slane %v951, 2
      %v972 = vrot.slane %v776, 2
      %v973 = vsel %vm493, %v971, %v972
      %v974 = vrot.slane %v952, 2
      %v975 = vrot.slane %v778, 2
      %v976 = vsel %vm493, %v974, %v975
      %v977 = vrot.slane %v953, 2
      %v978 = vrot.slane %v780, 2
      %v979 = vsel %vm493, %v977, %v978
      %v980 = vrot.slane %v954, 2
      %v981 = vrot.slane %v782, 2
      %v982 = vsel %vm493, %v980, %v981
      %v983 = vrot.slane %v955, 2
      %v984 = vrot.slane %v784, 2
      %v985 = vsel %vm493, %v983, %v984
      %v986 = vrot.slane %v956, 2
      %v987 = vrot.slane %v786, 2
      %v988 = vsel %vm493, %v986, %v987
      %v997 = vpack.c.bf16 %v970, %v967
      %v998 = vpack.c.bf16 %v976, %v973
      %v999 = vpack.c.bf16 %v982, %v979
      %v1000 = vpack.c.bf16 %v988, %v985
      %s1001 = scalar_lea.vmem %s1, 80
      %v1002 = vld [vmem:[%s1001] sm:$0xf]
      %v1003 = vld [vmem:[%s1001 + $0x4] sm:$0xf]
      %v1004 = vld [vmem:[%s1001 + $0x8] sm:$0xf]
      %v1005 = vld [vmem:[%s1001 + $0xc] sm:$0xf]
      %v1010 = vunpack.c.l.b16 %v1002
      %v1011 = vunpack.c.l.b16 %v1003
      %v1012 = vunpack.c.l.b16 %v1004
      %v1013 = vunpack.c.l.b16 %v1005
      %v1014 = vpack.c.b16 %v1011, %v1010
      %v1015 = vpack.c.b16 %v1013, %v1012
      %v1019 = vsel %vm302, %v997, 0
      %v1022 = vsel %vm302, %v998, 0
      %v1025 = vsel %vm302, %v999, 0
      %v1028 = vsel %vm302, %v1000, 0
      %1030 = vmatprep.subr.bf16.mxu0 0
      %1031 = vmatpush1.bf16.msra.mxu0 %v1014
      %1032 = vmatprep.subr.bf16.mxu0 0
      %1033 = vmatpush1.bf16.msra.mxu0 %v1015
      %1034 = vmatprep.subr.bf16.mxu0 0
      %1035 = vmatpush1.bf16.msra.mxu0 0
      %1036 = vmatprep.subr.bf16.mxu0 0
      %1037 = vmatpush1.bf16.msra.mxu0 0
      %1038 = vmatprep.subr.bf16.mxu0 0
      %1039 = vmatpush1.bf16.msra.mxu0 0
      %1040 = vmatprep.subr.bf16.mxu0 0
      %1041 = vmatpush1.bf16.msra.mxu0 0
      %1042 = vmatprep.subr.bf16.mxu0 0
      %1043 = vmatpush1.bf16.msra.mxu0 0
      %1044 = vmatprep.subr.bf16.mxu0 0
      %1045 = vmatpush1.bf16.msra.mxu0 0
      %1046 = vmatprep.subr.bf16.mxu0 0
      %1047 = vmatpush1.bf16.msra.mxu0 0
      %1048 = vmatprep.subr.bf16.mxu0 0
      %1049 = vmatpush1.bf16.msra.mxu0 0
      %1050 = vmatprep.subr.bf16.mxu0 0
      %1051 = vmatpush1.bf16.msra.mxu0 0
      %1052 = vmatprep.subr.bf16.mxu0 0
      %1053 = vmatpush1.bf16.msra.mxu0 0
      %1054 = vmatprep.subr.bf16.mxu0 0
      %1055 = vmatpush1.bf16.msra.mxu0 0
      %1056 = vmatprep.subr.bf16.mxu0 0
      %1057 = vmatpush1.bf16.msra.mxu0 0
      %1058 = vmatprep.subr.bf16.mxu0 0
      %1059 = vmatpush1.bf16.msra.mxu0 0
      %1060 = vmatprep.subr.bf16.mxu0 0
      %1061 = vmatpush1.bf16.msra.mxu0 0
      %1062 = vmatprep.mubr.bf16.mxu0 0
      %1063 = vmatmul.mubr.bf16.gmra.mrb[0].mxu0 %v1019
      %v1064 = vpop.f32.mrb[0].mxu0
      %v1065 = vadd.f32 0.0, %v1064
      %v1066 = vpop.f32.mrb[0].mxu0
      %v1067 = vpop.f32.mrb[0].mxu0
      %v1068 = vadd.f32 0.0, %v1067
      %v1069 = vpop.f32.mrb[0].mxu0
      %1070 = vmatprep.mubr.bf16.mxu0 0
      %1071 = vmatmul.mubr.bf16.gmra.mrb[0].mxu0 %v1022
      %v1072 = vpop.f32.mrb[0].mxu0
      %v1073 = vadd.f32 0.0, %v1072
      %v1074 = vpop.f32.mrb[0].mxu0
      %v1075 = vpop.f32.mrb[0].mxu0
      %v1076 = vadd.f32 0.0, %v1075
      %v1077 = vpop.f32.mrb[0].mxu0
      %1078 = vmatprep.mubr.bf16.mxu0 0
      %1079 = vmatmul.mubr.bf16.gmra.mrb[0].mxu0 %v1025
      %v1080 = vpop.f32.mrb[0].mxu0
      %v1081 = vadd.f32 0.0, %v1080
      %v1082 = vpop.f32.mrb[0].mxu0
      %v1083 = vpop.f32.mrb[0].mxu0
      %v1084 = vadd.f32 0.0, %v1083
      %v1085 = vpop.f32.mrb[0].mxu0
      %1086 = vmatprep.mubr.bf16.mxu0 0
      %1087 = vmatmul.mubr.bf16.gmra.mrb[0].mxu0 %v1028
      %v1088 = vpop.f32.mrb[0].mxu0
      %v1089 = vadd.f32 0.0, %v1088
      %v1090 = vpop.f32.mrb[0].mxu0
      %v1091 = vpop.f32.mrb[0].mxu0
      %v1092 = vadd.f32 0.0, %v1091
      %v1093 = vpop.f32.mrb[0].mxu0
      %1094 = vdwg.mxu0
      %v1095 = vadd.f32 %v933, %v1065
      %v1096 = vadd.f32 %v934, %v1068
      %v1097 = vadd.f32 %v935, %v1073
      %v1098 = vadd.f32 %v936, %v1076
      %v1099 = vadd.f32 %v937, %v1081
      %v1100 = vadd.f32 %v938, %v1084
      %v1101 = vadd.f32 %v939, %v1089
      %v1102 = vadd.f32 %v940, %v1092
      %s1103 = scalar_lea.vmem %s180, 16
      %v1104 = vld [vmem:[%s1103] sm:$0xf]
      %v1105 = vld [vmem:[%s1103 + $0x8] sm:$0xf]
      %v1106 = vld [vmem:[%s1103 + $0x10] sm:$0xf]
      %v1107 = vld [vmem:[%s1103 + $0x18] sm:$0xf]
      %v1108 = vld [vmem:[%s1103 + $0x20] sm:$0xf]
      %v1109 = vld [vmem:[%s1103 + $0x28] sm:$0xf]
      %v1110 = vld [vmem:[%s1103 + $0x30] sm:$0xf]
      %v1111 = vld [vmem:[%s1103 + $0x38] sm:$0xf]
      %v1112 = vunpack.c.l.bf16 %v1104
      %v1113 = vunpack.c.l.bf16 %v1105
      %v1114 = vunpack.c.l.bf16 %v1106
      %v1115 = vunpack.c.l.bf16 %v1107
      %v1116 = vunpack.c.l.bf16 %v1108
      %v1117 = vunpack.c.l.bf16 %v1109
      %v1118 = vunpack.c.l.bf16 %v1110
      %v1119 = vunpack.c.l.bf16 %v1111
      %v1120 = vpack.c.bf16 %v1113, %v1112
      %v1121 = vpack.c.bf16 %v1115, %v1114
      %v1122 = vpack.c.bf16 %v1117, %v1116
      %v1123 = vpack.c.bf16 %v1119, %v1118
      %s1124 = scalar_lea.vmem %s1, 96
      %v1125 = vld [vmem:[%s1124] sm:$0xf]
      %v1126 = vld [vmem:[%s1124 + $0x4] sm:$0xf]
      %v1127 = vld [vmem:[%s1124 + $0x8] sm:$0xf]
      %v1128 = vld [vmem:[%s1124 + $0xc] sm:$0xf]
      %v1133 = vunpack.c.l.b16 %v1125
      %v1134 = vunpack.c.l.b16 %v1126
      %v1135 = vunpack.c.l.b16 %v1127
      %v1136 = vunpack.c.l.b16 %v1128
      %v1137 = vpack.c.b16 %v1134, %v1133
      %v1138 = vpack.c.b16 %v1136, %v1135
      %v1142 = vsel %vm302, %v1120, 0
      %v1145 = vsel %vm302, %v1121, 0
      %v1148 = vsel %vm302, %v1122, 0
      %v1151 = vsel %vm302, %v1123, 0
      %1153 = vmatprep.subr.bf16.mxu0 0
      %1154 = vmatpush1.bf16.msra.mxu0 %v1137
      %1155 = vmatprep.subr.bf16.mxu0 0
      %1156 = vmatpush1.bf16.msra.mxu0 %v1138
      %1157 = vmatprep.subr.bf16.mxu0 0
      %1158 = vmatpush1.bf16.msra.mxu0 0
      %1159 = vmatprep.subr.bf16.mxu0 0
      %1160 = vmatpush1.bf16.msra.mxu0 0
      %1161 = vmatprep.subr.bf16.mxu0 0
      %1162 = vmatpush1.bf16.msra.mxu0 0
      %1163 = vmatprep.subr.bf16.mxu0 0
      %1164 = vmatpush1.bf16.msra.mxu0 0
      %1165 = vmatprep.subr.bf16.mxu0 0
      %1166 = vmatpush1.bf16.msra.mxu0 0
      %1167 = vmatprep.subr.bf16.mxu0 0
      %1168 = vmatpush1.bf16.msra.mxu0 0
      %1169 = vmatprep.subr.bf16.mxu0 0
      %1170 = vmatpush1.bf16.msra.mxu0 0
      %1171 = vmatprep.subr.bf16.mxu0 0
      %1172 = vmatpush1.bf16.msra.mxu0 0
      %1173 = vmatprep.subr.bf16.mxu0 0
      %1174 = vmatpush1.bf16.msra.mxu0 0
      %1175 = vmatprep.subr.bf16.mxu0 0
      %1176 = vmatpush1.bf16.msra.mxu0 0
      %1177 = vmatprep.subr.bf16.mxu0 0
      %1178 = vmatpush1.bf16.msra.mxu0 0
      %1179 = vmatprep.subr.bf16.mxu0 0
      %1180 = vmatpush1.bf16.msra.mxu0 0
      %1181 = vmatprep.subr.bf16.mxu0 0
      %1182 = vmatpush1.bf16.msra.mxu0 0
      %1183 = vmatprep.subr.bf16.mxu0 0
      %1184 = vmatpush1.bf16.msra.mxu0 0
      %1185 = vmatprep.mubr.bf16.mxu0 0
      %1186 = vmatmul.mubr.bf16.gmra.mrb[0].mxu0 %v1142
      %v1187 = vpop.f32.mrb[0].mxu0
      %v1188 = vadd.f32 0.0, %v1187
      %v1189 = vpop.f32.mrb[0].mxu0
      %v1190 = vpop.f32.mrb[0].mxu0
      %v1191 = vadd.f32 0.0, %v1190
      %v1192 = vpop.f32.mrb[0].mxu0
      %1193 = vmatprep.mubr.bf16.mxu0 0
      %1194 = vmatmul.mubr.bf16.gmra.mrb[0].mxu0 %v1145
      %v1195 = vpop.f32.mrb[0].mxu0
      %v1196 = vadd.f32 0.0, %v1195
      %v1197 = vpop.f32.mrb[0].mxu0
      %v1198 = vpop.f32.mrb[0].mxu0
      %v1199 = vadd.f32 0.0, %v1198
      %v1200 = vpop.f32.mrb[0].mxu0
      %1201 = vmatprep.mubr.bf16.mxu0 0
      %1202 = vmatmul.mubr.bf16.gmra.mrb[0].mxu0 %v1148
      %v1203 = vpop.f32.mrb[0].mxu0
      %v1204 = vadd.f32 0.0, %v1203
      %v1205 = vpop.f32.mrb[0].mxu0
      %v1206 = vpop.f32.mrb[0].mxu0
      %v1207 = vadd.f32 0.0, %v1206
      %v1208 = vpop.f32.mrb[0].mxu0
      %1209 = vmatprep.mubr.bf16.mxu0 0
      %1210 = vmatmul.mubr.bf16.gmra.mrb[0].mxu0 %v1151
      %v1211 = vpop.f32.mrb[0].mxu0
      %v1212 = vadd.f32 0.0, %v1211
      %v1213 = vpop.f32.mrb[0].mxu0
      %v1214 = vpop.f32.mrb[0].mxu0
      %v1215 = vadd.f32 0.0, %v1214
      %v1216 = vpop.f32.mrb[0].mxu0
      %1217 = vdwg.mxu0
      %v1218 = vadd.f32 %v1095, %v1188
      %v1219 = vadd.f32 %v1096, %v1191
      %v1220 = vadd.f32 %v1097, %v1196
      %v1221 = vadd.f32 %v1098, %v1199
      %v1222 = vadd.f32 %v1099, %v1204
      %v1223 = vadd.f32 %v1100, %v1207
      %v1224 = vadd.f32 %v1101, %v1212
      %v1225 = vadd.f32 %v1102, %v1215
      %v1226 = vld [vmem:[%s1103] sm:$0xf]
      %v1227 = vld [vmem:[%s1103 + $0x4] sm:$0x1]
      %v1228 = vld [vmem:[%s1103 + $0x8] sm:$0xf]
      %v1229 = vld [vmem:[%s1103 + $0xc] sm:$0x1]
      %v1230 = vld [vmem:[%s1103 + $0x10] sm:$0xf]
      %v1231 = vld [vmem:[%s1103 + $0x14] sm:$0x1]
      %v1232 = vld [vmem:[%s1103 + $0x18] sm:$0xf]
      %v1233 = vld [vmem:[%s1103 + $0x1c] sm:$0x1]
      %v1234 = vld [vmem:[%s1103 + $0x20] sm:$0xf]
      %v1235 = vld [vmem:[%s1103 + $0x24] sm:$0x1]
      %v1236 = vld [vmem:[%s1103 + $0x28] sm:$0xf]
      %v1237 = vld [vmem:[%s1103 + $0x2c] sm:$0x1]
      %v1238 = vld [vmem:[%s1103 + $0x30] sm:$0xf]
      %v1239 = vld [vmem:[%s1103 + $0x34] sm:$0x1]
      %v1240 = vld [vmem:[%s1103 + $0x38] sm:$0xf]
      %v1241 = vld [vmem:[%s1103 + $0x3c] sm:$0x1]
      %v1242 = vunpack.c.l.bf16 %v1226
      %v1243 = vunpack.c.l.bf16 %v1227
      %v1244 = vunpack.c.l.bf16 %v1228
      %v1245 = vunpack.c.l.bf16 %v1229
      %v1246 = vunpack.c.l.bf16 %v1230
      %v1247 = vunpack.c.l.bf16 %v1231
      %v1248 = vunpack.c.l.bf16 %v1232
      %v1249 = vunpack.c.l.bf16 %v1233
      %v1250 = vunpack.c.l.bf16 %v1234
      %v1251 = vunpack.c.l.bf16 %v1235
      %v1252 = vunpack.c.l.bf16 %v1236
      %v1253 = vunpack.c.l.bf16 %v1237
      %v1254 = vunpack.c.l.bf16 %v1238
      %v1255 = vunpack.c.l.bf16 %v1239
      %v1256 = vunpack.c.l.bf16 %v1240
      %v1257 = vunpack.c.l.bf16 %v1241
      %v1274 = vrot.slane %v1242, 1
      %v1275 = vrot.slane %v1243, 1
      %v1276 = vsel %vm248, %v1274, %v1275
      %v1277 = vrot.slane %v1244, 1
      %v1278 = vrot.slane %v1245, 1
      %v1279 = vsel %vm248, %v1277, %v1278
      %v1280 = vrot.slane %v1246, 1
      %v1281 = vrot.slane %v1247, 1
      %v1282 = vsel %vm248, %v1280, %v1281
      %v1283 = vrot.slane %v1248, 1
      %v1284 = vrot.slane %v1249, 1
      %v1285 = vsel %vm248, %v1283, %v1284
      %v1286 = vrot.slane %v1250, 1
      %v1287 = vrot.slane %v1251, 1
      %v1288 = vsel %vm248, %v1286, %v1287
      %v1289 = vrot.slane %v1252, 1
      %v1290 = vrot.slane %v1253, 1
      %v1291 = vsel %vm248, %v1289, %v1290
      %v1292 = vrot.slane %v1254, 1
      %v1293 = vrot.slane %v1255, 1
      %v1294 = vsel %vm248, %v1292, %v1293
      %v1295 = vrot.slane %v1256, 1
      %v1296 = vrot.slane %v1257, 1
      %v1297 = vsel %vm248, %v1295, %v1296
      %v1306 = vpack.c.bf16 %v1279, %v1276
      %v1307 = vpack.c.bf16 %v1285, %v1282
      %v1308 = vpack.c.bf16 %v1291, %v1288
      %v1309 = vpack.c.bf16 %v1297, %v1294
      %s1310 = scalar_lea.vmem %s1, 112
      %v1311 = vld [vmem:[%s1310] sm:$0xf]
      %v1312 = vld [vmem:[%s1310 + $0x4] sm:$0xf]
      %v1313 = vld [vmem:[%s1310 + $0x8] sm:$0xf]
      %v1314 = vld [vmem:[%s1310 + $0xc] sm:$0xf]
      %v1319 = vunpack.c.l.b16 %v1311
      %v1320 = vunpack.c.l.b16 %v1312
      %v1321 = vunpack.c.l.b16 %v1313
      %v1322 = vunpack.c.l.b16 %v1314
      %v1323 = vpack.c.b16 %v1320, %v1319
      %v1324 = vpack.c.b16 %v1322, %v1321
      %v1328 = vsel %vm302, %v1306, 0
      %v1331 = vsel %vm302, %v1307, 0
      %v1334 = vsel %vm302, %v1308, 0
      %v1337 = vsel %vm302, %v1309, 0
      %1339 = vmatprep.subr.bf16.mxu0 0
      %1340 = vmatpush1.bf16.msra.mxu0 %v1323
      %1341 = vmatprep.subr.bf16.mxu0 0
      %1342 = vmatpush1.bf16.msra.mxu0 %v1324
      %1343 = vmatprep.subr.bf16.mxu0 0
      %1344 = vmatpush1.bf16.msra.mxu0 0
      %1345 = vmatprep.subr.bf16.mxu0 0
      %1346 = vmatpush1.bf16.msra.mxu0 0
      %1347 = vmatprep.subr.bf16.mxu0 0
      %1348 = vmatpush1.bf16.msra.mxu0 0
      %1349 = vmatprep.subr.bf16.mxu0 0
      %1350 = vmatpush1.bf16.msra.mxu0 0
      %1351 = vmatprep.subr.bf16.mxu0 0
      %1352 = vmatpush1.bf16.msra.mxu0 0
      %1353 = vmatprep.subr.bf16.mxu0 0
      %1354 = vmatpush1.bf16.msra.mxu0 0
      %1355 = vmatprep.subr.bf16.mxu0 0
      %1356 = vmatpush1.bf16.msra.mxu0 0
      %1357 = vmatprep.subr.bf16.mxu0 0
      %1358 = vmatpush1.bf16.msra.mxu0 0
      %1359 = vmatprep.subr.bf16.mxu0 0
      %1360 = vmatpush1.bf16.msra.mxu0 0
      %1361 = vmatprep.subr.bf16.mxu0 0
      %1362 = vmatpush1.bf16.msra.mxu0 0
      %1363 = vmatprep.subr.bf16.mxu0 0
      %1364 = vmatpush1.bf16.msra.mxu0 0
      %1365 = vmatprep.subr.bf16.mxu0 0
      %1366 = vmatpush1.bf16.msra.mxu0 0
      %1367 = vmatprep.subr.bf16.mxu0 0
      %1368 = vmatpush1.bf16.msra.mxu0 0
      %1369 = vmatprep.subr.bf16.mxu0 0
      %1370 = vmatpush1.bf16.msra.mxu0 0
      %1371 = vmatprep.mubr.bf16.mxu0 0
      %1372 = vmatmul.mubr.bf16.gmra.mrb[0].mxu0 %v1328
      %v1373 = vpop.f32.mrb[0].mxu0
      %v1374 = vadd.f32 0.0, %v1373
      %v1375 = vpop.f32.mrb[0].mxu0
      %v1376 = vpop.f32.mrb[0].mxu0
      %v1377 = vadd.f32 0.0, %v1376
      %v1378 = vpop.f32.mrb[0].mxu0
      %1379 = vmatprep.mubr.bf16.mxu0 0
      %1380 = vmatmul.mubr.bf16.gmra.mrb[0].mxu0 %v1331
      %v1381 = vpop.f32.mrb[0].mxu0
      %v1382 = vadd.f32 0.0, %v1381
      %v1383 = vpop.f32.mrb[0].mxu0
      %v1384 = vpop.f32.mrb[0].mxu0
      %v1385 = vadd.f32 0.0, %v1384
      %v1386 = vpop.f32.mrb[0].mxu0
      %1387 = vmatprep.mubr.bf16.mxu0 0
      %1388 = vmatmul.mubr.bf16.gmra.mrb[0].mxu0 %v1334
      %v1389 = vpop.f32.mrb[0].mxu0
      %v1390 = vadd.f32 0.0, %v1389
      %v1391 = vpop.f32.mrb[0].mxu0
      %v1392 = vpop.f32.mrb[0].mxu0
      %v1393 = vadd.f32 0.0, %v1392
      %v1394 = vpop.f32.mrb[0].mxu0
      %1395 = vmatprep.mubr.bf16.mxu0 0
      %1396 = vmatmul.mubr.bf16.gmra.mrb[0].mxu0 %v1337
      %v1397 = vpop.f32.mrb[0].mxu0
      %v1398 = vadd.f32 0.0, %v1397
      %v1399 = vpop.f32.mrb[0].mxu0
      %v1400 = vpop.f32.mrb[0].mxu0
      %v1401 = vadd.f32 0.0, %v1400
      %v1402 = vpop.f32.mrb[0].mxu0
      %1403 = vdwg.mxu0
      %v1404 = vadd.f32 %v1218, %v1374
      %v1405 = vadd.f32 %v1219, %v1377
      %v1406 = vadd.f32 %v1220, %v1382
      %v1407 = vadd.f32 %v1221, %v1385
      %v1408 = vadd.f32 %v1222, %v1390
      %v1409 = vadd.f32 %v1223, %v1393
      %v1410 = vadd.f32 %v1224, %v1398
      %v1411 = vadd.f32 %v1225, %v1401
      %v1412 = vld [vmem:[%s1103] sm:$0xe]
      %v1413 = vld [vmem:[%s1103 + $0x8] sm:$0xe]
      %v1414 = vld [vmem:[%s1103 + $0x10] sm:$0xe]
      %v1415 = vld [vmem:[%s1103 + $0x18] sm:$0xe]
      %v1416 = vld [vmem:[%s1103 + $0x20] sm:$0xe]
      %v1417 = vld [vmem:[%s1103 + $0x28] sm:$0xe]
      %v1418 = vld [vmem:[%s1103 + $0x30] sm:$0xe]
      %v1419 = vld [vmem:[%s1103 + $0x38] sm:$0xe]
      %v1420 = vunpack.c.l.bf16 %v1412
      %v1421 = vunpack.c.l.bf16 %v1413
      %v1422 = vunpack.c.l.bf16 %v1414
      %v1423 = vunpack.c.l.bf16 %v1415
      %v1424 = vunpack.c.l.bf16 %v1416
      %v1425 = vunpack.c.l.bf16 %v1417
      %v1426 = vunpack.c.l.bf16 %v1418
      %v1427 = vunpack.c.l.bf16 %v1419
      %v1436 = vrot.slane %v1420, 2
      %v1437 = vrot.slane %v1243, 2
      %v1438 = vsel %vm493, %v1436, %v1437
      %v1439 = vrot.slane %v1421, 2
      %v1440 = vrot.slane %v1245, 2
      %v1441 = vsel %vm493, %v1439, %v1440
      %v1442 = vrot.slane %v1422, 2
      %v1443 = vrot.slane %v1247, 2
      %v1444 = vsel %vm493, %v1442, %v1443
      %v1445 = vrot.slane %v1423, 2
      %v1446 = vrot.slane %v1249, 2
      %v1447 = vsel %vm493, %v1445, %v1446
      %v1448 = vrot.slane %v1424, 2
      %v1449 = vrot.slane %v1251, 2
      %v1450 = vsel %vm493, %v1448, %v1449
      %v1451 = vrot.slane %v1425, 2
      %v1452 = vrot.slane %v1253, 2
      %v1453 = vsel %vm493, %v1451, %v1452
      %v1454 = vrot.slane %v1426, 2
      %v1455 = vrot.slane %v1255, 2
      %v1456 = vsel %vm493, %v1454, %v1455
      %v1457 = vrot.slane %v1427, 2
      %v1458 = vrot.slane %v1257, 2
      %v1459 = vsel %vm493, %v1457, %v1458
      %v1468 = vpack.c.bf16 %v1441, %v1438
      %v1469 = vpack.c.bf16 %v1447, %v1444
      %v1470 = vpack.c.bf16 %v1453, %v1450
      %v1471 = vpack.c.bf16 %v1459, %v1456
      %s1472 = scalar_lea.vmem %s1, 128
      %v1473 = vld [vmem:[%s1472] sm:$0xf]
      %v1474 = vld [vmem:[%s1472 + $0x4] sm:$0xf]
      %v1475 = vld [vmem:[%s1472 + $0x8] sm:$0xf]
      %v1476 = vld [vmem:[%s1472 + $0xc] sm:$0xf]
      %v1481 = vunpack.c.l.b16 %v1473
      %v1482 = vunpack.c.l.b16 %v1474
      %v1483 = vunpack.c.l.b16 %v1475
      %v1484 = vunpack.c.l.b16 %v1476
      %v1485 = vpack.c.b16 %v1482, %v1481
      %v1486 = vpack.c.b16 %v1484, %v1483
      %v1490 = vsel %vm302, %v1468, 0
      %v1493 = vsel %vm302, %v1469, 0
      %v1496 = vsel %vm302, %v1470, 0
      %v1499 = vsel %vm302, %v1471, 0
      %1501 = vmatprep.subr.bf16.mxu0 0
      %1502 = vmatpush1.bf16.msra.mxu0 %v1485
      %1503 = vmatprep.subr.bf16.mxu0 0
      %1504 = vmatpush1.bf16.msra.mxu0 %v1486
      %1505 = vmatprep.subr.bf16.mxu0 0
      %1506 = vmatpush1.bf16.msra.mxu0 0
      %1507 = vmatprep.subr.bf16.mxu0 0
      %1508 = vmatpush1.bf16.msra.mxu0 0
      %1509 = vmatprep.subr.bf16.mxu0 0
      %1510 = vmatpush1.bf16.msra.mxu0 0
      %1511 = vmatprep.subr.bf16.mxu0 0
      %1512 = vmatpush1.bf16.msra.mxu0 0
      %1513 = vmatprep.subr.bf16.mxu0 0
      %1514 = vmatpush1.bf16.msra.mxu0 0
      %1515 = vmatprep.subr.bf16.mxu0 0
      %1516 = vmatpush1.bf16.msra.mxu0 0
      %1517 = vmatprep.subr.bf16.mxu0 0
      %1518 = vmatpush1.bf16.msra.mxu0 0
      %1519 = vmatprep.subr.bf16.mxu0 0
      %1520 = vmatpush1.bf16.msra.mxu0 0
      %1521 = vmatprep.subr.bf16.mxu0 0
      %1522 = vmatpush1.bf16.msra.mxu0 0
      %1523 = vmatprep.subr.bf16.mxu0 0
      %1524 = vmatpush1.bf16.msra.mxu0 0
      %1525 = vmatprep.subr.bf16.mxu0 0
      %1526 = vmatpush1.bf16.msra.mxu0 0
      %1527 = vmatprep.subr.bf16.mxu0 0
      %1528 = vmatpush1.bf16.msra.mxu0 0
      %1529 = vmatprep.subr.bf16.mxu0 0
      %1530 = vmatpush1.bf16.msra.mxu0 0
      %1531 = vmatprep.subr.bf16.mxu0 0
      %1532 = vmatpush1.bf16.msra.mxu0 0
      %1533 = vmatprep.mubr.bf16.mxu0 0
      %1534 = vmatmul.mubr.bf16.gmra.mrb[0].mxu0 %v1490
      %v1535 = vpop.f32.mrb[0].mxu0
      %v1536 = vadd.f32 0.0, %v1535
      %v1537 = vpop.f32.mrb[0].mxu0
      %v1538 = vpop.f32.mrb[0].mxu0
      %v1539 = vadd.f32 0.0, %v1538
      %v1540 = vpop.f32.mrb[0].mxu0
      %1541 = vmatprep.mubr.bf16.mxu0 0
      %1542 = vmatmul.mubr.bf16.gmra.mrb[0].mxu0 %v1493
      %v1543 = vpop.f32.mrb[0].mxu0
      %v1544 = vadd.f32 0.0, %v1543
      %v1545 = vpop.f32.mrb[0].mxu0
      %v1546 = vpop.f32.mrb[0].mxu0
      %v1547 = vadd.f32 0.0, %v1546
      %v1548 = vpop.f32.mrb[0].mxu0
      %1549 = vmatprep.mubr.bf16.mxu0 0
      %1550 = vmatmul.mubr.bf16.gmra.mrb[0].mxu0 %v1496
      %v1551 = vpop.f32.mrb[0].mxu0
      %v1552 = vadd.f32 0.0, %v1551
      %v1553 = vpop.f32.mrb[0].mxu0
      %v1554 = vpop.f32.mrb[0].mxu0
      %v1555 = vadd.f32 0.0, %v1554
      %v1556 = vpop.f32.mrb[0].mxu0
      %1557 = vmatprep.mubr.bf16.mxu0 0
      %1558 = vmatmul.mubr.bf16.gmra.mrb[0].mxu0 %v1499
      %v1559 = vpop.f32.mrb[0].mxu0
      %v1560 = vadd.f32 0.0, %v1559
      %v1561 = vpop.f32.mrb[0].mxu0
      %v1562 = vpop.f32.mrb[0].mxu0
      %v1563 = vadd.f32 0.0, %v1562
      %v1564 = vpop.f32.mrb[0].mxu0
      %1565 = vdwg.mxu0
      %v1566 = vadd.f32 %v1404, %v1536
      %v1567 = vadd.f32 %v1405, %v1539
      %v1568 = vadd.f32 %v1406, %v1544
      %v1569 = vadd.f32 %v1407, %v1547
      %v1570 = vadd.f32 %v1408, %v1552
      %v1571 = vadd.f32 %v1409, %v1555
      %v1572 = vadd.f32 %v1410, %v1560
      %v1573 = vadd.f32 %v1411, %v1563
      %v1574 = vld [vmem:[%s185] sm:$0xf]
      %v1575 = vld [vmem:[%s185 + $0x4] sm:$0xf]
      %v1576 = vld [vmem:[%s185 + $0x8] sm:$0xf]
      %v1577 = vld [vmem:[%s185 + $0xc] sm:$0xf]
      %v1578 = vld [vmem:[%s185 + $0x10] sm:$0xf]
      %v1579 = vld [vmem:[%s185 + $0x14] sm:$0xf]
      %v1580 = vld [vmem:[%s185 + $0x18] sm:$0xf]
      %v1581 = vld [vmem:[%s185 + $0x1c] sm:$0xf]
      %v1582 = vunpack.c.l.bf16 %v1574
      %v1583 = vunpack.c.l.bf16 %v1575
      %v1584 = vunpack.c.l.bf16 %v1576
      %v1585 = vunpack.c.l.bf16 %v1577
      %v1586 = vunpack.c.l.bf16 %v1578
      %v1587 = vunpack.c.l.bf16 %v1579
      %v1588 = vunpack.c.l.bf16 %v1580
      %v1589 = vunpack.c.l.bf16 %v1581
      %v1590 = vadd.f32 %v1566, %v1582
      %v1591 = vadd.f32 %v1567, %v1583
      %v1592 = vadd.f32 %v1568, %v1584
      %v1593 = vadd.f32 %v1569, %v1585
      %v1594 = vadd.f32 %v1570, %v1586
      %v1595 = vadd.f32 %v1571, %v1587
      %v1596 = vadd.f32 %v1572, %v1588
      %v1597 = vadd.f32 %v1573, %v1589
      %v1598 = vpack.c.bf16 %v1591, %v1590
      %v1599 = vpack.c.bf16 %v1593, %v1592
      %v1600 = vpack.c.bf16 %v1595, %v1594
      %v1601 = vpack.c.bf16 %v1597, %v1596
      %v1606 = vunpack.c.l.b16 %v1598
      %v1607 = vunpack.c.h.b16 %v1598
      %v1608 = vunpack.c.l.b16 %v1599
      %v1609 = vunpack.c.h.b16 %v1599
      %v1610 = vunpack.c.l.b16 %v1600
      %v1611 = vunpack.c.h.b16 %v1600
      %v1612 = vunpack.c.l.b16 %v1601
      %v1613 = vunpack.c.h.b16 %v1601
      %v1614 = vpack.c.b16 %v1606, %v1606
      %v1615 = vpack.c.b16 %v1607, %v1607
      %v1616 = vpack.c.b16 %v1608, %v1608
      %v1617 = vpack.c.b16 %v1609, %v1609
      %v1618 = vpack.c.b16 %v1610, %v1610
      %v1619 = vpack.c.b16 %v1611, %v1611
      %v1620 = vpack.c.b16 %v1612, %v1612
      %v1621 = vpack.c.b16 %v1613, %v1613
      %vm1630 = vcmask 257024
      %1631 = vst.msk [vmem:[%s190] sm:$0xf] %vm1630, %v1614
      %1632 = vst.msk [vmem:[%s190 + $0x4] sm:$0xf] %vm1630, %v1615
      %1633 = vst.msk [vmem:[%s190 + $0x8] sm:$0xf] %vm1630, %v1616
      %1634 = vst.msk [vmem:[%s190 + $0xc] sm:$0xf] %vm1630, %v1617
      %1635 = vst.msk [vmem:[%s190 + $0x10] sm:$0xf] %vm1630, %v1618
      %1636 = vst.msk [vmem:[%s190 + $0x14] sm:$0xf] %vm1630, %v1619
      %1637 = vst.msk [vmem:[%s190 + $0x18] sm:$0xf] %vm1630, %v1620
      %1638 = vst.msk [vmem:[%s190 + $0x1c] sm:$0xf] %vm1630, %v1621
      %p1639 = scmp.lt.s32.totalorder %s14, 1
      %s1640 = scalar_select %p1639, %s14, 1
      %s1641 = smul.addr %s1640, 8
      %s1642 = smul.addr %s1641, 4
      %s1643 = scalar_lea.vmem %s3, %s1642
      // Predicated region
      $region33: #{_lambda_.6} parent=31 // pred_check
        %p1644 = pneg %p105
      $region34: #{_lambda_.6} parent=31 // pred_check_branch
        %1646 = sbr.rel (%p1644) target = $region36
      $region35: #{_lambda_.6} parent=31 // pred_region
        _
      $region36: #{_lambda_.6} parent=31 // pred_fallthru
        _
    $region32: #{_lambda_.6} parent=5 // pred_fallthru
      _
    %p1647 = scmp.le.s32.totalorder 2, %s9
    // Predicated region
    $region37: #{_lambda_.6} parent=5 // pred_check
      %p1648 = pneg %p1647
    $region38: #{_lambda_.6} parent=5 // pred_check_branch
      %1650 = sbr.rel (%p1648) target = $region40
    $region39: #{_lambda_.6} parent=5 // pred_region
      %s1651 = ssub.s32 %s9, 2
      // Predicated region
      $region41: #{_lambda_.6} parent=39 // pred_check
        %p1652 = pneg %p111
      $region42: #{_lambda_.6} parent=39 // pred_check_branch
        %1654 = sbr.rel (%p1652) target = $region44
      $region43: #{_lambda_.6} parent=39 // pred_region
        %p1655 = scmp.lt.s32.totalorder %s15, 1
        %s1656 = scalar_select %p1655, %s15, 1
        %s1657 = smul.addr %s1656, 8
        %s1658 = smul.addr %s1657, 4
        %s1659 = scalar_lea.vmem %s3, %s1658
      $region44: #{_lambda_.6} parent=39 // pred_fallthru
        _
    $region40: #{_lambda_.6} parent=5 // pred_fallthru
      _
  $region6: #{_lambda_.6} parent=0 // loop_footer
    %s13 = sadd.s32 1, %s9
  $region7: #{_lambda_.6} parent=0 // loop_footer_branch
    %8 = sbr.rel target = $region3
  $region8: #{_lambda_.6} parent=0 // loop_exit
    _

// kernel: _lambda_.5
$region0: #{_lambda_.5}
  #allocation0 [shape = 'u32[]', space=smem, size = 0x4, offset = 0x4, fixed_abs, tag = 'smem constant byte address 0x4 - core index']
  #allocation1 [shape = 'u32[144,128]{1,0:T(1,128)}', space=vmem, size = 0x12000, scoped, tag = 'internal scratch']
  %s0 = inlined_call_operand.vmem [shape: bf16[2,36,9,16], index: 0, kind: input, shape index: {}]
  %s1 = inlined_call_operand.vmem [shape: bf16[9,16,32], index: 1, kind: input, shape index: {}]
  %s2 = inlined_call_operand.vmem [shape: bf16[1,16,32], index: 2, kind: input, shape index: {}]
  %s3 = inlined_call_operand.vmem [shape: f32[1,32], index: 3, kind: input, shape index: {}]
  %s4 = inlined_call_operand.vmem [shape: f32[1,32], index: 4, kind: input, shape index: {}]
  %s5 = inlined_call_operand.vmem [shape: f32[32,32], index: 5, kind: input, shape index: {}]
  %s6 = inlined_call_operand.vmem [shape: bf16[2,64,32], index: 6, kind: output, shape index: {0}]
  %s7 = inlined_call_operand.vmem [shape: bf16[2,64,32], index: 7, kind: output, shape index: {1}]
  %8 = xla_tuple %s6, %s7
  %s9 = sld [smem:[#allocation0]]
  $region65: #{_lambda_.5} parent=0
    _
  %s11 = ssub.s32 1, %s9
  %s12 = scalar_select 0, %s11, %s9
  loop: start=0, step=1, limit=4
  $region2: #{_lambda_.5} parent=0 // loop_pre_header
    _
  $region3: #{_lambda_.5} parent=0 // loop_header
    %s14 = sphi 0, %s18
    %p15 = scmp.ge.s32.totalorder %s14, 4
    %s24 = sphi 0, %s26
    %s27 = sphi 0, %s24
    %s28 = sphi 0, %s27
    %s44 = sphi 0, %s28
    %s48 = sphi 0, %s48
    %s50 = sphi 0, %s48
    %s51 = sphi 0, %s50
    %s65 = sphi 0, %s51
    %s69 = sphi 0, %s69
    %s71 = sphi 0, %s69
    %s72 = sphi 0, %s71
    %s86 = sphi 0, %s72
    %s90 = sphi 0, %s90
    %s92 = sphi 0, %s90
    %s93 = sphi 0, %s92
    %s107 = sphi 0, %s93
    %s111 = sphi 0, %s111
    %s113 = sphi 0, %s111
    %s114 = sphi 0, %s113
    %s128 = sphi 0, %s114
    %s132 = sphi 0, %s132
    %s134 = sphi 0, %s132
    %s135 = sphi 0, %s134
    %s149 = sphi 0, %s135
    %s155 = sphi 0, %s157
    %s158 = sphi 0, %s155
    %s159 = sphi 0, %s158
    %s175 = sphi 0, %s159
    %s181 = sphi 0, %s183
    %s184 = sphi 0, %s181
    %s185 = sphi 0, %s184
    %s201 = sphi 0, %s185
  $region4: #{_lambda_.5} parent=0 // loop_header_branch
    %17 = sbr.rel (%p15) target = $region8
  $region5: #{_lambda_.5} parent=0 // loop_body
    %s19 = ssub.s32 %s14, 1
    %s20 = ssub.s32 %s14, 2
    %s21 = sadd.s32 %s14, 1
    %s22 = ssub.s32 %s14, %s21
    %p23 = scmp.eq.s32.totalorder %s22, 0
    %s25 = sadd.s32 %s24, 1
    %s26 = scalar_select %p23, %s24, %s25
    %p29 = pneg %p23
    %p30 = scmp.eq.s32.totalorder %s14, 1
    %p31 = por %p29, %p30
    %p32 = scmp.ne.s32.totalorder %s24, %s27
    %p33 = scmp.eq.s32.totalorder %s14, 0
    %p34 = por %p32, %p33
    %p35 = scmp.ne.s32.totalorder %s24, %s27
    %p36 = scmp.eq.s32.totalorder %s19, 1
    %p37 = por %p35, %p36
    %p38 = scmp.ne.s32.totalorder %s27, %s28
    %p39 = scmp.eq.s32.totalorder %s19, 0
    %p40 = por %p38, %p39
    %p41 = scmp.ne.s32.totalorder %s27, %s28
    %p42 = scmp.eq.s32.totalorder %s20, 1
    %p43 = por %p41, %p42
    %p45 = scmp.ne.s32.totalorder %s28, %s44
    %p46 = scmp.eq.s32.totalorder %s20, 0
    %p47 = por %p45, %p46
    %s49 = sadd.s32 %s48, 1
    %p52 = scmp.eq.s32.totalorder %s14, 1
    %p53 = scmp.ne.s32.totalorder %s48, %s50
    %p54 = scmp.eq.s32.totalorder %s14, 0
    %p55 = por %p53, %p54
    %p56 = scmp.ne.s32.totalorder %s48, %s50
    %p57 = scmp.eq.s32.totalorder %s19, 1
    %p58 = por %p56, %p57
    %p59 = scmp.ne.s32.totalorder %s50, %s51
    %p60 = scmp.eq.s32.totalorder %s19, 0
    %p61 = por %p59, %p60
    %p62 = scmp.ne.s32.totalorder %s50, %s51
    %p63 = scmp.eq.s32.totalorder %s20, 1
    %p64 = por %p62, %p63
    %p66 = scmp.ne.s32.totalorder %s51, %s65
    %p67 = scmp.eq.s32.totalorder %s20, 0
    %p68 = por %p66, %p67
    %s70 = sadd.s32 %s69, 1
    %p73 = scmp.eq.s32.totalorder %s14, 1
    %p74 = scmp.ne.s32.totalorder %s69, %s71
    %p75 = scmp.eq.s32.totalorder %s14, 0
    %p76 = por %p74, %p75
    %p77 = scmp.ne.s32.totalorder %s69, %s71
    %p78 = scmp.eq.s32.totalorder %s19, 1
    %p79 = por %p77, %p78
    %p80 = scmp.ne.s32.totalorder %s71, %s72
    %p81 = scmp.eq.s32.totalorder %s19, 0
    %p82 = por %p80, %p81
    %p83 = scmp.ne.s32.totalorder %s71, %s72
    %p84 = scmp.eq.s32.totalorder %s20, 1
    %p85 = por %p83, %p84
    %p87 = scmp.ne.s32.totalorder %s72, %s86
    %p88 = scmp.eq.s32.totalorder %s20, 0
    %p89 = por %p87, %p88
    %s91 = sadd.s32 %s90, 1
    %p94 = scmp.eq.s32.totalorder %s14, 1
    %p95 = scmp.ne.s32.totalorder %s90, %s92
    %p96 = scmp.eq.s32.totalorder %s14, 0
    %p97 = por %p95, %p96
    %p98 = scmp.ne.s32.totalorder %s90, %s92
    %p99 = scmp.eq.s32.totalorder %s19, 1
    %p100 = por %p98, %p99
    %p101 = scmp.ne.s32.totalorder %s92, %s93
    %p102 = scmp.eq.s32.totalorder %s19, 0
    %p103 = por %p101, %p102
    %p104 = scmp.ne.s32.totalorder %s92, %s93
    %p105 = scmp.eq.s32.totalorder %s20, 1
    %p106 = por %p104, %p105
    %p108 = scmp.ne.s32.totalorder %s93, %s107
    %p109 = scmp.eq.s32.totalorder %s20, 0
    %p110 = por %p108, %p109
    %s112 = sadd.s32 %s111, 1
    %p115 = scmp.eq.s32.totalorder %s14, 1
    %p116 = scmp.ne.s32.totalorder %s111, %s113
    %p117 = scmp.eq.s32.totalorder %s14, 0
    %p118 = por %p116, %p117
    %p119 = scmp.ne.s32.totalorder %s111, %s113
    %p120 = scmp.eq.s32.totalorder %s19, 1
    %p121 = por %p119, %p120
    %p122 = scmp.ne.s32.totalorder %s113, %s114
    %p123 = scmp.eq.s32.totalorder %s19, 0
    %p124 = por %p122, %p123
    %p125 = scmp.ne.s32.totalorder %s113, %s114
    %p126 = scmp.eq.s32.totalorder %s20, 1
    %p127 = por %p125, %p126
    %p129 = scmp.ne.s32.totalorder %s114, %s128
    %p130 = scmp.eq.s32.totalorder %s20, 0
    %p131 = por %p129, %p130
    %s133 = sadd.s32 %s132, 1
    %p136 = scmp.eq.s32.totalorder %s14, 1
    %p137 = scmp.ne.s32.totalorder %s132, %s134
    %p138 = scmp.eq.s32.totalorder %s14, 0
    %p139 = por %p137, %p138
    %p140 = scmp.ne.s32.totalorder %s132, %s134
    %p141 = scmp.eq.s32.totalorder %s19, 1
    %p142 = por %p140, %p141
    %p143 = scmp.ne.s32.totalorder %s134, %s135
    %p144 = scmp.eq.s32.totalorder %s19, 0
    %p145 = por %p143, %p144
    %p146 = scmp.ne.s32.totalorder %s134, %s135
    %p147 = scmp.eq.s32.totalorder %s20, 1
    %p148 = por %p146, %p147
    %p150 = scmp.ne.s32.totalorder %s135, %s149
    %p151 = scmp.eq.s32.totalorder %s20, 0
    %p152 = por %p150, %p151
    %s153 = ssub.s32 %s14, %s21
    %p154 = scmp.eq.s32.totalorder %s153, 0
    %s156 = sadd.s32 %s155, 1
    %s157 = scalar_select %p154, %s155, %s156
    %p160 = pneg %p154
    %p161 = scmp.eq.s32.totalorder %s14, 1
    %p162 = por %p160, %p161
    %p163 = scmp.ne.s32.totalorder %s155, %s158
    %p164 = scmp.eq.s32.totalorder %s14, 0
    %p165 = por %p163, %p164
    %p166 = scmp.ne.s32.totalorder %s155, %s158
    %p167 = scmp.eq.s32.totalorder %s19, 1
    %p168 = por %p166, %p167
    %p169 = scmp.ne.s32.totalorder %s158, %s159
    %p170 = scmp.eq.s32.totalorder %s19, 0
    %p171 = por %p169, %p170
    %p172 = scmp.ne.s32.totalorder %s158, %s159
    %p173 = scmp.eq.s32.totalorder %s20, 1
    %p174 = por %p172, %p173
    %p176 = scmp.ne.s32.totalorder %s159, %s175
    %p177 = scmp.eq.s32.totalorder %s20, 0
    %p178 = por %p176, %p177
    %s179 = ssub.s32 %s14, %s21
    %p180 = scmp.eq.s32.totalorder %s179, 0
    %s182 = sadd.s32 %s181, 1
    %s183 = scalar_select %p180, %s181, %s182
    %p186 = pneg %p180
    %p187 = scmp.eq.s32.totalorder %s14, 1
    %p188 = por %p186, %p187
    %p189 = scmp.ne.s32.totalorder %s181, %s184
    %p190 = scmp.eq.s32.totalorder %s14, 0
    %p191 = por %p189, %p190
    %p192 = scmp.ne.s32.totalorder %s181, %s184
    %p193 = scmp.eq.s32.totalorder %s19, 1
    %p194 = por %p192, %p193
    %p195 = scmp.ne.s32.totalorder %s184, %s185
    %p196 = scmp.eq.s32.totalorder %s19, 0
    %p197 = por %p195, %p196
    %p198 = scmp.ne.s32.totalorder %s184, %s185
    %p199 = scmp.eq.s32.totalorder %s20, 1
    %p200 = por %p198, %p199
    %p202 = scmp.ne.s32.totalorder %s185, %s201
    %p203 = scmp.eq.s32.totalorder %s20, 0
    %p204 = por %p202, %p203
    %p205 = scmp.le.s32.totalorder 1, %s14
    %p206 = scmp.lt.s32.totalorder %s14, 3
    %p207 = pnand %p205, %p206
    %p208 = pneg %p207
    // Predicated region
    $region9: #{_lambda_.5} parent=5 // pred_check
      _
    $region10: #{_lambda_.5} parent=5 // pred_check_branch
      %210 = sbr.rel (%p207) target = $region12
    $region11: #{_lambda_.5} parent=5 // pred_region
      %s211 = ssub.s32 %s14, 1
      // Predicated region
      $region13: #{_lambda_.5} parent=11 // pred_check
        %p212 = pneg %p61
      $region14: #{_lambda_.5} parent=11 // pred_check_branch
        %214 = sbr.rel (%p212) target = $region16
      $region15: #{_lambda_.5} parent=11 // pred_region
        _
      $region16: #{_lambda_.5} parent=11 // pred_fallthru
        _
      // Predicated region
      $region17: #{_lambda_.5} parent=11 // pred_check
        %p215 = pneg %p82
      $region18: #{_lambda_.5} parent=11 // pred_check_branch
        %217 = sbr.rel (%p215) target = $region20
      $region19: #{_lambda_.5} parent=11 // pred_region
        _
      $region20: #{_lambda_.5} parent=11 // pred_fallthru
        _
      // Predicated region
      $region21: #{_lambda_.5} parent=11 // pred_check
        %p218 = pneg %p103
      $region22: #{_lambda_.5} parent=11 // pred_check_branch
        %220 = sbr.rel (%p218) target = $region24
      $region23: #{_lambda_.5} parent=11 // pred_region
        _
      $region24: #{_lambda_.5} parent=11 // pred_fallthru
        _
      // Predicated region
      $region25: #{_lambda_.5} parent=11 // pred_check
        %p221 = pneg %p124
      $region26: #{_lambda_.5} parent=11 // pred_check_branch
        %223 = sbr.rel (%p221) target = $region28
      $region27: #{_lambda_.5} parent=11 // pred_region
        _
      $region28: #{_lambda_.5} parent=11 // pred_fallthru
        _
      // Predicated region
      $region29: #{_lambda_.5} parent=11 // pred_check
        %p224 = pneg %p145
      $region30: #{_lambda_.5} parent=11 // pred_check_branch
        %226 = sbr.rel (%p224) target = $region32
      $region31: #{_lambda_.5} parent=11 // pred_region
        _
      $region32: #{_lambda_.5} parent=11 // pred_fallthru
        _
    $region12: #{_lambda_.5} parent=5 // pred_fallthru
      _
    %p227 = scmp.lt.s32.totalorder %s14, 2
    // Predicated region
    $region33: #{_lambda_.5} parent=5 // pred_check
      %p228 = pneg %p227
    $region34: #{_lambda_.5} parent=5 // pred_check_branch
      %230 = sbr.rel (%p228) target = $region36
    $region35: #{_lambda_.5} parent=5 // pred_region
      // Predicated region
      $region37: #{_lambda_.5} parent=35 // pred_check
        %p231 = pneg %p34
      $region38: #{_lambda_.5} parent=35 // pred_check_branch
        %233 = sbr.rel (%p231) target = $region40
      $region39: #{_lambda_.5} parent=35 // pred_region
        %p234 = scmp.lt.s32.totalorder %s14, 1
        %s235 = scalar_select %p234, %s14, 1
        %s236 = smul.addr %s235, 72
        %s237 = smul.addr %s236, 4
        %s238 = scalar_lea.vmem %s0, %s237
      $region40: #{_lambda_.5} parent=35 // pred_fallthru
        _
    $region36: #{_lambda_.5} parent=5 // pred_fallthru
      _
    %p239 = scmp.le.s32.totalorder 1, %s14
    %p240 = scmp.lt.s32.totalorder %s14, 3
    %p241 = pnand %p239, %p240
    %p242 = pneg %p241
    // Predicated region
    $region41: #{_lambda_.5} parent=5 // pred_check
      _
    $region42: #{_lambda_.5} parent=5 // pred_check_branch
      %244 = sbr.rel (%p241) target = $region44
    $region43: #{_lambda_.5} parent=5 // pred_region
      %s245 = ssub.s32 %s14, 1
      %p246 = scmp.lt.s32.totalorder %s19, 1
      %s247 = scalar_select %p246, %s19, 1
      %s248 = smul.addr %s247, 72
      %s249 = smul.addr %s248, 4
      %s250 = scalar_lea.vmem %s0, %s249
      %p251 = pneg %p40
      %p252 = pneg %p37
      %p253 = pneg %p61
      %p254 = pneg %p58
      %p255 = pneg %p82
      %p256 = pneg %p79
      %p257 = pneg %p103
      %p258 = pneg %p100
      %p259 = pneg %p124
      %p260 = pneg %p121
      %p261 = pneg %p145
      %p262 = pneg %p142
      %p263 = pneg %p171
      %p264 = pneg %p168
      %p265 = scmp.lt.s32.totalorder %s19, 1
      %s266 = scalar_select %p265, %s19, 1
      %s267 = smul.addr %s266, 8
      %s268 = smul.addr %s267, 4
      %s269 = scalar_lea.vmem %s6, %s268
      %p270 = pneg %p197
      %p271 = pneg %p194
      %p272 = scmp.lt.s32.totalorder %s19, 1
      %s273 = scalar_select %p272, %s19, 1
      %s274 = smul.addr %s273, 8
      %s275 = smul.addr %s274, 4
      %s276 = scalar_lea.vmem %s7, %s275
      %p277 = scmp.lt.s32.totalorder %s19, 1
      %s278 = scalar_select %p277, %s19, 1
      %s279 = smul.addr %s278, 72
      %s280 = smul.addr %s279, 4
      %s281 = scalar_lea.vmem %s0, %s280
      %p282 = scmp.lt.s32.totalorder %s19, 1
      %s283 = scalar_select %p282, %s19, 1
      %s284 = smul.addr %s283, 8
      %s285 = smul.addr %s284, 4
      %s286 = scalar_lea.vmem %s6, %s285
      %p287 = scmp.lt.s32.totalorder %s19, 1
      %s288 = scalar_select %p287, %s19, 1
      %s289 = smul.addr %s288, 8
      %s290 = smul.addr %s289, 4
      %s291 = scalar_lea.vmem %s7, %s290
      %v293 = vld [vmem:[%s281] sm:$0xf]
      %v294 = vld [vmem:[%s281 + $0x8] sm:$0xf]
      %v295 = vld [vmem:[%s281 + $0x10] sm:$0xf]
      %v296 = vld [vmem:[%s281 + $0x18] sm:$0xf]
      %v297 = vld [vmem:[%s281 + $0x20] sm:$0xf]
      %v298 = vld [vmem:[%s281 + $0x28] sm:$0xf]
      %v299 = vld [vmem:[%s281 + $0x30] sm:$0xf]
      %v300 = vld [vmem:[%s281 + $0x38] sm:$0xf]
      %v301 = vunpack.c.l.bf16 %v293
      %v302 = vunpack.c.l.bf16 %v294
      %v303 = vunpack.c.l.bf16 %v295
      %v304 = vunpack.c.l.bf16 %v296
      %v305 = vunpack.c.l.bf16 %v297
      %v306 = vunpack.c.l.bf16 %v298
      %v307 = vunpack.c.l.bf16 %v299
      %v308 = vunpack.c.l.bf16 %v300
      %v309 = vpack.c.bf16 %v302, %v301
      %v310 = vpack.c.bf16 %v304, %v303
      %v311 = vpack.c.bf16 %v306, %v305
      %v312 = vpack.c.bf16 %v308, %v307
      %v313 = vld [vmem:[%s1] sm:$0xf]
      %v314 = vld [vmem:[%s1 + $0x4] sm:$0xf]
      %s315 = scalar_lea.vmem %s281, 72
      %v316 = vld [vmem:[%s315] sm:$0xf]
      %v317 = vld [vmem:[%s315 + $0x8] sm:$0xf]
      %v318 = vld [vmem:[%s315 + $0x10] sm:$0xf]
      %v319 = vld [vmem:[%s315 + $0x18] sm:$0xf]
      %v320 = vld [vmem:[%s315 + $0x20] sm:$0xf]
      %v321 = vld [vmem:[%s315 + $0x28] sm:$0xf]
      %v322 = vld [vmem:[%s315 + $0x30] sm:$0xf]
      %v323 = vld [vmem:[%s315 + $0x38] sm:$0xf]
      %v324 = vunpack.c.l.bf16 %v316
      %v325 = vunpack.c.l.bf16 %v317
      %v326 = vunpack.c.l.bf16 %v318
      %v327 = vunpack.c.l.bf16 %v319
      %v328 = vunpack.c.l.bf16 %v320
      %v329 = vunpack.c.l.bf16 %v321
      %v330 = vunpack.c.l.bf16 %v322
      %v331 = vunpack.c.l.bf16 %v323
      %v332 = vpack.c.bf16 %v325, %v324
      %v333 = vpack.c.bf16 %v327, %v326
      %v334 = vpack.c.bf16 %v329, %v328
      %v335 = vpack.c.bf16 %v331, %v330
      %s336 = scalar_lea.vmem %s1, 8
      %v337 = vld [vmem:[%s336] sm:$0xf]
      %v338 = vld [vmem:[%s336 + $0x4] sm:$0xf]
      %v341 = vunpack.c.l.b16 %v337
      %v342 = vunpack.c.l.b16 %v338
      %v343 = vpack.c.b16 %v342, %v341
      %vm345 = vcmask 130048
      %v347 = vsel %vm345, %v332, 0
      %v350 = vsel %vm345, %v333, 0
      %v353 = vsel %vm345, %v334, 0
      %v356 = vsel %vm345, %v335, 0
      %358 = vmatprep.subr.bf16.mxu0 0
      %359 = vmatpush1.bf16.msra.mxu0 %v343
      %360 = vmatprep.subr.bf16.mxu0 0
      %361 = vmatpush1.bf16.msra.mxu0 0
      %362 = vmatprep.subr.bf16.mxu0 0
      %363 = vmatpush1.bf16.msra.mxu0 0
      %364 = vmatprep.subr.bf16.mxu0 0
      %365 = vmatpush1.bf16.msra.mxu0 0
      %366 = vmatprep.subr.bf16.mxu0 0
      %367 = vmatpush1.bf16.msra.mxu0 0
      %368 = vmatprep.subr.bf16.mxu0 0
      %369 = vmatpush1.bf16.msra.mxu0 0
      %370 = vmatprep.subr.bf16.mxu0 0
      %371 = vmatpush1.bf16.msra.mxu0 0
      %372 = vmatprep.subr.bf16.mxu0 0
      %373 = vmatpush1.bf16.msra.mxu0 0
      %374 = vmatprep.subr.bf16.mxu0 0
      %375 = vmatpush1.bf16.msra.mxu0 0
      %376 = vmatprep.subr.bf16.mxu0 0
      %377 = vmatpush1.bf16.msra.mxu0 0
      %378 = vmatprep.subr.bf16.mxu0 0
      %379 = vmatpush1.bf16.msra.mxu0 0
      %380 = vmatprep.subr.bf16.mxu0 0
      %381 = vmatpush1.bf16.msra.mxu0 0
      %382 = vmatprep.subr.bf16.mxu0 0
      %383 = vmatpush1.bf16.msra.mxu0 0
      %384 = vmatprep.subr.bf16.mxu0 0
      %385 = vmatpush1.bf16.msra.mxu0 0
      %386 = vmatprep.subr.bf16.mxu0 0
      %387 = vmatpush1.bf16.msra.mxu0 0
      %388 = vmatprep.subr.bf16.mxu0 0
      %389 = vmatpush1.bf16.msra.mxu0 0
      %390 = vmatprep.mubr.bf16.mxu0 0
      %391 = vmatmul.mubr.bf16.gmra.mrb[0].mxu0 %v347
      %v392 = vpop.f32.mrb[0].mxu0
      %v393 = vadd.f32 0.0, %v392
      %v394 = vpop.f32.mrb[0].mxu0
      %v395 = vpop.f32.mrb[0].mxu0
      %v396 = vadd.f32 0.0, %v395
      %v397 = vpop.f32.mrb[0].mxu0
      %398 = vmatprep.mubr.bf16.mxu0 0
      %399 = vmatmul.mubr.bf16.gmra.mrb[0].mxu0 %v350
      %v400 = vpop.f32.mrb[0].mxu0
      %v401 = vadd.f32 0.0, %v400
      %v402 = vpop.f32.mrb[0].mxu0
      %v403 = vpop.f32.mrb[0].mxu0
      %v404 = vadd.f32 0.0, %v403
      %v405 = vpop.f32.mrb[0].mxu0
      %406 = vmatprep.mubr.bf16.mxu0 0
      %407 = vmatmul.mubr.bf16.gmra.mrb[0].mxu0 %v353
      %v408 = vpop.f32.mrb[0].mxu0
      %v409 = vadd.f32 0.0, %v408
      %v410 = vpop.f32.mrb[0].mxu0
      %v411 = vpop.f32.mrb[0].mxu0
      %v412 = vadd.f32 0.0, %v411
      %v413 = vpop.f32.mrb[0].mxu0
      %414 = vmatprep.mubr.bf16.mxu0 0
      %415 = vmatmul.mubr.bf16.gmra.mrb[0].mxu0 %v356
      %v416 = vpop.f32.mrb[0].mxu0
      %v417 = vadd.f32 0.0, %v416
      %v418 = vpop.f32.mrb[0].mxu0
      %v419 = vpop.f32.mrb[0].mxu0
      %v420 = vadd.f32 0.0, %v419
      %v421 = vpop.f32.mrb[0].mxu0
      %422 = vdwg.mxu0
      %v425 = vunpack.c.l.b16 %v313
      %v426 = vunpack.c.l.b16 %v314
      %v427 = vpack.c.b16 %v426, %v425
      %v430 = vsel %vm345, %v309, 0
      %v433 = vsel %vm345, %v310, 0
      %v436 = vsel %vm345, %v311, 0
      %v439 = vsel %vm345, %v312, 0
      %441 = vmatprep.subr.bf16.mxu0 0
      %442 = vmatpush1.bf16.msra.mxu0 %v427
      %443 = vmatprep.subr.bf16.mxu0 0
      %444 = vmatpush1.bf16.msra.mxu0 0
      %445 = vmatprep.subr.bf16.mxu0 0
      %446 = vmatpush1.bf16.msra.mxu0 0
      %447 = vmatprep.subr.bf16.mxu0 0
      %448 = vmatpush1.bf16.msra.mxu0 0
      %449 = vmatprep.subr.bf16.mxu0 0
      %450 = vmatpush1.bf16.msra.mxu0 0
      %451 = vmatprep.subr.bf16.mxu0 0
      %452 = vmatpush1.bf16.msra.mxu0 0
      %453 = vmatprep.subr.bf16.mxu0 0
      %454 = vmatpush1.bf16.msra.mxu0 0
      %455 = vmatprep.subr.bf16.mxu0 0
      %456 = vmatpush1.bf16.msra.mxu0 0
      %457 = vmatprep.subr.bf16.mxu0 0
      %458 = vmatpush1.bf16.msra.mxu0 0
      %459 = vmatprep.subr.bf16.mxu0 0
      %460 = vmatpush1.bf16.msra.mxu0 0
      %461 = vmatprep.subr.bf16.mxu0 0
      %462 = vmatpush1.bf16.msra.mxu0 0
      %463 = vmatprep.subr.bf16.mxu0 0
      %464 = vmatpush1.bf16.msra.mxu0 0
      %465 = vmatprep.subr.bf16.mxu0 0
      %466 = vmatpush1.bf16.msra.mxu0 0
      %467 = vmatprep.subr.bf16.mxu0 0
      %468 = vmatpush1.bf16.msra.mxu0 0
      %469 = vmatprep.subr.bf16.mxu0 0
      %470 = vmatpush1.bf16.msra.mxu0 0
      %471 = vmatprep.subr.bf16.mxu0 0
      %472 = vmatpush1.bf16.msra.mxu0 0
      %473 = vmatprep.mubr.bf16.mxu0 0
      %474 = vmatmul.mubr.bf16.gmra.mrb[0].mxu0 %v430
      %v475 = vpop.f32.mrb[0].mxu0
      %v476 = vadd.f32 %v393, %v475
      %v477 = vpop.f32.mrb[0].mxu0
      %v478 = vpop.f32.mrb[0].mxu0
      %v479 = vadd.f32 %v396, %v478
      %v480 = vpop.f32.mrb[0].mxu0
      %481 = vmatprep.mubr.bf16.mxu0 0
      %482 = vmatmul.mubr.bf16.gmra.mrb[0].mxu0 %v433
      %v483 = vpop.f32.mrb[0].mxu0
      %v484 = vadd.f32 %v401, %v483
      %v485 = vpop.f32.mrb[0].mxu0
      %v486 = vpop.f32.mrb[0].mxu0
      %v487 = vadd.f32 %v404, %v486
      %v488 = vpop.f32.mrb[0].mxu0
      %489 = vmatprep.mubr.bf16.mxu0 0
      %490 = vmatmul.mubr.bf16.gmra.mrb[0].mxu0 %v436
      %v491 = vpop.f32.mrb[0].mxu0
      %v492 = vadd.f32 %v409, %v491
      %v493 = vpop.f32.mrb[0].mxu0
      %v494 = vpop.f32.mrb[0].mxu0
      %v495 = vadd.f32 %v412, %v494
      %v496 = vpop.f32.mrb[0].mxu0
      %497 = vmatprep.mubr.bf16.mxu0 0
      %498 = vmatmul.mubr.bf16.gmra.mrb[0].mxu0 %v439
      %v499 = vpop.f32.mrb[0].mxu0
      %v500 = vadd.f32 %v417, %v499
      %v501 = vpop.f32.mrb[0].mxu0
      %v502 = vpop.f32.mrb[0].mxu0
      %v503 = vadd.f32 %v420, %v502
      %v504 = vpop.f32.mrb[0].mxu0
      %505 = vdwg.mxu0
      %v506 = vld [vmem:[%s281] sm:$0xf]
      %v507 = vld [vmem:[%s281 + $0x4] sm:$0x1]
      %v508 = vld [vmem:[%s281 + $0x8] sm:$0xf]
      %v509 = vld [vmem:[%s281 + $0xc] sm:$0x1]
      %v510 = vld [vmem:[%s281 + $0x10] sm:$0xf]
      %v511 = vld [vmem:[%s281 + $0x14] sm:$0x1]
      %v512 = vld [vmem:[%s281 + $0x18] sm:$0xf]
      %v513 = vld [vmem:[%s281 + $0x1c] sm:$0x1]
      %v514 = vld [vmem:[%s281 + $0x20] sm:$0xf]
      %v515 = vld [vmem:[%s281 + $0x24] sm:$0x1]
      %v516 = vld [vmem:[%s281 + $0x28] sm:$0xf]
      %v517 = vld [vmem:[%s281 + $0x2c] sm:$0x1]
      %v518 = vld [vmem:[%s281 + $0x30] sm:$0xf]
      %v519 = vld [vmem:[%s281 + $0x34] sm:$0x1]
      %v520 = vld [vmem:[%s281 + $0x38] sm:$0xf]
      %v521 = vld [vmem:[%s281 + $0x3c] sm:$0x1]
      %v522 = vunpack.c.l.bf16 %v506
      %v523 = vunpack.c.l.bf16 %v507
      %v524 = vunpack.c.l.bf16 %v508
      %v525 = vunpack.c.l.bf16 %v509
      %v526 = vunpack.c.l.bf16 %v510
      %v527 = vunpack.c.l.bf16 %v511
      %v528 = vunpack.c.l.bf16 %v512
      %v529 = vunpack.c.l.bf16 %v513
      %v530 = vunpack.c.l.bf16 %v514
      %v531 = vunpack.c.l.bf16 %v515
      %v532 = vunpack.c.l.bf16 %v516
      %v533 = vunpack.c.l.bf16 %v517
      %v534 = vunpack.c.l.bf16 %v518
      %v535 = vunpack.c.l.bf16 %v519
      %v536 = vunpack.c.l.bf16 %v520
      %v537 = vunpack.c.l.bf16 %v521
      %vm554 = vcmask 1046528
      %v555 = vrot.slane %v522, 1
      %v556 = vrot.slane %v523, 1
      %v557 = vsel %vm554, %v555, %v556
      %v558 = vrot.slane %v524, 1
      %v559 = vrot.slane %v525, 1
      %v560 = vsel %vm554, %v558, %v559
      %v561 = vrot.slane %v526, 1
      %v562 = vrot.slane %v527, 1
      %v563 = vsel %vm554, %v561, %v562
      %v564 = vrot.slane %v528, 1
      %v565 = vrot.slane %v529, 1
      %v566 = vsel %vm554, %v564, %v565
      %v567 = vrot.slane %v530, 1
      %v568 = vrot.slane %v531, 1
      %v569 = vsel %vm554, %v567, %v568
      %v570 = vrot.slane %v532, 1
      %v571 = vrot.slane %v533, 1
      %v572 = vsel %vm554, %v570, %v571
      %v573 = vrot.slane %v534, 1
      %v574 = vrot.slane %v535, 1
      %v575 = vsel %vm554, %v573, %v574
      %v576 = vrot.slane %v536, 1
      %v577 = vrot.slane %v537, 1
      %v578 = vsel %vm554, %v576, %v577
      %v587 = vpack.c.bf16 %v560, %v557
      %v588 = vpack.c.bf16 %v566, %v563
      %v589 = vpack.c.bf16 %v572, %v569
      %v590 = vpack.c.bf16 %v578, %v575
      %s591 = scalar_lea.vmem %s1, 16
      %v592 = vld [vmem:[%s591] sm:$0xf]
      %v593 = vld [vmem:[%s591 + $0x4] sm:$0xf]
      %v596 = vunpack.c.l.b16 %v592
      %v597 = vunpack.c.l.b16 %v593
      %v598 = vpack.c.b16 %v597, %v596
      %v601 = vsel %vm345, %v587, 0
      %v604 = vsel %vm345, %v588, 0
      %v607 = vsel %vm345, %v589, 0
      %v610 = vsel %vm345, %v590, 0
      %612 = vmatprep.subr.bf16.mxu0 0
      %613 = vmatpush1.bf16.msra.mxu0 %v598
      %614 = vmatprep.subr.bf16.mxu0 0
      %615 = vmatpush1.bf16.msra.mxu0 0
      %616 = vmatprep.subr.bf16.mxu0 0
      %617 = vmatpush1.bf16.msra.mxu0 0
      %618 = vmatprep.subr.bf16.mxu0 0
      %619 = vmatpush1.bf16.msra.mxu0 0
      %620 = vmatprep.subr.bf16.mxu0 0
      %621 = vmatpush1.bf16.msra.mxu0 0
      %622 = vmatprep.subr.bf16.mxu0 0
      %623 = vmatpush1.bf16.msra.mxu0 0
      %624 = vmatprep.subr.bf16.mxu0 0
      %625 = vmatpush1.bf16.msra.mxu0 0
      %626 = vmatprep.subr.bf16.mxu0 0
      %627 = vmatpush1.bf16.msra.mxu0 0
      %628 = vmatprep.subr.bf16.mxu0 0
      %629 = vmatpush1.bf16.msra.mxu0 0
      %630 = vmatprep.subr.bf16.mxu0 0
      %631 = vmatpush1.bf16.msra.mxu0 0
      %632 = vmatprep.subr.bf16.mxu0 0
      %633 = vmatpush1.bf16.msra.mxu0 0
      %634 = vmatprep.subr.bf16.mxu0 0
      %635 = vmatpush1.bf16.msra.mxu0 0
      %636 = vmatprep.subr.bf16.mxu0 0
      %637 = vmatpush1.bf16.msra.mxu0 0
      %638 = vmatprep.subr.bf16.mxu0 0
      %639 = vmatpush1.bf16.msra.mxu0 0
      %640 = vmatprep.subr.bf16.mxu0 0
      %641 = vmatpush1.bf16.msra.mxu0 0
      %642 = vmatprep.subr.bf16.mxu0 0
      %643 = vmatpush1.bf16.msra.mxu0 0
      %644 = vmatprep.mubr.bf16.mxu0 0
      %645 = vmatmul.mubr.bf16.gmra.mrb[0].mxu0 %v601
      %v646 = vpop.f32.mrb[0].mxu0
      %v647 = vadd.f32 0.0, %v646
      %v648 = vpop.f32.mrb[0].mxu0
      %v649 = vpop.f32.mrb[0].mxu0
      %v650 = vadd.f32 0.0, %v649
      %v651 = vpop.f32.mrb[0].mxu0
      %652 = vmatprep.mubr.bf16.mxu0 0
      %653 = vmatmul.mubr.bf16.gmra.mrb[0].mxu0 %v604
      %v654 = vpop.f32.mrb[0].mxu0
      %v655 = vadd.f32 0.0, %v654
      %v656 = vpop.f32.mrb[0].mxu0
      %v657 = vpop.f32.mrb[0].mxu0
      %v658 = vadd.f32 0.0, %v657
      %v659 = vpop.f32.mrb[0].mxu0
      %660 = vmatprep.mubr.bf16.mxu0 0
      %661 = vmatmul.mubr.bf16.gmra.mrb[0].mxu0 %v607
      %v662 = vpop.f32.mrb[0].mxu0
      %v663 = vadd.f32 0.0, %v662
      %v664 = vpop.f32.mrb[0].mxu0
      %v665 = vpop.f32.mrb[0].mxu0
      %v666 = vadd.f32 0.0, %v665
      %v667 = vpop.f32.mrb[0].mxu0
      %668 = vmatprep.mubr.bf16.mxu0 0
      %669 = vmatmul.mubr.bf16.gmra.mrb[0].mxu0 %v610
      %v670 = vpop.f32.mrb[0].mxu0
      %v671 = vadd.f32 0.0, %v670
      %v672 = vpop.f32.mrb[0].mxu0
      %v673 = vpop.f32.mrb[0].mxu0
      %v674 = vadd.f32 0.0, %v673
      %v675 = vpop.f32.mrb[0].mxu0
      %676 = vdwg.mxu0
      %v677 = vadd.f32 %v476, %v647
      %v678 = vadd.f32 %v479, %v650
      %v679 = vadd.f32 %v484, %v655
      %v680 = vadd.f32 %v487, %v658
      %v681 = vadd.f32 %v492, %v663
      %v682 = vadd.f32 %v495, %v666
      %v683 = vadd.f32 %v500, %v671
      %v684 = vadd.f32 %v503, %v674
      %s685 = scalar_lea.vmem %s281, 144
      %v686 = vld [vmem:[%s685] sm:$0xf]
      %v687 = vld [vmem:[%s685 + $0x8] sm:$0xf]
      %v688 = vld [vmem:[%s685 + $0x10] sm:$0xf]
      %v689 = vld [vmem:[%s685 + $0x18] sm:$0xf]
      %v690 = vld [vmem:[%s685 + $0x20] sm:$0xf]
      %v691 = vld [vmem:[%s685 + $0x28] sm:$0xf]
      %v692 = vld [vmem:[%s685 + $0x30] sm:$0xf]
      %v693 = vld [vmem:[%s685 + $0x38] sm:$0xf]
      %v694 = vunpack.c.l.bf16 %v686
      %v695 = vunpack.c.l.bf16 %v687
      %v696 = vunpack.c.l.bf16 %v688
      %v697 = vunpack.c.l.bf16 %v689
      %v698 = vunpack.c.l.bf16 %v690
      %v699 = vunpack.c.l.bf16 %v691
      %v700 = vunpack.c.l.bf16 %v692
      %v701 = vunpack.c.l.bf16 %v693
      %v702 = vpack.c.bf16 %v695, %v694
      %v703 = vpack.c.bf16 %v697, %v696
      %v704 = vpack.c.bf16 %v699, %v698
      %v705 = vpack.c.bf16 %v701, %v700
      %s706 = scalar_lea.vmem %s1, 24
      %v707 = vld [vmem:[%s706] sm:$0xf]
      %v708 = vld [vmem:[%s706 + $0x4] sm:$0xf]
      %v711 = vunpack.c.l.b16 %v707
      %v712 = vunpack.c.l.b16 %v708
      %v713 = vpack.c.b16 %v712, %v711
      %v716 = vsel %vm345, %v702, 0
      %v719 = vsel %vm345, %v703, 0
      %v722 = vsel %vm345, %v704, 0
      %v725 = vsel %vm345, %v705, 0
      %727 = vmatprep.subr.bf16.mxu0 0
      %728 = vmatpush1.bf16.msra.mxu0 %v713
      %729 = vmatprep.subr.bf16.mxu0 0
      %730 = vmatpush1.bf16.msra.mxu0 0
      %731 = vmatprep.subr.bf16.mxu0 0
      %732 = vmatpush1.bf16.msra.mxu0 0
      %733 = vmatprep.subr.bf16.mxu0 0
      %734 = vmatpush1.bf16.msra.mxu0 0
      %735 = vmatprep.subr.bf16.mxu0 0
      %736 = vmatpush1.bf16.msra.mxu0 0
      %737 = vmatprep.subr.bf16.mxu0 0
      %738 = vmatpush1.bf16.msra.mxu0 0
      %739 = vmatprep.subr.bf16.mxu0 0
      %740 = vmatpush1.bf16.msra.mxu0 0
      %741 = vmatprep.subr.bf16.mxu0 0
      %742 = vmatpush1.bf16.msra.mxu0 0
      %743 = vmatprep.subr.bf16.mxu0 0
      %744 = vmatpush1.bf16.msra.mxu0 0
      %745 = vmatprep.subr.bf16.mxu0 0
      %746 = vmatpush1.bf16.msra.mxu0 0
      %747 = vmatprep.subr.bf16.mxu0 0
      %748 = vmatpush1.bf16.msra.mxu0 0
      %749 = vmatprep.subr.bf16.mxu0 0
      %750 = vmatpush1.bf16.msra.mxu0 0
      %751 = vmatprep.subr.bf16.mxu0 0
      %752 = vmatpush1.bf16.msra.mxu0 0
      %753 = vmatprep.subr.bf16.mxu0 0
      %754 = vmatpush1.bf16.msra.mxu0 0
      %755 = vmatprep.subr.bf16.mxu0 0
      %756 = vmatpush1.bf16.msra.mxu0 0
      %757 = vmatprep.subr.bf16.mxu0 0
      %758 = vmatpush1.bf16.msra.mxu0 0
      %759 = vmatprep.mubr.bf16.mxu0 0
      %760 = vmatmul.mubr.bf16.gmra.mrb[0].mxu0 %v716
      %v761 = vpop.f32.mrb[0].mxu0
      %v762 = vadd.f32 0.0, %v761
      %v763 = vpop.f32.mrb[0].mxu0
      %v764 = vpop.f32.mrb[0].mxu0
      %v765 = vadd.f32 0.0, %v764
      %v766 = vpop.f32.mrb[0].mxu0
      %767 = vmatprep.mubr.bf16.mxu0 0
      %768 = vmatmul.mubr.bf16.gmra.mrb[0].mxu0 %v719
      %v769 = vpop.f32.mrb[0].mxu0
      %v770 = vadd.f32 0.0, %v769
      %v771 = vpop.f32.mrb[0].mxu0
      %v772 = vpop.f32.mrb[0].mxu0
      %v773 = vadd.f32 0.0, %v772
      %v774 = vpop.f32.mrb[0].mxu0
      %775 = vmatprep.mubr.bf16.mxu0 0
      %776 = vmatmul.mubr.bf16.gmra.mrb[0].mxu0 %v722
      %v777 = vpop.f32.mrb[0].mxu0
      %v778 = vadd.f32 0.0, %v777
      %v779 = vpop.f32.mrb[0].mxu0
      %v780 = vpop.f32.mrb[0].mxu0
      %v781 = vadd.f32 0.0, %v780
      %v782 = vpop.f32.mrb[0].mxu0
      %783 = vmatprep.mubr.bf16.mxu0 0
      %784 = vmatmul.mubr.bf16.gmra.mrb[0].mxu0 %v725
      %v785 = vpop.f32.mrb[0].mxu0
      %v786 = vadd.f32 0.0, %v785
      %v787 = vpop.f32.mrb[0].mxu0
      %v788 = vpop.f32.mrb[0].mxu0
      %v789 = vadd.f32 0.0, %v788
      %v790 = vpop.f32.mrb[0].mxu0
      %791 = vdwg.mxu0
      %v792 = vadd.f32 %v677, %v762
      %v793 = vadd.f32 %v678, %v765
      %v794 = vadd.f32 %v679, %v770
      %v795 = vadd.f32 %v680, %v773
      %v796 = vadd.f32 %v681, %v778
      %v797 = vadd.f32 %v682, %v781
      %v798 = vadd.f32 %v683, %v786
      %v799 = vadd.f32 %v684, %v789
      %s800 = scalar_lea.vmem %s281, 216
      %v801 = vld [vmem:[%s800] sm:$0xf]
      %v802 = vld [vmem:[%s800 + $0x8] sm:$0xf]
      %v803 = vld [vmem:[%s800 + $0x10] sm:$0xf]
      %v804 = vld [vmem:[%s800 + $0x18] sm:$0xf]
      %v805 = vld [vmem:[%s800 + $0x20] sm:$0xf]
      %v806 = vld [vmem:[%s800 + $0x28] sm:$0xf]
      %v807 = vld [vmem:[%s800 + $0x30] sm:$0xf]
      %v808 = vld [vmem:[%s800 + $0x38] sm:$0xf]
      %v809 = vunpack.c.l.bf16 %v801
      %v810 = vunpack.c.l.bf16 %v802
      %v811 = vunpack.c.l.bf16 %v803
      %v812 = vunpack.c.l.bf16 %v804
      %v813 = vunpack.c.l.bf16 %v805
      %v814 = vunpack.c.l.bf16 %v806
      %v815 = vunpack.c.l.bf16 %v807
      %v816 = vunpack.c.l.bf16 %v808
      %v817 = vpack.c.bf16 %v810, %v809
      %v818 = vpack.c.bf16 %v812, %v811
      %v819 = vpack.c.bf16 %v814, %v813
      %v820 = vpack.c.bf16 %v816, %v815
      %v821 = vld [vmem:[%s2] sm:$0xf]
      %v822 = vld [vmem:[%s2 + $0x4] sm:$0xf]
      %v825 = vunpack.c.l.b16 %v821
      %v826 = vunpack.c.l.b16 %v822
      %v827 = vpack.c.b16 %v826, %v825
      %v830 = vsel %vm345, %v817, 0
      %v833 = vsel %vm345, %v818, 0
      %v836 = vsel %vm345, %v819, 0
      %v839 = vsel %vm345, %v820, 0
      %841 = vmatprep.subr.bf16.mxu0 0
      %842 = vmatpush1.bf16.msra.mxu0 %v827
      %843 = vmatprep.subr.bf16.mxu0 0
      %844 = vmatpush1.bf16.msra.mxu0 0
      %845 = vmatprep.subr.bf16.mxu0 0
      %846 = vmatpush1.bf16.msra.mxu0 0
      %847 = vmatprep.subr.bf16.mxu0 0
      %848 = vmatpush1.bf16.msra.mxu0 0
      %849 = vmatprep.subr.bf16.mxu0 0
      %850 = vmatpush1.bf16.msra.mxu0 0
      %851 = vmatprep.subr.bf16.mxu0 0
      %852 = vmatpush1.bf16.msra.mxu0 0
      %853 = vmatprep.subr.bf16.mxu0 0
      %854 = vmatpush1.bf16.msra.mxu0 0
      %855 = vmatprep.subr.bf16.mxu0 0
      %856 = vmatpush1.bf16.msra.mxu0 0
      %857 = vmatprep.subr.bf16.mxu0 0
      %858 = vmatpush1.bf16.msra.mxu0 0
      %859 = vmatprep.subr.bf16.mxu0 0
      %860 = vmatpush1.bf16.msra.mxu0 0
      %861 = vmatprep.subr.bf16.mxu0 0
      %862 = vmatpush1.bf16.msra.mxu0 0
      %863 = vmatprep.subr.bf16.mxu0 0
      %864 = vmatpush1.bf16.msra.mxu0 0
      %865 = vmatprep.subr.bf16.mxu0 0
      %866 = vmatpush1.bf16.msra.mxu0 0
      %867 = vmatprep.subr.bf16.mxu0 0
      %868 = vmatpush1.bf16.msra.mxu0 0
      %869 = vmatprep.subr.bf16.mxu0 0
      %870 = vmatpush1.bf16.msra.mxu0 0
      %871 = vmatprep.subr.bf16.mxu0 0
      %872 = vmatpush1.bf16.msra.mxu0 0
      %873 = vmatprep.mubr.bf16.mxu0 0
      %874 = vmatmul.mubr.bf16.gmra.mrb[0].mxu0 %v830
      %v875 = vpop.f32.mrb[0].mxu0
      %v876 = vadd.f32 0.0, %v875
      %v877 = vpop.f32.mrb[0].mxu0
      %v878 = vpop.f32.mrb[0].mxu0
      %v879 = vadd.f32 0.0, %v878
      %v880 = vpop.f32.mrb[0].mxu0
      %881 = vmatprep.mubr.bf16.mxu0 0
      %882 = vmatmul.mubr.bf16.gmra.mrb[0].mxu0 %v833
      %v883 = vpop.f32.mrb[0].mxu0
      %v884 = vadd.f32 0.0, %v883
      %v885 = vpop.f32.mrb[0].mxu0
      %v886 = vpop.f32.mrb[0].mxu0
      %v887 = vadd.f32 0.0, %v886
      %v888 = vpop.f32.mrb[0].mxu0
      %889 = vmatprep.mubr.bf16.mxu0 0
      %890 = vmatmul.mubr.bf16.gmra.mrb[0].mxu0 %v836
      %v891 = vpop.f32.mrb[0].mxu0
      %v892 = vadd.f32 0.0, %v891
      %v893 = vpop.f32.mrb[0].mxu0
      %v894 = vpop.f32.mrb[0].mxu0
      %v895 = vadd.f32 0.0, %v894
      %v896 = vpop.f32.mrb[0].mxu0
      %897 = vmatprep.mubr.bf16.mxu0 0
      %898 = vmatmul.mubr.bf16.gmra.mrb[0].mxu0 %v839
      %v899 = vpop.f32.mrb[0].mxu0
      %v900 = vadd.f32 0.0, %v899
      %v901 = vpop.f32.mrb[0].mxu0
      %v902 = vpop.f32.mrb[0].mxu0
      %v903 = vadd.f32 0.0, %v902
      %v904 = vpop.f32.mrb[0].mxu0
      %905 = vdwg.mxu0
      %v906 = vpack.c.bf16 %v879, %v876
      %v907 = vpack.c.bf16 %v887, %v884
      %v908 = vpack.c.bf16 %v895, %v892
      %v909 = vpack.c.bf16 %v903, %v900
      %v914 = vunpack.c.l.b16 %v906
      %v915 = vunpack.c.h.b16 %v906
      %v916 = vunpack.c.l.b16 %v907
      %v917 = vunpack.c.h.b16 %v907
      %v918 = vunpack.c.l.b16 %v908
      %v919 = vunpack.c.h.b16 %v908
      %v920 = vunpack.c.l.b16 %v909
      %v921 = vunpack.c.h.b16 %v909
      %v922 = vpack.c.b16 %v914, %v914
      %v923 = vpack.c.b16 %v915, %v915
      %v924 = vpack.c.b16 %v916, %v916
      %v925 = vpack.c.b16 %v917, %v917
      %v926 = vpack.c.b16 %v918, %v918
      %v927 = vpack.c.b16 %v919, %v919
      %v928 = vpack.c.b16 %v920, %v920
      %v929 = vpack.c.b16 %v921, %v921
      %vm938 = vcmask 257024
      %939 = vst.msk [vmem:[%s291] sm:$0xf] %vm938, %v922
      %940 = vst.msk [vmem:[%s291 + $0x4] sm:$0xf] %vm938, %v923
      %941 = vst.msk [vmem:[%s291 + $0x8] sm:$0xf] %vm938, %v924
      %942 = vst.msk [vmem:[%s291 + $0xc] sm:$0xf] %vm938, %v925
      %943 = vst.msk [vmem:[%s291 + $0x10] sm:$0xf] %vm938, %v926
      %944 = vst.msk [vmem:[%s291 + $0x14] sm:$0xf] %vm938, %v927
      %945 = vst.msk [vmem:[%s291 + $0x18] sm:$0xf] %vm938, %v928
      %946 = vst.msk [vmem:[%s291 + $0x1c] sm:$0xf] %vm938, %v929
      %s947 = scalar_lea.vmem %s1, 32
      %v948 = vld [vmem:[%s947] sm:$0xf]
      %v949 = vld [vmem:[%s947 + $0x4] sm:$0xf]
      %v952 = vunpack.c.l.b16 %v948
      %v953 = vunpack.c.l.b16 %v949
      %v954 = vpack.c.b16 %v953, %v952
      %956 = vmatprep.subr.bf16.mxu0 0
      %957 = vmatpush1.bf16.msra.mxu0 %v954
      %958 = vmatprep.subr.bf16.mxu0 0
      %959 = vmatpush1.bf16.msra.mxu0 0
      %960 = vmatprep.subr.bf16.mxu0 0
      %961 = vmatpush1.bf16.msra.mxu0 0
      %962 = vmatprep.subr.bf16.mxu0 0
      %963 = vmatpush1.bf16.msra.mxu0 0
      %964 = vmatprep.subr.bf16.mxu0 0
      %965 = vmatpush1.bf16.msra.mxu0 0
      %966 = vmatprep.subr.bf16.mxu0 0
      %967 = vmatpush1.bf16.msra.mxu0 0
      %968 = vmatprep.subr.bf16.mxu0 0
      %969 = vmatpush1.bf16.msra.mxu0 0
      %970 = vmatprep.subr.bf16.mxu0 0
      %971 = vmatpush1.bf16.msra.mxu0 0
      %972 = vmatprep.subr.bf16.mxu0 0
      %973 = vmatpush1.bf16.msra.mxu0 0
      %974 = vmatprep.subr.bf16.mxu0 0
      %975 = vmatpush1.bf16.msra.mxu0 0
      %976 = vmatprep.subr.bf16.mxu0 0
      %977 = vmatpush1.bf16.msra.mxu0 0
      %978 = vmatprep.subr.bf16.mxu0 0
      %979 = vmatpush1.bf16.msra.mxu0 0
      %980 = vmatprep.subr.bf16.mxu0 0
      %981 = vmatpush1.bf16.msra.mxu0 0
      %982 = vmatprep.subr.bf16.mxu0 0
      %983 = vmatpush1.bf16.msra.mxu0 0
      %984 = vmatprep.subr.bf16.mxu0 0
      %985 = vmatpush1.bf16.msra.mxu0 0
      %986 = vmatprep.subr.bf16.mxu0 0
      %987 = vmatpush1.bf16.msra.mxu0 0
      %988 = vmatprep.mubr.bf16.mxu0 0
      %989 = vmatmul.mubr.bf16.gmra.mrb[0].mxu0 %v830
      %v990 = vpop.f32.mrb[0].mxu0
      %v991 = vadd.f32 0.0, %v990
      %v992 = vpop.f32.mrb[0].mxu0
      %v993 = vpop.f32.mrb[0].mxu0
      %v994 = vadd.f32 0.0, %v993
      %v995 = vpop.f32.mrb[0].mxu0
      %996 = vmatprep.mubr.bf16.mxu0 0
      %997 = vmatmul.mubr.bf16.gmra.mrb[0].mxu0 %v833
      %v998 = vpop.f32.mrb[0].mxu0
      %v999 = vadd.f32 0.0, %v998
      %v1000 = vpop.f32.mrb[0].mxu0
      %v1001 = vpop.f32.mrb[0].mxu0
      %v1002 = vadd.f32 0.0, %v1001
      %v1003 = vpop.f32.mrb[0].mxu0
      %1004 = vmatprep.mubr.bf16.mxu0 0
      %1005 = vmatmul.mubr.bf16.gmra.mrb[0].mxu0 %v836
      %v1006 = vpop.f32.mrb[0].mxu0
      %v1007 = vadd.f32 0.0, %v1006
      %v1008 = vpop.f32.mrb[0].mxu0
      %v1009 = vpop.f32.mrb[0].mxu0
      %v1010 = vadd.f32 0.0, %v1009
      %v1011 = vpop.f32.mrb[0].mxu0
      %1012 = vmatprep.mubr.bf16.mxu0 0
      %1013 = vmatmul.mubr.bf16.gmra.mrb[0].mxu0 %v839
      %v1014 = vpop.f32.mrb[0].mxu0
      %v1015 = vadd.f32 0.0, %v1014
      %v1016 = vpop.f32.mrb[0].mxu0
      %v1017 = vpop.f32.mrb[0].mxu0
      %v1018 = vadd.f32 0.0, %v1017
      %v1019 = vpop.f32.mrb[0].mxu0
      %1020 = vdwg.mxu0
      %v1021 = vadd.f32 %v792, %v991
      %v1022 = vadd.f32 %v793, %v994
      %v1023 = vadd.f32 %v794, %v999
      %v1024 = vadd.f32 %v795, %v1002
      %v1025 = vadd.f32 %v796, %v1007
      %v1026 = vadd.f32 %v797, %v1010
      %v1027 = vadd.f32 %v798, %v1015
      %v1028 = vadd.f32 %v799, %v1018
      %v1029 = vld [vmem:[%s685] sm:$0xf]
      %v1030 = vld [vmem:[%s685 + $0x4] sm:$0x1]
      %v1031 = vld [vmem:[%s685 + $0x8] sm:$0xf]
      %v1032 = vld [vmem:[%s685 + $0xc] sm:$0x1]
      %v1033 = vld [vmem:[%s685 + $0x10] sm:$0xf]
      %v1034 = vld [vmem:[%s685 + $0x14] sm:$0x1]
      %v1035 = vld [vmem:[%s685 + $0x18] sm:$0xf]
      %v1036 = vld [vmem:[%s685 + $0x1c] sm:$0x1]
      %v1037 = vld [vmem:[%s685 + $0x20] sm:$0xf]
      %v1038 = vld [vmem:[%s685 + $0x24] sm:$0x1]
      %v1039 = vld [vmem:[%s685 + $0x28] sm:$0xf]
      %v1040 = vld [vmem:[%s685 + $0x2c] sm:$0x1]
      %v1041 = vld [vmem:[%s685 + $0x30] sm:$0xf]
      %v1042 = vld [vmem:[%s685 + $0x34] sm:$0x1]
      %v1043 = vld [vmem:[%s685 + $0x38] sm:$0xf]
      %v1044 = vld [vmem:[%s685 + $0x3c] sm:$0x1]
      %v1045 = vunpack.c.l.bf16 %v1029
      %v1046 = vunpack.c.l.bf16 %v1030
      %v1047 = vunpack.c.l.bf16 %v1031
      %v1048 = vunpack.c.l.bf16 %v1032
      %v1049 = vunpack.c.l.bf16 %v1033
      %v1050 = vunpack.c.l.bf16 %v1034
      %v1051 = vunpack.c.l.bf16 %v1035
      %v1052 = vunpack.c.l.bf16 %v1036
      %v1053 = vunpack.c.l.bf16 %v1037
      %v1054 = vunpack.c.l.bf16 %v1038
      %v1055 = vunpack.c.l.bf16 %v1039
      %v1056 = vunpack.c.l.bf16 %v1040
      %v1057 = vunpack.c.l.bf16 %v1041
      %v1058 = vunpack.c.l.bf16 %v1042
      %v1059 = vunpack.c.l.bf16 %v1043
      %v1060 = vunpack.c.l.bf16 %v1044
      %v1077 = vrot.slane %v1045, 1
      %v1078 = vrot.slane %v1046, 1
      %v1079 = vsel %vm554, %v1077, %v1078
      %v1080 = vrot.slane %v1047, 1
      %v1081 = vrot.slane %v1048, 1
      %v1082 = vsel %vm554, %v1080, %v1081
      %v1083 = vrot.slane %v1049, 1
      %v1084 = vrot.slane %v1050, 1
      %v1085 = vsel %vm554, %v1083, %v1084
      %v1086 = vrot.slane %v1051, 1
      %v1087 = vrot.slane %v1052, 1
      %v1088 = vsel %vm554, %v1086, %v1087
      %v1089 = vrot.slane %v1053, 1
      %v1090 = vrot.slane %v1054, 1
      %v1091 = vsel %vm554, %v1089, %v1090
      %v1092 = vrot.slane %v1055, 1
      %v1093 = vrot.slane %v1056, 1
      %v1094 = vsel %vm554, %v1092, %v1093
      %v1095 = vrot.slane %v1057, 1
      %v1096 = vrot.slane %v1058, 1
      %v1097 = vsel %vm554, %v1095, %v1096
      %v1098 = vrot.slane %v1059, 1
      %v1099 = vrot.slane %v1060, 1
      %v1100 = vsel %vm554, %v1098, %v1099
      %v1109 = vpack.c.bf16 %v1082, %v1079
      %v1110 = vpack.c.bf16 %v1088, %v1085
      %v1111 = vpack.c.bf16 %v1094, %v1091
      %v1112 = vpack.c.bf16 %v1100, %v1097
      %s1113 = scalar_lea.vmem %s1, 40
      %v1114 = vld [vmem:[%s1113] sm:$0xf]
      %v1115 = vld [vmem:[%s1113 + $0x4] sm:$0xf]
      %v1118 = vunpack.c.l.b16 %v1114
      %v1119 = vunpack.c.l.b16 %v1115
      %v1120 = vpack.c.b16 %v1119, %v1118
      %v1123 = vsel %vm345, %v1109, 0
      %v1126 = vsel %vm345, %v1110, 0
      %v1129 = vsel %vm345, %v1111, 0
      %v1132 = vsel %vm345, %v1112, 0
      %1134 = vmatprep.subr.bf16.mxu0 0
      %1135 = vmatpush1.bf16.msra.mxu0 %v1120
      %1136 = vmatprep.subr.bf16.mxu0 0
      %1137 = vmatpush1.bf16.msra.mxu0 0
      %1138 = vmatprep.subr.bf16.mxu0 0
      %1139 = vmatpush1.bf16.msra.mxu0 0
      %1140 = vmatprep.subr.bf16.mxu0 0
      %1141 = vmatpush1.bf16.msra.mxu0 0
      %1142 = vmatprep.subr.bf16.mxu0 0
      %1143 = vmatpush1.bf16.msra.mxu0 0
      %1144 = vmatprep.subr.bf16.mxu0 0
      %1145 = vmatpush1.bf16.msra.mxu0 0
      %1146 = vmatprep.subr.bf16.mxu0 0
      %1147 = vmatpush1.bf16.msra.mxu0 0
      %1148 = vmatprep.subr.bf16.mxu0 0
      %1149 = vmatpush1.bf16.msra.mxu0 0
      %1150 = vmatprep.subr.bf16.mxu0 0
      %1151 = vmatpush1.bf16.msra.mxu0 0
      %1152 = vmatprep.subr.bf16.mxu0 0
      %1153 = vmatpush1.bf16.msra.mxu0 0
      %1154 = vmatprep.subr.bf16.mxu0 0
      %1155 = vmatpush1.bf16.msra.mxu0 0
      %1156 = vmatprep.subr.bf16.mxu0 0
      %1157 = vmatpush1.bf16.msra.mxu0 0
      %1158 = vmatprep.subr.bf16.mxu0 0
      %1159 = vmatpush1.bf16.msra.mxu0 0
      %1160 = vmatprep.subr.bf16.mxu0 0
      %1161 = vmatpush1.bf16.msra.mxu0 0
      %1162 = vmatprep.subr.bf16.mxu0 0
      %1163 = vmatpush1.bf16.msra.mxu0 0
      %1164 = vmatprep.subr.bf16.mxu0 0
      %1165 = vmatpush1.bf16.msra.mxu0 0
      %1166 = vmatprep.mubr.bf16.mxu0 0
      %1167 = vmatmul.mubr.bf16.gmra.mrb[0].mxu0 %v1123
      %v1168 = vpop.f32.mrb[0].mxu0
      %v1169 = vadd.f32 0.0, %v1168
      %v1170 = vpop.f32.mrb[0].mxu0
      %v1171 = vpop.f32.mrb[0].mxu0
      %v1172 = vadd.f32 0.0, %v1171
      %v1173 = vpop.f32.mrb[0].mxu0
      %1174 = vmatprep.mubr.bf16.mxu0 0
      %1175 = vmatmul.mubr.bf16.gmra.mrb[0].mxu0 %v1126
      %v1176 = vpop.f32.mrb[0].mxu0
      %v1177 = vadd.f32 0.0, %v1176
      %v1178 = vpop.f32.mrb[0].mxu0
      %v1179 = vpop.f32.mrb[0].mxu0
      %v1180 = vadd.f32 0.0, %v1179
      %v1181 = vpop.f32.mrb[0].mxu0
      %1182 = vmatprep.mubr.bf16.mxu0 0
      %1183 = vmatmul.mubr.bf16.gmra.mrb[0].mxu0 %v1129
      %v1184 = vpop.f32.mrb[0].mxu0
      %v1185 = vadd.f32 0.0, %v1184
      %v1186 = vpop.f32.mrb[0].mxu0
      %v1187 = vpop.f32.mrb[0].mxu0
      %v1188 = vadd.f32 0.0, %v1187
      %v1189 = vpop.f32.mrb[0].mxu0
      %1190 = vmatprep.mubr.bf16.mxu0 0
      %1191 = vmatmul.mubr.bf16.gmra.mrb[0].mxu0 %v1132
      %v1192 = vpop.f32.mrb[0].mxu0
      %v1193 = vadd.f32 0.0, %v1192
      %v1194 = vpop.f32.mrb[0].mxu0
      %v1195 = vpop.f32.mrb[0].mxu0
      %v1196 = vadd.f32 0.0, %v1195
      %v1197 = vpop.f32.mrb[0].mxu0
      %1198 = vdwg.mxu0
      %v1199 = vadd.f32 %v1021, %v1169
      %v1200 = vadd.f32 %v1022, %v1172
      %v1201 = vadd.f32 %v1023, %v1177
      %v1202 = vadd.f32 %v1024, %v1180
      %v1203 = vadd.f32 %v1025, %v1185
      %v1204 = vadd.f32 %v1026, %v1188
      %v1205 = vadd.f32 %v1027, %v1193
      %v1206 = vadd.f32 %v1028, %v1196
      %s1207 = scalar_lea.vmem %s281, 8
      %v1208 = vld [vmem:[%s1207] sm:$0xf]
      %v1209 = vld [vmem:[%s1207 + $0x8] sm:$0xf]
      %v1210 = vld [vmem:[%s1207 + $0x10] sm:$0xf]
      %v1211 = vld [vmem:[%s1207 + $0x18] sm:$0xf]
      %v1212 = vld [vmem:[%s1207 + $0x20] sm:$0xf]
      %v1213 = vld [vmem:[%s1207 + $0x28] sm:$0xf]
      %v1214 = vld [vmem:[%s1207 + $0x30] sm:$0xf]
      %v1215 = vld [vmem:[%s1207 + $0x38] sm:$0xf]
      %v1216 = vunpack.c.l.bf16 %v1208
      %v1217 = vunpack.c.l.bf16 %v1209
      %v1218 = vunpack.c.l.bf16 %v1210
      %v1219 = vunpack.c.l.bf16 %v1211
      %v1220 = vunpack.c.l.bf16 %v1212
      %v1221 = vunpack.c.l.bf16 %v1213
      %v1222 = vunpack.c.l.bf16 %v1214
      %v1223 = vunpack.c.l.bf16 %v1215
      %v1224 = vpack.c.bf16 %v1217, %v1216
      %v1225 = vpack.c.bf16 %v1219, %v1218
      %v1226 = vpack.c.bf16 %v1221, %v1220
      %v1227 = vpack.c.bf16 %v1223, %v1222
      %s1228 = scalar_lea.vmem %s1, 48
      %v1229 = vld [vmem:[%s1228] sm:$0xf]
      %v1230 = vld [vmem:[%s1228 + $0x4] sm:$0xf]
      %v1233 = vunpack.c.l.b16 %v1229
      %v1234 = vunpack.c.l.b16 %v1230
      %v1235 = vpack.c.b16 %v1234, %v1233
      %v1238 = vsel %vm345, %v1224, 0
      %v1241 = vsel %vm345, %v1225, 0
      %v1244 = vsel %vm345, %v1226, 0
      %v1247 = vsel %vm345, %v1227, 0
      %1249 = vmatprep.subr.bf16.mxu0 0
      %1250 = vmatpush1.bf16.msra.mxu0 %v1235
      %1251 = vmatprep.subr.bf16.mxu0 0
      %1252 = vmatpush1.bf16.msra.mxu0 0
      %1253 = vmatprep.subr.bf16.mxu0 0
      %1254 = vmatpush1.bf16.msra.mxu0 0
      %1255 = vmatprep.subr.bf16.mxu0 0
      %1256 = vmatpush1.bf16.msra.mxu0 0
      %1257 = vmatprep.subr.bf16.mxu0 0
      %1258 = vmatpush1.bf16.msra.mxu0 0
      %1259 = vmatprep.subr.bf16.mxu0 0
      %1260 = vmatpush1.bf16.msra.mxu0 0
      %1261 = vmatprep.subr.bf16.mxu0 0
      %1262 = vmatpush1.bf16.msra.mxu0 0
      %1263 = vmatprep.subr.bf16.mxu0 0
      %1264 = vmatpush1.bf16.msra.mxu0 0
      %1265 = vmatprep.subr.bf16.mxu0 0
      %1266 = vmatpush1.bf16.msra.mxu0 0
      %1267 = vmatprep.subr.bf16.mxu0 0
      %1268 = vmatpush1.bf16.msra.mxu0 0
      %1269 = vmatprep.subr.bf16.mxu0 0
      %1270 = vmatpush1.bf16.msra.mxu0 0
      %1271 = vmatprep.subr.bf16.mxu0 0
      %1272 = vmatpush1.bf16.msra.mxu0 0
      %1273 = vmatprep.subr.bf16.mxu0 0
      %1274 = vmatpush1.bf16.msra.mxu0 0
      %1275 = vmatprep.subr.bf16.mxu0 0
      %1276 = vmatpush1.bf16.msra.mxu0 0
      %1277 = vmatprep.subr.bf16.mxu0 0
      %1278 = vmatpush1.bf16.msra.mxu0 0
      %1279 = vmatprep.subr.bf16.mxu0 0
      %1280 = vmatpush1.bf16.msra.mxu0 0
      %1281 = vmatprep.mubr.bf16.mxu0 0
      %1282 = vmatmul.mubr.bf16.gmra.mrb[0].mxu0 %v1238
      %v1283 = vpop.f32.mrb[0].mxu0
      %v1284 = vadd.f32 0.0, %v1283
      %v1285 = vpop.f32.mrb[0].mxu0
      %v1286 = vpop.f32.mrb[0].mxu0
      %v1287 = vadd.f32 0.0, %v1286
      %v1288 = vpop.f32.mrb[0].mxu0
      %1289 = vmatprep.mubr.bf16.mxu0 0
      %1290 = vmatmul.mubr.bf16.gmra.mrb[0].mxu0 %v1241
      %v1291 = vpop.f32.mrb[0].mxu0
      %v1292 = vadd.f32 0.0, %v1291
      %v1293 = vpop.f32.mrb[0].mxu0
      %v1294 = vpop.f32.mrb[0].mxu0
      %v1295 = vadd.f32 0.0, %v1294
      %v1296 = vpop.f32.mrb[0].mxu0
      %1297 = vmatprep.mubr.bf16.mxu0 0
      %1298 = vmatmul.mubr.bf16.gmra.mrb[0].mxu0 %v1244
      %v1299 = vpop.f32.mrb[0].mxu0
      %v1300 = vadd.f32 0.0, %v1299
      %v1301 = vpop.f32.mrb[0].mxu0
      %v1302 = vpop.f32.mrb[0].mxu0
      %v1303 = vadd.f32 0.0, %v1302
      %v1304 = vpop.f32.mrb[0].mxu0
      %1305 = vmatprep.mubr.bf16.mxu0 0
      %1306 = vmatmul.mubr.bf16.gmra.mrb[0].mxu0 %v1247
      %v1307 = vpop.f32.mrb[0].mxu0
      %v1308 = vadd.f32 0.0, %v1307
      %v1309 = vpop.f32.mrb[0].mxu0
      %v1310 = vpop.f32.mrb[0].mxu0
      %v1311 = vadd.f32 0.0, %v1310
      %v1312 = vpop.f32.mrb[0].mxu0
      %1313 = vdwg.mxu0
      %v1314 = vadd.f32 %v1199, %v1284
      %v1315 = vadd.f32 %v1200, %v1287
      %v1316 = vadd.f32 %v1201, %v1292
      %v1317 = vadd.f32 %v1202, %v1295
      %v1318 = vadd.f32 %v1203, %v1300
      %v1319 = vadd.f32 %v1204, %v1303
      %v1320 = vadd.f32 %v1205, %v1308
      %v1321 = vadd.f32 %v1206, %v1311
      %s1322 = scalar_lea.vmem %s281, 80
      %v1323 = vld [vmem:[%s1322] sm:$0xf]
      %v1324 = vld [vmem:[%s1322 + $0x8] sm:$0xf]
      %v1325 = vld [vmem:[%s1322 + $0x10] sm:$0xf]
      %v1326 = vld [vmem:[%s1322 + $0x18] sm:$0xf]
      %v1327 = vld [vmem:[%s1322 + $0x20] sm:$0xf]
      %v1328 = vld [vmem:[%s1322 + $0x28] sm:$0xf]
      %v1329 = vld [vmem:[%s1322 + $0x30] sm:$0xf]
      %v1330 = vld [vmem:[%s1322 + $0x38] sm:$0xf]
      %v1331 = vunpack.c.l.bf16 %v1323
      %v1332 = vunpack.c.l.bf16 %v1324
      %v1333 = vunpack.c.l.bf16 %v1325
      %v1334 = vunpack.c.l.bf16 %v1326
      %v1335 = vunpack.c.l.bf16 %v1327
      %v1336 = vunpack.c.l.bf16 %v1328
      %v1337 = vunpack.c.l.bf16 %v1329
      %v1338 = vunpack.c.l.bf16 %v1330
      %v1339 = vpack.c.bf16 %v1332, %v1331
      %v1340 = vpack.c.bf16 %v1334, %v1333
      %v1341 = vpack.c.bf16 %v1336, %v1335
      %v1342 = vpack.c.bf16 %v1338, %v1337
      %s1343 = scalar_lea.vmem %s1, 56
      %v1344 = vld [vmem:[%s1343] sm:$0xf]
      %v1345 = vld [vmem:[%s1343 + $0x4] sm:$0xf]
      %v1348 = vunpack.c.l.b16 %v1344
      %v1349 = vunpack.c.l.b16 %v1345
      %v1350 = vpack.c.b16 %v1349, %v1348
      %v1353 = vsel %vm345, %v1339, 0
      %v1356 = vsel %vm345, %v1340, 0
      %v1359 = vsel %vm345, %v1341, 0
      %v1362 = vsel %vm345, %v1342, 0
      %1364 = vmatprep.subr.bf16.mxu0 0
      %1365 = vmatpush1.bf16.msra.mxu0 %v1350
      %1366 = vmatprep.subr.bf16.mxu0 0
      %1367 = vmatpush1.bf16.msra.mxu0 0
      %1368 = vmatprep.subr.bf16.mxu0 0
      %1369 = vmatpush1.bf16.msra.mxu0 0
      %1370 = vmatprep.subr.bf16.mxu0 0
      %1371 = vmatpush1.bf16.msra.mxu0 0
      %1372 = vmatprep.subr.bf16.mxu0 0
      %1373 = vmatpush1.bf16.msra.mxu0 0
      %1374 = vmatprep.subr.bf16.mxu0 0
      %1375 = vmatpush1.bf16.msra.mxu0 0
      %1376 = vmatprep.subr.bf16.mxu0 0
      %1377 = vmatpush1.bf16.msra.mxu0 0
      %1378 = vmatprep.subr.bf16.mxu0 0
      %1379 = vmatpush1.bf16.msra.mxu0 0
      %1380 = vmatprep.subr.bf16.mxu0 0
      %1381 = vmatpush1.bf16.msra.mxu0 0
      %1382 = vmatprep.subr.bf16.mxu0 0
      %1383 = vmatpush1.bf16.msra.mxu0 0
      %1384 = vmatprep.subr.bf16.mxu0 0
      %1385 = vmatpush1.bf16.msra.mxu0 0
      %1386 = vmatprep.subr.bf16.mxu0 0
      %1387 = vmatpush1.bf16.msra.mxu0 0
      %1388 = vmatprep.subr.bf16.mxu0 0
      %1389 = vmatpush1.bf16.msra.mxu0 0
      %1390 = vmatprep.subr.bf16.mxu0 0
      %1391 = vmatpush1.bf16.msra.mxu0 0
      %1392 = vmatprep.subr.bf16.mxu0 0
      %1393 = vmatpush1.bf16.msra.mxu0 0
      %1394 = vmatprep.subr.bf16.mxu0 0
      %1395 = vmatpush1.bf16.msra.mxu0 0
      %1396 = vmatprep.mubr.bf16.mxu0 0
      %1397 = vmatmul.mubr.bf16.gmra.mrb[0].mxu0 %v1353
      %v1398 = vpop.f32.mrb[0].mxu0
      %v1399 = vadd.f32 0.0, %v1398
      %v1400 = vpop.f32.mrb[0].mxu0
      %v1401 = vpop.f32.mrb[0].mxu0
      %v1402 = vadd.f32 0.0, %v1401
      %v1403 = vpop.f32.mrb[0].mxu0
      %1404 = vmatprep.mubr.bf16.mxu0 0
      %1405 = vmatmul.mubr.bf16.gmra.mrb[0].mxu0 %v1356
      %v1406 = vpop.f32.mrb[0].mxu0
      %v1407 = vadd.f32 0.0, %v1406
      %v1408 = vpop.f32.mrb[0].mxu0
      %v1409 = vpop.f32.mrb[0].mxu0
      %v1410 = vadd.f32 0.0, %v1409
      %v1411 = vpop.f32.mrb[0].mxu0
      %1412 = vmatprep.mubr.bf16.mxu0 0
      %1413 = vmatmul.mubr.bf16.gmra.mrb[0].mxu0 %v1359
      %v1414 = vpop.f32.mrb[0].mxu0
      %v1415 = vadd.f32 0.0, %v1414
      %v1416 = vpop.f32.mrb[0].mxu0
      %v1417 = vpop.f32.mrb[0].mxu0
      %v1418 = vadd.f32 0.0, %v1417
      %v1419 = vpop.f32.mrb[0].mxu0
      %1420 = vmatprep.mubr.bf16.mxu0 0
      %1421 = vmatmul.mubr.bf16.gmra.mrb[0].mxu0 %v1362
      %v1422 = vpop.f32.mrb[0].mxu0
      %v1423 = vadd.f32 0.0, %v1422
      %v1424 = vpop.f32.mrb[0].mxu0
      %v1425 = vpop.f32.mrb[0].mxu0
      %v1426 = vadd.f32 0.0, %v1425
      %v1427 = vpop.f32.mrb[0].mxu0
      %1428 = vdwg.mxu0
      %v1429 = vadd.f32 %v1314, %v1399
      %v1430 = vadd.f32 %v1315, %v1402
      %v1431 = vadd.f32 %v1316, %v1407
      %v1432 = vadd.f32 %v1317, %v1410
      %v1433 = vadd.f32 %v1318, %v1415
      %v1434 = vadd.f32 %v1319, %v1418
      %v1435 = vadd.f32 %v1320, %v1423
      %v1436 = vadd.f32 %v1321, %v1426
      %v1437 = vld [vmem:[%s1207] sm:$0xf]
      %v1438 = vld [vmem:[%s1207 + $0x4] sm:$0x1]
      %v1439 = vld [vmem:[%s1207 + $0x8] sm:$0xf]
      %v1440 = vld [vmem:[%s1207 + $0xc] sm:$0x1]
      %v1441 = vld [vmem:[%s1207 + $0x10] sm:$0xf]
      %v1442 = vld [vmem:[%s1207 + $0x14] sm:$0x1]
      %v1443 = vld [vmem:[%s1207 + $0x18] sm:$0xf]
      %v1444 = vld [vmem:[%s1207 + $0x1c] sm:$0x1]
      %v1445 = vld [vmem:[%s1207 + $0x20] sm:$0xf]
      %v1446 = vld [vmem:[%s1207 + $0x24] sm:$0x1]
      %v1447 = vld [vmem:[%s1207 + $0x28] sm:$0xf]
      %v1448 = vld [vmem:[%s1207 + $0x2c] sm:$0x1]
      %v1449 = vld [vmem:[%s1207 + $0x30] sm:$0xf]
      %v1450 = vld [vmem:[%s1207 + $0x34] sm:$0x1]
      %v1451 = vld [vmem:[%s1207 + $0x38] sm:$0xf]
      %v1452 = vld [vmem:[%s1207 + $0x3c] sm:$0x1]
      %v1453 = vunpack.c.l.bf16 %v1437
      %v1454 = vunpack.c.l.bf16 %v1438
      %v1455 = vunpack.c.l.bf16 %v1439
      %v1456 = vunpack.c.l.bf16 %v1440
      %v1457 = vunpack.c.l.bf16 %v1441
      %v1458 = vunpack.c.l.bf16 %v1442
      %v1459 = vunpack.c.l.bf16 %v1443
      %v1460 = vunpack.c.l.bf16 %v1444
      %v1461 = vunpack.c.l.bf16 %v1445
      %v1462 = vunpack.c.l.bf16 %v1446
      %v1463 = vunpack.c.l.bf16 %v1447
      %v1464 = vunpack.c.l.bf16 %v1448
      %v1465 = vunpack.c.l.bf16 %v1449
      %v1466 = vunpack.c.l.bf16 %v1450
      %v1467 = vunpack.c.l.bf16 %v1451
      %v1468 = vunpack.c.l.bf16 %v1452
      %v1485 = vrot.slane %v1453, 1
      %v1486 = vrot.slane %v1454, 1
      %v1487 = vsel %vm554, %v1485, %v1486
      %v1488 = vrot.slane %v1455, 1
      %v1489 = vrot.slane %v1456, 1
      %v1490 = vsel %vm554, %v1488, %v1489
      %v1491 = vrot.slane %v1457, 1
      %v1492 = vrot.slane %v1458, 1
      %v1493 = vsel %vm554, %v1491, %v1492
      %v1494 = vrot.slane %v1459, 1
      %v1495 = vrot.slane %v1460, 1
      %v1496 = vsel %vm554, %v1494, %v1495
      %v1497 = vrot.slane %v1461, 1
      %v1498 = vrot.slane %v1462, 1
      %v1499 = vsel %vm554, %v1497, %v1498
      %v1500 = vrot.slane %v1463, 1
      %v1501 = vrot.slane %v1464, 1
      %v1502 = vsel %vm554, %v1500, %v1501
      %v1503 = vrot.slane %v1465, 1
      %v1504 = vrot.slane %v1466, 1
      %v1505 = vsel %vm554, %v1503, %v1504
      %v1506 = vrot.slane %v1467, 1
      %v1507 = vrot.slane %v1468, 1
      %v1508 = vsel %vm554, %v1506, %v1507
      %v1517 = vpack.c.bf16 %v1490, %v1487
      %v1518 = vpack.c.bf16 %v1496, %v1493
      %v1519 = vpack.c.bf16 %v1502, %v1499
      %v1520 = vpack.c.bf16 %v1508, %v1505
      %s1521 = scalar_lea.vmem %s1, 64
      %v1522 = vld [vmem:[%s1521] sm:$0xf]
      %v1523 = vld [vmem:[%s1521 + $0x4] sm:$0xf]
      %v1526 = vunpack.c.l.b16 %v1522
      %v1527 = vunpack.c.l.b16 %v1523
      %v1528 = vpack.c.b16 %v1527, %v1526
      %v1531 = vsel %vm345, %v1517, 0
      %v1534 = vsel %vm345, %v1518, 0
      %v1537 = vsel %vm345, %v1519, 0
      %v1540 = vsel %vm345, %v1520, 0
      %1542 = vmatprep.subr.bf16.mxu0 0
      %1543 = vmatpush1.bf16.msra.mxu0 %v1528
      %1544 = vmatprep.subr.bf16.mxu0 0
      %1545 = vmatpush1.bf16.msra.mxu0 0
      %1546 = vmatprep.subr.bf16.mxu0 0
      %1547 = vmatpush1.bf16.msra.mxu0 0
      %1548 = vmatprep.subr.bf16.mxu0 0
      %1549 = vmatpush1.bf16.msra.mxu0 0
      %1550 = vmatprep.subr.bf16.mxu0 0
      %1551 = vmatpush1.bf16.msra.mxu0 0
      %1552 = vmatprep.subr.bf16.mxu0 0
      %1553 = vmatpush1.bf16.msra.mxu0 0
      %1554 = vmatprep.subr.bf16.mxu0 0
      %1555 = vmatpush1.bf16.msra.mxu0 0
      %1556 = vmatprep.subr.bf16.mxu0 0
      %1557 = vmatpush1.bf16.msra.mxu0 0
      %1558 = vmatprep.subr.bf16.mxu0 0
      %1559 = vmatpush1.bf16.msra.mxu0 0
      %1560 = vmatprep.subr.bf16.mxu0 0
      %1561 = vmatpush1.bf16.msra.mxu0 0
      %1562 = vmatprep.subr.bf16.mxu0 0
      %1563 = vmatpush1.bf16.msra.mxu0 0
      %1564 = vmatprep.subr.bf16.mxu0 0
      %1565 = vmatpush1.bf16.msra.mxu0 0
      %1566 = vmatprep.subr.bf16.mxu0 0
      %1567 = vmatpush1.bf16.msra.mxu0 0
      %1568 = vmatprep.subr.bf16.mxu0 0
      %1569 = vmatpush1.bf16.msra.mxu0 0
      %1570 = vmatprep.subr.bf16.mxu0 0
      %1571 = vmatpush1.bf16.msra.mxu0 0
      %1572 = vmatprep.subr.bf16.mxu0 0
      %1573 = vmatpush1.bf16.msra.mxu0 0
      %1574 = vmatprep.mubr.bf16.mxu0 0
      %1575 = vmatmul.mubr.bf16.gmra.mrb[0].mxu0 %v1531
      %v1576 = vpop.f32.mrb[0].mxu0
      %v1577 = vadd.f32 0.0, %v1576
      %v1578 = vpop.f32.mrb[0].mxu0
      %v1579 = vpop.f32.mrb[0].mxu0
      %v1580 = vadd.f32 0.0, %v1579
      %v1581 = vpop.f32.mrb[0].mxu0
      %1582 = vmatprep.mubr.bf16.mxu0 0
      %1583 = vmatmul.mubr.bf16.gmra.mrb[0].mxu0 %v1534
      %v1584 = vpop.f32.mrb[0].mxu0
      %v1585 = vadd.f32 0.0, %v1584
      %v1586 = vpop.f32.mrb[0].mxu0
      %v1587 = vpop.f32.mrb[0].mxu0
      %v1588 = vadd.f32 0.0, %v1587
      %v1589 = vpop.f32.mrb[0].mxu0
      %1590 = vmatprep.mubr.bf16.mxu0 0
      %1591 = vmatmul.mubr.bf16.gmra.mrb[0].mxu0 %v1537
      %v1592 = vpop.f32.mrb[0].mxu0
      %v1593 = vadd.f32 0.0, %v1592
      %v1594 = vpop.f32.mrb[0].mxu0
      %v1595 = vpop.f32.mrb[0].mxu0
      %v1596 = vadd.f32 0.0, %v1595
      %v1597 = vpop.f32.mrb[0].mxu0
      %1598 = vmatprep.mubr.bf16.mxu0 0
      %1599 = vmatmul.mubr.bf16.gmra.mrb[0].mxu0 %v1540
      %v1600 = vpop.f32.mrb[0].mxu0
      %v1601 = vadd.f32 0.0, %v1600
      %v1602 = vpop.f32.mrb[0].mxu0
      %v1603 = vpop.f32.mrb[0].mxu0
      %v1604 = vadd.f32 0.0, %v1603
      %v1605 = vpop.f32.mrb[0].mxu0
      %1606 = vdwg.mxu0
      %v1607 = vadd.f32 %v1429, %v1577
      %v1608 = vadd.f32 %v1430, %v1580
      %v1609 = vadd.f32 %v1431, %v1585
      %v1610 = vadd.f32 %v1432, %v1588
      %v1611 = vadd.f32 %v1433, %v1593
      %v1612 = vadd.f32 %v1434, %v1596
      %v1613 = vadd.f32 %v1435, %v1601
      %v1614 = vadd.f32 %v1436, %v1604
      %v1615 = vld [vmem:[%s3] sm:$0x1]
      %v1616 = vld [vmem:[%s4] sm:$0x1]
      %v1617 = vld [vmem:[%s5] sm:$0xff]
      %v1618 = vld [vmem:[%s5 + $0x8] sm:$0xff]
      %v1619 = vld [vmem:[%s5 + $0x10] sm:$0xff]
      %v1620 = vld [vmem:[%s5 + $0x18] sm:$0xff]
      %vm1621 = vcmask 261120
      %v1622 = vsel %vm1621, %v1607, 0.0
      %v1623 = vsel %vm1621, %v1608, 0.0
      %v1624 = vadd.f32 %v1622, %v1623
      %v1625 = vsel %vm1621, %v1609, 0.0
      %v1626 = vadd.f32 %v1624, %v1625
      %v1627 = vsel %vm1621, %v1610, 0.0
      %v1628 = vadd.f32 %v1626, %v1627
      %v1629 = vsel %vm1621, %v1611, 0.0
      %v1630 = vadd.f32 %v1628, %v1629
      %v1631 = vsel %vm1621, %v1612, 0.0
      %v1632 = vadd.f32 %v1630, %v1631
      %v1633 = vsel %vm1621, %v1613, 0.0
      %v1634 = vadd.f32 %v1632, %v1633
      %v1635 = vsel %vm1621, %v1614, 0.0
      %v1636 = vadd.f32 %v1634, %v1635
      %v1637 = vrot.slane %v1636, 4
      %v1638 = vadd.f32 %v1636, %v1637
      %v1639 = vrot.slane %v1638, 2
      %v1640 = vadd.f32 %v1638, %v1639
      %v1641 = vrot.slane %v1640, 1
      %v1642 = vadd.f32 %v1640, %v1641
      %v1643 = vmul.f32 %v1607, %v1607
      %v1644 = vmul.f32 %v1608, %v1608
      %v1645 = vmul.f32 %v1609, %v1609
      %v1646 = vmul.f32 %v1610, %v1610
      %v1647 = vmul.f32 %v1611, %v1611
      %v1648 = vmul.f32 %v1612, %v1612
      %v1649 = vmul.f32 %v1613, %v1613
      %v1650 = vmul.f32 %v1614, %v1614
      %v1651 = vsel %vm1621, %v1643, 0.0
      %v1652 = vsel %vm1621, %v1644, 0.0
      %v1653 = vadd.f32 %v1651, %v1652
      %v1654 = vsel %vm1621, %v1645, 0.0
      %v1655 = vadd.f32 %v1653, %v1654
      %v1656 = vsel %vm1621, %v1646, 0.0
      %v1657 = vadd.f32 %v1655, %v1656
      %v1658 = vsel %vm1621, %v1647, 0.0
      %v1659 = vadd.f32 %v1657, %v1658
      %v1660 = vsel %vm1621, %v1648, 0.0
      %v1661 = vadd.f32 %v1659, %v1660
      %v1662 = vsel %vm1621, %v1649, 0.0
      %v1663 = vadd.f32 %v1661, %v1662
      %v1664 = vsel %vm1621, %v1650, 0.0
      %v1665 = vadd.f32 %v1663, %v1664
      %v1666 = vrot.slane %v1665, 4
      %v1667 = vadd.f32 %v1665, %v1666
      %v1668 = vrot.slane %v1667, 2
      %v1669 = vadd.f32 %v1667, %v1668
      %v1670 = vrot.slane %v1669, 1
      %v1671 = vadd.f32 %v1669, %v1670
      %v1673 = vsel %vm1621, %v1642, 0
      %1675 = vmatprep.subr.mxu0 0.0
      %1676 = vmatpush1.msra.mxu0 %v1617
      %1677 = vmatprep.subr.mxu0 0.0
      %1678 = vmatpush1.msra.mxu0 %v1618
      %1679 = vmatprep.subr.mxu0 0.0
      %1680 = vmatpush1.msra.mxu0 %v1619
      %1681 = vmatprep.subr.mxu0 0.0
      %1682 = vmatpush1.msra.mxu0 %v1620
      %1683 = vmatprep.subr.mxu0 0.0
      %1684 = vmatpush1.msra.mxu0 0.0
      %1685 = vmatprep.subr.mxu0 0.0
      %1686 = vmatpush1.msra.mxu0 0.0
      %1687 = vmatprep.subr.mxu0 0.0
      %1688 = vmatpush1.msra.mxu0 0.0
      %1689 = vmatprep.subr.mxu0 0.0
      %1690 = vmatpush1.msra.mxu0 0.0
      %1691 = vmatprep.subr.mxu0 0.0
      %1692 = vmatpush1.msra.mxu0 0.0
      %1693 = vmatprep.subr.mxu0 0.0
      %1694 = vmatpush1.msra.mxu0 0.0
      %1695 = vmatprep.subr.mxu0 0.0
      %1696 = vmatpush1.msra.mxu0 0.0
      %1697 = vmatprep.subr.mxu0 0.0
      %1698 = vmatpush1.msra.mxu0 0.0
      %1699 = vmatprep.subr.mxu0 0.0
      %1700 = vmatpush1.msra.mxu0 0.0
      %1701 = vmatprep.subr.mxu0 0.0
      %1702 = vmatpush1.msra.mxu0 0.0
      %1703 = vmatprep.subr.mxu0 0.0
      %1704 = vmatpush1.msra.mxu0 0.0
      %1705 = vmatprep.subr.mxu0 0.0
      %1706 = vmatpush1.msra.mxu0 0.0
      %1707 = vmatprep.subr.mxu0 0.0
      %1708 = vmatpush1.msra.mxu0 0.0
      %1709 = vmatprep.subr.mxu0 0.0
      %1710 = vmatpush1.msra.mxu0 0.0
      %1711 = vmatprep.subr.mxu0 0.0
      %1712 = vmatpush1.msra.mxu0 0.0
      %1713 = vmatprep.subr.mxu0 0.0
      %1714 = vmatpush1.msra.mxu0 0.0
      %1715 = vmatprep.subr.mxu0 0.0
      %1716 = vmatpush1.msra.mxu0 0.0
      %1717 = vmatprep.subr.mxu0 0.0
      %1718 = vmatpush1.msra.mxu0 0.0
      %1719 = vmatprep.subr.mxu0 0.0
      %1720 = vmatpush1.msra.mxu0 0.0
      %1721 = vmatprep.subr.mxu0 0.0
      %1722 = vmatpush1.msra.mxu0 0.0
      %1723 = vmatprep.subr.mxu0 0.0
      %1724 = vmatpush1.msra.mxu0 0.0
      %1725 = vmatprep.subr.mxu0 0.0
      %1726 = vmatpush1.msra.mxu0 0.0
      %1727 = vmatprep.subr.mxu0 0.0
      %1728 = vmatpush1.msra.mxu0 0.0
      %1729 = vmatprep.subr.mxu0 0.0
      %1730 = vmatpush1.msra.mxu0 0.0
      %1731 = vmatprep.subr.mxu0 0.0
      %1732 = vmatpush1.msra.mxu0 0.0
      %1733 = vmatprep.subr.mxu0 0.0
      %1734 = vmatpush1.msra.mxu0 0.0
      %1735 = vmatprep.subr.mxu0 0.0
      %1736 = vmatpush1.msra.mxu0 0.0
      %1737 = vmatprep.subr.mxu0 0.0
      %1738 = vmatpush1.msra.mxu0 0.0
      %1739 = vmatprep.mubr.f32.mxu0 0.0
      %1740 = vmatmul.mubr.f32.gmra.mrb[0].mxu0 %v1673
      %v1741 = vpop.f32.mrb[0].mxu0
      %v1742 = vadd.f32 0.0, %v1741
      %v1743 = vpop.f32.mrb[0].mxu0
      %1744 = vdwg.mxu0
      %v1745 = vrcp.pop 512.0
      %v1746 = vmul.f32 %v1742, %v1745
      %v1748 = vsel %vm1621, %v1671, 0
      %1750 = vmatprep.subr.mxu0 0.0
      %1751 = vmatpush1.msra.mxu0 %v1617
      %1752 = vmatprep.subr.mxu0 0.0
      %1753 = vmatpush1.msra.mxu0 %v1618
      %1754 = vmatprep.subr.mxu0 0.0
      %1755 = vmatpush1.msra.mxu0 %v1619
      %1756 = vmatprep.subr.mxu0 0.0
      %1757 = vmatpush1.msra.mxu0 %v1620
      %1758 = vmatprep.subr.mxu0 0.0
      %1759 = vmatpush1.msra.mxu0 0.0
      %1760 = vmatprep.subr.mxu0 0.0
      %1761 = vmatpush1.msra.mxu0 0.0
      %1762 = vmatprep.subr.mxu0 0.0
      %1763 = vmatpush1.msra.mxu0 0.0
      %1764 = vmatprep.subr.mxu0 0.0
      %1765 = vmatpush1.msra.mxu0 0.0
      %1766 = vmatprep.subr.mxu0 0.0
      %1767 = vmatpush1.msra.mxu0 0.0
      %1768 = vmatprep.subr.mxu0 0.0
      %1769 = vmatpush1.msra.mxu0 0.0
      %1770 = vmatprep.subr.mxu0 0.0
      %1771 = vmatpush1.msra.mxu0 0.0
      %1772 = vmatprep.subr.mxu0 0.0
      %1773 = vmatpush1.msra.mxu0 0.0
      %1774 = vmatprep.subr.mxu0 0.0
      %1775 = vmatpush1.msra.mxu0 0.0
      %1776 = vmatprep.subr.mxu0 0.0
      %1777 = vmatpush1.msra.mxu0 0.0
      %1778 = vmatprep.subr.mxu0 0.0
      %1779 = vmatpush1.msra.mxu0 0.0
      %1780 = vmatprep.subr.mxu0 0.0
      %1781 = vmatpush1.msra.mxu0 0.0
      %1782 = vmatprep.subr.mxu0 0.0
      %1783 = vmatpush1.msra.mxu0 0.0
      %1784 = vmatprep.subr.mxu0 0.0
      %1785 = vmatpush1.msra.mxu0 0.0
      %1786 = vmatprep.subr.mxu0 0.0
      %1787 = vmatpush1.msra.mxu0 0.0
      %1788 = vmatprep.subr.mxu0 0.0
      %1789 = vmatpush1.msra.mxu0 0.0
      %1790 = vmatprep.subr.mxu0 0.0
      %1791 = vmatpush1.msra.mxu0 0.0
      %1792 = vmatprep.subr.mxu0 0.0
      %1793 = vmatpush1.msra.mxu0 0.0
      %1794 = vmatprep.subr.mxu0 0.0
      %1795 = vmatpush1.msra.mxu0 0.0
      %1796 = vmatprep.subr.mxu0 0.0
      %1797 = vmatpush1.msra.mxu0 0.0
      %1798 = vmatprep.subr.mxu0 0.0
      %1799 = vmatpush1.msra.mxu0 0.0
      %1800 = vmatprep.subr.mxu0 0.0
      %1801 = vmatpush1.msra.mxu0 0.0
      %1802 = vmatprep.subr.mxu0 0.0
      %1803 = vmatpush1.msra.mxu0 0.0
      %1804 = vmatprep.subr.mxu0 0.0
      %1805 = vmatpush1.msra.mxu0 0.0
      %1806 = vmatprep.subr.mxu0 0.0
      %1807 = vmatpush1.msra.mxu0 0.0
      %1808 = vmatprep.subr.mxu0 0.0
      %1809 = vmatpush1.msra.mxu0 0.0
      %1810 = vmatprep.subr.mxu0 0.0
      %1811 = vmatpush1.msra.mxu0 0.0
      %1812 = vmatprep.subr.mxu0 0.0
      %1813 = vmatpush1.msra.mxu0 0.0
      %1814 = vmatprep.mubr.f32.mxu0 0.0
      %1815 = vmatmul.mubr.f32.gmra.mrb[0].mxu0 %v1748
      %v1816 = vpop.f32.mrb[0].mxu0
      %v1817 = vadd.f32 0.0, %v1816
      %v1818 = vpop.f32.mrb[0].mxu0
      %1819 = vdwg.mxu0
      %v1820 = vmul.f32 %v1817, %v1745
      %v1821 = vmul.f32 %v1746, %v1746
      %v1822 = vsub.f32 %v1820, %v1821
      %v1823 = vmax.f32 %v1822, 0.0
      %v1824 = vadd.f32 %v1823, 1e-05
      %v1825 = vrsqrt.pop %v1824
      %v1826 = vlaneseq
      %v1827 = vshrl.u32 %v1826, 7
      %v1828 = vsub.s32 0, %v1827
      %v1829 = vrot.slane %v1746, %v1828
      %v1830 = vsub.f32 %v1607, %v1829
      %v1831 = vsub.f32 %v1608, %v1829
      %v1832 = vsub.f32 %v1609, %v1829
      %v1833 = vsub.f32 %v1610, %v1829
      %v1834 = vsub.f32 %v1611, %v1829
      %v1835 = vsub.f32 %v1612, %v1829
      %v1836 = vsub.f32 %v1613, %v1829
      %v1837 = vsub.f32 %v1614, %v1829
      %v1838 = vlaneseq
      %v1839 = vshrl.u32 %v1838, 7
      %v1840 = vsub.s32 0, %v1839
      %v1841 = vrot.slane %v1825, %v1840
      %v1842 = vmul.f32 %v1830, %v1841
      %v1843 = vmul.f32 %v1831, %v1841
      %v1844 = vmul.f32 %v1832, %v1841
      %v1845 = vmul.f32 %v1833, %v1841
      %v1846 = vmul.f32 %v1834, %v1841
      %v1847 = vmul.f32 %v1835, %v1841
      %v1848 = vmul.f32 %v1836, %v1841
      %v1849 = vmul.f32 %v1837, %v1841
      %v1851 = vlaneseq
      %v1852 = vshrl.u32 %v1851, 7
      %v1853 = vsub.s32 0, %v1852
      %v1854 = vrot.slane %v1615, %v1853
      %v1856 = vmul.f32 %v1842, %v1854
      %v1857 = vmul.f32 %v1843, %v1854
      %v1858 = vmul.f32 %v1844, %v1854
      %v1859 = vmul.f32 %v1845, %v1854
      %v1860 = vmul.f32 %v1846, %v1854
      %v1861 = vmul.f32 %v1847, %v1854
      %v1862 = vmul.f32 %v1848, %v1854
      %v1863 = vmul.f32 %v1849, %v1854
      %v1865 = vlaneseq
      %v1866 = vshrl.u32 %v1865, 7
      %v1867 = vsub.s32 0, %v1866
      %v1868 = vrot.slane %v1616, %v1867
      %v1870 = vadd.f32 %v1856, %v1868
      %v1871 = vadd.f32 %v1857, %v1868
      %v1872 = vadd.f32 %v1858, %v1868
      %v1873 = vadd.f32 %v1859, %v1868
      %v1874 = vadd.f32 %v1860, %v1868
      %v1875 = vadd.f32 %v1861, %v1868
      %v1876 = vadd.f32 %v1862, %v1868
      %v1877 = vadd.f32 %v1863, %v1868
      %v1878 = vmax.f32 %v1870, 0.0
      %v1879 = vmax.f32 %v1871, 0.0
      %v1880 = vmax.f32 %v1872, 0.0
      %v1881 = vmax.f32 %v1873, 0.0
      %v1882 = vmax.f32 %v1874, 0.0
      %v1883 = vmax.f32 %v1875, 0.0
      %v1884 = vmax.f32 %v1876, 0.0
      %v1885 = vmax.f32 %v1877, 0.0
      %v1886 = vpack.c.bf16 %v1879, %v1878
      %v1887 = vpack.c.bf16 %v1881, %v1880
      %v1888 = vpack.c.bf16 %v1883, %v1882
      %v1889 = vpack.c.bf16 %v1885, %v1884
      %v1894 = vunpack.c.l.b16 %v1886
      %v1895 = vunpack.c.h.b16 %v1886
      %v1896 = vunpack.c.l.b16 %v1887
      %v1897 = vunpack.c.h.b16 %v1887
      %v1898 = vunpack.c.l.b16 %v1888
      %v1899 = vunpack.c.h.b16 %v1888
      %v1900 = vunpack.c.l.b16 %v1889
      %v1901 = vunpack.c.h.b16 %v1889
      %v1902 = vpack.c.b16 %v1894, %v1894
      %v1903 = vpack.c.b16 %v1895, %v1895
      %v1904 = vpack.c.b16 %v1896, %v1896
      %v1905 = vpack.c.b16 %v1897, %v1897
      %v1906 = vpack.c.b16 %v1898, %v1898
      %v1907 = vpack.c.b16 %v1899, %v1899
      %v1908 = vpack.c.b16 %v1900, %v1900
      %v1909 = vpack.c.b16 %v1901, %v1901
      %1918 = vst.msk [vmem:[%s286] sm:$0xf] %vm938, %v1902
      %1919 = vst.msk [vmem:[%s286 + $0x4] sm:$0xf] %vm938, %v1903
      %1920 = vst.msk [vmem:[%s286 + $0x8] sm:$0xf] %vm938, %v1904
      %1921 = vst.msk [vmem:[%s286 + $0xc] sm:$0xf] %vm938, %v1905
      %1922 = vst.msk [vmem:[%s286 + $0x10] sm:$0xf] %vm938, %v1906
      %1923 = vst.msk [vmem:[%s286 + $0x14] sm:$0xf] %vm938, %v1907
      %1924 = vst.msk [vmem:[%s286 + $0x18] sm:$0xf] %vm938, %v1908
      %1925 = vst.msk [vmem:[%s286 + $0x1c] sm:$0xf] %vm938, %v1909
      %p1926 = scmp.lt.s32.totalorder %s19, 1
      %s1927 = scalar_select %p1926, %s19, 1
      %s1928 = smul.addr %s1927, 8
      %s1929 = smul.addr %s1928, 4
      %s1930 = scalar_lea.vmem %s6, %s1929
      %p1931 = scmp.lt.s32.totalorder %s19, 1
      %s1932 = scalar_select %p1931, %s19, 1
      %s1933 = smul.addr %s1932, 8
      %s1934 = smul.addr %s1933, 4
      %s1935 = scalar_lea.vmem %s7, %s1934
      // Predicated region
      $region45: #{_lambda_.5} parent=43 // pred_check
        %p1936 = pneg %p168
      $region46: #{_lambda_.5} parent=43 // pred_check_branch
        %1938 = sbr.rel (%p1936) target = $region48
      $region47: #{_lambda_.5} parent=43 // pred_region
        _
      $region48: #{_lambda_.5} parent=43 // pred_fallthru
        _
      // Predicated region
      $region49: #{_lambda_.5} parent=43 // pred_check
        %p1939 = pneg %p194
      $region50: #{_lambda_.5} parent=43 // pred_check_branch
        %1941 = sbr.rel (%p1939) target = $region52
      $region51: #{_lambda_.5} parent=43 // pred_region
        _
      $region52: #{_lambda_.5} parent=43 // pred_fallthru
        _
    $region44: #{_lambda_.5} parent=5 // pred_fallthru
      _
    %p1942 = scmp.le.s32.totalorder 2, %s14
    // Predicated region
    $region53: #{_lambda_.5} parent=5 // pred_check
      %p1943 = pneg %p1942
    $region54: #{_lambda_.5} parent=5 // pred_check_branch
      %1945 = sbr.rel (%p1943) target = $region56
    $region55: #{_lambda_.5} parent=5 // pred_region
      %s1946 = ssub.s32 %s14, 2
      // Predicated region
      $region57: #{_lambda_.5} parent=55 // pred_check
        %p1947 = pneg %p174
      $region58: #{_lambda_.5} parent=55 // pred_check_branch
        %1949 = sbr.rel (%p1947) target = $region60
      $region59: #{_lambda_.5} parent=55 // pred_region
        %p1950 = scmp.lt.s32.totalorder %s20, 1
        %s1951 = scalar_select %p1950, %s20, 1
        %s1952 = smul.addr %s1951, 8
        %s1953 = smul.addr %s1952, 4
        %s1954 = scalar_lea.vmem %s6, %s1953
      $region60: #{_lambda_.5} parent=55 // pred_fallthru
        _
      // Predicated region
      $region61: #{_lambda_.5} parent=55 // pred_check
        %p1955 = pneg %p200
      $region62: #{_lambda_.5} parent=55 // pred_check_branch
        %1957 = sbr.rel (%p1955) target = $region64
      $region63: #{_lambda_.5} parent=55 // pred_region
        %p1958 = scmp.lt.s32.totalorder %s20, 1
        %s1959 = scalar_select %p1958, %s20, 1
        %s1960 = smul.addr %s1959, 8
        %s1961 = smul.addr %s1960, 4
        %s1962 = scalar_lea.vmem %s7, %s1961
      $region64: #{_lambda_.5} parent=55 // pred_fallthru
        _
    $region56: #{_lambda_.5} parent=5 // pred_fallthru
      _
  $region6: #{_lambda_.5} parent=0 // loop_footer
    %s18 = sadd.s32 1, %s14
  $region7: #{_lambda_.5} parent=0 // loop_footer_branch
    %13 = sbr.rel target = $region3
  $region8: #{_lambda_.5} parent=0 // loop_exit
    _

// kernel: _lambda_.7
$region0: #{_lambda_.7}
  #allocation0 [shape = 'u32[]', space=smem, size = 0x4, offset = 0x4, fixed_abs, tag = 'smem constant byte address 0x4 - core index']
  #allocation1 [shape = 'u32[144,128]{1,0:T(1,128)}', space=vmem, size = 0x12000, scoped, tag = 'internal scratch']
  #allocation2 [shape = 'f32[10,24,32]{2,1,0:T(8,128)}', space=vmem, size = 0x1e000, scoped, tag = 'scratch operand']
  #allocation3 [shape = 'f32[10,24,32]{2,1,0:T(8,128)}', space=vmem, size = 0x1e000, scoped, tag = 'scratch operand']
  %s0 = inlined_call_operand.vmem [shape: bf16[2,64,32], index: 0, kind: input, shape index: {}]
  %s1 = inlined_call_operand.vmem [shape: bf16[9,32,32], index: 1, kind: input, shape index: {}]
  %s2 = inlined_call_operand.vmem [shape: bf16[9,32,32], index: 2, kind: input, shape index: {}]
  %s3 = inlined_call_operand.vmem [shape: f32[1,32], index: 3, kind: input, shape index: {}, may-alias: {3,6}]
  %s4 = inlined_call_operand.vmem [shape: f32[1,32], index: 4, kind: input, shape index: {}, may-alias: {4,7}]
  %s5 = inlined_call_operand.vmem [shape: f32[32,32], index: 5, kind: input, shape index: {}, may-alias: {5,8}]
  %s6 = inlined_call_operand.vmem [shape: f32[1,32], index: 6, kind: input, shape index: {}, may-alias: {3,6}]
  %s7 = inlined_call_operand.vmem [shape: f32[1,32], index: 7, kind: input, shape index: {}, may-alias: {4,7}]
  %s8 = inlined_call_operand.vmem [shape: f32[32,32], index: 8, kind: input, shape index: {}, may-alias: {5,8}]
  %s9 = inlined_call_operand.vmem [shape: bf16[2,64,32], index: 9, kind: output, shape index: {}]
  %s10 = sld [smem:[#allocation0]]
  $region69: #{_lambda_.7} parent=0
    _
  %s12 = ssub.s32 1, %s10
  %s13 = scalar_select 0, %s12, %s10
  loop: start=0, step=1, limit=4
  $region2: #{_lambda_.7} parent=0 // loop_pre_header
    _
  $region3: #{_lambda_.7} parent=0 // loop_header
    %s15 = sphi 0, %s19
    %p16 = scmp.ge.s32.totalorder %s15, 4
    %s25 = sphi 0, %s27
    %s28 = sphi 0, %s25
    %s29 = sphi 0, %s28
    %s45 = sphi 0, %s29
    %s49 = sphi 0, %s49
    %s51 = sphi 0, %s49
    %s52 = sphi 0, %s51
    %s66 = sphi 0, %s52
    %s70 = sphi 0, %s70
    %s72 = sphi 0, %s70
    %s73 = sphi 0, %s72
    %s87 = sphi 0, %s73
    %s91 = sphi 0, %s91
    %s93 = sphi 0, %s91
    %s94 = sphi 0, %s93
    %s108 = sphi 0, %s94
    %s112 = sphi 0, %s112
    %s114 = sphi 0, %s112
    %s115 = sphi 0, %s114
    %s129 = sphi 0, %s115
    %s133 = sphi 0, %s133
    %s135 = sphi 0, %s133
    %s136 = sphi 0, %s135
    %s150 = sphi 0, %s136
    %s154 = sphi 0, %s154
    %s156 = sphi 0, %s154
    %s157 = sphi 0, %s156
    %s171 = sphi 0, %s157
    %s175 = sphi 0, %s175
    %s177 = sphi 0, %s175
    %s178 = sphi 0, %s177
    %s192 = sphi 0, %s178
    %s196 = sphi 0, %s196
    %s198 = sphi 0, %s196
    %s199 = sphi 0, %s198
    %s213 = sphi 0, %s199
    %s219 = sphi 0, %s221
    %s222 = sphi 0, %s219
    %s223 = sphi 0, %s222
    %s239 = sphi 0, %s223
  $region4: #{_lambda_.7} parent=0 // loop_header_branch
    %18 = sbr.rel (%p16) target = $region8
  $region5: #{_lambda_.7} parent=0 // loop_body
    %s20 = ssub.s32 %s15, 1
    %s21 = ssub.s32 %s15, 2
    %s22 = sadd.s32 %s15, 1
    %s23 = ssub.s32 %s15, %s22
    %p24 = scmp.eq.s32.totalorder %s23, 0
    %s26 = sadd.s32 %s25, 1
    %s27 = scalar_select %p24, %s25, %s26
    %p30 = pneg %p24
    %p31 = scmp.eq.s32.totalorder %s15, 1
    %p32 = por %p30, %p31
    %p33 = scmp.ne.s32.totalorder %s25, %s28
    %p34 = scmp.eq.s32.totalorder %s15, 0
    %p35 = por %p33, %p34
    %p36 = scmp.ne.s32.totalorder %s25, %s28
    %p37 = scmp.eq.s32.totalorder %s20, 1
    %p38 = por %p36, %p37
    %p39 = scmp.ne.s32.totalorder %s28, %s29
    %p40 = scmp.eq.s32.totalorder %s20, 0
    %p41 = por %p39, %p40
    %p42 = scmp.ne.s32.totalorder %s28, %s29
    %p43 = scmp.eq.s32.totalorder %s21, 1
    %p44 = por %p42, %p43
    %p46 = scmp.ne.s32.totalorder %s29, %s45
    %p47 = scmp.eq.s32.totalorder %s21, 0
    %p48 = por %p46, %p47
    %s50 = sadd.s32 %s49, 1
    %p53 = scmp.eq.s32.totalorder %s15, 1
    %p54 = scmp.ne.s32.totalorder %s49, %s51
    %p55 = scmp.eq.s32.totalorder %s15, 0
    %p56 = por %p54, %p55
    %p57 = scmp.ne.s32.totalorder %s49, %s51
    %p58 = scmp.eq.s32.totalorder %s20, 1
    %p59 = por %p57, %p58
    %p60 = scmp.ne.s32.totalorder %s51, %s52
    %p61 = scmp.eq.s32.totalorder %s20, 0
    %p62 = por %p60, %p61
    %p63 = scmp.ne.s32.totalorder %s51, %s52
    %p64 = scmp.eq.s32.totalorder %s21, 1
    %p65 = por %p63, %p64
    %p67 = scmp.ne.s32.totalorder %s52, %s66
    %p68 = scmp.eq.s32.totalorder %s21, 0
    %p69 = por %p67, %p68
    %s71 = sadd.s32 %s70, 1
    %p74 = scmp.eq.s32.totalorder %s15, 1
    %p75 = scmp.ne.s32.totalorder %s70, %s72
    %p76 = scmp.eq.s32.totalorder %s15, 0
    %p77 = por %p75, %p76
    %p78 = scmp.ne.s32.totalorder %s70, %s72
    %p79 = scmp.eq.s32.totalorder %s20, 1
    %p80 = por %p78, %p79
    %p81 = scmp.ne.s32.totalorder %s72, %s73
    %p82 = scmp.eq.s32.totalorder %s20, 0
    %p83 = por %p81, %p82
    %p84 = scmp.ne.s32.totalorder %s72, %s73
    %p85 = scmp.eq.s32.totalorder %s21, 1
    %p86 = por %p84, %p85
    %p88 = scmp.ne.s32.totalorder %s73, %s87
    %p89 = scmp.eq.s32.totalorder %s21, 0
    %p90 = por %p88, %p89
    %s92 = sadd.s32 %s91, 1
    %p95 = scmp.eq.s32.totalorder %s15, 1
    %p96 = scmp.ne.s32.totalorder %s91, %s93
    %p97 = scmp.eq.s32.totalorder %s15, 0
    %p98 = por %p96, %p97
    %p99 = scmp.ne.s32.totalorder %s91, %s93
    %p100 = scmp.eq.s32.totalorder %s20, 1
    %p101 = por %p99, %p100
    %p102 = scmp.ne.s32.totalorder %s93, %s94
    %p103 = scmp.eq.s32.totalorder %s20, 0
    %p104 = por %p102, %p103
    %p105 = scmp.ne.s32.totalorder %s93, %s94
    %p106 = scmp.eq.s32.totalorder %s21, 1
    %p107 = por %p105, %p106
    %p109 = scmp.ne.s32.totalorder %s94, %s108
    %p110 = scmp.eq.s32.totalorder %s21, 0
    %p111 = por %p109, %p110
    %s113 = sadd.s32 %s112, 1
    %p116 = scmp.eq.s32.totalorder %s15, 1
    %p117 = scmp.ne.s32.totalorder %s112, %s114
    %p118 = scmp.eq.s32.totalorder %s15, 0
    %p119 = por %p117, %p118
    %p120 = scmp.ne.s32.totalorder %s112, %s114
    %p121 = scmp.eq.s32.totalorder %s20, 1
    %p122 = por %p120, %p121
    %p123 = scmp.ne.s32.totalorder %s114, %s115
    %p124 = scmp.eq.s32.totalorder %s20, 0
    %p125 = por %p123, %p124
    %p126 = scmp.ne.s32.totalorder %s114, %s115
    %p127 = scmp.eq.s32.totalorder %s21, 1
    %p128 = por %p126, %p127
    %p130 = scmp.ne.s32.totalorder %s115, %s129
    %p131 = scmp.eq.s32.totalorder %s21, 0
    %p132 = por %p130, %p131
    %s134 = sadd.s32 %s133, 1
    %p137 = scmp.eq.s32.totalorder %s15, 1
    %p138 = scmp.ne.s32.totalorder %s133, %s135
    %p139 = scmp.eq.s32.totalorder %s15, 0
    %p140 = por %p138, %p139
    %p141 = scmp.ne.s32.totalorder %s133, %s135
    %p142 = scmp.eq.s32.totalorder %s20, 1
    %p143 = por %p141, %p142
    %p144 = scmp.ne.s32.totalorder %s135, %s136
    %p145 = scmp.eq.s32.totalorder %s20, 0
    %p146 = por %p144, %p145
    %p147 = scmp.ne.s32.totalorder %s135, %s136
    %p148 = scmp.eq.s32.totalorder %s21, 1
    %p149 = por %p147, %p148
    %p151 = scmp.ne.s32.totalorder %s136, %s150
    %p152 = scmp.eq.s32.totalorder %s21, 0
    %p153 = por %p151, %p152
    %s155 = sadd.s32 %s154, 1
    %p158 = scmp.eq.s32.totalorder %s15, 1
    %p159 = scmp.ne.s32.totalorder %s154, %s156
    %p160 = scmp.eq.s32.totalorder %s15, 0
    %p161 = por %p159, %p160
    %p162 = scmp.ne.s32.totalorder %s154, %s156
    %p163 = scmp.eq.s32.totalorder %s20, 1
    %p164 = por %p162, %p163
    %p165 = scmp.ne.s32.totalorder %s156, %s157
    %p166 = scmp.eq.s32.totalorder %s20, 0
    %p167 = por %p165, %p166
    %p168 = scmp.ne.s32.totalorder %s156, %s157
    %p169 = scmp.eq.s32.totalorder %s21, 1
    %p170 = por %p168, %p169
    %p172 = scmp.ne.s32.totalorder %s157, %s171
    %p173 = scmp.eq.s32.totalorder %s21, 0
    %p174 = por %p172, %p173
    %s176 = sadd.s32 %s175, 1
    %p179 = scmp.eq.s32.totalorder %s15, 1
    %p180 = scmp.ne.s32.totalorder %s175, %s177
    %p181 = scmp.eq.s32.totalorder %s15, 0
    %p182 = por %p180, %p181
    %p183 = scmp.ne.s32.totalorder %s175, %s177
    %p184 = scmp.eq.s32.totalorder %s20, 1
    %p185 = por %p183, %p184
    %p186 = scmp.ne.s32.totalorder %s177, %s178
    %p187 = scmp.eq.s32.totalorder %s20, 0
    %p188 = por %p186, %p187
    %p189 = scmp.ne.s32.totalorder %s177, %s178
    %p190 = scmp.eq.s32.totalorder %s21, 1
    %p191 = por %p189, %p190
    %p193 = scmp.ne.s32.totalorder %s178, %s192
    %p194 = scmp.eq.s32.totalorder %s21, 0
    %p195 = por %p193, %p194
    %s197 = sadd.s32 %s196, 1
    %p200 = scmp.eq.s32.totalorder %s15, 1
    %p201 = scmp.ne.s32.totalorder %s196, %s198
    %p202 = scmp.eq.s32.totalorder %s15, 0
    %p203 = por %p201, %p202
    %p204 = scmp.ne.s32.totalorder %s196, %s198
    %p205 = scmp.eq.s32.totalorder %s20, 1
    %p206 = por %p204, %p205
    %p207 = scmp.ne.s32.totalorder %s198, %s199
    %p208 = scmp.eq.s32.totalorder %s20, 0
    %p209 = por %p207, %p208
    %p210 = scmp.ne.s32.totalorder %s198, %s199
    %p211 = scmp.eq.s32.totalorder %s21, 1
    %p212 = por %p210, %p211
    %p214 = scmp.ne.s32.totalorder %s199, %s213
    %p215 = scmp.eq.s32.totalorder %s21, 0
    %p216 = por %p214, %p215
    %s217 = ssub.s32 %s15, %s22
    %p218 = scmp.eq.s32.totalorder %s217, 0
    %s220 = sadd.s32 %s219, 1
    %s221 = scalar_select %p218, %s219, %s220
    %p224 = pneg %p218
    %p225 = scmp.eq.s32.totalorder %s15, 1
    %p226 = por %p224, %p225
    %p227 = scmp.ne.s32.totalorder %s219, %s222
    %p228 = scmp.eq.s32.totalorder %s15, 0
    %p229 = por %p227, %p228
    %p230 = scmp.ne.s32.totalorder %s219, %s222
    %p231 = scmp.eq.s32.totalorder %s20, 1
    %p232 = por %p230, %p231
    %p233 = scmp.ne.s32.totalorder %s222, %s223
    %p234 = scmp.eq.s32.totalorder %s20, 0
    %p235 = por %p233, %p234
    %p236 = scmp.ne.s32.totalorder %s222, %s223
    %p237 = scmp.eq.s32.totalorder %s21, 1
    %p238 = por %p236, %p237
    %p240 = scmp.ne.s32.totalorder %s223, %s239
    %p241 = scmp.eq.s32.totalorder %s21, 0
    %p242 = por %p240, %p241
    %p243 = scmp.le.s32.totalorder 1, %s15
    %p244 = scmp.lt.s32.totalorder %s15, 3
    %p245 = pnand %p243, %p244
    %p246 = pneg %p245
    // Predicated region
    $region9: #{_lambda_.7} parent=5 // pred_check
      _
    $region10: #{_lambda_.7} parent=5 // pred_check_branch
      %248 = sbr.rel (%p245) target = $region12
    $region11: #{_lambda_.7} parent=5 // pred_region
      %s249 = ssub.s32 %s15, 1
      // Predicated region
      $region13: #{_lambda_.7} parent=11 // pred_check
        %p250 = pneg %p62
      $region14: #{_lambda_.7} parent=11 // pred_check_branch
        %252 = sbr.rel (%p250) target = $region16
      $region15: #{_lambda_.7} parent=11 // pred_region
        _
      $region16: #{_lambda_.7} parent=11 // pred_fallthru
        _
      // Predicated region
      $region17: #{_lambda_.7} parent=11 // pred_check
        %p253 = pneg %p83
      $region18: #{_lambda_.7} parent=11 // pred_check_branch
        %255 = sbr.rel (%p253) target = $region20
      $region19: #{_lambda_.7} parent=11 // pred_region
        _
      $region20: #{_lambda_.7} parent=11 // pred_fallthru
        _
      // Predicated region
      $region21: #{_lambda_.7} parent=11 // pred_check
        %p256 = pneg %p104
      $region22: #{_lambda_.7} parent=11 // pred_check_branch
        %258 = sbr.rel (%p256) target = $region24
      $region23: #{_lambda_.7} parent=11 // pred_region
        _
      $region24: #{_lambda_.7} parent=11 // pred_fallthru
        _
      // Predicated region
      $region25: #{_lambda_.7} parent=11 // pred_check
        %p259 = pneg %p125
      $region26: #{_lambda_.7} parent=11 // pred_check_branch
        %261 = sbr.rel (%p259) target = $region28
      $region27: #{_lambda_.7} parent=11 // pred_region
        _
      $region28: #{_lambda_.7} parent=11 // pred_fallthru
        _
      // Predicated region
      $region29: #{_lambda_.7} parent=11 // pred_check
        %p262 = pneg %p146
      $region30: #{_lambda_.7} parent=11 // pred_check_branch
        %264 = sbr.rel (%p262) target = $region32
      $region31: #{_lambda_.7} parent=11 // pred_region
        _
      $region32: #{_lambda_.7} parent=11 // pred_fallthru
        _
      // Predicated region
      $region33: #{_lambda_.7} parent=11 // pred_check
        %p265 = pneg %p167
      $region34: #{_lambda_.7} parent=11 // pred_check_branch
        %267 = sbr.rel (%p265) target = $region36
      $region35: #{_lambda_.7} parent=11 // pred_region
        _
      $region36: #{_lambda_.7} parent=11 // pred_fallthru
        _
      // Predicated region
      $region37: #{_lambda_.7} parent=11 // pred_check
        %p268 = pneg %p188
      $region38: #{_lambda_.7} parent=11 // pred_check_branch
        %270 = sbr.rel (%p268) target = $region40
      $region39: #{_lambda_.7} parent=11 // pred_region
        _
      $region40: #{_lambda_.7} parent=11 // pred_fallthru
        _
      // Predicated region
      $region41: #{_lambda_.7} parent=11 // pred_check
        %p271 = pneg %p209
      $region42: #{_lambda_.7} parent=11 // pred_check_branch
        %273 = sbr.rel (%p271) target = $region44
      $region43: #{_lambda_.7} parent=11 // pred_region
        _
      $region44: #{_lambda_.7} parent=11 // pred_fallthru
        _
    $region12: #{_lambda_.7} parent=5 // pred_fallthru
      _
    %p274 = scmp.lt.s32.totalorder %s15, 2
    // Predicated region
    $region45: #{_lambda_.7} parent=5 // pred_check
      %p275 = pneg %p274
    $region46: #{_lambda_.7} parent=5 // pred_check_branch
      %277 = sbr.rel (%p275) target = $region48
    $region47: #{_lambda_.7} parent=5 // pred_region
      // Predicated region
      $region49: #{_lambda_.7} parent=47 // pred_check
        %p278 = pneg %p35
      $region50: #{_lambda_.7} parent=47 // pred_check_branch
        %280 = sbr.rel (%p278) target = $region52
      $region51: #{_lambda_.7} parent=47 // pred_region
        %p281 = scmp.lt.s32.totalorder %s15, 1
        %s282 = scalar_select %p281, %s15, 1
        %s283 = smul.addr %s282, 8
        %s284 = smul.addr %s283, 4
        %s285 = scalar_lea.vmem %s0, %s284
      $region52: #{_lambda_.7} parent=47 // pred_fallthru
        _
    $region48: #{_lambda_.7} parent=5 // pred_fallthru
      _
    %p286 = scmp.le.s32.totalorder 1, %s15
    %p287 = scmp.lt.s32.totalorder %s15, 3
    %p288 = pnand %p286, %p287
    %p289 = pneg %p288
    // Predicated region
    $region53: #{_lambda_.7} parent=5 // pred_check
      _
    $region54: #{_lambda_.7} parent=5 // pred_check_branch
      %291 = sbr.rel (%p288) target = $region56
    $region55: #{_lambda_.7} parent=5 // pred_region
      %s292 = ssub.s32 %s15, 1
      %p293 = scmp.lt.s32.totalorder %s20, 1
      %s294 = scalar_select %p293, %s20, 1
      %s295 = smul.addr %s294, 8
      %s296 = smul.addr %s295, 4
      %s297 = scalar_lea.vmem %s0, %s296
      %p298 = pneg %p41
      %p299 = pneg %p38
      %p300 = pneg %p62
      %p301 = pneg %p59
      %p302 = pneg %p83
      %p303 = pneg %p80
      %p304 = pneg %p104
      %p305 = pneg %p101
      %p306 = pneg %p125
      %p307 = pneg %p122
      %p308 = pneg %p146
      %p309 = pneg %p143
      %p310 = pneg %p167
      %p311 = pneg %p164
      %p312 = pneg %p188
      %p313 = pneg %p185
      %p314 = pneg %p209
      %p315 = pneg %p206
      %p316 = pneg %p235
      %p317 = pneg %p232
      %p318 = scmp.lt.s32.totalorder %s20, 1
      %s319 = scalar_select %p318, %s20, 1
      %s320 = smul.addr %s319, 8
      %s321 = smul.addr %s320, 4
      %s322 = scalar_lea.vmem %s9, %s321
      %p323 = scmp.lt.s32.totalorder %s20, 1
      %s324 = scalar_select %p323, %s20, 1
      %s325 = smul.addr %s324, 8
      %s326 = smul.addr %s325, 4
      %s327 = scalar_lea.vmem %s0, %s326
      %p328 = scmp.lt.s32.totalorder %s20, 1
      %s329 = scalar_select %p328, %s20, 1
      %s330 = smul.addr %s329, 8
      %s331 = smul.addr %s330, 4
      %s332 = scalar_lea.vmem %s9, %s331
      %v334 = vld [vmem:[%s327] sm:$0xf]
      %v335 = vld [vmem:[%s327 + $0x4] sm:$0xf]
      %v336 = vld [vmem:[%s327 + $0x8] sm:$0xf]
      %v337 = vld [vmem:[%s327 + $0xc] sm:$0xf]
      %v338 = vld [vmem:[%s327 + $0x10] sm:$0xf]
      %v339 = vld [vmem:[%s327 + $0x14] sm:$0xf]
      %v340 = vld [vmem:[%s327 + $0x18] sm:$0xf]
      %v341 = vld [vmem:[%s327 + $0x1c] sm:$0xf]
      %v342 = vunpack.c.l.bf16 %v334
      %v343 = vunpack.c.l.bf16 %v335
      %v344 = vunpack.c.l.bf16 %v336
      %v345 = vunpack.c.l.bf16 %v337
      %v346 = vunpack.c.l.bf16 %v338
      %v347 = vunpack.c.l.bf16 %v339
      %v348 = vunpack.c.l.bf16 %v340
      %v349 = vunpack.c.l.bf16 %v341
      %v350 = vld [vmem:[%s3] sm:$0x1]
      %v351 = vld [vmem:[%s4] sm:$0x1]
      %v352 = vld [vmem:[%s5] sm:$0xff]
      %v353 = vld [vmem:[%s5 + $0x8] sm:$0xff]
      %v354 = vld [vmem:[%s5 + $0x10] sm:$0xff]
      %v355 = vld [vmem:[%s5 + $0x18] sm:$0xff]
      %vm356 = vcmask 261120
      %v357 = vsel %vm356, %v342, 0.0
      %v358 = vsel %vm356, %v343, 0.0
      %v359 = vadd.f32 %v357, %v358
      %v360 = vsel %vm356, %v344, 0.0
      %v361 = vadd.f32 %v359, %v360
      %v362 = vsel %vm356, %v345, 0.0
      %v363 = vadd.f32 %v361, %v362
      %v364 = vsel %vm356, %v346, 0.0
      %v365 = vadd.f32 %v363, %v364
      %v366 = vsel %vm356, %v347, 0.0
      %v367 = vadd.f32 %v365, %v366
      %v368 = vsel %vm356, %v348, 0.0
      %v369 = vadd.f32 %v367, %v368
      %v370 = vsel %vm356, %v349, 0.0
      %v371 = vadd.f32 %v369, %v370
      %v372 = vrot.slane %v371, 4
      %v373 = vadd.f32 %v371, %v372
      %v374 = vrot.slane %v373, 2
      %v375 = vadd.f32 %v373, %v374
      %v376 = vrot.slane %v375, 1
      %v377 = vadd.f32 %v375, %v376
      %v378 = vmul.f32 %v342, %v342
      %v379 = vmul.f32 %v343, %v343
      %v380 = vmul.f32 %v344, %v344
      %v381 = vmul.f32 %v345, %v345
      %v382 = vmul.f32 %v346, %v346
      %v383 = vmul.f32 %v347, %v347
      %v384 = vmul.f32 %v348, %v348
      %v385 = vmul.f32 %v349, %v349
      %v386 = vsel %vm356, %v378, 0.0
      %v387 = vsel %vm356, %v379, 0.0
      %v388 = vadd.f32 %v386, %v387
      %v389 = vsel %vm356, %v380, 0.0
      %v390 = vadd.f32 %v388, %v389
      %v391 = vsel %vm356, %v381, 0.0
      %v392 = vadd.f32 %v390, %v391
      %v393 = vsel %vm356, %v382, 0.0
      %v394 = vadd.f32 %v392, %v393
      %v395 = vsel %vm356, %v383, 0.0
      %v396 = vadd.f32 %v394, %v395
      %v397 = vsel %vm356, %v384, 0.0
      %v398 = vadd.f32 %v396, %v397
      %v399 = vsel %vm356, %v385, 0.0
      %v400 = vadd.f32 %v398, %v399
      %v401 = vrot.slane %v400, 4
      %v402 = vadd.f32 %v400, %v401
      %v403 = vrot.slane %v402, 2
      %v404 = vadd.f32 %v402, %v403
      %v405 = vrot.slane %v404, 1
      %v406 = vadd.f32 %v404, %v405
      %v408 = vsel %vm356, %v377, 0
      %410 = vmatprep.subr.mxu0 0.0
      %411 = vmatpush1.msra.mxu0 %v352
      %412 = vmatprep.subr.mxu0 0.0
      %413 = vmatpush1.msra.mxu0 %v353
      %414 = vmatprep.subr.mxu0 0.0
      %415 = vmatpush1.msra.mxu0 %v354
      %416 = vmatprep.subr.mxu0 0.0
      %417 = vmatpush1.msra.mxu0 %v355
      %418 = vmatprep.subr.mxu0 0.0
      %419 = vmatpush1.msra.mxu0 0.0
      %420 = vmatprep.subr.mxu0 0.0
      %421 = vmatpush1.msra.mxu0 0.0
      %422 = vmatprep.subr.mxu0 0.0
      %423 = vmatpush1.msra.mxu0 0.0
      %424 = vmatprep.subr.mxu0 0.0
      %425 = vmatpush1.msra.mxu0 0.0
      %426 = vmatprep.subr.mxu0 0.0
      %427 = vmatpush1.msra.mxu0 0.0
      %428 = vmatprep.subr.mxu0 0.0
      %429 = vmatpush1.msra.mxu0 0.0
      %430 = vmatprep.subr.mxu0 0.0
      %431 = vmatpush1.msra.mxu0 0.0
      %432 = vmatprep.subr.mxu0 0.0
      %433 = vmatpush1.msra.mxu0 0.0
      %434 = vmatprep.subr.mxu0 0.0
      %435 = vmatpush1.msra.mxu0 0.0
      %436 = vmatprep.subr.mxu0 0.0
      %437 = vmatpush1.msra.mxu0 0.0
      %438 = vmatprep.subr.mxu0 0.0
      %439 = vmatpush1.msra.mxu0 0.0
      %440 = vmatprep.subr.mxu0 0.0
      %441 = vmatpush1.msra.mxu0 0.0
      %442 = vmatprep.subr.mxu0 0.0
      %443 = vmatpush1.msra.mxu0 0.0
      %444 = vmatprep.subr.mxu0 0.0
      %445 = vmatpush1.msra.mxu0 0.0
      %446 = vmatprep.subr.mxu0 0.0
      %447 = vmatpush1.msra.mxu0 0.0
      %448 = vmatprep.subr.mxu0 0.0
      %449 = vmatpush1.msra.mxu0 0.0
      %450 = vmatprep.subr.mxu0 0.0
      %451 = vmatpush1.msra.mxu0 0.0
      %452 = vmatprep.subr.mxu0 0.0
      %453 = vmatpush1.msra.mxu0 0.0
      %454 = vmatprep.subr.mxu0 0.0
      %455 = vmatpush1.msra.mxu0 0.0
      %456 = vmatprep.subr.mxu0 0.0
      %457 = vmatpush1.msra.mxu0 0.0
      %458 = vmatprep.subr.mxu0 0.0
      %459 = vmatpush1.msra.mxu0 0.0
      %460 = vmatprep.subr.mxu0 0.0
      %461 = vmatpush1.msra.mxu0 0.0
      %462 = vmatprep.subr.mxu0 0.0
      %463 = vmatpush1.msra.mxu0 0.0
      %464 = vmatprep.subr.mxu0 0.0
      %465 = vmatpush1.msra.mxu0 0.0
      %466 = vmatprep.subr.mxu0 0.0
      %467 = vmatpush1.msra.mxu0 0.0
      %468 = vmatprep.subr.mxu0 0.0
      %469 = vmatpush1.msra.mxu0 0.0
      %470 = vmatprep.subr.mxu0 0.0
      %471 = vmatpush1.msra.mxu0 0.0
      %472 = vmatprep.subr.mxu0 0.0
      %473 = vmatpush1.msra.mxu0 0.0
      %474 = vmatprep.mubr.f32.mxu0 0.0
      %475 = vmatmul.mubr.f32.gmra.mrb[0].mxu0 %v408
      %v476 = vpop.f32.mrb[0].mxu0
      %v477 = vadd.f32 0.0, %v476
      %v478 = vpop.f32.mrb[0].mxu0
      %479 = vdwg.mxu0
      %v480 = vrcp.pop 512.0
      %v481 = vmul.f32 %v477, %v480
      %v483 = vsel %vm356, %v406, 0
      %485 = vmatprep.subr.mxu0 0.0
      %486 = vmatpush1.msra.mxu0 %v352
      %487 = vmatprep.subr.mxu0 0.0
      %488 = vmatpush1.msra.mxu0 %v353
      %489 = vmatprep.subr.mxu0 0.0
      %490 = vmatpush1.msra.mxu0 %v354
      %491 = vmatprep.subr.mxu0 0.0
      %492 = vmatpush1.msra.mxu0 %v355
      %493 = vmatprep.subr.mxu0 0.0
      %494 = vmatpush1.msra.mxu0 0.0
      %495 = vmatprep.subr.mxu0 0.0
      %496 = vmatpush1.msra.mxu0 0.0
      %497 = vmatprep.subr.mxu0 0.0
      %498 = vmatpush1.msra.mxu0 0.0
      %499 = vmatprep.subr.mxu0 0.0
      %500 = vmatpush1.msra.mxu0 0.0
      %501 = vmatprep.subr.mxu0 0.0
      %502 = vmatpush1.msra.mxu0 0.0
      %503 = vmatprep.subr.mxu0 0.0
      %504 = vmatpush1.msra.mxu0 0.0
      %505 = vmatprep.subr.mxu0 0.0
      %506 = vmatpush1.msra.mxu0 0.0
      %507 = vmatprep.subr.mxu0 0.0
      %508 = vmatpush1.msra.mxu0 0.0
      %509 = vmatprep.subr.mxu0 0.0
      %510 = vmatpush1.msra.mxu0 0.0
      %511 = vmatprep.subr.mxu0 0.0
      %512 = vmatpush1.msra.mxu0 0.0
      %513 = vmatprep.subr.mxu0 0.0
      %514 = vmatpush1.msra.mxu0 0.0
      %515 = vmatprep.subr.mxu0 0.0
      %516 = vmatpush1.msra.mxu0 0.0
      %517 = vmatprep.subr.mxu0 0.0
      %518 = vmatpush1.msra.mxu0 0.0
      %519 = vmatprep.subr.mxu0 0.0
      %520 = vmatpush1.msra.mxu0 0.0
      %521 = vmatprep.subr.mxu0 0.0
      %522 = vmatpush1.msra.mxu0 0.0
      %523 = vmatprep.subr.mxu0 0.0
      %524 = vmatpush1.msra.mxu0 0.0
      %525 = vmatprep.subr.mxu0 0.0
      %526 = vmatpush1.msra.mxu0 0.0
      %527 = vmatprep.subr.mxu0 0.0
      %528 = vmatpush1.msra.mxu0 0.0
      %529 = vmatprep.subr.mxu0 0.0
      %530 = vmatpush1.msra.mxu0 0.0
      %531 = vmatprep.subr.mxu0 0.0
      %532 = vmatpush1.msra.mxu0 0.0
      %533 = vmatprep.subr.mxu0 0.0
      %534 = vmatpush1.msra.mxu0 0.0
      %535 = vmatprep.subr.mxu0 0.0
      %536 = vmatpush1.msra.mxu0 0.0
      %537 = vmatprep.subr.mxu0 0.0
      %538 = vmatpush1.msra.mxu0 0.0
      %539 = vmatprep.subr.mxu0 0.0
      %540 = vmatpush1.msra.mxu0 0.0
      %541 = vmatprep.subr.mxu0 0.0
      %542 = vmatpush1.msra.mxu0 0.0
      %543 = vmatprep.subr.mxu0 0.0
      %544 = vmatpush1.msra.mxu0 0.0
      %545 = vmatprep.subr.mxu0 0.0
      %546 = vmatpush1.msra.mxu0 0.0
      %547 = vmatprep.subr.mxu0 0.0
      %548 = vmatpush1.msra.mxu0 0.0
      %549 = vmatprep.mubr.f32.mxu0 0.0
      %550 = vmatmul.mubr.f32.gmra.mrb[0].mxu0 %v483
      %v551 = vpop.f32.mrb[0].mxu0
      %v552 = vadd.f32 0.0, %v551
      %v553 = vpop.f32.mrb[0].mxu0
      %554 = vdwg.mxu0
      %v555 = vmul.f32 %v552, %v480
      %v556 = vmul.f32 %v481, %v481
      %v557 = vsub.f32 %v555, %v556
      %v558 = vmax.f32 %v557, 0.0
      %v559 = vadd.f32 %v558, 1e-05
      %v560 = vrsqrt.pop %v559
      %v561 = vlaneseq
      %v562 = vshrl.u32 %v561, 7
      %v563 = vsub.s32 0, %v562
      %v564 = vrot.slane %v481, %v563
      %v565 = vsub.f32 %v342, %v564
      %v566 = vsub.f32 %v343, %v564
      %v567 = vsub.f32 %v344, %v564
      %v568 = vsub.f32 %v345, %v564
      %v569 = vsub.f32 %v346, %v564
      %v570 = vsub.f32 %v347, %v564
      %v571 = vsub.f32 %v348, %v564
      %v572 = vsub.f32 %v349, %v564
      %v573 = vlaneseq
      %v574 = vshrl.u32 %v573, 7
      %v575 = vsub.s32 0, %v574
      %v576 = vrot.slane %v560, %v575
      %v577 = vmul.f32 %v565, %v576
      %v578 = vmul.f32 %v566, %v576
      %v579 = vmul.f32 %v567, %v576
      %v580 = vmul.f32 %v568, %v576
      %v581 = vmul.f32 %v569, %v576
      %v582 = vmul.f32 %v570, %v576
      %v583 = vmul.f32 %v571, %v576
      %v584 = vmul.f32 %v572, %v576
      %v586 = vlaneseq
      %v587 = vshrl.u32 %v586, 7
      %v588 = vsub.s32 0, %v587
      %v589 = vrot.slane %v350, %v588
      %v591 = vmul.f32 %v577, %v589
      %v592 = vmul.f32 %v578, %v589
      %v593 = vmul.f32 %v579, %v589
      %v594 = vmul.f32 %v580, %v589
      %v595 = vmul.f32 %v581, %v589
      %v596 = vmul.f32 %v582, %v589
      %v597 = vmul.f32 %v583, %v589
      %v598 = vmul.f32 %v584, %v589
      %v600 = vlaneseq
      %v601 = vshrl.u32 %v600, 7
      %v602 = vsub.s32 0, %v601
      %v603 = vrot.slane %v351, %v602
      %v605 = vadd.f32 %v591, %v603
      %v606 = vadd.f32 %v592, %v603
      %v607 = vadd.f32 %v593, %v603
      %v608 = vadd.f32 %v594, %v603
      %v609 = vadd.f32 %v595, %v603
      %v610 = vadd.f32 %v596, %v603
      %v611 = vadd.f32 %v597, %v603
      %v612 = vadd.f32 %v598, %v603
      %v613 = vmax.f32 %v605, 0.0
      %v614 = vmax.f32 %v606, 0.0
      %v615 = vmax.f32 %v607, 0.0
      %v616 = vmax.f32 %v608, 0.0
      %v617 = vmax.f32 %v609, 0.0
      %v618 = vmax.f32 %v610, 0.0
      %v619 = vmax.f32 %v611, 0.0
      %v620 = vmax.f32 %v612, 0.0
      %621 = vst.msk [vmem:[#allocation2] sm:$0xff] %vm356, 0.0
      %622 = vst.msk [vmem:[#allocation2 + $0x8] sm:$0xff] %vm356, 0.0
      %623 = vst.msk [vmem:[#allocation2 + $0x10] sm:$0xff] %vm356, 0.0
      %624 = vst.msk [vmem:[#allocation2 + $0x18] sm:$0xff] %vm356, 0.0
      %625 = vst.msk [vmem:[#allocation2 + $0x20] sm:$0xff] %vm356, 0.0
      %626 = vst.msk [vmem:[#allocation2 + $0x28] sm:$0xff] %vm356, 0.0
      %627 = vst.msk [vmem:[#allocation2 + $0x30] sm:$0xff] %vm356, 0.0
      %628 = vst.msk [vmem:[#allocation2 + $0x38] sm:$0xff] %vm356, 0.0
      %629 = vst.msk [vmem:[#allocation2 + $0x40] sm:$0xff] %vm356, 0.0
      %630 = vst.msk [vmem:[#allocation2 + $0x48] sm:$0xff] %vm356, 0.0
      %631 = vst.msk [vmem:[#allocation2 + $0x50] sm:$0xff] %vm356, 0.0
      %632 = vst.msk [vmem:[#allocation2 + $0x58] sm:$0xff] %vm356, 0.0
      %633 = vst.msk [vmem:[#allocation2 + $0x60] sm:$0xff] %vm356, 0.0
      %634 = vst.msk [vmem:[#allocation2 + $0x68] sm:$0xff] %vm356, 0.0
      %635 = vst.msk [vmem:[#allocation2 + $0x70] sm:$0xff] %vm356, 0.0
      %636 = vst.msk [vmem:[#allocation2 + $0x78] sm:$0xff] %vm356, 0.0
      %637 = vst.msk [vmem:[#allocation2 + $0x80] sm:$0xff] %vm356, 0.0
      %638 = vst.msk [vmem:[#allocation2 + $0x88] sm:$0xff] %vm356, 0.0
      %639 = vst.msk [vmem:[#allocation2 + $0x90] sm:$0xff] %vm356, 0.0
      %640 = vst.msk [vmem:[#allocation2 + $0x98] sm:$0xff] %vm356, 0.0
      %641 = vst.msk [vmem:[#allocation2 + $0xa0] sm:$0xff] %vm356, 0.0
      %642 = vst.msk [vmem:[#allocation2 + $0xa8] sm:$0xff] %vm356, 0.0
      %643 = vst.msk [vmem:[#allocation2 + $0xb0] sm:$0xff] %vm356, 0.0
      %644 = vst.msk [vmem:[#allocation2 + $0xb8] sm:$0xff] %vm356, 0.0
      %645 = vst.msk [vmem:[#allocation2 + $0xc0] sm:$0xff] %vm356, 0.0
      %646 = vst.msk [vmem:[#allocation2 + $0xc8] sm:$0xff] %vm356, 0.0
      %647 = vst.msk [vmem:[#allocation2 + $0xd0] sm:$0xff] %vm356, 0.0
      %648 = vst.msk [vmem:[#allocation2 + $0xd8] sm:$0xff] %vm356, 0.0
      %649 = vst.msk [vmem:[#allocation2 + $0xe0] sm:$0xff] %vm356, 0.0
      %650 = vst.msk [vmem:[#allocation2 + $0xe8] sm:$0xff] %vm356, 0.0
      %s651 = scalar_lea.vmem [#allocation2], 24
      %652 = vst.msk [vmem:[%s651 + $0x8] sm:$0xff] %vm356, %v613
      %653 = vst.msk [vmem:[%s651 + $0x20] sm:$0xff] %vm356, %v614
      %654 = vst.msk [vmem:[%s651 + $0x38] sm:$0xff] %vm356, %v615
      %655 = vst.msk [vmem:[%s651 + $0x50] sm:$0xff] %vm356, %v616
      %656 = vst.msk [vmem:[%s651 + $0x68] sm:$0xff] %vm356, %v617
      %657 = vst.msk [vmem:[%s651 + $0x80] sm:$0xff] %vm356, %v618
      %658 = vst.msk [vmem:[%s651 + $0x98] sm:$0xff] %vm356, %v619
      %659 = vst.msk [vmem:[%s651 + $0xb0] sm:$0xff] %vm356, %v620
      %v660 = vld [vmem:[#allocation2 + $0x7] sm:$0xff]
      %v661 = vld [vmem:[#allocation2 + $0x1f] sm:$0xff]
      %v662 = vld [vmem:[#allocation2 + $0x37] sm:$0xff]
      %v663 = vld [vmem:[#allocation2 + $0x4f] sm:$0xff]
      %v664 = vld [vmem:[#allocation2 + $0x67] sm:$0xff]
      %v665 = vld [vmem:[#allocation2 + $0x7f] sm:$0xff]
      %v666 = vld [vmem:[#allocation2 + $0x97] sm:$0xff]
      %v667 = vld [vmem:[#allocation2 + $0xaf] sm:$0xff]
      %v668 = vpack.c.bf16 %v661, %v660
      %v669 = vpack.c.bf16 %v663, %v662
      %v670 = vpack.c.bf16 %v665, %v664
      %v671 = vpack.c.bf16 %v667, %v666
      %v672 = vld [vmem:[%s1] sm:$0xf]
      %v673 = vld [vmem:[%s1 + $0x4] sm:$0xf]
      %v674 = vld [vmem:[%s1 + $0x8] sm:$0xf]
      %v675 = vld [vmem:[%s1 + $0xc] sm:$0xf]
      %v676 = vld [vmem:[#allocation2 + $0x8] sm:$0xff]
      %v677 = vld [vmem:[#allocation2 + $0x20] sm:$0xff]
      %v678 = vld [vmem:[#allocation2 + $0x38] sm:$0xff]
      %v679 = vld [vmem:[#allocation2 + $0x50] sm:$0xff]
      %v680 = vld [vmem:[#allocation2 + $0x68] sm:$0xff]
      %v681 = vld [vmem:[#allocation2 + $0x80] sm:$0xff]
      %v682 = vld [vmem:[#allocation2 + $0x98] sm:$0xff]
      %v683 = vld [vmem:[#allocation2 + $0xb0] sm:$0xff]
      %v684 = vpack.c.bf16 %v677, %v676
      %v685 = vpack.c.bf16 %v679, %v678
      %v686 = vpack.c.bf16 %v681, %v680
      %v687 = vpack.c.bf16 %v683, %v682
      %s688 = scalar_lea.vmem %s1, 16
      %v689 = vld [vmem:[%s688] sm:$0xf]
      %v690 = vld [vmem:[%s688 + $0x4] sm:$0xf]
      %v691 = vld [vmem:[%s688 + $0x8] sm:$0xf]
      %v692 = vld [vmem:[%s688 + $0xc] sm:$0xf]
      %v697 = vunpack.c.l.b16 %v689
      %v698 = vunpack.c.l.b16 %v690
      %v699 = vunpack.c.l.b16 %v691
      %v700 = vunpack.c.l.b16 %v692
      %v701 = vpack.c.b16 %v698, %v697
      %v702 = vpack.c.b16 %v700, %v699
      %v706 = vsel %vm356, %v684, 0
      %v709 = vsel %vm356, %v685, 0
      %v712 = vsel %vm356, %v686, 0
      %v715 = vsel %vm356, %v687, 0
      %717 = vmatprep.subr.bf16.mxu0 0
      %718 = vmatpush1.bf16.msra.mxu0 %v701
      %719 = vmatprep.subr.bf16.mxu0 0
      %720 = vmatpush1.bf16.msra.mxu0 %v702
      %721 = vmatprep.subr.bf16.mxu0 0
      %722 = vmatpush1.bf16.msra.mxu0 0
      %723 = vmatprep.subr.bf16.mxu0 0
      %724 = vmatpush1.bf16.msra.mxu0 0
      %725 = vmatprep.subr.bf16.mxu0 0
      %726 = vmatpush1.bf16.msra.mxu0 0
      %727 = vmatprep.subr.bf16.mxu0 0
      %728 = vmatpush1.bf16.msra.mxu0 0
      %729 = vmatprep.subr.bf16.mxu0 0
      %730 = vmatpush1.bf16.msra.mxu0 0
      %731 = vmatprep.subr.bf16.mxu0 0
      %732 = vmatpush1.bf16.msra.mxu0 0
      %733 = vmatprep.subr.bf16.mxu0 0
      %734 = vmatpush1.bf16.msra.mxu0 0
      %735 = vmatprep.subr.bf16.mxu0 0
      %736 = vmatpush1.bf16.msra.mxu0 0
      %737 = vmatprep.subr.bf16.mxu0 0
      %738 = vmatpush1.bf16.msra.mxu0 0
      %739 = vmatprep.subr.bf16.mxu0 0
      %740 = vmatpush1.bf16.msra.mxu0 0
      %741 = vmatprep.subr.bf16.mxu0 0
      %742 = vmatpush1.bf16.msra.mxu0 0
      %743 = vmatprep.subr.bf16.mxu0 0
      %744 = vmatpush1.bf16.msra.mxu0 0
      %745 = vmatprep.subr.bf16.mxu0 0
      %746 = vmatpush1.bf16.msra.mxu0 0
      %747 = vmatprep.subr.bf16.mxu0 0
      %748 = vmatpush1.bf16.msra.mxu0 0
      %749 = vmatprep.mubr.bf16.mxu0 0
      %750 = vmatmul.mubr.bf16.gmra.mrb[0].mxu0 %v706
      %v751 = vpop.f32.mrb[0].mxu0
      %v752 = vadd.f32 0.0, %v751
      %v753 = vpop.f32.mrb[0].mxu0
      %v754 = vpop.f32.mrb[0].mxu0
      %v755 = vadd.f32 0.0, %v754
      %v756 = vpop.f32.mrb[0].mxu0
      %757 = vmatprep.mubr.bf16.mxu0 0
      %758 = vmatmul.mubr.bf16.gmra.mrb[0].mxu0 %v709
      %v759 = vpop.f32.mrb[0].mxu0
      %v760 = vadd.f32 0.0, %v759
      %v761 = vpop.f32.mrb[0].mxu0
      %v762 = vpop.f32.mrb[0].mxu0
      %v763 = vadd.f32 0.0, %v762
      %v764 = vpop.f32.mrb[0].mxu0
      %765 = vmatprep.mubr.bf16.mxu0 0
      %766 = vmatmul.mubr.bf16.gmra.mrb[0].mxu0 %v712
      %v767 = vpop.f32.mrb[0].mxu0
      %v768 = vadd.f32 0.0, %v767
      %v769 = vpop.f32.mrb[0].mxu0
      %v770 = vpop.f32.mrb[0].mxu0
      %v771 = vadd.f32 0.0, %v770
      %v772 = vpop.f32.mrb[0].mxu0
      %773 = vmatprep.mubr.bf16.mxu0 0
      %774 = vmatmul.mubr.bf16.gmra.mrb[0].mxu0 %v715
      %v775 = vpop.f32.mrb[0].mxu0
      %v776 = vadd.f32 0.0, %v775
      %v777 = vpop.f32.mrb[0].mxu0
      %v778 = vpop.f32.mrb[0].mxu0
      %v779 = vadd.f32 0.0, %v778
      %v780 = vpop.f32.mrb[0].mxu0
      %781 = vdwg.mxu0
      %v786 = vunpack.c.l.b16 %v672
      %v787 = vunpack.c.l.b16 %v673
      %v788 = vunpack.c.l.b16 %v674
      %v789 = vunpack.c.l.b16 %v675
      %v790 = vpack.c.b16 %v787, %v786
      %v791 = vpack.c.b16 %v789, %v788
      %v795 = vsel %vm356, %v668, 0
      %v798 = vsel %vm356, %v669, 0
      %v801 = vsel %vm356, %v670, 0
      %v804 = vsel %vm356, %v671, 0
      %806 = vmatprep.subr.bf16.mxu0 0
      %807 = vmatpush1.bf16.msra.mxu0 %v790
      %808 = vmatprep.subr.bf16.mxu0 0
      %809 = vmatpush1.bf16.msra.mxu0 %v791
      %810 = vmatprep.subr.bf16.mxu0 0
      %811 = vmatpush1.bf16.msra.mxu0 0
      %812 = vmatprep.subr.bf16.mxu0 0
      %813 = vmatpush1.bf16.msra.mxu0 0
      %814 = vmatprep.subr.bf16.mxu0 0
      %815 = vmatpush1.bf16.msra.mxu0 0
      %816 = vmatprep.subr.bf16.mxu0 0
      %817 = vmatpush1.bf16.msra.mxu0 0
      %818 = vmatprep.subr.bf16.mxu0 0
      %819 = vmatpush1.bf16.msra.mxu0 0
      %820 = vmatprep.subr.bf16.mxu0 0
      %821 = vmatpush1.bf16.msra.mxu0 0
      %822 = vmatprep.subr.bf16.mxu0 0
      %823 = vmatpush1.bf16.msra.mxu0 0
      %824 = vmatprep.subr.bf16.mxu0 0
      %825 = vmatpush1.bf16.msra.mxu0 0
      %826 = vmatprep.subr.bf16.mxu0 0
      %827 = vmatpush1.bf16.msra.mxu0 0
      %828 = vmatprep.subr.bf16.mxu0 0
      %829 = vmatpush1.bf16.msra.mxu0 0
      %830 = vmatprep.subr.bf16.mxu0 0
      %831 = vmatpush1.bf16.msra.mxu0 0
      %832 = vmatprep.subr.bf16.mxu0 0
      %833 = vmatpush1.bf16.msra.mxu0 0
      %834 = vmatprep.subr.bf16.mxu0 0
      %835 = vmatpush1.bf16.msra.mxu0 0
      %836 = vmatprep.subr.bf16.mxu0 0
      %837 = vmatpush1.bf16.msra.mxu0 0
      %838 = vmatprep.mubr.bf16.mxu0 0
      %839 = vmatmul.mubr.bf16.gmra.mrb[0].mxu0 %v795
      %v840 = vpop.f32.mrb[0].mxu0
      %v841 = vadd.f32 %v752, %v840
      %v842 = vpop.f32.mrb[0].mxu0
      %v843 = vpop.f32.mrb[0].mxu0
      %v844 = vadd.f32 %v755, %v843
      %v845 = vpop.f32.mrb[0].mxu0
      %846 = vmatprep.mubr.bf16.mxu0 0
      %847 = vmatmul.mubr.bf16.gmra.mrb[0].mxu0 %v798
      %v848 = vpop.f32.mrb[0].mxu0
      %v849 = vadd.f32 %v760, %v848
      %v850 = vpop.f32.mrb[0].mxu0
      %v851 = vpop.f32.mrb[0].mxu0
      %v852 = vadd.f32 %v763, %v851
      %v853 = vpop.f32.mrb[0].mxu0
      %854 = vmatprep.mubr.bf16.mxu0 0
      %855 = vmatmul.mubr.bf16.gmra.mrb[0].mxu0 %v801
      %v856 = vpop.f32.mrb[0].mxu0
      %v857 = vadd.f32 %v768, %v856
      %v858 = vpop.f32.mrb[0].mxu0
      %v859 = vpop.f32.mrb[0].mxu0
      %v860 = vadd.f32 %v771, %v859
      %v861 = vpop.f32.mrb[0].mxu0
      %862 = vmatprep.mubr.bf16.mxu0 0
      %863 = vmatmul.mubr.bf16.gmra.mrb[0].mxu0 %v804
      %v864 = vpop.f32.mrb[0].mxu0
      %v865 = vadd.f32 %v776, %v864
      %v866 = vpop.f32.mrb[0].mxu0
      %v867 = vpop.f32.mrb[0].mxu0
      %v868 = vadd.f32 %v779, %v867
      %v869 = vpop.f32.mrb[0].mxu0
      %870 = vdwg.mxu0
      %v871 = vld [vmem:[#allocation2 + $0x9] sm:$0xff]
      %v872 = vld [vmem:[#allocation2 + $0x21] sm:$0xff]
      %v873 = vld [vmem:[#allocation2 + $0x39] sm:$0xff]
      %v874 = vld [vmem:[#allocation2 + $0x51] sm:$0xff]
      %v875 = vld [vmem:[#allocation2 + $0x69] sm:$0xff]
      %v876 = vld [vmem:[#allocation2 + $0x81] sm:$0xff]
      %v877 = vld [vmem:[#allocation2 + $0x99] sm:$0xff]
      %v878 = vld [vmem:[#allocation2 + $0xb1] sm:$0xff]
      %v879 = vpack.c.bf16 %v872, %v871
      %v880 = vpack.c.bf16 %v874, %v873
      %v881 = vpack.c.bf16 %v876, %v875
      %v882 = vpack.c.bf16 %v878, %v877
      %s883 = scalar_lea.vmem %s1, 32
      %v884 = vld [vmem:[%s883] sm:$0xf]
      %v885 = vld [vmem:[%s883 + $0x4] sm:$0xf]
      %v886 = vld [vmem:[%s883 + $0x8] sm:$0xf]
      %v887 = vld [vmem:[%s883 + $0xc] sm:$0xf]
      %v892 = vunpack.c.l.b16 %v884
      %v893 = vunpack.c.l.b16 %v885
      %v894 = vunpack.c.l.b16 %v886
      %v895 = vunpack.c.l.b16 %v887
      %v896 = vpack.c.b16 %v893, %v892
      %v897 = vpack.c.b16 %v895, %v894
      %v901 = vsel %vm356, %v879, 0
      %v904 = vsel %vm356, %v880, 0
      %v907 = vsel %vm356, %v881, 0
      %v910 = vsel %vm356, %v882, 0
      %912 = vmatprep.subr.bf16.mxu0 0
      %913 = vmatpush1.bf16.msra.mxu0 %v896
      %914 = vmatprep.subr.bf16.mxu0 0
      %915 = vmatpush1.bf16.msra.mxu0 %v897
      %916 = vmatprep.subr.bf16.mxu0 0
      %917 = vmatpush1.bf16.msra.mxu0 0
      %918 = vmatprep.subr.bf16.mxu0 0
      %919 = vmatpush1.bf16.msra.mxu0 0
      %920 = vmatprep.subr.bf16.mxu0 0
      %921 = vmatpush1.bf16.msra.mxu0 0
      %922 = vmatprep.subr.bf16.mxu0 0
      %923 = vmatpush1.bf16.msra.mxu0 0
      %924 = vmatprep.subr.bf16.mxu0 0
      %925 = vmatpush1.bf16.msra.mxu0 0
      %926 = vmatprep.subr.bf16.mxu0 0
      %927 = vmatpush1.bf16.msra.mxu0 0
      %928 = vmatprep.subr.bf16.mxu0 0
      %929 = vmatpush1.bf16.msra.mxu0 0
      %930 = vmatprep.subr.bf16.mxu0 0
      %931 = vmatpush1.bf16.msra.mxu0 0
      %932 = vmatprep.subr.bf16.mxu0 0
      %933 = vmatpush1.bf16.msra.mxu0 0
      %934 = vmatprep.subr.bf16.mxu0 0
      %935 = vmatpush1.bf16.msra.mxu0 0
      %936 = vmatprep.subr.bf16.mxu0 0
      %937 = vmatpush1.bf16.msra.mxu0 0
      %938 = vmatprep.subr.bf16.mxu0 0
      %939 = vmatpush1.bf16.msra.mxu0 0
      %940 = vmatprep.subr.bf16.mxu0 0
      %941 = vmatpush1.bf16.msra.mxu0 0
      %942 = vmatprep.subr.bf16.mxu0 0
      %943 = vmatpush1.bf16.msra.mxu0 0
      %944 = vmatprep.mubr.bf16.mxu0 0
      %945 = vmatmul.mubr.bf16.gmra.mrb[0].mxu0 %v901
      %v946 = vpop.f32.mrb[0].mxu0
      %v947 = vadd.f32 0.0, %v946
      %v948 = vpop.f32.mrb[0].mxu0
      %v949 = vpop.f32.mrb[0].mxu0
      %v950 = vadd.f32 0.0, %v949
      %v951 = vpop.f32.mrb[0].mxu0
      %952 = vmatprep.mubr.bf16.mxu0 0
      %953 = vmatmul.mubr.bf16.gmra.mrb[0].mxu0 %v904
      %v954 = vpop.f32.mrb[0].mxu0
      %v955 = vadd.f32 0.0, %v954
      %v956 = vpop.f32.mrb[0].mxu0
      %v957 = vpop.f32.mrb[0].mxu0
      %v958 = vadd.f32 0.0, %v957
      %v959 = vpop.f32.mrb[0].mxu0
      %960 = vmatprep.mubr.bf16.mxu0 0
      %961 = vmatmul.mubr.bf16.gmra.mrb[0].mxu0 %v907
      %v962 = vpop.f32.mrb[0].mxu0
      %v963 = vadd.f32 0.0, %v962
      %v964 = vpop.f32.mrb[0].mxu0
      %v965 = vpop.f32.mrb[0].mxu0
      %v966 = vadd.f32 0.0, %v965
      %v967 = vpop.f32.mrb[0].mxu0
      %968 = vmatprep.mubr.bf16.mxu0 0
      %969 = vmatmul.mubr.bf16.gmra.mrb[0].mxu0 %v910
      %v970 = vpop.f32.mrb[0].mxu0
      %v971 = vadd.f32 0.0, %v970
      %v972 = vpop.f32.mrb[0].mxu0
      %v973 = vpop.f32.mrb[0].mxu0
      %v974 = vadd.f32 0.0, %v973
      %v975 = vpop.f32.mrb[0].mxu0
      %976 = vdwg.mxu0
      %v977 = vadd.f32 %v841, %v947
      %v978 = vadd.f32 %v844, %v950
      %v979 = vadd.f32 %v849, %v955
      %v980 = vadd.f32 %v852, %v958
      %v981 = vadd.f32 %v857, %v963
      %v982 = vadd.f32 %v860, %v966
      %v983 = vadd.f32 %v865, %v971
      %v984 = vadd.f32 %v868, %v974
      %v985 = vld [vmem:[%s651 + $0x7] sm:$0xff]
      %v986 = vld [vmem:[%s651 + $0x1f] sm:$0xff]
      %v987 = vld [vmem:[%s651 + $0x37] sm:$0xff]
      %v988 = vld [vmem:[%s651 + $0x4f] sm:$0xff]
      %v989 = vld [vmem:[%s651 + $0x67] sm:$0xff]
      %v990 = vld [vmem:[%s651 + $0x7f] sm:$0xff]
      %v991 = vld [vmem:[%s651 + $0x97] sm:$0xff]
      %v992 = vld [vmem:[%s651 + $0xaf] sm:$0xff]
      %v993 = vpack.c.bf16 %v986, %v985
      %v994 = vpack.c.bf16 %v988, %v987
      %v995 = vpack.c.bf16 %v990, %v989
      %v996 = vpack.c.bf16 %v992, %v991
      %s997 = scalar_lea.vmem %s1, 48
      %v998 = vld [vmem:[%s997] sm:$0xf]
      %v999 = vld [vmem:[%s997 + $0x4] sm:$0xf]
      %v1000 = vld [vmem:[%s997 + $0x8] sm:$0xf]
      %v1001 = vld [vmem:[%s997 + $0xc] sm:$0xf]
      %v1006 = vunpack.c.l.b16 %v998
      %v1007 = vunpack.c.l.b16 %v999
      %v1008 = vunpack.c.l.b16 %v1000
      %v1009 = vunpack.c.l.b16 %v1001
      %v1010 = vpack.c.b16 %v1007, %v1006
      %v1011 = vpack.c.b16 %v1009, %v1008
      %v1015 = vsel %vm356, %v993, 0
      %v1018 = vsel %vm356, %v994, 0
      %v1021 = vsel %vm356, %v995, 0
      %v1024 = vsel %vm356, %v996, 0
      %1026 = vmatprep.subr.bf16.mxu0 0
      %1027 = vmatpush1.bf16.msra.mxu0 %v1010
      %1028 = vmatprep.subr.bf16.mxu0 0
      %1029 = vmatpush1.bf16.msra.mxu0 %v1011
      %1030 = vmatprep.subr.bf16.mxu0 0
      %1031 = vmatpush1.bf16.msra.mxu0 0
      %1032 = vmatprep.subr.bf16.mxu0 0
      %1033 = vmatpush1.bf16.msra.mxu0 0
      %1034 = vmatprep.subr.bf16.mxu0 0
      %1035 = vmatpush1.bf16.msra.mxu0 0
      %1036 = vmatprep.subr.bf16.mxu0 0
      %1037 = vmatpush1.bf16.msra.mxu0 0
      %1038 = vmatprep.subr.bf16.mxu0 0
      %1039 = vmatpush1.bf16.msra.mxu0 0
      %1040 = vmatprep.subr.bf16.mxu0 0
      %1041 = vmatpush1.bf16.msra.mxu0 0
      %1042 = vmatprep.subr.bf16.mxu0 0
      %1043 = vmatpush1.bf16.msra.mxu0 0
      %1044 = vmatprep.subr.bf16.mxu0 0
      %1045 = vmatpush1.bf16.msra.mxu0 0
      %1046 = vmatprep.subr.bf16.mxu0 0
      %1047 = vmatpush1.bf16.msra.mxu0 0
      %1048 = vmatprep.subr.bf16.mxu0 0
      %1049 = vmatpush1.bf16.msra.mxu0 0
      %1050 = vmatprep.subr.bf16.mxu0 0
      %1051 = vmatpush1.bf16.msra.mxu0 0
      %1052 = vmatprep.subr.bf16.mxu0 0
      %1053 = vmatpush1.bf16.msra.mxu0 0
      %1054 = vmatprep.subr.bf16.mxu0 0
      %1055 = vmatpush1.bf16.msra.mxu0 0
      %1056 = vmatprep.subr.bf16.mxu0 0
      %1057 = vmatpush1.bf16.msra.mxu0 0
      %1058 = vmatprep.mubr.bf16.mxu0 0
      %1059 = vmatmul.mubr.bf16.gmra.mrb[0].mxu0 %v1015
      %v1060 = vpop.f32.mrb[0].mxu0
      %v1061 = vadd.f32 0.0, %v1060
      %v1062 = vpop.f32.mrb[0].mxu0
      %v1063 = vpop.f32.mrb[0].mxu0
      %v1064 = vadd.f32 0.0, %v1063
      %v1065 = vpop.f32.mrb[0].mxu0
      %1066 = vmatprep.mubr.bf16.mxu0 0
      %1067 = vmatmul.mubr.bf16.gmra.mrb[0].mxu0 %v1018
      %v1068 = vpop.f32.mrb[0].mxu0
      %v1069 = vadd.f32 0.0, %v1068
      %v1070 = vpop.f32.mrb[0].mxu0
      %v1071 = vpop.f32.mrb[0].mxu0
      %v1072 = vadd.f32 0.0, %v1071
      %v1073 = vpop.f32.mrb[0].mxu0
      %1074 = vmatprep.mubr.bf16.mxu0 0
      %1075 = vmatmul.mubr.bf16.gmra.mrb[0].mxu0 %v1021
      %v1076 = vpop.f32.mrb[0].mxu0
      %v1077 = vadd.f32 0.0, %v1076
      %v1078 = vpop.f32.mrb[0].mxu0
      %v1079 = vpop.f32.mrb[0].mxu0
      %v1080 = vadd.f32 0.0, %v1079
      %v1081 = vpop.f32.mrb[0].mxu0
      %1082 = vmatprep.mubr.bf16.mxu0 0
      %1083 = vmatmul.mubr.bf16.gmra.mrb[0].mxu0 %v1024
      %v1084 = vpop.f32.mrb[0].mxu0
      %v1085 = vadd.f32 0.0, %v1084
      %v1086 = vpop.f32.mrb[0].mxu0
      %v1087 = vpop.f32.mrb[0].mxu0
      %v1088 = vadd.f32 0.0, %v1087
      %v1089 = vpop.f32.mrb[0].mxu0
      %1090 = vdwg.mxu0
      %v1091 = vadd.f32 %v977, %v1061
      %v1092 = vadd.f32 %v978, %v1064
      %v1093 = vadd.f32 %v979, %v1069
      %v1094 = vadd.f32 %v980, %v1072
      %v1095 = vadd.f32 %v981, %v1077
      %v1096 = vadd.f32 %v982, %v1080
      %v1097 = vadd.f32 %v983, %v1085
      %v1098 = vadd.f32 %v984, %v1088
      %v1099 = vld [vmem:[%s651 + $0x8] sm:$0xff]
      %v1100 = vld [vmem:[%s651 + $0x20] sm:$0xff]
      %v1101 = vld [vmem:[%s651 + $0x38] sm:$0xff]
      %v1102 = vld [vmem:[%s651 + $0x50] sm:$0xff]
      %v1103 = vld [vmem:[%s651 + $0x68] sm:$0xff]
      %v1104 = vld [vmem:[%s651 + $0x80] sm:$0xff]
      %v1105 = vld [vmem:[%s651 + $0x98] sm:$0xff]
      %v1106 = vld [vmem:[%s651 + $0xb0] sm:$0xff]
      %v1107 = vpack.c.bf16 %v1100, %v1099
      %v1108 = vpack.c.bf16 %v1102, %v1101
      %v1109 = vpack.c.bf16 %v1104, %v1103
      %v1110 = vpack.c.bf16 %v1106, %v1105
      %s1111 = scalar_lea.vmem %s1, 64
      %v1112 = vld [vmem:[%s1111] sm:$0xf]
      %v1113 = vld [vmem:[%s1111 + $0x4] sm:$0xf]
      %v1114 = vld [vmem:[%s1111 + $0x8] sm:$0xf]
      %v1115 = vld [vmem:[%s1111 + $0xc] sm:$0xf]
      %v1120 = vunpack.c.l.b16 %v1112
      %v1121 = vunpack.c.l.b16 %v1113
      %v1122 = vunpack.c.l.b16 %v1114
      %v1123 = vunpack.c.l.b16 %v1115
      %v1124 = vpack.c.b16 %v1121, %v1120
      %v1125 = vpack.c.b16 %v1123, %v1122
      %v1129 = vsel %vm356, %v1107, 0
      %v1132 = vsel %vm356, %v1108, 0
      %v1135 = vsel %vm356, %v1109, 0
      %v1138 = vsel %vm356, %v1110, 0
      %1140 = vmatprep.subr.bf16.mxu0 0
      %1141 = vmatpush1.bf16.msra.mxu0 %v1124
      %1142 = vmatprep.subr.bf16.mxu0 0
      %1143 = vmatpush1.bf16.msra.mxu0 %v1125
      %1144 = vmatprep.subr.bf16.mxu0 0
      %1145 = vmatpush1.bf16.msra.mxu0 0
      %1146 = vmatprep.subr.bf16.mxu0 0
      %1147 = vmatpush1.bf16.msra.mxu0 0
      %1148 = vmatprep.subr.bf16.mxu0 0
      %1149 = vmatpush1.bf16.msra.mxu0 0
      %1150 = vmatprep.subr.bf16.mxu0 0
      %1151 = vmatpush1.bf16.msra.mxu0 0
      %1152 = vmatprep.subr.bf16.mxu0 0
      %1153 = vmatpush1.bf16.msra.mxu0 0
      %1154 = vmatprep.subr.bf16.mxu0 0
      %1155 = vmatpush1.bf16.msra.mxu0 0
      %1156 = vmatprep.subr.bf16.mxu0 0
      %1157 = vmatpush1.bf16.msra.mxu0 0
      %1158 = vmatprep.subr.bf16.mxu0 0
      %1159 = vmatpush1.bf16.msra.mxu0 0
      %1160 = vmatprep.subr.bf16.mxu0 0
      %1161 = vmatpush1.bf16.msra.mxu0 0
      %1162 = vmatprep.subr.bf16.mxu0 0
      %1163 = vmatpush1.bf16.msra.mxu0 0
      %1164 = vmatprep.subr.bf16.mxu0 0
      %1165 = vmatpush1.bf16.msra.mxu0 0
      %1166 = vmatprep.subr.bf16.mxu0 0
      %1167 = vmatpush1.bf16.msra.mxu0 0
      %1168 = vmatprep.subr.bf16.mxu0 0
      %1169 = vmatpush1.bf16.msra.mxu0 0
      %1170 = vmatprep.subr.bf16.mxu0 0
      %1171 = vmatpush1.bf16.msra.mxu0 0
      %1172 = vmatprep.mubr.bf16.mxu0 0
      %1173 = vmatmul.mubr.bf16.gmra.mrb[0].mxu0 %v1129
      %v1174 = vpop.f32.mrb[0].mxu0
      %v1175 = vadd.f32 0.0, %v1174
      %v1176 = vpop.f32.mrb[0].mxu0
      %v1177 = vpop.f32.mrb[0].mxu0
      %v1178 = vadd.f32 0.0, %v1177
      %v1179 = vpop.f32.mrb[0].mxu0
      %1180 = vmatprep.mubr.bf16.mxu0 0
      %1181 = vmatmul.mubr.bf16.gmra.mrb[0].mxu0 %v1132
      %v1182 = vpop.f32.mrb[0].mxu0
      %v1183 = vadd.f32 0.0, %v1182
      %v1184 = vpop.f32.mrb[0].mxu0
      %v1185 = vpop.f32.mrb[0].mxu0
      %v1186 = vadd.f32 0.0, %v1185
      %v1187 = vpop.f32.mrb[0].mxu0
      %1188 = vmatprep.mubr.bf16.mxu0 0
      %1189 = vmatmul.mubr.bf16.gmra.mrb[0].mxu0 %v1135
      %v1190 = vpop.f32.mrb[0].mxu0
      %v1191 = vadd.f32 0.0, %v1190
      %v1192 = vpop.f32.mrb[0].mxu0
      %v1193 = vpop.f32.mrb[0].mxu0
      %v1194 = vadd.f32 0.0, %v1193
      %v1195 = vpop.f32.mrb[0].mxu0
      %1196 = vmatprep.mubr.bf16.mxu0 0
      %1197 = vmatmul.mubr.bf16.gmra.mrb[0].mxu0 %v1138
      %v1198 = vpop.f32.mrb[0].mxu0
      %v1199 = vadd.f32 0.0, %v1198
      %v1200 = vpop.f32.mrb[0].mxu0
      %v1201 = vpop.f32.mrb[0].mxu0
      %v1202 = vadd.f32 0.0, %v1201
      %v1203 = vpop.f32.mrb[0].mxu0
      %1204 = vdwg.mxu0
      %v1205 = vadd.f32 %v1091, %v1175
      %v1206 = vadd.f32 %v1092, %v1178
      %v1207 = vadd.f32 %v1093, %v1183
      %v1208 = vadd.f32 %v1094, %v1186
      %v1209 = vadd.f32 %v1095, %v1191
      %v1210 = vadd.f32 %v1096, %v1194
      %v1211 = vadd.f32 %v1097, %v1199
      %v1212 = vadd.f32 %v1098, %v1202
      %v1213 = vld [vmem:[%s651 + $0x9] sm:$0xff]
      %v1214 = vld [vmem:[%s651 + $0x21] sm:$0xff]
      %v1215 = vld [vmem:[%s651 + $0x39] sm:$0xff]
      %v1216 = vld [vmem:[%s651 + $0x51] sm:$0xff]
      %v1217 = vld [vmem:[%s651 + $0x69] sm:$0xff]
      %v1218 = vld [vmem:[%s651 + $0x81] sm:$0xff]
      %v1219 = vld [vmem:[%s651 + $0x99] sm:$0xff]
      %v1220 = vld [vmem:[%s651 + $0xb1] sm:$0xff]
      %v1221 = vpack.c.bf16 %v1214, %v1213
      %v1222 = vpack.c.bf16 %v1216, %v1215
      %v1223 = vpack.c.bf16 %v1218, %v1217
      %v1224 = vpack.c.bf16 %v1220, %v1219
      %s1225 = scalar_lea.vmem %s1, 80
      %v1226 = vld [vmem:[%s1225] sm:$0xf]
      %v1227 = vld [vmem:[%s1225 + $0x4] sm:$0xf]
      %v1228 = vld [vmem:[%s1225 + $0x8] sm:$0xf]
      %v1229 = vld [vmem:[%s1225 + $0xc] sm:$0xf]
      %v1234 = vunpack.c.l.b16 %v1226
      %v1235 = vunpack.c.l.b16 %v1227
      %v1236 = vunpack.c.l.b16 %v1228
      %v1237 = vunpack.c.l.b16 %v1229
      %v1238 = vpack.c.b16 %v1235, %v1234
      %v1239 = vpack.c.b16 %v1237, %v1236
      %v1243 = vsel %vm356, %v1221, 0
      %v1246 = vsel %vm356, %v1222, 0
      %v1249 = vsel %vm356, %v1223, 0
      %v1252 = vsel %vm356, %v1224, 0
      %1254 = vmatprep.subr.bf16.mxu0 0
      %1255 = vmatpush1.bf16.msra.mxu0 %v1238
      %1256 = vmatprep.subr.bf16.mxu0 0
      %1257 = vmatpush1.bf16.msra.mxu0 %v1239
      %1258 = vmatprep.subr.bf16.mxu0 0
      %1259 = vmatpush1.bf16.msra.mxu0 0
      %1260 = vmatprep.subr.bf16.mxu0 0
      %1261 = vmatpush1.bf16.msra.mxu0 0
      %1262 = vmatprep.subr.bf16.mxu0 0
      %1263 = vmatpush1.bf16.msra.mxu0 0
      %1264 = vmatprep.subr.bf16.mxu0 0
      %1265 = vmatpush1.bf16.msra.mxu0 0
      %1266 = vmatprep.subr.bf16.mxu0 0
      %1267 = vmatpush1.bf16.msra.mxu0 0
      %1268 = vmatprep.subr.bf16.mxu0 0
      %1269 = vmatpush1.bf16.msra.mxu0 0
      %1270 = vmatprep.subr.bf16.mxu0 0
      %1271 = vmatpush1.bf16.msra.mxu0 0
      %1272 = vmatprep.subr.bf16.mxu0 0
      %1273 = vmatpush1.bf16.msra.mxu0 0
      %1274 = vmatprep.subr.bf16.mxu0 0
      %1275 = vmatpush1.bf16.msra.mxu0 0
      %1276 = vmatprep.subr.bf16.mxu0 0
      %1277 = vmatpush1.bf16.msra.mxu0 0
      %1278 = vmatprep.subr.bf16.mxu0 0
      %1279 = vmatpush1.bf16.msra.mxu0 0
      %1280 = vmatprep.subr.bf16.mxu0 0
      %1281 = vmatpush1.bf16.msra.mxu0 0
      %1282 = vmatprep.subr.bf16.mxu0 0
      %1283 = vmatpush1.bf16.msra.mxu0 0
      %1284 = vmatprep.subr.bf16.mxu0 0
      %1285 = vmatpush1.bf16.msra.mxu0 0
      %1286 = vmatprep.mubr.bf16.mxu0 0
      %1287 = vmatmul.mubr.bf16.gmra.mrb[0].mxu0 %v1243
      %v1288 = vpop.f32.mrb[0].mxu0
      %v1289 = vadd.f32 0.0, %v1288
      %v1290 = vpop.f32.mrb[0].mxu0
      %v1291 = vpop.f32.mrb[0].mxu0
      %v1292 = vadd.f32 0.0, %v1291
      %v1293 = vpop.f32.mrb[0].mxu0
      %1294 = vmatprep.mubr.bf16.mxu0 0
      %1295 = vmatmul.mubr.bf16.gmra.mrb[0].mxu0 %v1246
      %v1296 = vpop.f32.mrb[0].mxu0
      %v1297 = vadd.f32 0.0, %v1296
      %v1298 = vpop.f32.mrb[0].mxu0
      %v1299 = vpop.f32.mrb[0].mxu0
      %v1300 = vadd.f32 0.0, %v1299
      %v1301 = vpop.f32.mrb[0].mxu0
      %1302 = vmatprep.mubr.bf16.mxu0 0
      %1303 = vmatmul.mubr.bf16.gmra.mrb[0].mxu0 %v1249
      %v1304 = vpop.f32.mrb[0].mxu0
      %v1305 = vadd.f32 0.0, %v1304
      %v1306 = vpop.f32.mrb[0].mxu0
      %v1307 = vpop.f32.mrb[0].mxu0
      %v1308 = vadd.f32 0.0, %v1307
      %v1309 = vpop.f32.mrb[0].mxu0
      %1310 = vmatprep.mubr.bf16.mxu0 0
      %1311 = vmatmul.mubr.bf16.gmra.mrb[0].mxu0 %v1252
      %v1312 = vpop.f32.mrb[0].mxu0
      %v1313 = vadd.f32 0.0, %v1312
      %v1314 = vpop.f32.mrb[0].mxu0
      %v1315 = vpop.f32.mrb[0].mxu0
      %v1316 = vadd.f32 0.0, %v1315
      %v1317 = vpop.f32.mrb[0].mxu0
      %1318 = vdwg.mxu0
      %v1319 = vadd.f32 %v1205, %v1289
      %v1320 = vadd.f32 %v1206, %v1292
      %v1321 = vadd.f32 %v1207, %v1297
      %v1322 = vadd.f32 %v1208, %v1300
      %v1323 = vadd.f32 %v1209, %v1305
      %v1324 = vadd.f32 %v1210, %v1308
      %v1325 = vadd.f32 %v1211, %v1313
      %v1326 = vadd.f32 %v1212, %v1316
      %s1327 = scalar_lea.vmem [#allocation2], 48
      %v1328 = vld [vmem:[%s1327 + $0x7] sm:$0xff]
      %v1329 = vld [vmem:[%s1327 + $0x1f] sm:$0xff]
      %v1330 = vld [vmem:[%s1327 + $0x37] sm:$0xff]
      %v1331 = vld [vmem:[%s1327 + $0x4f] sm:$0xff]
      %v1332 = vld [vmem:[%s1327 + $0x67] sm:$0xff]
      %v1333 = vld [vmem:[%s1327 + $0x7f] sm:$0xff]
      %v1334 = vld [vmem:[%s1327 + $0x97] sm:$0xff]
      %v1335 = vld [vmem:[%s1327 + $0xaf] sm:$0xff]
      %v1336 = vpack.c.bf16 %v1329, %v1328
      %v1337 = vpack.c.bf16 %v1331, %v1330
      %v1338 = vpack.c.bf16 %v1333, %v1332
      %v1339 = vpack.c.bf16 %v1335, %v1334
      %s1340 = scalar_lea.vmem %s1, 96
      %v1341 = vld [vmem:[%s1340] sm:$0xf]
      %v1342 = vld [vmem:[%s1340 + $0x4] sm:$0xf]
      %v1343 = vld [vmem:[%s1340 + $0x8] sm:$0xf]
      %v1344 = vld [vmem:[%s1340 + $0xc] sm:$0xf]
      %v1349 = vunpack.c.l.b16 %v1341
      %v1350 = vunpack.c.l.b16 %v1342
      %v1351 = vunpack.c.l.b16 %v1343
      %v1352 = vunpack.c.l.b16 %v1344
      %v1353 = vpack.c.b16 %v1350, %v1349
      %v1354 = vpack.c.b16 %v1352, %v1351
      %v1358 = vsel %vm356, %v1336, 0
      %v1361 = vsel %vm356, %v1337, 0
      %v1364 = vsel %vm356, %v1338, 0
      %v1367 = vsel %vm356, %v1339, 0
      %1369 = vmatprep.subr.bf16.mxu0 0
      %1370 = vmatpush1.bf16.msra.mxu0 %v1353
      %1371 = vmatprep.subr.bf16.mxu0 0
      %1372 = vmatpush1.bf16.msra.mxu0 %v1354
      %1373 = vmatprep.subr.bf16.mxu0 0
      %1374 = vmatpush1.bf16.msra.mxu0 0
      %1375 = vmatprep.subr.bf16.mxu0 0
      %1376 = vmatpush1.bf16.msra.mxu0 0
      %1377 = vmatprep.subr.bf16.mxu0 0
      %1378 = vmatpush1.bf16.msra.mxu0 0
      %1379 = vmatprep.subr.bf16.mxu0 0
      %1380 = vmatpush1.bf16.msra.mxu0 0
      %1381 = vmatprep.subr.bf16.mxu0 0
      %1382 = vmatpush1.bf16.msra.mxu0 0
      %1383 = vmatprep.subr.bf16.mxu0 0
      %1384 = vmatpush1.bf16.msra.mxu0 0
      %1385 = vmatprep.subr.bf16.mxu0 0
      %1386 = vmatpush1.bf16.msra.mxu0 0
      %1387 = vmatprep.subr.bf16.mxu0 0
      %1388 = vmatpush1.bf16.msra.mxu0 0
      %1389 = vmatprep.subr.bf16.mxu0 0
      %1390 = vmatpush1.bf16.msra.mxu0 0
      %1391 = vmatprep.subr.bf16.mxu0 0
      %1392 = vmatpush1.bf16.msra.mxu0 0
      %1393 = vmatprep.subr.bf16.mxu0 0
      %1394 = vmatpush1.bf16.msra.mxu0 0
      %1395 = vmatprep.subr.bf16.mxu0 0
      %1396 = vmatpush1.bf16.msra.mxu0 0
      %1397 = vmatprep.subr.bf16.mxu0 0
      %1398 = vmatpush1.bf16.msra.mxu0 0
      %1399 = vmatprep.subr.bf16.mxu0 0
      %1400 = vmatpush1.bf16.msra.mxu0 0
      %1401 = vmatprep.mubr.bf16.mxu0 0
      %1402 = vmatmul.mubr.bf16.gmra.mrb[0].mxu0 %v1358
      %v1403 = vpop.f32.mrb[0].mxu0
      %v1404 = vadd.f32 0.0, %v1403
      %v1405 = vpop.f32.mrb[0].mxu0
      %v1406 = vpop.f32.mrb[0].mxu0
      %v1407 = vadd.f32 0.0, %v1406
      %v1408 = vpop.f32.mrb[0].mxu0
      %1409 = vmatprep.mubr.bf16.mxu0 0
      %1410 = vmatmul.mubr.bf16.gmra.mrb[0].mxu0 %v1361
      %v1411 = vpop.f32.mrb[0].mxu0
      %v1412 = vadd.f32 0.0, %v1411
      %v1413 = vpop.f32.mrb[0].mxu0
      %v1414 = vpop.f32.mrb[0].mxu0
      %v1415 = vadd.f32 0.0, %v1414
      %v1416 = vpop.f32.mrb[0].mxu0
      %1417 = vmatprep.mubr.bf16.mxu0 0
      %1418 = vmatmul.mubr.bf16.gmra.mrb[0].mxu0 %v1364
      %v1419 = vpop.f32.mrb[0].mxu0
      %v1420 = vadd.f32 0.0, %v1419
      %v1421 = vpop.f32.mrb[0].mxu0
      %v1422 = vpop.f32.mrb[0].mxu0
      %v1423 = vadd.f32 0.0, %v1422
      %v1424 = vpop.f32.mrb[0].mxu0
      %1425 = vmatprep.mubr.bf16.mxu0 0
      %1426 = vmatmul.mubr.bf16.gmra.mrb[0].mxu0 %v1367
      %v1427 = vpop.f32.mrb[0].mxu0
      %v1428 = vadd.f32 0.0, %v1427
      %v1429 = vpop.f32.mrb[0].mxu0
      %v1430 = vpop.f32.mrb[0].mxu0
      %v1431 = vadd.f32 0.0, %v1430
      %v1432 = vpop.f32.mrb[0].mxu0
      %1433 = vdwg.mxu0
      %v1434 = vadd.f32 %v1319, %v1404
      %v1435 = vadd.f32 %v1320, %v1407
      %v1436 = vadd.f32 %v1321, %v1412
      %v1437 = vadd.f32 %v1322, %v1415
      %v1438 = vadd.f32 %v1323, %v1420
      %v1439 = vadd.f32 %v1324, %v1423
      %v1440 = vadd.f32 %v1325, %v1428
      %v1441 = vadd.f32 %v1326, %v1431
      %v1442 = vld [vmem:[%s1327 + $0x8] sm:$0xff]
      %v1443 = vld [vmem:[%s1327 + $0x20] sm:$0xff]
      %v1444 = vld [vmem:[%s1327 + $0x38] sm:$0xff]
      %v1445 = vld [vmem:[%s1327 + $0x50] sm:$0xff]
      %v1446 = vld [vmem:[%s1327 + $0x68] sm:$0xff]
      %v1447 = vld [vmem:[%s1327 + $0x80] sm:$0xff]
      %v1448 = vld [vmem:[%s1327 + $0x98] sm:$0xff]
      %v1449 = vld [vmem:[%s1327 + $0xb0] sm:$0xff]
      %v1450 = vpack.c.bf16 %v1443, %v1442
      %v1451 = vpack.c.bf16 %v1445, %v1444
      %v1452 = vpack.c.bf16 %v1447, %v1446
      %v1453 = vpack.c.bf16 %v1449, %v1448
      %s1454 = scalar_lea.vmem %s1, 112
      %v1455 = vld [vmem:[%s1454] sm:$0xf]
      %v1456 = vld [vmem:[%s1454 + $0x4] sm:$0xf]
      %v1457 = vld [vmem:[%s1454 + $0x8] sm:$0xf]
      %v1458 = vld [vmem:[%s1454 + $0xc] sm:$0xf]
      %v1463 = vunpack.c.l.b16 %v1455
      %v1464 = vunpack.c.l.b16 %v1456
      %v1465 = vunpack.c.l.b16 %v1457
      %v1466 = vunpack.c.l.b16 %v1458
      %v1467 = vpack.c.b16 %v1464, %v1463
      %v1468 = vpack.c.b16 %v1466, %v1465
      %v1472 = vsel %vm356, %v1450, 0
      %v1475 = vsel %vm356, %v1451, 0
      %v1478 = vsel %vm356, %v1452, 0
      %v1481 = vsel %vm356, %v1453, 0
      %1483 = vmatprep.subr.bf16.mxu0 0
      %1484 = vmatpush1.bf16.msra.mxu0 %v1467
      %1485 = vmatprep.subr.bf16.mxu0 0
      %1486 = vmatpush1.bf16.msra.mxu0 %v1468
      %1487 = vmatprep.subr.bf16.mxu0 0
      %1488 = vmatpush1.bf16.msra.mxu0 0
      %1489 = vmatprep.subr.bf16.mxu0 0
      %1490 = vmatpush1.bf16.msra.mxu0 0
      %1491 = vmatprep.subr.bf16.mxu0 0
      %1492 = vmatpush1.bf16.msra.mxu0 0
      %1493 = vmatprep.subr.bf16.mxu0 0
      %1494 = vmatpush1.bf16.msra.mxu0 0
      %1495 = vmatprep.subr.bf16.mxu0 0
      %1496 = vmatpush1.bf16.msra.mxu0 0
      %1497 = vmatprep.subr.bf16.mxu0 0
      %1498 = vmatpush1.bf16.msra.mxu0 0
      %1499 = vmatprep.subr.bf16.mxu0 0
      %1500 = vmatpush1.bf16.msra.mxu0 0
      %1501 = vmatprep.subr.bf16.mxu0 0
      %1502 = vmatpush1.bf16.msra.mxu0 0
      %1503 = vmatprep.subr.bf16.mxu0 0
      %1504 = vmatpush1.bf16.msra.mxu0 0
      %1505 = vmatprep.subr.bf16.mxu0 0
      %1506 = vmatpush1.bf16.msra.mxu0 0
      %1507 = vmatprep.subr.bf16.mxu0 0
      %1508 = vmatpush1.bf16.msra.mxu0 0
      %1509 = vmatprep.subr.bf16.mxu0 0
      %1510 = vmatpush1.bf16.msra.mxu0 0
      %1511 = vmatprep.subr.bf16.mxu0 0
      %1512 = vmatpush1.bf16.msra.mxu0 0
      %1513 = vmatprep.subr.bf16.mxu0 0
      %1514 = vmatpush1.bf16.msra.mxu0 0
      %1515 = vmatprep.mubr.bf16.mxu0 0
      %1516 = vmatmul.mubr.bf16.gmra.mrb[0].mxu0 %v1472
      %v1517 = vpop.f32.mrb[0].mxu0
      %v1518 = vadd.f32 0.0, %v1517
      %v1519 = vpop.f32.mrb[0].mxu0
      %v1520 = vpop.f32.mrb[0].mxu0
      %v1521 = vadd.f32 0.0, %v1520
      %v1522 = vpop.f32.mrb[0].mxu0
      %1523 = vmatprep.mubr.bf16.mxu0 0
      %1524 = vmatmul.mubr.bf16.gmra.mrb[0].mxu0 %v1475
      %v1525 = vpop.f32.mrb[0].mxu0
      %v1526 = vadd.f32 0.0, %v1525
      %v1527 = vpop.f32.mrb[0].mxu0
      %v1528 = vpop.f32.mrb[0].mxu0
      %v1529 = vadd.f32 0.0, %v1528
      %v1530 = vpop.f32.mrb[0].mxu0
      %1531 = vmatprep.mubr.bf16.mxu0 0
      %1532 = vmatmul.mubr.bf16.gmra.mrb[0].mxu0 %v1478
      %v1533 = vpop.f32.mrb[0].mxu0
      %v1534 = vadd.f32 0.0, %v1533
      %v1535 = vpop.f32.mrb[0].mxu0
      %v1536 = vpop.f32.mrb[0].mxu0
      %v1537 = vadd.f32 0.0, %v1536
      %v1538 = vpop.f32.mrb[0].mxu0
      %1539 = vmatprep.mubr.bf16.mxu0 0
      %1540 = vmatmul.mubr.bf16.gmra.mrb[0].mxu0 %v1481
      %v1541 = vpop.f32.mrb[0].mxu0
      %v1542 = vadd.f32 0.0, %v1541
      %v1543 = vpop.f32.mrb[0].mxu0
      %v1544 = vpop.f32.mrb[0].mxu0
      %v1545 = vadd.f32 0.0, %v1544
      %v1546 = vpop.f32.mrb[0].mxu0
      %1547 = vdwg.mxu0
      %v1548 = vadd.f32 %v1434, %v1518
      %v1549 = vadd.f32 %v1435, %v1521
      %v1550 = vadd.f32 %v1436, %v1526
      %v1551 = vadd.f32 %v1437, %v1529
      %v1552 = vadd.f32 %v1438, %v1534
      %v1553 = vadd.f32 %v1439, %v1537
      %v1554 = vadd.f32 %v1440, %v1542
      %v1555 = vadd.f32 %v1441, %v1545
      %v1556 = vld [vmem:[%s1327 + $0x9] sm:$0xff]
      %v1557 = vld [vmem:[%s1327 + $0x21] sm:$0xff]
      %v1558 = vld [vmem:[%s1327 + $0x39] sm:$0xff]
      %v1559 = vld [vmem:[%s1327 + $0x51] sm:$0xff]
      %v1560 = vld [vmem:[%s1327 + $0x69] sm:$0xff]
      %v1561 = vld [vmem:[%s1327 + $0x81] sm:$0xff]
      %v1562 = vld [vmem:[%s1327 + $0x99] sm:$0xff]
      %v1563 = vld [vmem:[%s1327 + $0xb1] sm:$0xff]
      %v1564 = vpack.c.bf16 %v1557, %v1556
      %v1565 = vpack.c.bf16 %v1559, %v1558
      %v1566 = vpack.c.bf16 %v1561, %v1560
      %v1567 = vpack.c.bf16 %v1563, %v1562
      %s1568 = scalar_lea.vmem %s1, 128
      %v1569 = vld [vmem:[%s1568] sm:$0xf]
      %v1570 = vld [vmem:[%s1568 + $0x4] sm:$0xf]
      %v1571 = vld [vmem:[%s1568 + $0x8] sm:$0xf]
      %v1572 = vld [vmem:[%s1568 + $0xc] sm:$0xf]
      %v1577 = vunpack.c.l.b16 %v1569
      %v1578 = vunpack.c.l.b16 %v1570
      %v1579 = vunpack.c.l.b16 %v1571
      %v1580 = vunpack.c.l.b16 %v1572
      %v1581 = vpack.c.b16 %v1578, %v1577
      %v1582 = vpack.c.b16 %v1580, %v1579
      %v1586 = vsel %vm356, %v1564, 0
      %v1589 = vsel %vm356, %v1565, 0
      %v1592 = vsel %vm356, %v1566, 0
      %v1595 = vsel %vm356, %v1567, 0
      %1597 = vmatprep.subr.bf16.mxu0 0
      %1598 = vmatpush1.bf16.msra.mxu0 %v1581
      %1599 = vmatprep.subr.bf16.mxu0 0
      %1600 = vmatpush1.bf16.msra.mxu0 %v1582
      %1601 = vmatprep.subr.bf16.mxu0 0
      %1602 = vmatpush1.bf16.msra.mxu0 0
      %1603 = vmatprep.subr.bf16.mxu0 0
      %1604 = vmatpush1.bf16.msra.mxu0 0
      %1605 = vmatprep.subr.bf16.mxu0 0
      %1606 = vmatpush1.bf16.msra.mxu0 0
      %1607 = vmatprep.subr.bf16.mxu0 0
      %1608 = vmatpush1.bf16.msra.mxu0 0
      %1609 = vmatprep.subr.bf16.mxu0 0
      %1610 = vmatpush1.bf16.msra.mxu0 0
      %1611 = vmatprep.subr.bf16.mxu0 0
      %1612 = vmatpush1.bf16.msra.mxu0 0
      %1613 = vmatprep.subr.bf16.mxu0 0
      %1614 = vmatpush1.bf16.msra.mxu0 0
      %1615 = vmatprep.subr.bf16.mxu0 0
      %1616 = vmatpush1.bf16.msra.mxu0 0
      %1617 = vmatprep.subr.bf16.mxu0 0
      %1618 = vmatpush1.bf16.msra.mxu0 0
      %1619 = vmatprep.subr.bf16.mxu0 0
      %1620 = vmatpush1.bf16.msra.mxu0 0
      %1621 = vmatprep.subr.bf16.mxu0 0
      %1622 = vmatpush1.bf16.msra.mxu0 0
      %1623 = vmatprep.subr.bf16.mxu0 0
      %1624 = vmatpush1.bf16.msra.mxu0 0
      %1625 = vmatprep.subr.bf16.mxu0 0
      %1626 = vmatpush1.bf16.msra.mxu0 0
      %1627 = vmatprep.subr.bf16.mxu0 0
      %1628 = vmatpush1.bf16.msra.mxu0 0
      %1629 = vmatprep.mubr.bf16.mxu0 0
      %1630 = vmatmul.mubr.bf16.gmra.mrb[0].mxu0 %v1586
      %v1631 = vpop.f32.mrb[0].mxu0
      %v1632 = vadd.f32 0.0, %v1631
      %v1633 = vpop.f32.mrb[0].mxu0
      %v1634 = vpop.f32.mrb[0].mxu0
      %v1635 = vadd.f32 0.0, %v1634
      %v1636 = vpop.f32.mrb[0].mxu0
      %1637 = vmatprep.mubr.bf16.mxu0 0
      %1638 = vmatmul.mubr.bf16.gmra.mrb[0].mxu0 %v1589
      %v1639 = vpop.f32.mrb[0].mxu0
      %v1640 = vadd.f32 0.0, %v1639
      %v1641 = vpop.f32.mrb[0].mxu0
      %v1642 = vpop.f32.mrb[0].mxu0
      %v1643 = vadd.f32 0.0, %v1642
      %v1644 = vpop.f32.mrb[0].mxu0
      %1645 = vmatprep.mubr.bf16.mxu0 0
      %1646 = vmatmul.mubr.bf16.gmra.mrb[0].mxu0 %v1592
      %v1647 = vpop.f32.mrb[0].mxu0
      %v1648 = vadd.f32 0.0, %v1647
      %v1649 = vpop.f32.mrb[0].mxu0
      %v1650 = vpop.f32.mrb[0].mxu0
      %v1651 = vadd.f32 0.0, %v1650
      %v1652 = vpop.f32.mrb[0].mxu0
      %1653 = vmatprep.mubr.bf16.mxu0 0
      %1654 = vmatmul.mubr.bf16.gmra.mrb[0].mxu0 %v1595
      %v1655 = vpop.f32.mrb[0].mxu0
      %v1656 = vadd.f32 0.0, %v1655
      %v1657 = vpop.f32.mrb[0].mxu0
      %v1658 = vpop.f32.mrb[0].mxu0
      %v1659 = vadd.f32 0.0, %v1658
      %v1660 = vpop.f32.mrb[0].mxu0
      %1661 = vdwg.mxu0
      %v1662 = vadd.f32 %v1548, %v1632
      %v1663 = vadd.f32 %v1549, %v1635
      %v1664 = vadd.f32 %v1550, %v1640
      %v1665 = vadd.f32 %v1551, %v1643
      %v1666 = vadd.f32 %v1552, %v1648
      %v1667 = vadd.f32 %v1553, %v1651
      %v1668 = vadd.f32 %v1554, %v1656
      %v1669 = vadd.f32 %v1555, %v1659
      %v1670 = vld [vmem:[%s6] sm:$0x1]
      %v1671 = vld [vmem:[%s7] sm:$0x1]
      %v1672 = vld [vmem:[%s8] sm:$0xff]
      %v1673 = vld [vmem:[%s8 + $0x8] sm:$0xff]
      %v1674 = vld [vmem:[%s8 + $0x10] sm:$0xff]
      %v1675 = vld [vmem:[%s8 + $0x18] sm:$0xff]
      %v1676 = vsel %vm356, %v1662, 0.0
      %v1677 = vsel %vm356, %v1663, 0.0
      %v1678 = vadd.f32 %v1676, %v1677
      %v1679 = vsel %vm356, %v1664, 0.0
      %v1680 = vadd.f32 %v1678, %v1679
      %v1681 = vsel %vm356, %v1665, 0.0
      %v1682 = vadd.f32 %v1680, %v1681
      %v1683 = vsel %vm356, %v1666, 0.0
      %v1684 = vadd.f32 %v1682, %v1683
      %v1685 = vsel %vm356, %v1667, 0.0
      %v1686 = vadd.f32 %v1684, %v1685
      %v1687 = vsel %vm356, %v1668, 0.0
      %v1688 = vadd.f32 %v1686, %v1687
      %v1689 = vsel %vm356, %v1669, 0.0
      %v1690 = vadd.f32 %v1688, %v1689
      %v1691 = vrot.slane %v1690, 4
      %v1692 = vadd.f32 %v1690, %v1691
      %v1693 = vrot.slane %v1692, 2
      %v1694 = vadd.f32 %v1692, %v1693
      %v1695 = vrot.slane %v1694, 1
      %v1696 = vadd.f32 %v1694, %v1695
      %v1697 = vmul.f32 %v1662, %v1662
      %v1698 = vmul.f32 %v1663, %v1663
      %v1699 = vmul.f32 %v1664, %v1664
      %v1700 = vmul.f32 %v1665, %v1665
      %v1701 = vmul.f32 %v1666, %v1666
      %v1702 = vmul.f32 %v1667, %v1667
      %v1703 = vmul.f32 %v1668, %v1668
      %v1704 = vmul.f32 %v1669, %v1669
      %v1705 = vsel %vm356, %v1697, 0.0
      %v1706 = vsel %vm356, %v1698, 0.0
      %v1707 = vadd.f32 %v1705, %v1706
      %v1708 = vsel %vm356, %v1699, 0.0
      %v1709 = vadd.f32 %v1707, %v1708
      %v1710 = vsel %vm356, %v1700, 0.0
      %v1711 = vadd.f32 %v1709, %v1710
      %v1712 = vsel %vm356, %v1701, 0.0
      %v1713 = vadd.f32 %v1711, %v1712
      %v1714 = vsel %vm356, %v1702, 0.0
      %v1715 = vadd.f32 %v1713, %v1714
      %v1716 = vsel %vm356, %v1703, 0.0
      %v1717 = vadd.f32 %v1715, %v1716
      %v1718 = vsel %vm356, %v1704, 0.0
      %v1719 = vadd.f32 %v1717, %v1718
      %v1720 = vrot.slane %v1719, 4
      %v1721 = vadd.f32 %v1719, %v1720
      %v1722 = vrot.slane %v1721, 2
      %v1723 = vadd.f32 %v1721, %v1722
      %v1724 = vrot.slane %v1723, 1
      %v1725 = vadd.f32 %v1723, %v1724
      %v1727 = vsel %vm356, %v1696, 0
      %1729 = vmatprep.subr.mxu0 0.0
      %1730 = vmatpush1.msra.mxu0 %v1672
      %1731 = vmatprep.subr.mxu0 0.0
      %1732 = vmatpush1.msra.mxu0 %v1673
      %1733 = vmatprep.subr.mxu0 0.0
      %1734 = vmatpush1.msra.mxu0 %v1674
      %1735 = vmatprep.subr.mxu0 0.0
      %1736 = vmatpush1.msra.mxu0 %v1675
      %1737 = vmatprep.subr.mxu0 0.0
      %1738 = vmatpush1.msra.mxu0 0.0
      %1739 = vmatprep.subr.mxu0 0.0
      %1740 = vmatpush1.msra.mxu0 0.0
      %1741 = vmatprep.subr.mxu0 0.0
      %1742 = vmatpush1.msra.mxu0 0.0
      %1743 = vmatprep.subr.mxu0 0.0
      %1744 = vmatpush1.msra.mxu0 0.0
      %1745 = vmatprep.subr.mxu0 0.0
      %1746 = vmatpush1.msra.mxu0 0.0
      %1747 = vmatprep.subr.mxu0 0.0
      %1748 = vmatpush1.msra.mxu0 0.0
      %1749 = vmatprep.subr.mxu0 0.0
      %1750 = vmatpush1.msra.mxu0 0.0
      %1751 = vmatprep.subr.mxu0 0.0
      %1752 = vmatpush1.msra.mxu0 0.0
      %1753 = vmatprep.subr.mxu0 0.0
      %1754 = vmatpush1.msra.mxu0 0.0
      %1755 = vmatprep.subr.mxu0 0.0
      %1756 = vmatpush1.msra.mxu0 0.0
      %1757 = vmatprep.subr.mxu0 0.0
      %1758 = vmatpush1.msra.mxu0 0.0
      %1759 = vmatprep.subr.mxu0 0.0
      %1760 = vmatpush1.msra.mxu0 0.0
      %1761 = vmatprep.subr.mxu0 0.0
      %1762 = vmatpush1.msra.mxu0 0.0
      %1763 = vmatprep.subr.mxu0 0.0
      %1764 = vmatpush1.msra.mxu0 0.0
      %1765 = vmatprep.subr.mxu0 0.0
      %1766 = vmatpush1.msra.mxu0 0.0
      %1767 = vmatprep.subr.mxu0 0.0
      %1768 = vmatpush1.msra.mxu0 0.0
      %1769 = vmatprep.subr.mxu0 0.0
      %1770 = vmatpush1.msra.mxu0 0.0
      %1771 = vmatprep.subr.mxu0 0.0
      %1772 = vmatpush1.msra.mxu0 0.0
      %1773 = vmatprep.subr.mxu0 0.0
      %1774 = vmatpush1.msra.mxu0 0.0
      %1775 = vmatprep.subr.mxu0 0.0
      %1776 = vmatpush1.msra.mxu0 0.0
      %1777 = vmatprep.subr.mxu0 0.0
      %1778 = vmatpush1.msra.mxu0 0.0
      %1779 = vmatprep.subr.mxu0 0.0
      %1780 = vmatpush1.msra.mxu0 0.0
      %1781 = vmatprep.subr.mxu0 0.0
      %1782 = vmatpush1.msra.mxu0 0.0
      %1783 = vmatprep.subr.mxu0 0.0
      %1784 = vmatpush1.msra.mxu0 0.0
      %1785 = vmatprep.subr.mxu0 0.0
      %1786 = vmatpush1.msra.mxu0 0.0
      %1787 = vmatprep.subr.mxu0 0.0
      %1788 = vmatpush1.msra.mxu0 0.0
      %1789 = vmatprep.subr.mxu0 0.0
      %1790 = vmatpush1.msra.mxu0 0.0
      %1791 = vmatprep.subr.mxu0 0.0
      %1792 = vmatpush1.msra.mxu0 0.0
      %1793 = vmatprep.mubr.f32.mxu0 0.0
      %1794 = vmatmul.mubr.f32.gmra.mrb[0].mxu0 %v1727
      %v1795 = vpop.f32.mrb[0].mxu0
      %v1796 = vadd.f32 0.0, %v1795
      %v1797 = vpop.f32.mrb[0].mxu0
      %1798 = vdwg.mxu0
      %v1799 = vmul.f32 %v1796, %v480
      %v1801 = vsel %vm356, %v1725, 0
      %1803 = vmatprep.subr.mxu0 0.0
      %1804 = vmatpush1.msra.mxu0 %v1672
      %1805 = vmatprep.subr.mxu0 0.0
      %1806 = vmatpush1.msra.mxu0 %v1673
      %1807 = vmatprep.subr.mxu0 0.0
      %1808 = vmatpush1.msra.mxu0 %v1674
      %1809 = vmatprep.subr.mxu0 0.0
      %1810 = vmatpush1.msra.mxu0 %v1675
      %1811 = vmatprep.subr.mxu0 0.0
      %1812 = vmatpush1.msra.mxu0 0.0
      %1813 = vmatprep.subr.mxu0 0.0
      %1814 = vmatpush1.msra.mxu0 0.0
      %1815 = vmatprep.subr.mxu0 0.0
      %1816 = vmatpush1.msra.mxu0 0.0
      %1817 = vmatprep.subr.mxu0 0.0
      %1818 = vmatpush1.msra.mxu0 0.0
      %1819 = vmatprep.subr.mxu0 0.0
      %1820 = vmatpush1.msra.mxu0 0.0
      %1821 = vmatprep.subr.mxu0 0.0
      %1822 = vmatpush1.msra.mxu0 0.0
      %1823 = vmatprep.subr.mxu0 0.0
      %1824 = vmatpush1.msra.mxu0 0.0
      %1825 = vmatprep.subr.mxu0 0.0
      %1826 = vmatpush1.msra.mxu0 0.0
      %1827 = vmatprep.subr.mxu0 0.0
      %1828 = vmatpush1.msra.mxu0 0.0
      %1829 = vmatprep.subr.mxu0 0.0
      %1830 = vmatpush1.msra.mxu0 0.0
      %1831 = vmatprep.subr.mxu0 0.0
      %1832 = vmatpush1.msra.mxu0 0.0
      %1833 = vmatprep.subr.mxu0 0.0
      %1834 = vmatpush1.msra.mxu0 0.0
      %1835 = vmatprep.subr.mxu0 0.0
      %1836 = vmatpush1.msra.mxu0 0.0
      %1837 = vmatprep.subr.mxu0 0.0
      %1838 = vmatpush1.msra.mxu0 0.0
      %1839 = vmatprep.subr.mxu0 0.0
      %1840 = vmatpush1.msra.mxu0 0.0
      %1841 = vmatprep.subr.mxu0 0.0
      %1842 = vmatpush1.msra.mxu0 0.0
      %1843 = vmatprep.subr.mxu0 0.0
      %1844 = vmatpush1.msra.mxu0 0.0
      %1845 = vmatprep.subr.mxu0 0.0
      %1846 = vmatpush1.msra.mxu0 0.0
      %1847 = vmatprep.subr.mxu0 0.0
      %1848 = vmatpush1.msra.mxu0 0.0
      %1849 = vmatprep.subr.mxu0 0.0
      %1850 = vmatpush1.msra.mxu0 0.0
      %1851 = vmatprep.subr.mxu0 0.0
      %1852 = vmatpush1.msra.mxu0 0.0
      %1853 = vmatprep.subr.mxu0 0.0
      %1854 = vmatpush1.msra.mxu0 0.0
      %1855 = vmatprep.subr.mxu0 0.0
      %1856 = vmatpush1.msra.mxu0 0.0
      %1857 = vmatprep.subr.mxu0 0.0
      %1858 = vmatpush1.msra.mxu0 0.0
      %1859 = vmatprep.subr.mxu0 0.0
      %1860 = vmatpush1.msra.mxu0 0.0
      %1861 = vmatprep.subr.mxu0 0.0
      %1862 = vmatpush1.msra.mxu0 0.0
      %1863 = vmatprep.subr.mxu0 0.0
      %1864 = vmatpush1.msra.mxu0 0.0
      %1865 = vmatprep.subr.mxu0 0.0
      %1866 = vmatpush1.msra.mxu0 0.0
      %1867 = vmatprep.mubr.f32.mxu0 0.0
      %1868 = vmatmul.mubr.f32.gmra.mrb[0].mxu0 %v1801
      %v1869 = vpop.f32.mrb[0].mxu0
      %v1870 = vadd.f32 0.0, %v1869
      %v1871 = vpop.f32.mrb[0].mxu0
      %1872 = vdwg.mxu0
      %v1873 = vmul.f32 %v1870, %v480
      %v1874 = vmul.f32 %v1799, %v1799
      %v1875 = vsub.f32 %v1873, %v1874
      %v1876 = vmax.f32 %v1875, 0.0
      %v1877 = vadd.f32 %v1876, 1e-05
      %v1878 = vrsqrt.pop %v1877
      %v1879 = vlaneseq
      %v1880 = vshrl.u32 %v1879, 7
      %v1881 = vsub.s32 0, %v1880
      %v1882 = vrot.slane %v1799, %v1881
      %v1883 = vsub.f32 %v1662, %v1882
      %v1884 = vsub.f32 %v1663, %v1882
      %v1885 = vsub.f32 %v1664, %v1882
      %v1886 = vsub.f32 %v1665, %v1882
      %v1887 = vsub.f32 %v1666, %v1882
      %v1888 = vsub.f32 %v1667, %v1882
      %v1889 = vsub.f32 %v1668, %v1882
      %v1890 = vsub.f32 %v1669, %v1882
      %v1891 = vlaneseq
      %v1892 = vshrl.u32 %v1891, 7
      %v1893 = vsub.s32 0, %v1892
      %v1894 = vrot.slane %v1878, %v1893
      %v1895 = vmul.f32 %v1883, %v1894
      %v1896 = vmul.f32 %v1884, %v1894
      %v1897 = vmul.f32 %v1885, %v1894
      %v1898 = vmul.f32 %v1886, %v1894
      %v1899 = vmul.f32 %v1887, %v1894
      %v1900 = vmul.f32 %v1888, %v1894
      %v1901 = vmul.f32 %v1889, %v1894
      %v1902 = vmul.f32 %v1890, %v1894
      %v1904 = vlaneseq
      %v1905 = vshrl.u32 %v1904, 7
      %v1906 = vsub.s32 0, %v1905
      %v1907 = vrot.slane %v1670, %v1906
      %v1909 = vmul.f32 %v1895, %v1907
      %v1910 = vmul.f32 %v1896, %v1907
      %v1911 = vmul.f32 %v1897, %v1907
      %v1912 = vmul.f32 %v1898, %v1907
      %v1913 = vmul.f32 %v1899, %v1907
      %v1914 = vmul.f32 %v1900, %v1907
      %v1915 = vmul.f32 %v1901, %v1907
      %v1916 = vmul.f32 %v1902, %v1907
      %v1918 = vlaneseq
      %v1919 = vshrl.u32 %v1918, 7
      %v1920 = vsub.s32 0, %v1919
      %v1921 = vrot.slane %v1671, %v1920
      %v1923 = vadd.f32 %v1909, %v1921
      %v1924 = vadd.f32 %v1910, %v1921
      %v1925 = vadd.f32 %v1911, %v1921
      %v1926 = vadd.f32 %v1912, %v1921
      %v1927 = vadd.f32 %v1913, %v1921
      %v1928 = vadd.f32 %v1914, %v1921
      %v1929 = vadd.f32 %v1915, %v1921
      %v1930 = vadd.f32 %v1916, %v1921
      %v1931 = vmax.f32 %v1923, 0.0
      %v1932 = vmax.f32 %v1924, 0.0
      %v1933 = vmax.f32 %v1925, 0.0
      %v1934 = vmax.f32 %v1926, 0.0
      %v1935 = vmax.f32 %v1927, 0.0
      %v1936 = vmax.f32 %v1928, 0.0
      %v1937 = vmax.f32 %v1929, 0.0
      %v1938 = vmax.f32 %v1930, 0.0
      %1939 = vst.msk [vmem:[#allocation3] sm:$0xff] %vm356, 0.0
      %1940 = vst.msk [vmem:[#allocation3 + $0x8] sm:$0xff] %vm356, 0.0
      %1941 = vst.msk [vmem:[#allocation3 + $0x10] sm:$0xff] %vm356, 0.0
      %1942 = vst.msk [vmem:[#allocation3 + $0x18] sm:$0xff] %vm356, 0.0
      %1943 = vst.msk [vmem:[#allocation3 + $0x20] sm:$0xff] %vm356, 0.0
      %1944 = vst.msk [vmem:[#allocation3 + $0x28] sm:$0xff] %vm356, 0.0
      %1945 = vst.msk [vmem:[#allocation3 + $0x30] sm:$0xff] %vm356, 0.0
      %1946 = vst.msk [vmem:[#allocation3 + $0x38] sm:$0xff] %vm356, 0.0
      %1947 = vst.msk [vmem:[#allocation3 + $0x40] sm:$0xff] %vm356, 0.0
      %1948 = vst.msk [vmem:[#allocation3 + $0x48] sm:$0xff] %vm356, 0.0
      %1949 = vst.msk [vmem:[#allocation3 + $0x50] sm:$0xff] %vm356, 0.0
      %1950 = vst.msk [vmem:[#allocation3 + $0x58] sm:$0xff] %vm356, 0.0
      %1951 = vst.msk [vmem:[#allocation3 + $0x60] sm:$0xff] %vm356, 0.0
      %1952 = vst.msk [vmem:[#allocation3 + $0x68] sm:$0xff] %vm356, 0.0
      %1953 = vst.msk [vmem:[#allocation3 + $0x70] sm:$0xff] %vm356, 0.0
      %1954 = vst.msk [vmem:[#allocation3 + $0x78] sm:$0xff] %vm356, 0.0
      %1955 = vst.msk [vmem:[#allocation3 + $0x80] sm:$0xff] %vm356, 0.0
      %1956 = vst.msk [vmem:[#allocation3 + $0x88] sm:$0xff] %vm356, 0.0
      %1957 = vst.msk [vmem:[#allocation3 + $0x90] sm:$0xff] %vm356, 0.0
      %1958 = vst.msk [vmem:[#allocation3 + $0x98] sm:$0xff] %vm356, 0.0
      %1959 = vst.msk [vmem:[#allocation3 + $0xa0] sm:$0xff] %vm356, 0.0
      %1960 = vst.msk [vmem:[#allocation3 + $0xa8] sm:$0xff] %vm356, 0.0
      %1961 = vst.msk [vmem:[#allocation3 + $0xb0] sm:$0xff] %vm356, 0.0
      %1962 = vst.msk [vmem:[#allocation3 + $0xb8] sm:$0xff] %vm356, 0.0
      %1963 = vst.msk [vmem:[#allocation3 + $0xc0] sm:$0xff] %vm356, 0.0
      %1964 = vst.msk [vmem:[#allocation3 + $0xc8] sm:$0xff] %vm356, 0.0
      %1965 = vst.msk [vmem:[#allocation3 + $0xd0] sm:$0xff] %vm356, 0.0
      %1966 = vst.msk [vmem:[#allocation3 + $0xd8] sm:$0xff] %vm356, 0.0
      %1967 = vst.msk [vmem:[#allocation3 + $0xe0] sm:$0xff] %vm356, 0.0
      %1968 = vst.msk [vmem:[#allocation3 + $0xe8] sm:$0xff] %vm356, 0.0
      %s1969 = scalar_lea.vmem [#allocation3], 24
      %1970 = vst.msk [vmem:[%s1969 + $0x8] sm:$0xff] %vm356, %v1931
      %1971 = vst.msk [vmem:[%s1969 + $0x20] sm:$0xff] %vm356, %v1932
      %1972 = vst.msk [vmem:[%s1969 + $0x38] sm:$0xff] %vm356, %v1933
      %1973 = vst.msk [vmem:[%s1969 + $0x50] sm:$0xff] %vm356, %v1934
      %1974 = vst.msk [vmem:[%s1969 + $0x68] sm:$0xff] %vm356, %v1935
      %1975 = vst.msk [vmem:[%s1969 + $0x80] sm:$0xff] %vm356, %v1936
      %1976 = vst.msk [vmem:[%s1969 + $0x98] sm:$0xff] %vm356, %v1937
      %1977 = vst.msk [vmem:[%s1969 + $0xb0] sm:$0xff] %vm356, %v1938
      %v1978 = vld [vmem:[#allocation3 + $0x7] sm:$0xff]
      %v1979 = vld [vmem:[#allocation3 + $0x1f] sm:$0xff]
      %v1980 = vld [vmem:[#allocation3 + $0x37] sm:$0xff]
      %v1981 = vld [vmem:[#allocation3 + $0x4f] sm:$0xff]
      %v1982 = vld [vmem:[#allocation3 + $0x67] sm:$0xff]
      %v1983 = vld [vmem:[#allocation3 + $0x7f] sm:$0xff]
      %v1984 = vld [vmem:[#allocation3 + $0x97] sm:$0xff]
      %v1985 = vld [vmem:[#allocation3 + $0xaf] sm:$0xff]
      %v1986 = vpack.c.bf16 %v1979, %v1978
      %v1987 = vpack.c.bf16 %v1981, %v1980
      %v1988 = vpack.c.bf16 %v1983, %v1982
      %v1989 = vpack.c.bf16 %v1985, %v1984
      %v1990 = vld [vmem:[%s2] sm:$0xf]
      %v1991 = vld [vmem:[%s2 + $0x4] sm:$0xf]
      %v1992 = vld [vmem:[%s2 + $0x8] sm:$0xf]
      %v1993 = vld [vmem:[%s2 + $0xc] sm:$0xf]
      %v1994 = vld [vmem:[#allocation3 + $0x8] sm:$0xff]
      %v1995 = vld [vmem:[#allocation3 + $0x20] sm:$0xff]
      %v1996 = vld [vmem:[#allocation3 + $0x38] sm:$0xff]
      %v1997 = vld [vmem:[#allocation3 + $0x50] sm:$0xff]
      %v1998 = vld [vmem:[#allocation3 + $0x68] sm:$0xff]
      %v1999 = vld [vmem:[#allocation3 + $0x80] sm:$0xff]
      %v2000 = vld [vmem:[#allocation3 + $0x98] sm:$0xff]
      %v2001 = vld [vmem:[#allocation3 + $0xb0] sm:$0xff]
      %v2002 = vpack.c.bf16 %v1995, %v1994
      %v2003 = vpack.c.bf16 %v1997, %v1996
      %v2004 = vpack.c.bf16 %v1999, %v1998
      %v2005 = vpack.c.bf16 %v2001, %v2000
      %s2006 = scalar_lea.vmem %s2, 16
      %v2007 = vld [vmem:[%s2006] sm:$0xf]
      %v2008 = vld [vmem:[%s2006 + $0x4] sm:$0xf]
      %v2009 = vld [vmem:[%s2006 + $0x8] sm:$0xf]
      %v2010 = vld [vmem:[%s2006 + $0xc] sm:$0xf]
      %v2015 = vunpack.c.l.b16 %v2007
      %v2016 = vunpack.c.l.b16 %v2008
      %v2017 = vunpack.c.l.b16 %v2009
      %v2018 = vunpack.c.l.b16 %v2010
      %v2019 = vpack.c.b16 %v2016, %v2015
      %v2020 = vpack.c.b16 %v2018, %v2017
      %v2024 = vsel %vm356, %v2002, 0
      %v2027 = vsel %vm356, %v2003, 0
      %v2030 = vsel %vm356, %v2004, 0
      %v2033 = vsel %vm356, %v2005, 0
      %2035 = vmatprep.subr.bf16.mxu0 0
      %2036 = vmatpush1.bf16.msra.mxu0 %v2019
      %2037 = vmatprep.subr.bf16.mxu0 0
      %2038 = vmatpush1.bf16.msra.mxu0 %v2020
      %2039 = vmatprep.subr.bf16.mxu0 0
      %2040 = vmatpush1.bf16.msra.mxu0 0
      %2041 = vmatprep.subr.bf16.mxu0 0
      %2042 = vmatpush1.bf16.msra.mxu0 0
      %2043 = vmatprep.subr.bf16.mxu0 0
      %2044 = vmatpush1.bf16.msra.mxu0 0
      %2045 = vmatprep.subr.bf16.mxu0 0
      %2046 = vmatpush1.bf16.msra.mxu0 0
      %2047 = vmatprep.subr.bf16.mxu0 0
      %2048 = vmatpush1.bf16.msra.mxu0 0
      %2049 = vmatprep.subr.bf16.mxu0 0
      %2050 = vmatpush1.bf16.msra.mxu0 0
      %2051 = vmatprep.subr.bf16.mxu0 0
      %2052 = vmatpush1.bf16.msra.mxu0 0
      %2053 = vmatprep.subr.bf16.mxu0 0
      %2054 = vmatpush1.bf16.msra.mxu0 0
      %2055 = vmatprep.subr.bf16.mxu0 0
      %2056 = vmatpush1.bf16.msra.mxu0 0
      %2057 = vmatprep.subr.bf16.mxu0 0
      %2058 = vmatpush1.bf16.msra.mxu0 0
      %2059 = vmatprep.subr.bf16.mxu0 0
      %2060 = vmatpush1.bf16.msra.mxu0 0
      %2061 = vmatprep.subr.bf16.mxu0 0
      %2062 = vmatpush1.bf16.msra.mxu0 0
      %2063 = vmatprep.subr.bf16.mxu0 0
      %2064 = vmatpush1.bf16.msra.mxu0 0
      %2065 = vmatprep.subr.bf16.mxu0 0
      %2066 = vmatpush1.bf16.msra.mxu0 0
      %2067 = vmatprep.mubr.bf16.mxu0 0
      %2068 = vmatmul.mubr.bf16.gmra.mrb[0].mxu0 %v2024
      %v2069 = vpop.f32.mrb[0].mxu0
      %v2070 = vadd.f32 0.0, %v2069
      %v2071 = vpop.f32.mrb[0].mxu0
      %v2072 = vpop.f32.mrb[0].mxu0
      %v2073 = vadd.f32 0.0, %v2072
      %v2074 = vpop.f32.mrb[0].mxu0
      %2075 = vmatprep.mubr.bf16.mxu0 0
      %2076 = vmatmul.mubr.bf16.gmra.mrb[0].mxu0 %v2027
      %v2077 = vpop.f32.mrb[0].mxu0
      %v2078 = vadd.f32 0.0, %v2077
      %v2079 = vpop.f32.mrb[0].mxu0
      %v2080 = vpop.f32.mrb[0].mxu0
      %v2081 = vadd.f32 0.0, %v2080
      %v2082 = vpop.f32.mrb[0].mxu0
      %2083 = vmatprep.mubr.bf16.mxu0 0
      %2084 = vmatmul.mubr.bf16.gmra.mrb[0].mxu0 %v2030
      %v2085 = vpop.f32.mrb[0].mxu0
      %v2086 = vadd.f32 0.0, %v2085
      %v2087 = vpop.f32.mrb[0].mxu0
      %v2088 = vpop.f32.mrb[0].mxu0
      %v2089 = vadd.f32 0.0, %v2088
      %v2090 = vpop.f32.mrb[0].mxu0
      %2091 = vmatprep.mubr.bf16.mxu0 0
      %2092 = vmatmul.mubr.bf16.gmra.mrb[0].mxu0 %v2033
      %v2093 = vpop.f32.mrb[0].mxu0
      %v2094 = vadd.f32 0.0, %v2093
      %v2095 = vpop.f32.mrb[0].mxu0
      %v2096 = vpop.f32.mrb[0].mxu0
      %v2097 = vadd.f32 0.0, %v2096
      %v2098 = vpop.f32.mrb[0].mxu0
      %2099 = vdwg.mxu0
      %v2104 = vunpack.c.l.b16 %v1990
      %v2105 = vunpack.c.l.b16 %v1991
      %v2106 = vunpack.c.l.b16 %v1992
      %v2107 = vunpack.c.l.b16 %v1993
      %v2108 = vpack.c.b16 %v2105, %v2104
      %v2109 = vpack.c.b16 %v2107, %v2106
      %v2113 = vsel %vm356, %v1986, 0
      %v2116 = vsel %vm356, %v1987, 0
      %v2119 = vsel %vm356, %v1988, 0
      %v2122 = vsel %vm356, %v1989, 0
      %2124 = vmatprep.subr.bf16.mxu0 0
      %2125 = vmatpush1.bf16.msra.mxu0 %v2108
      %2126 = vmatprep.subr.bf16.mxu0 0
      %2127 = vmatpush1.bf16.msra.mxu0 %v2109
      %2128 = vmatprep.subr.bf16.mxu0 0
      %2129 = vmatpush1.bf16.msra.mxu0 0
      %2130 = vmatprep.subr.bf16.mxu0 0
      %2131 = vmatpush1.bf16.msra.mxu0 0
      %2132 = vmatprep.subr.bf16.mxu0 0
      %2133 = vmatpush1.bf16.msra.mxu0 0
      %2134 = vmatprep.subr.bf16.mxu0 0
      %2135 = vmatpush1.bf16.msra.mxu0 0
      %2136 = vmatprep.subr.bf16.mxu0 0
      %2137 = vmatpush1.bf16.msra.mxu0 0
      %2138 = vmatprep.subr.bf16.mxu0 0
      %2139 = vmatpush1.bf16.msra.mxu0 0
      %2140 = vmatprep.subr.bf16.mxu0 0
      %2141 = vmatpush1.bf16.msra.mxu0 0
      %2142 = vmatprep.subr.bf16.mxu0 0
      %2143 = vmatpush1.bf16.msra.mxu0 0
      %2144 = vmatprep.subr.bf16.mxu0 0
      %2145 = vmatpush1.bf16.msra.mxu0 0
      %2146 = vmatprep.subr.bf16.mxu0 0
      %2147 = vmatpush1.bf16.msra.mxu0 0
      %2148 = vmatprep.subr.bf16.mxu0 0
      %2149 = vmatpush1.bf16.msra.mxu0 0
      %2150 = vmatprep.subr.bf16.mxu0 0
      %2151 = vmatpush1.bf16.msra.mxu0 0
      %2152 = vmatprep.subr.bf16.mxu0 0
      %2153 = vmatpush1.bf16.msra.mxu0 0
      %2154 = vmatprep.subr.bf16.mxu0 0
      %2155 = vmatpush1.bf16.msra.mxu0 0
      %2156 = vmatprep.mubr.bf16.mxu0 0
      %2157 = vmatmul.mubr.bf16.gmra.mrb[0].mxu0 %v2113
      %v2158 = vpop.f32.mrb[0].mxu0
      %v2159 = vadd.f32 %v2070, %v2158
      %v2160 = vpop.f32.mrb[0].mxu0
      %v2161 = vpop.f32.mrb[0].mxu0
      %v2162 = vadd.f32 %v2073, %v2161
      %v2163 = vpop.f32.mrb[0].mxu0
      %2164 = vmatprep.mubr.bf16.mxu0 0
      %2165 = vmatmul.mubr.bf16.gmra.mrb[0].mxu0 %v2116
      %v2166 = vpop.f32.mrb[0].mxu0
      %v2167 = vadd.f32 %v2078, %v2166
      %v2168 = vpop.f32.mrb[0].mxu0
      %v2169 = vpop.f32.mrb[0].mxu0
      %v2170 = vadd.f32 %v2081, %v2169
      %v2171 = vpop.f32.mrb[0].mxu0
      %2172 = vmatprep.mubr.bf16.mxu0 0
      %2173 = vmatmul.mubr.bf16.gmra.mrb[0].mxu0 %v2119
      %v2174 = vpop.f32.mrb[0].mxu0
      %v2175 = vadd.f32 %v2086, %v2174
      %v2176 = vpop.f32.mrb[0].mxu0
      %v2177 = vpop.f32.mrb[0].mxu0
      %v2178 = vadd.f32 %v2089, %v2177
      %v2179 = vpop.f32.mrb[0].mxu0
      %2180 = vmatprep.mubr.bf16.mxu0 0
      %2181 = vmatmul.mubr.bf16.gmra.mrb[0].mxu0 %v2122
      %v2182 = vpop.f32.mrb[0].mxu0
      %v2183 = vadd.f32 %v2094, %v2182
      %v2184 = vpop.f32.mrb[0].mxu0
      %v2185 = vpop.f32.mrb[0].mxu0
      %v2186 = vadd.f32 %v2097, %v2185
      %v2187 = vpop.f32.mrb[0].mxu0
      %2188 = vdwg.mxu0
      %v2189 = vld [vmem:[#allocation3 + $0x9] sm:$0xff]
      %v2190 = vld [vmem:[#allocation3 + $0x21] sm:$0xff]
      %v2191 = vld [vmem:[#allocation3 + $0x39] sm:$0xff]
      %v2192 = vld [vmem:[#allocation3 + $0x51] sm:$0xff]
      %v2193 = vld [vmem:[#allocation3 + $0x69] sm:$0xff]
      %v2194 = vld [vmem:[#allocation3 + $0x81] sm:$0xff]
      %v2195 = vld [vmem:[#allocation3 + $0x99] sm:$0xff]
      %v2196 = vld [vmem:[#allocation3 + $0xb1] sm:$0xff]
      %v2197 = vpack.c.bf16 %v2190, %v2189
      %v2198 = vpack.c.bf16 %v2192, %v2191
      %v2199 = vpack.c.bf16 %v2194, %v2193
      %v2200 = vpack.c.bf16 %v2196, %v2195
      %s2201 = scalar_lea.vmem %s2, 32
      %v2202 = vld [vmem:[%s2201] sm:$0xf]
      %v2203 = vld [vmem:[%s2201 + $0x4] sm:$0xf]
      %v2204 = vld [vmem:[%s2201 + $0x8] sm:$0xf]
      %v2205 = vld [vmem:[%s2201 + $0xc] sm:$0xf]
      %v2210 = vunpack.c.l.b16 %v2202
      %v2211 = vunpack.c.l.b16 %v2203
      %v2212 = vunpack.c.l.b16 %v2204
      %v2213 = vunpack.c.l.b16 %v2205
      %v2214 = vpack.c.b16 %v2211, %v2210
      %v2215 = vpack.c.b16 %v2213, %v2212
      %v2219 = vsel %vm356, %v2197, 0
      %v2222 = vsel %vm356, %v2198, 0
      %v2225 = vsel %vm356, %v2199, 0
      %v2228 = vsel %vm356, %v2200, 0
      %2230 = vmatprep.subr.bf16.mxu0 0
      %2231 = vmatpush1.bf16.msra.mxu0 %v2214
      %2232 = vmatprep.subr.bf16.mxu0 0
      %2233 = vmatpush1.bf16.msra.mxu0 %v2215
      %2234 = vmatprep.subr.bf16.mxu0 0
      %2235 = vmatpush1.bf16.msra.mxu0 0
      %2236 = vmatprep.subr.bf16.mxu0 0
      %2237 = vmatpush1.bf16.msra.mxu0 0
      %2238 = vmatprep.subr.bf16.mxu0 0
      %2239 = vmatpush1.bf16.msra.mxu0 0
      %2240 = vmatprep.subr.bf16.mxu0 0
      %2241 = vmatpush1.bf16.msra.mxu0 0
      %2242 = vmatprep.subr.bf16.mxu0 0
      %2243 = vmatpush1.bf16.msra.mxu0 0
      %2244 = vmatprep.subr.bf16.mxu0 0
      %2245 = vmatpush1.bf16.msra.mxu0 0
      %2246 = vmatprep.subr.bf16.mxu0 0
      %2247 = vmatpush1.bf16.msra.mxu0 0
      %2248 = vmatprep.subr.bf16.mxu0 0
      %2249 = vmatpush1.bf16.msra.mxu0 0
      %2250 = vmatprep.subr.bf16.mxu0 0
      %2251 = vmatpush1.bf16.msra.mxu0 0
      %2252 = vmatprep.subr.bf16.mxu0 0
      %2253 = vmatpush1.bf16.msra.mxu0 0
      %2254 = vmatprep.subr.bf16.mxu0 0
      %2255 = vmatpush1.bf16.msra.mxu0 0
      %2256 = vmatprep.subr.bf16.mxu0 0
      %2257 = vmatpush1.bf16.msra.mxu0 0
      %2258 = vmatprep.subr.bf16.mxu0 0
      %2259 = vmatpush1.bf16.msra.mxu0 0
      %2260 = vmatprep.subr.bf16.mxu0 0
      %2261 = vmatpush1.bf16.msra.mxu0 0
      %2262 = vmatprep.mubr.bf16.mxu0 0
      %2263 = vmatmul.mubr.bf16.gmra.mrb[0].mxu0 %v2219
      %v2264 = vpop.f32.mrb[0].mxu0
      %v2265 = vadd.f32 0.0, %v2264
      %v2266 = vpop.f32.mrb[0].mxu0
      %v2267 = vpop.f32.mrb[0].mxu0
      %v2268 = vadd.f32 0.0, %v2267
      %v2269 = vpop.f32.mrb[0].mxu0
      %2270 = vmatprep.mubr.bf16.mxu0 0
      %2271 = vmatmul.mubr.bf16.gmra.mrb[0].mxu0 %v2222
      %v2272 = vpop.f32.mrb[0].mxu0
      %v2273 = vadd.f32 0.0, %v2272
      %v2274 = vpop.f32.mrb[0].mxu0
      %v2275 = vpop.f32.mrb[0].mxu0
      %v2276 = vadd.f32 0.0, %v2275
      %v2277 = vpop.f32.mrb[0].mxu0
      %2278 = vmatprep.mubr.bf16.mxu0 0
      %2279 = vmatmul.mubr.bf16.gmra.mrb[0].mxu0 %v2225
      %v2280 = vpop.f32.mrb[0].mxu0
      %v2281 = vadd.f32 0.0, %v2280
      %v2282 = vpop.f32.mrb[0].mxu0
      %v2283 = vpop.f32.mrb[0].mxu0
      %v2284 = vadd.f32 0.0, %v2283
      %v2285 = vpop.f32.mrb[0].mxu0
      %2286 = vmatprep.mubr.bf16.mxu0 0
      %2287 = vmatmul.mubr.bf16.gmra.mrb[0].mxu0 %v2228
      %v2288 = vpop.f32.mrb[0].mxu0
      %v2289 = vadd.f32 0.0, %v2288
      %v2290 = vpop.f32.mrb[0].mxu0
      %v2291 = vpop.f32.mrb[0].mxu0
      %v2292 = vadd.f32 0.0, %v2291
      %v2293 = vpop.f32.mrb[0].mxu0
      %2294 = vdwg.mxu0
      %v2295 = vadd.f32 %v2159, %v2265
      %v2296 = vadd.f32 %v2162, %v2268
      %v2297 = vadd.f32 %v2167, %v2273
      %v2298 = vadd.f32 %v2170, %v2276
      %v2299 = vadd.f32 %v2175, %v2281
      %v2300 = vadd.f32 %v2178, %v2284
      %v2301 = vadd.f32 %v2183, %v2289
      %v2302 = vadd.f32 %v2186, %v2292
      %v2303 = vld [vmem:[%s1969 + $0x7] sm:$0xff]
      %v2304 = vld [vmem:[%s1969 + $0x1f] sm:$0xff]
      %v2305 = vld [vmem:[%s1969 + $0x37] sm:$0xff]
      %v2306 = vld [vmem:[%s1969 + $0x4f] sm:$0xff]
      %v2307 = vld [vmem:[%s1969 + $0x67] sm:$0xff]
      %v2308 = vld [vmem:[%s1969 + $0x7f] sm:$0xff]
      %v2309 = vld [vmem:[%s1969 + $0x97] sm:$0xff]
      %v2310 = vld [vmem:[%s1969 + $0xaf] sm:$0xff]
      %v2311 = vpack.c.bf16 %v2304, %v2303
      %v2312 = vpack.c.bf16 %v2306, %v2305
      %v2313 = vpack.c.bf16 %v2308, %v2307
      %v2314 = vpack.c.bf16 %v2310, %v2309
      %s2315 = scalar_lea.vmem %s2, 48
      %v2316 = vld [vmem:[%s2315] sm:$0xf]
      %v2317 = vld [vmem:[%s2315 + $0x4] sm:$0xf]
      %v2318 = vld [vmem:[%s2315 + $0x8] sm:$0xf]
      %v2319 = vld [vmem:[%s2315 + $0xc] sm:$0xf]
      %v2324 = vunpack.c.l.b16 %v2316
      %v2325 = vunpack.c.l.b16 %v2317
      %v2326 = vunpack.c.l.b16 %v2318
      %v2327 = vunpack.c.l.b16 %v2319
      %v2328 = vpack.c.b16 %v2325, %v2324
      %v2329 = vpack.c.b16 %v2327, %v2326
      %v2333 = vsel %vm356, %v2311, 0
      %v2336 = vsel %vm356, %v2312, 0
      %v2339 = vsel %vm356, %v2313, 0
      %v2342 = vsel %vm356, %v2314, 0
      %2344 = vmatprep.subr.bf16.mxu0 0
      %2345 = vmatpush1.bf16.msra.mxu0 %v2328
      %2346 = vmatprep.subr.bf16.mxu0 0
      %2347 = vmatpush1.bf16.msra.mxu0 %v2329
      %2348 = vmatprep.subr.bf16.mxu0 0
      %2349 = vmatpush1.bf16.msra.mxu0 0
      %2350 = vmatprep.subr.bf16.mxu0 0
      %2351 = vmatpush1.bf16.msra.mxu0 0
      %2352 = vmatprep.subr.bf16.mxu0 0
      %2353 = vmatpush1.bf16.msra.mxu0 0
      %2354 = vmatprep.subr.bf16.mxu0 0
      %2355 = vmatpush1.bf16.msra.mxu0 0
      %2356 = vmatprep.subr.bf16.mxu0 0
      %2357 = vmatpush1.bf16.msra.mxu0 0
      %2358 = vmatprep.subr.bf16.mxu0 0
      %2359 = vmatpush1.bf16.msra.mxu0 0
      %2360 = vmatprep.subr.bf16.mxu0 0
      %2361 = vmatpush1.bf16.msra.mxu0 0
      %2362 = vmatprep.subr.bf16.mxu0 0
      %2363 = vmatpush1.bf16.msra.mxu0 0
      %2364 = vmatprep.subr.bf16.mxu0 0
      %2365 = vmatpush1.bf16.msra.mxu0 0
      %2366 = vmatprep.subr.bf16.mxu0 0
      %2367 = vmatpush1.bf16.msra.mxu0 0
      %2368 = vmatprep.subr.bf16.mxu0 0
      %2369 = vmatpush1.bf16.msra.mxu0 0
      %2370 = vmatprep.subr.bf16.mxu0 0
      %2371 = vmatpush1.bf16.msra.mxu0 0
      %2372 = vmatprep.subr.bf16.mxu0 0
      %2373 = vmatpush1.bf16.msra.mxu0 0
      %2374 = vmatprep.subr.bf16.mxu0 0
      %2375 = vmatpush1.bf16.msra.mxu0 0
      %2376 = vmatprep.mubr.bf16.mxu0 0
      %2377 = vmatmul.mubr.bf16.gmra.mrb[0].mxu0 %v2333
      %v2378 = vpop.f32.mrb[0].mxu0
      %v2379 = vadd.f32 0.0, %v2378
      %v2380 = vpop.f32.mrb[0].mxu0
      %v2381 = vpop.f32.mrb[0].mxu0
      %v2382 = vadd.f32 0.0, %v2381
      %v2383 = vpop.f32.mrb[0].mxu0
      %2384 = vmatprep.mubr.bf16.mxu0 0
      %2385 = vmatmul.mubr.bf16.gmra.mrb[0].mxu0 %v2336
      %v2386 = vpop.f32.mrb[0].mxu0
      %v2387 = vadd.f32 0.0, %v2386
      %v2388 = vpop.f32.mrb[0].mxu0
      %v2389 = vpop.f32.mrb[0].mxu0
      %v2390 = vadd.f32 0.0, %v2389
      %v2391 = vpop.f32.mrb[0].mxu0
      %2392 = vmatprep.mubr.bf16.mxu0 0
      %2393 = vmatmul.mubr.bf16.gmra.mrb[0].mxu0 %v2339
      %v2394 = vpop.f32.mrb[0].mxu0
      %v2395 = vadd.f32 0.0, %v2394
      %v2396 = vpop.f32.mrb[0].mxu0
      %v2397 = vpop.f32.mrb[0].mxu0
      %v2398 = vadd.f32 0.0, %v2397
      %v2399 = vpop.f32.mrb[0].mxu0
      %2400 = vmatprep.mubr.bf16.mxu0 0
      %2401 = vmatmul.mubr.bf16.gmra.mrb[0].mxu0 %v2342
      %v2402 = vpop.f32.mrb[0].mxu0
      %v2403 = vadd.f32 0.0, %v2402
      %v2404 = vpop.f32.mrb[0].mxu0
      %v2405 = vpop.f32.mrb[0].mxu0
      %v2406 = vadd.f32 0.0, %v2405
      %v2407 = vpop.f32.mrb[0].mxu0
      %2408 = vdwg.mxu0
      %v2409 = vadd.f32 %v2295, %v2379
      %v2410 = vadd.f32 %v2296, %v2382
      %v2411 = vadd.f32 %v2297, %v2387
      %v2412 = vadd.f32 %v2298, %v2390
      %v2413 = vadd.f32 %v2299, %v2395
      %v2414 = vadd.f32 %v2300, %v2398
      %v2415 = vadd.f32 %v2301, %v2403
      %v2416 = vadd.f32 %v2302, %v2406
      %v2417 = vld [vmem:[%s1969 + $0x8] sm:$0xff]
      %v2418 = vld [vmem:[%s1969 + $0x20] sm:$0xff]
      %v2419 = vld [vmem:[%s1969 + $0x38] sm:$0xff]
      %v2420 = vld [vmem:[%s1969 + $0x50] sm:$0xff]
      %v2421 = vld [vmem:[%s1969 + $0x68] sm:$0xff]
      %v2422 = vld [vmem:[%s1969 + $0x80] sm:$0xff]
      %v2423 = vld [vmem:[%s1969 + $0x98] sm:$0xff]
      %v2424 = vld [vmem:[%s1969 + $0xb0] sm:$0xff]
      %v2425 = vpack.c.bf16 %v2418, %v2417
      %v2426 = vpack.c.bf16 %v2420, %v2419
      %v2427 = vpack.c.bf16 %v2422, %v2421
      %v2428 = vpack.c.bf16 %v2424, %v2423
      %s2429 = scalar_lea.vmem %s2, 64
      %v2430 = vld [vmem:[%s2429] sm:$0xf]
      %v2431 = vld [vmem:[%s2429 + $0x4] sm:$0xf]
      %v2432 = vld [vmem:[%s2429 + $0x8] sm:$0xf]
      %v2433 = vld [vmem:[%s2429 + $0xc] sm:$0xf]
      %v2438 = vunpack.c.l.b16 %v2430
      %v2439 = vunpack.c.l.b16 %v2431
      %v2440 = vunpack.c.l.b16 %v2432
      %v2441 = vunpack.c.l.b16 %v2433
      %v2442 = vpack.c.b16 %v2439, %v2438
      %v2443 = vpack.c.b16 %v2441, %v2440
      %v2447 = vsel %vm356, %v2425, 0
      %v2450 = vsel %vm356, %v2426, 0
      %v2453 = vsel %vm356, %v2427, 0
      %v2456 = vsel %vm356, %v2428, 0
      %2458 = vmatprep.subr.bf16.mxu0 0
      %2459 = vmatpush1.bf16.msra.mxu0 %v2442
      %2460 = vmatprep.subr.bf16.mxu0 0
      %2461 = vmatpush1.bf16.msra.mxu0 %v2443
      %2462 = vmatprep.subr.bf16.mxu0 0
      %2463 = vmatpush1.bf16.msra.mxu0 0
      %2464 = vmatprep.subr.bf16.mxu0 0
      %2465 = vmatpush1.bf16.msra.mxu0 0
      %2466 = vmatprep.subr.bf16.mxu0 0
      %2467 = vmatpush1.bf16.msra.mxu0 0
      %2468 = vmatprep.subr.bf16.mxu0 0
      %2469 = vmatpush1.bf16.msra.mxu0 0
      %2470 = vmatprep.subr.bf16.mxu0 0
      %2471 = vmatpush1.bf16.msra.mxu0 0
      %2472 = vmatprep.subr.bf16.mxu0 0
      %2473 = vmatpush1.bf16.msra.mxu0 0
      %2474 = vmatprep.subr.bf16.mxu0 0
      %2475 = vmatpush1.bf16.msra.mxu0 0
      %2476 = vmatprep.subr.bf16.mxu0 0
      %2477 = vmatpush1.bf16.msra.mxu0 0
      %2478 = vmatprep.subr.bf16.mxu0 0
      %2479 = vmatpush1.bf16.msra.mxu0 0
      %2480 = vmatprep.subr.bf16.mxu0 0
      %2481 = vmatpush1.bf16.msra.mxu0 0
      %2482 = vmatprep.subr.bf16.mxu0 0
      %2483 = vmatpush1.bf16.msra.mxu0 0
      %2484 = vmatprep.subr.bf16.mxu0 0
      %2485 = vmatpush1.bf16.msra.mxu0 0
      %2486 = vmatprep.subr.bf16.mxu0 0
      %2487 = vmatpush1.bf16.msra.mxu0 0
      %2488 = vmatprep.subr.bf16.mxu0 0
      %2489 = vmatpush1.bf16.msra.mxu0 0
      %2490 = vmatprep.mubr.bf16.mxu0 0
      %2491 = vmatmul.mubr.bf16.gmra.mrb[0].mxu0 %v2447
      %v2492 = vpop.f32.mrb[0].mxu0
      %v2493 = vadd.f32 0.0, %v2492
      %v2494 = vpop.f32.mrb[0].mxu0
      %v2495 = vpop.f32.mrb[0].mxu0
      %v2496 = vadd.f32 0.0, %v2495
      %v2497 = vpop.f32.mrb[0].mxu0
      %2498 = vmatprep.mubr.bf16.mxu0 0
      %2499 = vmatmul.mubr.bf16.gmra.mrb[0].mxu0 %v2450
      %v2500 = vpop.f32.mrb[0].mxu0
      %v2501 = vadd.f32 0.0, %v2500
      %v2502 = vpop.f32.mrb[0].mxu0
      %v2503 = vpop.f32.mrb[0].mxu0
      %v2504 = vadd.f32 0.0, %v2503
      %v2505 = vpop.f32.mrb[0].mxu0
      %2506 = vmatprep.mubr.bf16.mxu0 0
      %2507 = vmatmul.mubr.bf16.gmra.mrb[0].mxu0 %v2453
      %v2508 = vpop.f32.mrb[0].mxu0
      %v2509 = vadd.f32 0.0, %v2508
      %v2510 = vpop.f32.mrb[0].mxu0
      %v2511 = vpop.f32.mrb[0].mxu0
      %v2512 = vadd.f32 0.0, %v2511
      %v2513 = vpop.f32.mrb[0].mxu0
      %2514 = vmatprep.mubr.bf16.mxu0 0
      %2515 = vmatmul.mubr.bf16.gmra.mrb[0].mxu0 %v2456
      %v2516 = vpop.f32.mrb[0].mxu0
      %v2517 = vadd.f32 0.0, %v2516
      %v2518 = vpop.f32.mrb[0].mxu0
      %v2519 = vpop.f32.mrb[0].mxu0
      %v2520 = vadd.f32 0.0, %v2519
      %v2521 = vpop.f32.mrb[0].mxu0
      %2522 = vdwg.mxu0
      %v2523 = vadd.f32 %v2409, %v2493
      %v2524 = vadd.f32 %v2410, %v2496
      %v2525 = vadd.f32 %v2411, %v2501
      %v2526 = vadd.f32 %v2412, %v2504
      %v2527 = vadd.f32 %v2413, %v2509
      %v2528 = vadd.f32 %v2414, %v2512
      %v2529 = vadd.f32 %v2415, %v2517
      %v2530 = vadd.f32 %v2416, %v2520
      %v2531 = vld [vmem:[%s1969 + $0x9] sm:$0xff]
      %v2532 = vld [vmem:[%s1969 + $0x21] sm:$0xff]
      %v2533 = vld [vmem:[%s1969 + $0x39] sm:$0xff]
      %v2534 = vld [vmem:[%s1969 + $0x51] sm:$0xff]
      %v2535 = vld [vmem:[%s1969 + $0x69] sm:$0xff]
      %v2536 = vld [vmem:[%s1969 + $0x81] sm:$0xff]
      %v2537 = vld [vmem:[%s1969 + $0x99] sm:$0xff]
      %v2538 = vld [vmem:[%s1969 + $0xb1] sm:$0xff]
      %v2539 = vpack.c.bf16 %v2532, %v2531
      %v2540 = vpack.c.bf16 %v2534, %v2533
      %v2541 = vpack.c.bf16 %v2536, %v2535
      %v2542 = vpack.c.bf16 %v2538, %v2537
      %s2543 = scalar_lea.vmem %s2, 80
      %v2544 = vld [vmem:[%s2543] sm:$0xf]
      %v2545 = vld [vmem:[%s2543 + $0x4] sm:$0xf]
      %v2546 = vld [vmem:[%s2543 + $0x8] sm:$0xf]
      %v2547 = vld [vmem:[%s2543 + $0xc] sm:$0xf]
      %v2552 = vunpack.c.l.b16 %v2544
      %v2553 = vunpack.c.l.b16 %v2545
      %v2554 = vunpack.c.l.b16 %v2546
      %v2555 = vunpack.c.l.b16 %v2547
      %v2556 = vpack.c.b16 %v2553, %v2552
      %v2557 = vpack.c.b16 %v2555, %v2554
      %v2561 = vsel %vm356, %v2539, 0
      %v2564 = vsel %vm356, %v2540, 0
      %v2567 = vsel %vm356, %v2541, 0
      %v2570 = vsel %vm356, %v2542, 0
      %2572 = vmatprep.subr.bf16.mxu0 0
      %2573 = vmatpush1.bf16.msra.mxu0 %v2556
      %2574 = vmatprep.subr.bf16.mxu0 0
      %2575 = vmatpush1.bf16.msra.mxu0 %v2557
      %2576 = vmatprep.subr.bf16.mxu0 0
      %2577 = vmatpush1.bf16.msra.mxu0 0
      %2578 = vmatprep.subr.bf16.mxu0 0
      %2579 = vmatpush1.bf16.msra.mxu0 0
      %2580 = vmatprep.subr.bf16.mxu0 0
      %2581 = vmatpush1.bf16.msra.mxu0 0
      %2582 = vmatprep.subr.bf16.mxu0 0
      %2583 = vmatpush1.bf16.msra.mxu0 0
      %2584 = vmatprep.subr.bf16.mxu0 0
      %2585 = vmatpush1.bf16.msra.mxu0 0
      %2586 = vmatprep.subr.bf16.mxu0 0
      %2587 = vmatpush1.bf16.msra.mxu0 0
      %2588 = vmatprep.subr.bf16.mxu0 0
      %2589 = vmatpush1.bf16.msra.mxu0 0
      %2590 = vmatprep.subr.bf16.mxu0 0
      %2591 = vmatpush1.bf16.msra.mxu0 0
      %2592 = vmatprep.subr.bf16.mxu0 0
      %2593 = vmatpush1.bf16.msra.mxu0 0
      %2594 = vmatprep.subr.bf16.mxu0 0
      %2595 = vmatpush1.bf16.msra.mxu0 0
      %2596 = vmatprep.subr.bf16.mxu0 0
      %2597 = vmatpush1.bf16.msra.mxu0 0
      %2598 = vmatprep.subr.bf16.mxu0 0
      %2599 = vmatpush1.bf16.msra.mxu0 0
      %2600 = vmatprep.subr.bf16.mxu0 0
      %2601 = vmatpush1.bf16.msra.mxu0 0
      %2602 = vmatprep.subr.bf16.mxu0 0
      %2603 = vmatpush1.bf16.msra.mxu0 0
      %2604 = vmatprep.mubr.bf16.mxu0 0
      %2605 = vmatmul.mubr.bf16.gmra.mrb[0].mxu0 %v2561
      %v2606 = vpop.f32.mrb[0].mxu0
      %v2607 = vadd.f32 0.0, %v2606
      %v2608 = vpop.f32.mrb[0].mxu0
      %v2609 = vpop.f32.mrb[0].mxu0
      %v2610 = vadd.f32 0.0, %v2609
      %v2611 = vpop.f32.mrb[0].mxu0
      %2612 = vmatprep.mubr.bf16.mxu0 0
      %2613 = vmatmul.mubr.bf16.gmra.mrb[0].mxu0 %v2564
      %v2614 = vpop.f32.mrb[0].mxu0
      %v2615 = vadd.f32 0.0, %v2614
      %v2616 = vpop.f32.mrb[0].mxu0
      %v2617 = vpop.f32.mrb[0].mxu0
      %v2618 = vadd.f32 0.0, %v2617
      %v2619 = vpop.f32.mrb[0].mxu0
      %2620 = vmatprep.mubr.bf16.mxu0 0
      %2621 = vmatmul.mubr.bf16.gmra.mrb[0].mxu0 %v2567
      %v2622 = vpop.f32.mrb[0].mxu0
      %v2623 = vadd.f32 0.0, %v2622
      %v2624 = vpop.f32.mrb[0].mxu0
      %v2625 = vpop.f32.mrb[0].mxu0
      %v2626 = vadd.f32 0.0, %v2625
      %v2627 = vpop.f32.mrb[0].mxu0
      %2628 = vmatprep.mubr.bf16.mxu0 0
      %2629 = vmatmul.mubr.bf16.gmra.mrb[0].mxu0 %v2570
      %v2630 = vpop.f32.mrb[0].mxu0
      %v2631 = vadd.f32 0.0, %v2630
      %v2632 = vpop.f32.mrb[0].mxu0
      %v2633 = vpop.f32.mrb[0].mxu0
      %v2634 = vadd.f32 0.0, %v2633
      %v2635 = vpop.f32.mrb[0].mxu0
      %2636 = vdwg.mxu0
      %v2637 = vadd.f32 %v2523, %v2607
      %v2638 = vadd.f32 %v2524, %v2610
      %v2639 = vadd.f32 %v2525, %v2615
      %v2640 = vadd.f32 %v2526, %v2618
      %v2641 = vadd.f32 %v2527, %v2623
      %v2642 = vadd.f32 %v2528, %v2626
      %v2643 = vadd.f32 %v2529, %v2631
      %v2644 = vadd.f32 %v2530, %v2634
      %s2645 = scalar_lea.vmem [#allocation3], 48
      %v2646 = vld [vmem:[%s2645 + $0x7] sm:$0xff]
      %v2647 = vld [vmem:[%s2645 + $0x1f] sm:$0xff]
      %v2648 = vld [vmem:[%s2645 + $0x37] sm:$0xff]
      %v2649 = vld [vmem:[%s2645 + $0x4f] sm:$0xff]
      %v2650 = vld [vmem:[%s2645 + $0x67] sm:$0xff]
      %v2651 = vld [vmem:[%s2645 + $0x7f] sm:$0xff]
      %v2652 = vld [vmem:[%s2645 + $0x97] sm:$0xff]
      %v2653 = vld [vmem:[%s2645 + $0xaf] sm:$0xff]
      %v2654 = vpack.c.bf16 %v2647, %v2646
      %v2655 = vpack.c.bf16 %v2649, %v2648
      %v2656 = vpack.c.bf16 %v2651, %v2650
      %v2657 = vpack.c.bf16 %v2653, %v2652
      %s2658 = scalar_lea.vmem %s2, 96
      %v2659 = vld [vmem:[%s2658] sm:$0xf]
      %v2660 = vld [vmem:[%s2658 + $0x4] sm:$0xf]
      %v2661 = vld [vmem:[%s2658 + $0x8] sm:$0xf]
      %v2662 = vld [vmem:[%s2658 + $0xc] sm:$0xf]
      %v2667 = vunpack.c.l.b16 %v2659
      %v2668 = vunpack.c.l.b16 %v2660
      %v2669 = vunpack.c.l.b16 %v2661
      %v2670 = vunpack.c.l.b16 %v2662
      %v2671 = vpack.c.b16 %v2668, %v2667
      %v2672 = vpack.c.b16 %v2670, %v2669
      %v2676 = vsel %vm356, %v2654, 0
      %v2679 = vsel %vm356, %v2655, 0
      %v2682 = vsel %vm356, %v2656, 0
      %v2685 = vsel %vm356, %v2657, 0
      %2687 = vmatprep.subr.bf16.mxu0 0
      %2688 = vmatpush1.bf16.msra.mxu0 %v2671
      %2689 = vmatprep.subr.bf16.mxu0 0
      %2690 = vmatpush1.bf16.msra.mxu0 %v2672
      %2691 = vmatprep.subr.bf16.mxu0 0
      %2692 = vmatpush1.bf16.msra.mxu0 0
      %2693 = vmatprep.subr.bf16.mxu0 0
      %2694 = vmatpush1.bf16.msra.mxu0 0
      %2695 = vmatprep.subr.bf16.mxu0 0
      %2696 = vmatpush1.bf16.msra.mxu0 0
      %2697 = vmatprep.subr.bf16.mxu0 0
      %2698 = vmatpush1.bf16.msra.mxu0 0
      %2699 = vmatprep.subr.bf16.mxu0 0
      %2700 = vmatpush1.bf16.msra.mxu0 0
      %2701 = vmatprep.subr.bf16.mxu0 0
      %2702 = vmatpush1.bf16.msra.mxu0 0
      %2703 = vmatprep.subr.bf16.mxu0 0
      %2704 = vmatpush1.bf16.msra.mxu0 0
      %2705 = vmatprep.subr.bf16.mxu0 0
      %2706 = vmatpush1.bf16.msra.mxu0 0
      %2707 = vmatprep.subr.bf16.mxu0 0
      %2708 = vmatpush1.bf16.msra.mxu0 0
      %2709 = vmatprep.subr.bf16.mxu0 0
      %2710 = vmatpush1.bf16.msra.mxu0 0
      %2711 = vmatprep.subr.bf16.mxu0 0
      %2712 = vmatpush1.bf16.msra.mxu0 0
      %2713 = vmatprep.subr.bf16.mxu0 0
      %2714 = vmatpush1.bf16.msra.mxu0 0
      %2715 = vmatprep.subr.bf16.mxu0 0
      %2716 = vmatpush1.bf16.msra.mxu0 0
      %2717 = vmatprep.subr.bf16.mxu0 0
      %2718 = vmatpush1.bf16.msra.mxu0 0
      %2719 = vmatprep.mubr.bf16.mxu0 0
      %2720 = vmatmul.mubr.bf16.gmra.mrb[0].mxu0 %v2676
      %v2721 = vpop.f32.mrb[0].mxu0
      %v2722 = vadd.f32 0.0, %v2721
      %v2723 = vpop.f32.mrb[0].mxu0
      %v2724 = vpop.f32.mrb[0].mxu0
      %v2725 = vadd.f32 0.0, %v2724
      %v2726 = vpop.f32.mrb[0].mxu0
      %2727 = vmatprep.mubr.bf16.mxu0 0
      %2728 = vmatmul.mubr.bf16.gmra.mrb[0].mxu0 %v2679
      %v2729 = vpop.f32.mrb[0].mxu0
      %v2730 = vadd.f32 0.0, %v2729
      %v2731 = vpop.f32.mrb[0].mxu0
      %v2732 = vpop.f32.mrb[0].mxu0
      %v2733 = vadd.f32 0.0, %v2732
      %v2734 = vpop.f32.mrb[0].mxu0
      %2735 = vmatprep.mubr.bf16.mxu0 0
      %2736 = vmatmul.mubr.bf16.gmra.mrb[0].mxu0 %v2682
      %v2737 = vpop.f32.mrb[0].mxu0
      %v2738 = vadd.f32 0.0, %v2737
      %v2739 = vpop.f32.mrb[0].mxu0
      %v2740 = vpop.f32.mrb[0].mxu0
      %v2741 = vadd.f32 0.0, %v2740
      %v2742 = vpop.f32.mrb[0].mxu0
      %2743 = vmatprep.mubr.bf16.mxu0 0
      %2744 = vmatmul.mubr.bf16.gmra.mrb[0].mxu0 %v2685
      %v2745 = vpop.f32.mrb[0].mxu0
      %v2746 = vadd.f32 0.0, %v2745
      %v2747 = vpop.f32.mrb[0].mxu0
      %v2748 = vpop.f32.mrb[0].mxu0
      %v2749 = vadd.f32 0.0, %v2748
      %v2750 = vpop.f32.mrb[0].mxu0
      %2751 = vdwg.mxu0
      %v2752 = vadd.f32 %v2637, %v2722
      %v2753 = vadd.f32 %v2638, %v2725
      %v2754 = vadd.f32 %v2639, %v2730
      %v2755 = vadd.f32 %v2640, %v2733
      %v2756 = vadd.f32 %v2641, %v2738
      %v2757 = vadd.f32 %v2642, %v2741
      %v2758 = vadd.f32 %v2643, %v2746
      %v2759 = vadd.f32 %v2644, %v2749
      %v2760 = vld [vmem:[%s2645 + $0x8] sm:$0xff]
      %v2761 = vld [vmem:[%s2645 + $0x20] sm:$0xff]
      %v2762 = vld [vmem:[%s2645 + $0x38] sm:$0xff]
      %v2763 = vld [vmem:[%s2645 + $0x50] sm:$0xff]
      %v2764 = vld [vmem:[%s2645 + $0x68] sm:$0xff]
      %v2765 = vld [vmem:[%s2645 + $0x80] sm:$0xff]
      %v2766 = vld [vmem:[%s2645 + $0x98] sm:$0xff]
      %v2767 = vld [vmem:[%s2645 + $0xb0] sm:$0xff]
      %v2768 = vpack.c.bf16 %v2761, %v2760
      %v2769 = vpack.c.bf16 %v2763, %v2762
      %v2770 = vpack.c.bf16 %v2765, %v2764
      %v2771 = vpack.c.bf16 %v2767, %v2766
      %s2772 = scalar_lea.vmem %s2, 112
      %v2773 = vld [vmem:[%s2772] sm:$0xf]
      %v2774 = vld [vmem:[%s2772 + $0x4] sm:$0xf]
      %v2775 = vld [vmem:[%s2772 + $0x8] sm:$0xf]
      %v2776 = vld [vmem:[%s2772 + $0xc] sm:$0xf]
      %v2781 = vunpack.c.l.b16 %v2773
      %v2782 = vunpack.c.l.b16 %v2774
      %v2783 = vunpack.c.l.b16 %v2775
      %v2784 = vunpack.c.l.b16 %v2776
      %v2785 = vpack.c.b16 %v2782, %v2781
      %v2786 = vpack.c.b16 %v2784, %v2783
      %v2790 = vsel %vm356, %v2768, 0
      %v2793 = vsel %vm356, %v2769, 0
      %v2796 = vsel %vm356, %v2770, 0
      %v2799 = vsel %vm356, %v2771, 0
      %2801 = vmatprep.subr.bf16.mxu0 0
      %2802 = vmatpush1.bf16.msra.mxu0 %v2785
      %2803 = vmatprep.subr.bf16.mxu0 0
      %2804 = vmatpush1.bf16.msra.mxu0 %v2786
      %2805 = vmatprep.subr.bf16.mxu0 0
      %2806 = vmatpush1.bf16.msra.mxu0 0
      %2807 = vmatprep.subr.bf16.mxu0 0
      %2808 = vmatpush1.bf16.msra.mxu0 0
      %2809 = vmatprep.subr.bf16.mxu0 0
      %2810 = vmatpush1.bf16.msra.mxu0 0
      %2811 = vmatprep.subr.bf16.mxu0 0
      %2812 = vmatpush1.bf16.msra.mxu0 0
      %2813 = vmatprep.subr.bf16.mxu0 0
      %2814 = vmatpush1.bf16.msra.mxu0 0
      %2815 = vmatprep.subr.bf16.mxu0 0
      %2816 = vmatpush1.bf16.msra.mxu0 0
      %2817 = vmatprep.subr.bf16.mxu0 0
      %2818 = vmatpush1.bf16.msra.mxu0 0
      %2819 = vmatprep.subr.bf16.mxu0 0
      %2820 = vmatpush1.bf16.msra.mxu0 0
      %2821 = vmatprep.subr.bf16.mxu0 0
      %2822 = vmatpush1.bf16.msra.mxu0 0
      %2823 = vmatprep.subr.bf16.mxu0 0
      %2824 = vmatpush1.bf16.msra.mxu0 0
      %2825 = vmatprep.subr.bf16.mxu0 0
      %2826 = vmatpush1.bf16.msra.mxu0 0
      %2827 = vmatprep.subr.bf16.mxu0 0
      %2828 = vmatpush1.bf16.msra.mxu0 0
      %2829 = vmatprep.subr.bf16.mxu0 0
      %2830 = vmatpush1.bf16.msra.mxu0 0
      %2831 = vmatprep.subr.bf16.mxu0 0
      %2832 = vmatpush1.bf16.msra.mxu0 0
      %2833 = vmatprep.mubr.bf16.mxu0 0
      %2834 = vmatmul.mubr.bf16.gmra.mrb[0].mxu0 %v2790
      %v2835 = vpop.f32.mrb[0].mxu0
      %v2836 = vadd.f32 0.0, %v2835
      %v2837 = vpop.f32.mrb[0].mxu0
      %v2838 = vpop.f32.mrb[0].mxu0
      %v2839 = vadd.f32 0.0, %v2838
      %v2840 = vpop.f32.mrb[0].mxu0
      %2841 = vmatprep.mubr.bf16.mxu0 0
      %2842 = vmatmul.mubr.bf16.gmra.mrb[0].mxu0 %v2793
      %v2843 = vpop.f32.mrb[0].mxu0
      %v2844 = vadd.f32 0.0, %v2843
      %v2845 = vpop.f32.mrb[0].mxu0
      %v2846 = vpop.f32.mrb[0].mxu0
      %v2847 = vadd.f32 0.0, %v2846
      %v2848 = vpop.f32.mrb[0].mxu0
      %2849 = vmatprep.mubr.bf16.mxu0 0
      %2850 = vmatmul.mubr.bf16.gmra.mrb[0].mxu0 %v2796
      %v2851 = vpop.f32.mrb[0].mxu0
      %v2852 = vadd.f32 0.0, %v2851
      %v2853 = vpop.f32.mrb[0].mxu0
      %v2854 = vpop.f32.mrb[0].mxu0
      %v2855 = vadd.f32 0.0, %v2854
      %v2856 = vpop.f32.mrb[0].mxu0
      %2857 = vmatprep.mubr.bf16.mxu0 0
      %2858 = vmatmul.mubr.bf16.gmra.mrb[0].mxu0 %v2799
      %v2859 = vpop.f32.mrb[0].mxu0
      %v2860 = vadd.f32 0.0, %v2859
      %v2861 = vpop.f32.mrb[0].mxu0
      %v2862 = vpop.f32.mrb[0].mxu0
      %v2863 = vadd.f32 0.0, %v2862
      %v2864 = vpop.f32.mrb[0].mxu0
      %2865 = vdwg.mxu0
      %v2866 = vadd.f32 %v2752, %v2836
      %v2867 = vadd.f32 %v2753, %v2839
      %v2868 = vadd.f32 %v2754, %v2844
      %v2869 = vadd.f32 %v2755, %v2847
      %v2870 = vadd.f32 %v2756, %v2852
      %v2871 = vadd.f32 %v2757, %v2855
      %v2872 = vadd.f32 %v2758, %v2860
      %v2873 = vadd.f32 %v2759, %v2863
      %v2874 = vld [vmem:[%s2645 + $0x9] sm:$0xff]
      %v2875 = vld [vmem:[%s2645 + $0x21] sm:$0xff]
      %v2876 = vld [vmem:[%s2645 + $0x39] sm:$0xff]
      %v2877 = vld [vmem:[%s2645 + $0x51] sm:$0xff]
      %v2878 = vld [vmem:[%s2645 + $0x69] sm:$0xff]
      %v2879 = vld [vmem:[%s2645 + $0x81] sm:$0xff]
      %v2880 = vld [vmem:[%s2645 + $0x99] sm:$0xff]
      %v2881 = vld [vmem:[%s2645 + $0xb1] sm:$0xff]
      %v2882 = vpack.c.bf16 %v2875, %v2874
      %v2883 = vpack.c.bf16 %v2877, %v2876
      %v2884 = vpack.c.bf16 %v2879, %v2878
      %v2885 = vpack.c.bf16 %v2881, %v2880
      %s2886 = scalar_lea.vmem %s2, 128
      %v2887 = vld [vmem:[%s2886] sm:$0xf]
      %v2888 = vld [vmem:[%s2886 + $0x4] sm:$0xf]
      %v2889 = vld [vmem:[%s2886 + $0x8] sm:$0xf]
      %v2890 = vld [vmem:[%s2886 + $0xc] sm:$0xf]
      %v2895 = vunpack.c.l.b16 %v2887
      %v2896 = vunpack.c.l.b16 %v2888
      %v2897 = vunpack.c.l.b16 %v2889
      %v2898 = vunpack.c.l.b16 %v2890
      %v2899 = vpack.c.b16 %v2896, %v2895
      %v2900 = vpack.c.b16 %v2898, %v2897
      %v2904 = vsel %vm356, %v2882, 0
      %v2907 = vsel %vm356, %v2883, 0
      %v2910 = vsel %vm356, %v2884, 0
      %v2913 = vsel %vm356, %v2885, 0
      %2915 = vmatprep.subr.bf16.mxu0 0
      %2916 = vmatpush1.bf16.msra.mxu0 %v2899
      %2917 = vmatprep.subr.bf16.mxu0 0
      %2918 = vmatpush1.bf16.msra.mxu0 %v2900
      %2919 = vmatprep.subr.bf16.mxu0 0
      %2920 = vmatpush1.bf16.msra.mxu0 0
      %2921 = vmatprep.subr.bf16.mxu0 0
      %2922 = vmatpush1.bf16.msra.mxu0 0
      %2923 = vmatprep.subr.bf16.mxu0 0
      %2924 = vmatpush1.bf16.msra.mxu0 0
      %2925 = vmatprep.subr.bf16.mxu0 0
      %2926 = vmatpush1.bf16.msra.mxu0 0
      %2927 = vmatprep.subr.bf16.mxu0 0
      %2928 = vmatpush1.bf16.msra.mxu0 0
      %2929 = vmatprep.subr.bf16.mxu0 0
      %2930 = vmatpush1.bf16.msra.mxu0 0
      %2931 = vmatprep.subr.bf16.mxu0 0
      %2932 = vmatpush1.bf16.msra.mxu0 0
      %2933 = vmatprep.subr.bf16.mxu0 0
      %2934 = vmatpush1.bf16.msra.mxu0 0
      %2935 = vmatprep.subr.bf16.mxu0 0
      %2936 = vmatpush1.bf16.msra.mxu0 0
      %2937 = vmatprep.subr.bf16.mxu0 0
      %2938 = vmatpush1.bf16.msra.mxu0 0
      %2939 = vmatprep.subr.bf16.mxu0 0
      %2940 = vmatpush1.bf16.msra.mxu0 0
      %2941 = vmatprep.subr.bf16.mxu0 0
      %2942 = vmatpush1.bf16.msra.mxu0 0
      %2943 = vmatprep.subr.bf16.mxu0 0
      %2944 = vmatpush1.bf16.msra.mxu0 0
      %2945 = vmatprep.subr.bf16.mxu0 0
      %2946 = vmatpush1.bf16.msra.mxu0 0
      %2947 = vmatprep.mubr.bf16.mxu0 0
      %2948 = vmatmul.mubr.bf16.gmra.mrb[0].mxu0 %v2904
      %v2949 = vpop.f32.mrb[0].mxu0
      %v2950 = vadd.f32 0.0, %v2949
      %v2951 = vpop.f32.mrb[0].mxu0
      %v2952 = vpop.f32.mrb[0].mxu0
      %v2953 = vadd.f32 0.0, %v2952
      %v2954 = vpop.f32.mrb[0].mxu0
      %2955 = vmatprep.mubr.bf16.mxu0 0
      %2956 = vmatmul.mubr.bf16.gmra.mrb[0].mxu0 %v2907
      %v2957 = vpop.f32.mrb[0].mxu0
      %v2958 = vadd.f32 0.0, %v2957
      %v2959 = vpop.f32.mrb[0].mxu0
      %v2960 = vpop.f32.mrb[0].mxu0
      %v2961 = vadd.f32 0.0, %v2960
      %v2962 = vpop.f32.mrb[0].mxu0
      %2963 = vmatprep.mubr.bf16.mxu0 0
      %2964 = vmatmul.mubr.bf16.gmra.mrb[0].mxu0 %v2910
      %v2965 = vpop.f32.mrb[0].mxu0
      %v2966 = vadd.f32 0.0, %v2965
      %v2967 = vpop.f32.mrb[0].mxu0
      %v2968 = vpop.f32.mrb[0].mxu0
      %v2969 = vadd.f32 0.0, %v2968
      %v2970 = vpop.f32.mrb[0].mxu0
      %2971 = vmatprep.mubr.bf16.mxu0 0
      %2972 = vmatmul.mubr.bf16.gmra.mrb[0].mxu0 %v2913
      %v2973 = vpop.f32.mrb[0].mxu0
      %v2974 = vadd.f32 0.0, %v2973
      %v2975 = vpop.f32.mrb[0].mxu0
      %v2976 = vpop.f32.mrb[0].mxu0
      %v2977 = vadd.f32 0.0, %v2976
      %v2978 = vpop.f32.mrb[0].mxu0
      %2979 = vdwg.mxu0
      %v2980 = vadd.f32 %v2866, %v2950
      %v2981 = vadd.f32 %v2867, %v2953
      %v2982 = vadd.f32 %v2868, %v2958
      %v2983 = vadd.f32 %v2869, %v2961
      %v2984 = vadd.f32 %v2870, %v2966
      %v2985 = vadd.f32 %v2871, %v2969
      %v2986 = vadd.f32 %v2872, %v2974
      %v2987 = vadd.f32 %v2873, %v2977
      %v2988 = vadd.f32 %v2980, %v342
      %v2989 = vadd.f32 %v2981, %v343
      %v2990 = vadd.f32 %v2982, %v344
      %v2991 = vadd.f32 %v2983, %v345
      %v2992 = vadd.f32 %v2984, %v346
      %v2993 = vadd.f32 %v2985, %v347
      %v2994 = vadd.f32 %v2986, %v348
      %v2995 = vadd.f32 %v2987, %v349
      %v2996 = vpack.c.bf16 %v2989, %v2988
      %v2997 = vpack.c.bf16 %v2991, %v2990
      %v2998 = vpack.c.bf16 %v2993, %v2992
      %v2999 = vpack.c.bf16 %v2995, %v2994
      %v3004 = vunpack.c.l.b16 %v2996
      %v3005 = vunpack.c.h.b16 %v2996
      %v3006 = vunpack.c.l.b16 %v2997
      %v3007 = vunpack.c.h.b16 %v2997
      %v3008 = vunpack.c.l.b16 %v2998
      %v3009 = vunpack.c.h.b16 %v2998
      %v3010 = vunpack.c.l.b16 %v2999
      %v3011 = vunpack.c.h.b16 %v2999
      %v3012 = vpack.c.b16 %v3004, %v3004
      %v3013 = vpack.c.b16 %v3005, %v3005
      %v3014 = vpack.c.b16 %v3006, %v3006
      %v3015 = vpack.c.b16 %v3007, %v3007
      %v3016 = vpack.c.b16 %v3008, %v3008
      %v3017 = vpack.c.b16 %v3009, %v3009
      %v3018 = vpack.c.b16 %v3010, %v3010
      %v3019 = vpack.c.b16 %v3011, %v3011
      %vm3028 = vcmask 257024
      %3029 = vst.msk [vmem:[%s332] sm:$0xf] %vm3028, %v3012
      %3030 = vst.msk [vmem:[%s332 + $0x4] sm:$0xf] %vm3028, %v3013
      %3031 = vst.msk [vmem:[%s332 + $0x8] sm:$0xf] %vm3028, %v3014
      %3032 = vst.msk [vmem:[%s332 + $0xc] sm:$0xf] %vm3028, %v3015
      %3033 = vst.msk [vmem:[%s332 + $0x10] sm:$0xf] %vm3028, %v3016
      %3034 = vst.msk [vmem:[%s332 + $0x14] sm:$0xf] %vm3028, %v3017
      %3035 = vst.msk [vmem:[%s332 + $0x18] sm:$0xf] %vm3028, %v3018
      %3036 = vst.msk [vmem:[%s332 + $0x1c] sm:$0xf] %vm3028, %v3019
      %p3037 = scmp.lt.s32.totalorder %s20, 1
      %s3038 = scalar_select %p3037, %s20, 1
      %s3039 = smul.addr %s3038, 8
      %s3040 = smul.addr %s3039, 4
      %s3041 = scalar_lea.vmem %s9, %s3040
      // Predicated region
      $region57: #{_lambda_.7} parent=55 // pred_check
        %p3042 = pneg %p232
      $region58: #{_lambda_.7} parent=55 // pred_check_branch
        %3044 = sbr.rel (%p3042) target = $region60
      $region59: #{_lambda_.7} parent=55 // pred_region
        _
      $region60: #{_lambda_.7} parent=55 // pred_fallthru
        _
    $region56: #{_lambda_.7} parent=5 // pred_fallthru
      _
    %p3045 = scmp.le.s32.totalorder 2, %s15
    // Predicated region
    $region61: #{_lambda_.7} parent=5 // pred_check
      %p3046 = pneg %p3045
    $region62: #{_lambda_.7} parent=5 // pred_check_branch
      %3048 = sbr.rel (%p3046) target = $region64
    $region63: #{_lambda_.7} parent=5 // pred_region
      %s3049 = ssub.s32 %s15, 2
      // Predicated region
      $region65: #{_lambda_.7} parent=63 // pred_check
        %p3050 = pneg %p238
      $region66: #{_lambda_.7} parent=63 // pred_check_branch
        %3052 = sbr.rel (%p3050) target = $region68
      $region67: #{_lambda_.7} parent=63 // pred_region
        %p3053 = scmp.lt.s32.totalorder %s21, 1
        %s3054 = scalar_select %p3053, %s21, 1
        %s3055 = smul.addr %s3054, 8
        %s3056 = smul.addr %s3055, 4
        %s3057 = scalar_lea.vmem %s9, %s3056
      $region68: #{_lambda_.7} parent=63 // pred_fallthru
        _
    $region64: #{_lambda_.7} parent=5 // pred_fallthru
      _
  $region6: #{_lambda_.7} parent=0 // loop_footer
    %s19 = sadd.s32 1, %s15
  $region7: #{_lambda_.7} parent=0 // loop_footer_branch
    %14 = sbr.rel target = $region3
  $region8: #{_lambda_.7} parent=0 // loop_exit
    _

</llo_original>
